<compile_context>
chip_gen: v5e
topology: v5e:2x2
jax: 0.10.0
libtpu: 0.0.40
codegen_flags: <defaults>
</compile_context>

<pallas_src>
import functools

import jax
import jax.numpy as jnp
from jax import lax
from jax.experimental import pallas as pl
from jax.experimental.pallas import tpu as pltpu

_CP = pltpu.CompilerParams(dimension_semantics=("parallel",))


# ---------------------------------------------------------------------------
# BlockSpec helpers
# ---------------------------------------------------------------------------
def _wspec(shape):
    """Constant (weight) block: full array, same block for every grid step."""
    nd = len(shape)
    return pl.BlockSpec(shape, lambda g: (0,) * nd)


def _bspec(shape):
    """Per-batch block: leading batch dim of size 1, full extent elsewhere."""
    nd = len(shape)
    return pl.BlockSpec((1,) + tuple(shape), lambda g: (g,) + (0,) * nd)


# ---------------------------------------------------------------------------
# Kernels
# ---------------------------------------------------------------------------
def _gat_fused_kernel(x_ref, adj_ref, wa_ref, ba_ref, w0_ref, b0_ref,
                      w1_ref, b1_ref, wf_ref, bfin_ref, o_ref, *, num_layers):
    """All 7 GAT layers + final linear, activations resident, bf16 matmuls."""
    n = x_ref.shape[1]
    x = x_ref[0]                      # (n, d) f32, running activation
    adj = adj_ref[0]                  # (n, n) f32  (diagonal forced to 1 upstream)
    # diagonal mask hoisted out of the layer loop
    row = lax.broadcasted_iota(jnp.int32, (n, n), 0)
    col = lax.broadcasted_iota(jnp.int32, (n, n), 1)
    eye = (row == col).astype(jnp.float32)

    for l in range(num_layers):
        xb = x.astype(jnp.bfloat16)
        xa = jnp.dot(xb, wa_ref[l], preferred_element_type=jnp.float32) + ba_ref[l]
        # einsum('ij,kj->ik', w_attn(x), x)
        logits = lax.dot_general(xa.astype(jnp.bfloat16), xb,
                                 (((1,), (1,)), ((), ())),
                                 preferred_element_type=jnp.float32)
        # Row-max stabilized; scaling numerator & denominator by exp(-m) keeps this
        # exactly equal to the reference (exp(logits) + 1e-5*I) * adj / rowsum.
        m = jnp.max(logits, axis=-1, keepdims=True)
        p = jnp.exp(logits - m) + (1e-5 * jnp.exp(-m)) * eye
        p = p * adj
        denom = jnp.sum(p, axis=-1, keepdims=True)
        p = p * pl.reciprocal(denom, approx=True)
        h = jnp.dot(p.astype(jnp.bfloat16), xb, preferred_element_type=jnp.float32)
        h = jnp.maximum(jnp.dot(h.astype(jnp.bfloat16), w0_ref[l],
                                preferred_element_type=jnp.float32) + b0_ref[l], 0.0)
        h = jnp.maximum(jnp.dot(h.astype(jnp.bfloat16), w1_ref[l],
                                preferred_element_type=jnp.float32) + b1_ref[l], 0.0)
        x = h + x
    o_ref[0] = jnp.dot(x.astype(jnp.bfloat16), wf_ref[...],
                       preferred_element_type=jnp.float32) + bfin_ref[...]


def _gcn_fused_kernel(x_ref, adj_ref, w1_ref, b1_ref, w2_ref, b2_ref,
                      w3_ref, b3_ref, wf_ref, bfin_ref, o_ref):
    """3 GCN layers + final linear, fused."""
    x = x_ref[0]          # (nc, 128) f32 (feature dim zero-padded to 128)
    adj = adj_ref[0]      # (nc, nc) f32
    for w_r, b_r in ((w1_ref, b1_ref), (w2_ref, b2_ref), (w3_ref, b3_ref)):
        h = jnp.dot(x.astype(jnp.bfloat16), w_r[...],
                    preferred_element_type=jnp.float32) + b_r[...]
        h = jnp.dot(adj, h, preferred_element_type=jnp.float32)
        x = jnp.maximum(h, 0.0)
    o_ref[0] = jnp.dot(x.astype(jnp.bfloat16), wf_ref[...],
                       preferred_element_type=jnp.float32) + bfin_ref[...]


def _cross_interaction_kernel(xs_ref, xg_ref, w00_ref, b00_ref, w01_ref, b01_ref,
                              w10_ref, b10_ref, w11_ref, b11_ref,
                              wla_ref, wlb_ref, bl_ref, o_ref):
    xs = xs_ref[0]     # (n, d)  sequence embedding, f32
    xg = xg_ref[0]     # (n, d)  graph embedding, f32
    xsb = xs.astype(jnp.bfloat16)
    xgb = xg.astype(jnp.bfloat16)

    h0 = jnp.maximum(jnp.dot(xgb, w00_ref[...],
                             preferred_element_type=jnp.float32) + b00_ref[...], 0.0)
    h0 = jnp.dot(h0.astype(jnp.bfloat16), w01_ref[...],
                 preferred_element_type=jnp.float32) + b01_ref[...]
    ci0 = jnp.tanh(jnp.sum(h0 * xs, axis=-1, keepdims=True)) + 1.0    # (n, 1)

    h1 = jnp.maximum(jnp.dot(xsb, w10_ref[...],
                             preferred_element_type=jnp.float32) + b10_ref[...], 0.0)
    h1 = jnp.dot(h1.astype(jnp.bfloat16), w11_ref[...],
                 preferred_element_type=jnp.float32) + b11_ref[...]
    ci1 = jnp.tanh(jnp.sum(h1 * xg, axis=-1, keepdims=True)) + 1.0    # (n, 1)

    xs2 = xs * ci0
    xg2 = xg * ci1
    # linear over cat([xs2, xg2], -1): split the (2d, d) weight into two halves
    o_ref[0] = (jnp.dot(xs2.astype(jnp.bfloat16), wla_ref[...],
                        preferred_element_type=jnp.float32)
                + jnp.dot(xg2.astype(jnp.bfloat16), wlb_ref[...],
                          preferred_element_type=jnp.float32)
                + bl_ref[...])


def _head_kernel(p_ref, c_ref, wp_ref, bp_ref, wc_ref, bc_ref,
                 cw_ref, cb_ref, selc_ref, selp_ref, inter_ref, pool_ref):
    """joint attention + cp embedding + Conv1d/LeakyReLU/MaxPool, fused per sample."""
    p = p_ref[0]                       # (n, d)  f32
    c = c_ref[0]                       # (nc, d) f32
    nc = c.shape[0]

    # joint attention (global softmax over the (n, nc) matrix, max-stabilized)
    pa = jnp.dot(jnp.maximum(p, 0.0).astype(jnp.bfloat16), wp_ref[...],
                 preferred_element_type=jnp.float32) + bp_ref[...]
    ca = jnp.dot(jnp.maximum(c, 0.0).astype(jnp.bfloat16), wc_ref[...],
                 preferred_element_type=jnp.float32) + bc_ref[...]
    logits = lax.dot_general(pa.astype(jnp.bfloat16), ca.astype(jnp.bfloat16),
                             (((1,), (1,)), ((), ())),
                             preferred_element_type=jnp.float32)      # (n, nc)
    m = jnp.max(logits, keepdims=True)                                # (1, 1)
    e = jnp.exp(logits - m)
    s = jnp.sum(e, keepdims=True)                                     # (1, 1)
    inter = e * pl.reciprocal(s, approx=True)
    inter_ref[0] = inter

    # cp embedding: loop over compound vertices, no (n, nc, d) intermediate
    acc = jnp.zeros(p.shape, jnp.float32)
    for k in range(nc):
        acc = acc + jnp.tanh(p * c[k:k + 1, :]) * inter[:, k:k + 1]
    cp = jnp.sum(acc, axis=0, keepdims=True)                          # (1, d)

    # Conv1d(1->64, k=4, s=2, p=1) + LeakyReLU(0.1) via precomputed tap selections
    cw = cw_ref[...]                                                  # (64, 4)
    h = jnp.zeros((64, 128), jnp.float32) + cb_ref[...]               # bias
    for k in range(4):
        tap = jnp.dot(cp, selc_ref[k], preferred_element_type=jnp.float32)  # (1,128)
        h = h + cw[:, k:k + 1] * tap
    h = jnp.where(h > 0, h, 0.1 * h)

    # MaxPool1d(k=4, s=4) via precomputed column selections
    pooled = jnp.dot(h, selp_ref[0], preferred_element_type=jnp.float32)
    for k in range(1, 4):
        pooled = jnp.maximum(
            pooled, jnp.dot(h, selp_ref[k], preferred_element_type=jnp.float32))
    pool_ref[0] = pooled                                              # (64, 32)


def _mlp_kernel(x_ref, w1_ref, b1_ref, w2_ref, b2_ref, w3_ref, b3_ref, o_ref):
    x = x_ref[...]                     # (B, 2048) f32 -- whole batch in one call
    h = jnp.dot(x.astype(jnp.bfloat16), w1_ref[...],
                preferred_element_type=jnp.float32) + b1_ref[...]
    h = jnp.where(h > 0, h, 0.1 * h)
    # TODO(synk): Dropout(0.5) treated as identity (inference semantics).
    h = jnp.dot(h.astype(jnp.bfloat16), w2_ref[...],
                preferred_element_type=jnp.float32) + b2_ref[...]
    h = jnp.where(h > 0, h, 0.1 * h)
    o_ref[...] = jnp.dot(h, w3_ref[...],
                         preferred_element_type=jnp.float32) + b3_ref[...]


# ---------------------------------------------------------------------------
# Wrappers (pallas_call glue)
# ---------------------------------------------------------------------------
def gat_forward(x, adj, gat_params):
    B, n, d = x.shape
    layers = gat_params["layers"]
    L = len(layers)
    wa = jnp.stack([l[0] for l in layers]).astype(jnp.bfloat16)   # (L, d, d)
    ba = jnp.stack([l[1] for l in layers])                        # (L, 1, d) f32
    w0 = jnp.stack([l[2] for l in layers]).astype(jnp.bfloat16)
    b0 = jnp.stack([l[3] for l in layers])
    w1 = jnp.stack([l[4] for l in layers]).astype(jnp.bfloat16)
    b1 = jnp.stack([l[5] for l in layers])
    wf, bfin = gat_params["final"]
    wf = wf.astype(jnp.bfloat16)

    return pl.pallas_call(
        functools.partial(_gat_fused_kernel, num_layers=L),
        out_shape=jax.ShapeDtypeStruct((B, n, d), jnp.float32),
        grid=(B,),
        in_specs=[_bspec((n, d)), _bspec((n, n)),
                  _wspec((L, d, d)), _wspec((L, 1, d)),
                  _wspec((L, d, d)), _wspec((L, 1, d)),
                  _wspec((L, d, d)), _wspec((L, 1, d)),
                  _wspec((d, d)), _wspec((1, d))],
        out_specs=_bspec((n, d)),
        compiler_params=pltpu.CompilerParams(
            dimension_semantics=("parallel",),
            vmem_limit_bytes=32 * 1024 * 1024),
    )(x, adj, wa, ba, w0, b0, w1, b1, wf, bfin)


def gcn_comp_forward(x, adj, gcn_params):
    B, nc, fin = x.shape
    fpad = ((fin + 127) // 128) * 128          # lane-dense first layer (43 -> 128)
    x = jnp.pad(x, ((0, 0), (0, 0), (0, fpad - fin)))
    (w1, b1), (w2, b2), (w3, b3) = gcn_params["layers"]
    w1 = jnp.pad(w1, ((0, fpad - fin), (0, 0))).astype(jnp.bfloat16)
    w2 = w2.astype(jnp.bfloat16)
    w3 = w3.astype(jnp.bfloat16)
    wf, bfin = gcn_params["final"]
    wf = wf.astype(jnp.bfloat16)
    d = wf.shape[1]

    return pl.pallas_call(
        _gcn_fused_kernel,
        out_shape=jax.ShapeDtypeStruct((B, nc, d), jnp.float32),
        grid=(B,),
        in_specs=[_bspec((nc, fpad)), _bspec((nc, nc)),
                  _wspec((fpad, d)), _wspec((1, d)),
                  _wspec((d, d)), _wspec((1, d)),
                  _wspec((d, d)), _wspec((1, d)),
                  _wspec((d, d)), _wspec((1, d))],
        out_specs=_bspec((nc, d)),
        compiler_params=_CP,
    )(x, adj, w1, b1, w2, b2, w3, b3, wf, bfin)


def cross_interaction_forward(x_seq, x_graph, ci_params):
    B, n, d = x_seq.shape
    (w00, b00), (w01, b01) = ci_params["ci0"]
    (w10, b10), (w11, b11) = ci_params["ci1"]
    wl, bl = ci_params["lin"]
    wla = wl[:d].astype(jnp.bfloat16)
    wlb = wl[d:].astype(jnp.bfloat16)
    w00, w01 = w00.astype(jnp.bfloat16), w01.astype(jnp.bfloat16)
    w10, w11 = w10.astype(jnp.bfloat16), w11.astype(jnp.bfloat16)
    return pl.pallas_call(
        _cross_interaction_kernel,
        out_shape=jax.ShapeDtypeStruct((B, n, d), jnp.float32),
        grid=(B,),
        in_specs=[_bspec((n, d)), _bspec((n, d)),
                  _wspec((d, d)), _wspec((1, d)),
                  _wspec((d, d)), _wspec((1, d)),
                  _wspec((d, d)), _wspec((1, d)),
                  _wspec((d, d)), _wspec((1, d)),
                  _wspec((d, d)), _wspec((d, d)), _wspec((1, d))],
        out_specs=_bspec((n, d)),
        compiler_params=_CP,
    )(x_seq, x_graph, w00, b00, w01, b01, w10, b10, w11, b11, wla, wlb, bl)


def head_forward(prot_emb, comp_emb, params):
    """joint attention + cp embedding + conv/pool in one call per sample."""
    B, n, d = prot_emb.shape
    nc = comp_emb.shape[1]
    wp, bp = params["jap"]
    wc, bc = params["jac"]
    wp = wp.astype(jnp.bfloat16)
    wc = wc.astype(jnp.bfloat16)
    selc, selp = params["selc"], params["selp"]

    inter, pooled = pl.pallas_call(
        _head_kernel,
        out_shape=(jax.ShapeDtypeStruct((B, n, nc), jnp.float32),
                   jax.ShapeDtypeStruct((B, 64, 32), jnp.float32)),
        grid=(B,),
        in_specs=[_bspec((n, d)), _bspec((nc, d)),
                  _wspec((d, d)), _wspec((1, d)),
                  _wspec((d, d)), _wspec((1, d)),
                  _wspec((64, 4)), _wspec((64, 1)),
                  _wspec((4, 256, 128)), _wspec((4, 128, 32))],
        out_specs=(_bspec((n, nc)), _bspec((64, 32))),
        compiler_params=_CP,
    )(prot_emb, comp_emb, wp, bp, wc, bc,
      params["conv_w"], params["conv_b"], selc, selp)
    return inter, pooled


def regressor_mlp_forward(x, reg1):
    B, D = x.shape
    (w1, b1), (w2, b2), (w3, b3) = reg1
    d1, d2 = w1.shape[1], w2.shape[1]
    return pl.pallas_call(
        _mlp_kernel,
        out_shape=jax.ShapeDtypeStruct((B, 1), jnp.float32),
        grid=(1,),
        in_specs=[pl.BlockSpec((B, D), lambda g: (0, 0)),
                  _wspec((D, d1)), _wspec((1, d1)),
                  _wspec((d1, d2)), _wspec((1, d2)),
                  _wspec((d2, 1)), _wspec((1, 1))],
        out_specs=pl.BlockSpec((B, 1), lambda g: (0, 0)),
        compiler_params=pltpu.CompilerParams(dimension_semantics=("arbitrary",)),
    )(x, w1.astype(jnp.bfloat16), b1, w2.astype(jnp.bfloat16), b2, w3, b3)


# ---------------------------------------------------------------------------
# Full forward
# ---------------------------------------------------------------------------
def net_cross_interaction_forward(params, prot_data, drug_data_ver,
                                  drug_data_adj, prot_contacts):
    # embedding lookup (gather) -- plain JAX glue
    emb = params["embedding"][prot_data]          # (b, i, j, 256)
    b, i, j, d = emb.shape
    n = i * j
    # GRU outputs are discarded in the reference forward -> omitted.
    prot_seq = emb.reshape(b, n, d)
    prot_graph = emb.reshape(b, n, d)
    # reference: adj[:, range(N), range(N)] = 1
    idx = jnp.arange(n)
    adj = prot_contacts.at[:, idx, idx].set(1.0)

    prot_graph = gat_forward(prot_graph, adj, params["gat"])
    prot_emb = cross_interaction_forward(prot_seq, prot_graph, params["ci"])
    comp_emb = gcn_comp_forward(drug_data_ver, drug_data_adj, params["gcn"])

    inter, pooled = head_forward(prot_emb, comp_emb, params)      # (b,n,nc), (b,64,32)
    flat = pooled.reshape(b, 64 * 32)          # glue reshape (== torch .view)
    affn = regressor_mlp_forward(flat, params["reg1"])            # (b, 1)
    return inter, affn


# ---------------------------------------------------------------------------
# Deterministic parameter init (weights stored as (in, out), bias as (1, out))
# ---------------------------------------------------------------------------
def _make_selections():
    """0/1 selection matrices for Conv1d(k=4,s=2,p=1) taps and MaxPool1d(4,4)."""
    s = jnp.arange(256)[:, None]
    t = jnp.arange(128)[None, :]
    selc = jnp.stack([(s == 2 * t + (k - 1)).astype(jnp.float32)
                      for k in range(4)])                   # (4, 256, 128)
    t2 = jnp.arange(128)[:, None]
    u = jnp.arange(32)[None, :]
    selp = jnp.stack([(t2 == 4 * u + k).astype(jnp.float32)
                      for k in range(4)])                   # (4, 128, 32)
    return selc, selp


def init_params(key):
    keys = list(jax.random.split(key, 64))
    it = iter(keys)

    def lin(din, dout, scale=0.05):
        kw, kb = jax.random.split(next(it))
        return (scale * jax.random.normal(kw, (din, dout), jnp.float32),
                scale * jax.random.normal(kb, (1, dout), jnp.float32))

    params = {}
    params["embedding"] = 0.05 * jax.random.normal(next(it), (24, 256), jnp.float32)

    gat_layers = []
    for _ in range(7):
        wa, ba = lin(256, 256)
        w0, b0 = lin(256, 256)
        w1, b1 = lin(256, 256)
        gat_layers.append((wa, ba, w0, b0, w1, b1))
    params["gat"] = {"layers": gat_layers, "final": lin(256, 256)}

    params["ci"] = {"ci0": (lin(256, 256), lin(256, 256)),
                    "ci1": (lin(256, 256), lin(256, 256)),
                    "lin": lin(512, 256)}

    params["gcn"] = {"layers": [lin(43, 256), lin(256, 256), lin(256, 256)],
                     "final": lin(256, 256)}

    params["jap"] = lin(256, 256)
    params["jac"] = lin(256, 256)

    kw, kb = jax.random.split(next(it))
    params["conv_w"] = 0.05 * jax.random.normal(kw, (64, 4), jnp.float32)   # Conv1d(1,64,4)
    params["conv_b"] = 0.05 * jax.random.normal(kb, (64, 1), jnp.float32)

    params["reg1"] = [lin(64 * 32, 600), lin(600, 300), lin(300, 1)]

    params["selc"], params["selp"] = _make_selections()
    return params


# ---------------------------------------------------------------------------
if __name__ == "__main__":
    key = jax.random.PRNGKey(0)
    kp, k1, k2, k3, k4 = jax.random.split(key, 5)
    params = init_params(kp)

    b, i, j = 2, 4, 8          # protein: b batches, i*j = 32 residues
    n_comp = 8                 # compound vertices
    prot_data = jax.random.randint(k1, (b, i, j), 0, 24, dtype=jnp.int32)
    drug_data_ver = jax.random.normal(k2, (b, n_comp, 43), jnp.float32)
    drug_data_adj = (jax.random.uniform(k3, (b, n_comp, n_comp)) > 0.5).astype(jnp.float32)
    prot_contacts = (jax.random.uniform(k4, (b, i * j, i * j)) > 0.5).astype(jnp.float32)

    inter, affn = net_cross_interaction_forward(
        params, prot_data, drug_data_ver, drug_data_adj, prot_contacts)
    jax.block_until_ready((inter, affn))
    assert inter.shape == (b, i * j, n_comp) and affn.shape == (b, 1)
    print("KERNEL_OK")
</pallas_src>

<mosaic_0001>
module attributes {stable_mosaic.version = 11 : i64} {
  func.func @_gat_fused_kernel(%arg0: i32, %arg1: memref<1x32x256xf32, #tpu.memory_space<vmem>>, %arg2: memref<1x32x32xf32, #tpu.memory_space<vmem>>, %arg3: memref<7x256x256xbf16, #tpu.memory_space<vmem>>, %arg4: memref<7x1x256xf32, #tpu.memory_space<vmem>>, %arg5: memref<7x256x256xbf16, #tpu.memory_space<vmem>>, %arg6: memref<7x1x256xf32, #tpu.memory_space<vmem>>, %arg7: memref<7x256x256xbf16, #tpu.memory_space<vmem>>, %arg8: memref<7x1x256xf32, #tpu.memory_space<vmem>>, %arg9: memref<256x256xbf16, #tpu.memory_space<vmem>>, %arg10: memref<1x256xf32, #tpu.memory_space<vmem>>, %arg11: memref<1x32x256xf32, #tpu.memory_space<vmem>>) attributes {dimension_semantics = [#tpu.dimension_semantics<parallel>], iteration_bounds = array<i64: 2>, scalar_prefetch = 0 : i64, scratch_operands = 0 : i64, tpu.core_type = #tpu.core_type<tc>, window_params = [{transform_indices = @transform_0, window_bounds = array<i64: 1, 32, 256>}, {transform_indices = @transform_1, window_bounds = array<i64: 1, 32, 32>}, {pipeline_mode = #tpu.pipeline_mode<synchronous>, transform_indices = @transform_2, window_bounds = array<i64: 7, 256, 256>}, {pipeline_mode = #tpu.pipeline_mode<synchronous>, transform_indices = @transform_3, window_bounds = array<i64: 7, 1, 256>}, {pipeline_mode = #tpu.pipeline_mode<synchronous>, transform_indices = @transform_4, window_bounds = array<i64: 7, 256, 256>}, {pipeline_mode = #tpu.pipeline_mode<synchronous>, transform_indices = @transform_5, window_bounds = array<i64: 7, 1, 256>}, {pipeline_mode = #tpu.pipeline_mode<synchronous>, transform_indices = @transform_6, window_bounds = array<i64: 7, 256, 256>}, {pipeline_mode = #tpu.pipeline_mode<synchronous>, transform_indices = @transform_7, window_bounds = array<i64: 7, 1, 256>}, {pipeline_mode = #tpu.pipeline_mode<synchronous>, transform_indices = @transform_8, window_bounds = array<i64: 256, 256>}, {pipeline_mode = #tpu.pipeline_mode<synchronous>, transform_indices = @transform_9, window_bounds = array<i64: 1, 256>}, {transform_indices = @transform_10, window_bounds = array<i64: 1, 32, 256>}]} {
    %c0 = arith.constant 0 : index
    %c0_0 = arith.constant 0 : index
    %c0_1 = arith.constant 0 : index
    %0 = vector.load %arg1[%c0, %c0_0, %c0_1] : memref<1x32x256xf32, #tpu.memory_space<vmem>>, vector<1x32x256xf32>
    %1 = vector.shape_cast %0 : vector<1x32x256xf32> to vector<32x256xf32>
    %c0_2 = arith.constant 0 : index
    %c0_3 = arith.constant 0 : index
    %c0_4 = arith.constant 0 : index
    %2 = vector.load %arg2[%c0_2, %c0_3, %c0_4] : memref<1x32x32xf32, #tpu.memory_space<vmem>>, vector<1x32x32xf32>
    %3 = vector.shape_cast %2 : vector<1x32x32xf32> to vector<32x32xf32>
    %4 = tpu.iota {dimensions = array<i32: 0>} : vector<32x32xi32>
    %5 = tpu.iota {dimensions = array<i32: 1>} : vector<32x32xi32>
    %6 = arith.cmpi eq, %4, %5 : vector<32x32xi32>
    %7 = arith.extui %6 : vector<32x32xi1> to vector<32x32xi32>
    %8 = arith.sitofp %7 : vector<32x32xi32> to vector<32x32xf32>
    %9 = arith.truncf %1 : vector<32x256xf32> to vector<32x256xbf16>
    %c0_5 = arith.constant 0 : index
    %c0_6 = arith.constant 0 : index
    %c0_7 = arith.constant 0 : index
    %10 = vector.load %arg3[%c0_5, %c0_6, %c0_7] : memref<7x256x256xbf16, #tpu.memory_space<vmem>>, vector<1x256x256xbf16>
    %11 = vector.shape_cast %10 : vector<1x256x256xbf16> to vector<256x256xbf16>
    %cst = arith.constant dense<0.000000e+00> : vector<32x256xf32>
    %12 = tpu.matmul %9, %11, %cst {dimension_numbers = #tpu.dot_dimension_numbers<[1], [0], [0], [1], [0, 0, 1, 1], [], []>} : vector<32x256xbf16>, vector<256x256xbf16>, vector<32x256xf32> -> vector<32x256xf32>
    %c0_8 = arith.constant 0 : index
    %c0_9 = arith.constant 0 : index
    %c0_10 = arith.constant 0 : index
    %13 = vector.load %arg4[%c0_8, %c0_9, %c0_10] : memref<7x1x256xf32, #tpu.memory_space<vmem>>, vector<1x1x256xf32>
    %14 = vector.shape_cast %13 : vector<1x1x256xf32> to vector<1x256xf32>
    %15 = vector.broadcast %14 : vector<1x256xf32> to vector<32x256xf32>
    %16 = arith.addf %12, %15 : vector<32x256xf32>
    %17 = arith.truncf %16 : vector<32x256xf32> to vector<32x256xbf16>
    %cst_11 = arith.constant dense<0.000000e+00> : vector<32x32xf32>
    %18 = tpu.matmul %17, %9, %cst_11 {dimension_numbers = #tpu.dot_dimension_numbers<[1], [1], [0], [0], [0, 0, 1, 0], [], []>} : vector<32x256xbf16>, vector<32x256xbf16>, vector<32x32xf32> -> vector<32x32xf32>
    %cst_12 = arith.constant dense<0xFF800000> : vector<32xf32>
    %19 = vector.multi_reduction <maximumf>, %18, %cst_12 [1] : vector<32x32xf32> to vector<32xf32>
    %20 = vector.shape_cast %19 : vector<32xf32> to vector<32x1xf32>
    %21 = vector.broadcast %20 : vector<32x1xf32> to vector<32x32xf32>
    %22 = arith.subf %18, %21 : vector<32x32xf32>
    %23 = math.exp %22 : vector<32x32xf32>
    %cst_13 = arith.constant 0.000000e+00 : f32
    %24 = vector.broadcast %cst_13 : f32 to vector<32x1xf32>
    %25 = arith.subf %24, %20 : vector<32x1xf32>
    %26 = math.exp %25 : vector<32x1xf32>
    %cst_14 = arith.constant 9.99999974E-6 : f32
    %27 = vector.broadcast %cst_14 : f32 to vector<32x1xf32>
    %28 = arith.mulf %27, %26 : vector<32x1xf32>
    %29 = vector.broadcast %28 : vector<32x1xf32> to vector<32x32xf32>
    %30 = arith.mulf %29, %8 : vector<32x32xf32>
    %31 = arith.addf %23, %30 : vector<32x32xf32>
    %32 = arith.mulf %31, %3 : vector<32x32xf32>
    %cst_15 = arith.constant dense<0.000000e+00> : vector<32xf32>
    %33 = vector.multi_reduction <add>, %32, %cst_15 [1] : vector<32x32xf32> to vector<32xf32>
    %34 = vector.shape_cast %33 : vector<32xf32> to vector<32x1xf32>
    %35 = tpu.reciprocal %34 {approx = true} : vector<32x1xf32> -> vector<32x1xf32>
    %36 = vector.broadcast %35 : vector<32x1xf32> to vector<32x32xf32>
    %37 = arith.mulf %32, %36 : vector<32x32xf32>
    %38 = arith.truncf %37 : vector<32x32xf32> to vector<32x32xbf16>
    %cst_16 = arith.constant dense<0.000000e+00> : vector<32x256xf32>
    %39 = tpu.matmul %38, %9, %cst_16 {dimension_numbers = #tpu.dot_dimension_numbers<[1], [0], [0], [1], [0, 0, 1, 1], [], []>} : vector<32x32xbf16>, vector<32x256xbf16>, vector<32x256xf32> -> vector<32x256xf32>
    %40 = arith.truncf %39 : vector<32x256xf32> to vector<32x256xbf16>
    %c0_17 = arith.constant 0 : index
    %c0_18 = arith.constant 0 : index
    %c0_19 = arith.constant 0 : index
    %41 = vector.load %arg5[%c0_17, %c0_18, %c0_19] : memref<7x256x256xbf16, #tpu.memory_space<vmem>>, vector<1x256x256xbf16>
    %42 = vector.shape_cast %41 : vector<1x256x256xbf16> to vector<256x256xbf16>
    %cst_20 = arith.constant dense<0.000000e+00> : vector<32x256xf32>
    %43 = tpu.matmul %40, %42, %cst_20 {dimension_numbers = #tpu.dot_dimension_numbers<[1], [0], [0], [1], [0, 0, 1, 1], [], []>} : vector<32x256xbf16>, vector<256x256xbf16>, vector<32x256xf32> -> vector<32x256xf32>
    %c0_21 = arith.constant 0 : index
    %c0_22 = arith.constant 0 : index
    %c0_23 = arith.constant 0 : index
    %44 = vector.load %arg6[%c0_21, %c0_22, %c0_23] : memref<7x1x256xf32, #tpu.memory_space<vmem>>, vector<1x1x256xf32>
    %45 = vector.shape_cast %44 : vector<1x1x256xf32> to vector<1x256xf32>
    %46 = vector.broadcast %45 : vector<1x256xf32> to vector<32x256xf32>
    %47 = arith.addf %43, %46 : vector<32x256xf32>
    %cst_24 = arith.constant 0.000000e+00 : f32
    %48 = vector.broadcast %cst_24 : f32 to vector<32x256xf32>
    %49 = arith.maximumf %47, %48 : vector<32x256xf32>
    %50 = arith.truncf %49 : vector<32x256xf32> to vector<32x256xbf16>
    %c0_25 = arith.constant 0 : index
    %c0_26 = arith.constant 0 : index
    %c0_27 = arith.constant 0 : index
    %51 = vector.load %arg7[%c0_25, %c0_26, %c0_27] : memref<7x256x256xbf16, #tpu.memory_space<vmem>>, vector<1x256x256xbf16>
    %52 = vector.shape_cast %51 : vector<1x256x256xbf16> to vector<256x256xbf16>
    %cst_28 = arith.constant dense<0.000000e+00> : vector<32x256xf32>
    %53 = tpu.matmul %50, %52, %cst_28 {dimension_numbers = #tpu.dot_dimension_numbers<[1], [0], [0], [1], [0, 0, 1, 1], [], []>} : vector<32x256xbf16>, vector<256x256xbf16>, vector<32x256xf32> -> vector<32x256xf32>
    %c0_29 = arith.constant 0 : index
    %c0_30 = arith.constant 0 : index
    %c0_31 = arith.constant 0 : index
    %54 = vector.load %arg8[%c0_29, %c0_30, %c0_31] : memref<7x1x256xf32, #tpu.memory_space<vmem>>, vector<1x1x256xf32>
    %55 = vector.shape_cast %54 : vector<1x1x256xf32> to vector<1x256xf32>
    %56 = vector.broadcast %55 : vector<1x256xf32> to vector<32x256xf32>
    %57 = arith.addf %53, %56 : vector<32x256xf32>
    %cst_32 = arith.constant 0.000000e+00 : f32
    %58 = vector.broadcast %cst_32 : f32 to vector<32x256xf32>
    %59 = arith.maximumf %57, %58 : vector<32x256xf32>
    %60 = arith.addf %59, %1 : vector<32x256xf32>
    %61 = arith.truncf %60 : vector<32x256xf32> to vector<32x256xbf16>
    %c1 = arith.constant 1 : index
    %c0_33 = arith.constant 0 : index
    %c0_34 = arith.constant 0 : index
    %62 = vector.load %arg3[%c1, %c0_33, %c0_34] : memref<7x256x256xbf16, #tpu.memory_space<vmem>>, vector<1x256x256xbf16>
    %63 = vector.shape_cast %62 : vector<1x256x256xbf16> to vector<256x256xbf16>
    %cst_35 = arith.constant dense<0.000000e+00> : vector<32x256xf32>
    %64 = tpu.matmul %61, %63, %cst_35 {dimension_numbers = #tpu.dot_dimension_numbers<[1], [0], [0], [1], [0, 0, 1, 1], [], []>} : vector<32x256xbf16>, vector<256x256xbf16>, vector<32x256xf32> -> vector<32x256xf32>
    %c1_36 = arith.constant 1 : index
    %c0_37 = arith.constant 0 : index
    %c0_38 = arith.constant 0 : index
    %65 = vector.load %arg4[%c1_36, %c0_37, %c0_38] : memref<7x1x256xf32, #tpu.memory_space<vmem>>, vector<1x1x256xf32>
    %66 = vector.shape_cast %65 : vector<1x1x256xf32> to vector<1x256xf32>
    %67 = vector.broadcast %66 : vector<1x256xf32> to vector<32x256xf32>
    %68 = arith.addf %64, %67 : vector<32x256xf32>
    %69 = arith.truncf %68 : vector<32x256xf32> to vector<32x256xbf16>
    %cst_39 = arith.constant dense<0.000000e+00> : vector<32x32xf32>
    %70 = tpu.matmul %69, %61, %cst_39 {dimension_numbers = #tpu.dot_dimension_numbers<[1], [1], [0], [0], [0, 0, 1, 0], [], []>} : vector<32x256xbf16>, vector<32x256xbf16>, vector<32x32xf32> -> vector<32x32xf32>
    %cst_40 = arith.constant dense<0xFF800000> : vector<32xf32>
    %71 = vector.multi_reduction <maximumf>, %70, %cst_40 [1] : vector<32x32xf32> to vector<32xf32>
    %72 = vector.shape_cast %71 : vector<32xf32> to vector<32x1xf32>
    %73 = vector.broadcast %72 : vector<32x1xf32> to vector<32x32xf32>
    %74 = arith.subf %70, %73 : vector<32x32xf32>
    %75 = math.exp %74 : vector<32x32xf32>
    %cst_41 = arith.constant 0.000000e+00 : f32
    %76 = vector.broadcast %cst_41 : f32 to vector<32x1xf32>
    %77 = arith.subf %76, %72 : vector<32x1xf32>
    %78 = math.exp %77 : vector<32x1xf32>
    %cst_42 = arith.constant 9.99999974E-6 : f32
    %79 = vector.broadcast %cst_42 : f32 to vector<32x1xf32>
    %80 = arith.mulf %79, %78 : vector<32x1xf32>
    %81 = vector.broadcast %80 : vector<32x1xf32> to vector<32x32xf32>
    %82 = arith.mulf %81, %8 : vector<32x32xf32>
    %83 = arith.addf %75, %82 : vector<32x32xf32>
    %84 = arith.mulf %83, %3 : vector<32x32xf32>
    %cst_43 = arith.constant dense<0.000000e+00> : vector<32xf32>
    %85 = vector.multi_reduction <add>, %84, %cst_43 [1] : vector<32x32xf32> to vector<32xf32>
    %86 = vector.shape_cast %85 : vector<32xf32> to vector<32x1xf32>
    %87 = tpu.reciprocal %86 {approx = true} : vector<32x1xf32> -> vector<32x1xf32>
    %88 = vector.broadcast %87 : vector<32x1xf32> to vector<32x32xf32>
    %89 = arith.mulf %84, %88 : vector<32x32xf32>
    %90 = arith.truncf %89 : vector<32x32xf32> to vector<32x32xbf16>
    %cst_44 = arith.constant dense<0.000000e+00> : vector<32x256xf32>
    %91 = tpu.matmul %90, %61, %cst_44 {dimension_numbers = #tpu.dot_dimension_numbers<[1], [0], [0], [1], [0, 0, 1, 1], [], []>} : vector<32x32xbf16>, vector<32x256xbf16>, vector<32x256xf32> -> vector<32x256xf32>
    %92 = arith.truncf %91 : vector<32x256xf32> to vector<32x256xbf16>
    %c1_45 = arith.constant 1 : index
    %c0_46 = arith.constant 0 : index
    %c0_47 = arith.constant 0 : index
    %93 = vector.load %arg5[%c1_45, %c0_46, %c0_47] : memref<7x256x256xbf16, #tpu.memory_space<vmem>>, vector<1x256x256xbf16>
    %94 = vector.shape_cast %93 : vector<1x256x256xbf16> to vector<256x256xbf16>
    %cst_48 = arith.constant dense<0.000000e+00> : vector<32x256xf32>
    %95 = tpu.matmul %92, %94, %cst_48 {dimension_numbers = #tpu.dot_dimension_numbers<[1], [0], [0], [1], [0, 0, 1, 1], [], []>} : vector<32x256xbf16>, vector<256x256xbf16>, vector<32x256xf32> -> vector<32x256xf32>
    %c1_49 = arith.constant 1 : index
    %c0_50 = arith.constant 0 : index
    %c0_51 = arith.constant 0 : index
    %96 = vector.load %arg6[%c1_49, %c0_50, %c0_51] : memref<7x1x256xf32, #tpu.memory_space<vmem>>, vector<1x1x256xf32>
    %97 = vector.shape_cast %96 : vector<1x1x256xf32> to vector<1x256xf32>
    %98 = vector.broadcast %97 : vector<1x256xf32> to vector<32x256xf32>
    %99 = arith.addf %95, %98 : vector<32x256xf32>
    %cst_52 = arith.constant 0.000000e+00 : f32
    %100 = vector.broadcast %cst_52 : f32 to vector<32x256xf32>
    %101 = arith.maximumf %99, %100 : vector<32x256xf32>
    %102 = arith.truncf %101 : vector<32x256xf32> to vector<32x256xbf16>
    %c1_53 = arith.constant 1 : index
    %c0_54 = arith.constant 0 : index
    %c0_55 = arith.constant 0 : index
    %103 = vector.load %arg7[%c1_53, %c0_54, %c0_55] : memref<7x256x256xbf16, #tpu.memory_space<vmem>>, vector<1x256x256xbf16>
    %104 = vector.shape_cast %103 : vector<1x256x256xbf16> to vector<256x256xbf16>
    %cst_56 = arith.constant dense<0.000000e+00> : vector<32x256xf32>
    %105 = tpu.matmul %102, %104, %cst_56 {dimension_numbers = #tpu.dot_dimension_numbers<[1], [0], [0], [1], [0, 0, 1, 1], [], []>} : vector<32x256xbf16>, vector<256x256xbf16>, vector<32x256xf32> -> vector<32x256xf32>
    %c1_57 = arith.constant 1 : index
    %c0_58 = arith.constant 0 : index
    %c0_59 = arith.constant 0 : index
    %106 = vector.load %arg8[%c1_57, %c0_58, %c0_59] : memref<7x1x256xf32, #tpu.memory_space<vmem>>, vector<1x1x256xf32>
    %107 = vector.shape_cast %106 : vector<1x1x256xf32> to vector<1x256xf32>
    %108 = vector.broadcast %107 : vector<1x256xf32> to vector<32x256xf32>
    %109 = arith.addf %105, %108 : vector<32x256xf32>
    %cst_60 = arith.constant 0.000000e+00 : f32
    %110 = vector.broadcast %cst_60 : f32 to vector<32x256xf32>
    %111 = arith.maximumf %109, %110 : vector<32x256xf32>
    %112 = arith.addf %111, %60 : vector<32x256xf32>
    %113 = arith.truncf %112 : vector<32x256xf32> to vector<32x256xbf16>
    %c2 = arith.constant 2 : index
    %c0_61 = arith.constant 0 : index
    %c0_62 = arith.constant 0 : index
    %114 = vector.load %arg3[%c2, %c0_61, %c0_62] : memref<7x256x256xbf16, #tpu.memory_space<vmem>>, vector<1x256x256xbf16>
    %115 = vector.shape_cast %114 : vector<1x256x256xbf16> to vector<256x256xbf16>
    %cst_63 = arith.constant dense<0.000000e+00> : vector<32x256xf32>
    %116 = tpu.matmul %113, %115, %cst_63 {dimension_numbers = #tpu.dot_dimension_numbers<[1], [0], [0], [1], [0, 0, 1, 1], [], []>} : vector<32x256xbf16>, vector<256x256xbf16>, vector<32x256xf32> -> vector<32x256xf32>
    %c2_64 = arith.constant 2 : index
    %c0_65 = arith.constant 0 : index
    %c0_66 = arith.constant 0 : index
    %117 = vector.load %arg4[%c2_64, %c0_65, %c0_66] : memref<7x1x256xf32, #tpu.memory_space<vmem>>, vector<1x1x256xf32>
    %118 = vector.shape_cast %117 : vector<1x1x256xf32> to vector<1x256xf32>
    %119 = vector.broadcast %118 : vector<1x256xf32> to vector<32x256xf32>
    %120 = arith.addf %116, %119 : vector<32x256xf32>
    %121 = arith.truncf %120 : vector<32x256xf32> to vector<32x256xbf16>
    %cst_67 = arith.constant dense<0.000000e+00> : vector<32x32xf32>
    %122 = tpu.matmul %121, %113, %cst_67 {dimension_numbers = #tpu.dot_dimension_numbers<[1], [1], [0], [0], [0, 0, 1, 0], [], []>} : vector<32x256xbf16>, vector<32x256xbf16>, vector<32x32xf32> -> vector<32x32xf32>
    %cst_68 = arith.constant dense<0xFF800000> : vector<32xf32>
    %123 = vector.multi_reduction <maximumf>, %122, %cst_68 [1] : vector<32x32xf32> to vector<32xf32>
    %124 = vector.shape_cast %123 : vector<32xf32> to vector<32x1xf32>
    %125 = vector.broadcast %124 : vector<32x1xf32> to vector<32x32xf32>
    %126 = arith.subf %122, %125 : vector<32x32xf32>
    %127 = math.exp %126 : vector<32x32xf32>
    %cst_69 = arith.constant 0.000000e+00 : f32
    %128 = vector.broadcast %cst_69 : f32 to vector<32x1xf32>
    %129 = arith.subf %128, %124 : vector<32x1xf32>
    %130 = math.exp %129 : vector<32x1xf32>
    %cst_70 = arith.constant 9.99999974E-6 : f32
    %131 = vector.broadcast %cst_70 : f32 to vector<32x1xf32>
    %132 = arith.mulf %131, %130 : vector<32x1xf32>
    %133 = vector.broadcast %132 : vector<32x1xf32> to vector<32x32xf32>
    %134 = arith.mulf %133, %8 : vector<32x32xf32>
    %135 = arith.addf %127, %134 : vector<32x32xf32>
    %136 = arith.mulf %135, %3 : vector<32x32xf32>
    %cst_71 = arith.constant dense<0.000000e+00> : vector<32xf32>
    %137 = vector.multi_reduction <add>, %136, %cst_71 [1] : vector<32x32xf32> to vector<32xf32>
    %138 = vector.shape_cast %137 : vector<32xf32> to vector<32x1xf32>
    %139 = tpu.reciprocal %138 {approx = true} : vector<32x1xf32> -> vector<32x1xf32>
    %140 = vector.broadcast %139 : vector<32x1xf32> to vector<32x32xf32>
    %141 = arith.mulf %136, %140 : vector<32x32xf32>
    %142 = arith.truncf %141 : vector<32x32xf32> to vector<32x32xbf16>
    %cst_72 = arith.constant dense<0.000000e+00> : vector<32x256xf32>
    %143 = tpu.matmul %142, %113, %cst_72 {dimension_numbers = #tpu.dot_dimension_numbers<[1], [0], [0], [1], [0, 0, 1, 1], [], []>} : vector<32x32xbf16>, vector<32x256xbf16>, vector<32x256xf32> -> vector<32x256xf32>
    %144 = arith.truncf %143 : vector<32x256xf32> to vector<32x256xbf16>
    %c2_73 = arith.constant 2 : index
    %c0_74 = arith.constant 0 : index
    %c0_75 = arith.constant 0 : index
    %145 = vector.load %arg5[%c2_73, %c0_74, %c0_75] : memref<7x256x256xbf16, #tpu.memory_space<vmem>>, vector<1x256x256xbf16>
    %146 = vector.shape_cast %145 : vector<1x256x256xbf16> to vector<256x256xbf16>
    %cst_76 = arith.constant dense<0.000000e+00> : vector<32x256xf32>
    %147 = tpu.matmul %144, %146, %cst_76 {dimension_numbers = #tpu.dot_dimension_numbers<[1], [0], [0], [1], [0, 0, 1, 1], [], []>} : vector<32x256xbf16>, vector<256x256xbf16>, vector<32x256xf32> -> vector<32x256xf32>
    %c2_77 = arith.constant 2 : index
    %c0_78 = arith.constant 0 : index
    %c0_79 = arith.constant 0 : index
    %148 = vector.load %arg6[%c2_77, %c0_78, %c0_79] : memref<7x1x256xf32, #tpu.memory_space<vmem>>, vector<1x1x256xf32>
    %149 = vector.shape_cast %148 : vector<1x1x256xf32> to vector<1x256xf32>
    %150 = vector.broadcast %149 : vector<1x256xf32> to vector<32x256xf32>
    %151 = arith.addf %147, %150 : vector<32x256xf32>
    %cst_80 = arith.constant 0.000000e+00 : f32
    %152 = vector.broadcast %cst_80 : f32 to vector<32x256xf32>
    %153 = arith.maximumf %151, %152 : vector<32x256xf32>
    %154 = arith.truncf %153 : vector<32x256xf32> to vector<32x256xbf16>
    %c2_81 = arith.constant 2 : index
    %c0_82 = arith.constant 0 : index
    %c0_83 = arith.constant 0 : index
    %155 = vector.load %arg7[%c2_81, %c0_82, %c0_83] : memref<7x256x256xbf16, #tpu.memory_space<vmem>>, vector<1x256x256xbf16>
    %156 = vector.shape_cast %155 : vector<1x256x256xbf16> to vector<256x256xbf16>
    %cst_84 = arith.constant dense<0.000000e+00> : vector<32x256xf32>
    %157 = tpu.matmul %154, %156, %cst_84 {dimension_numbers = #tpu.dot_dimension_numbers<[1], [0], [0], [1], [0, 0, 1, 1], [], []>} : vector<32x256xbf16>, vector<256x256xbf16>, vector<32x256xf32> -> vector<32x256xf32>
    %c2_85 = arith.constant 2 : index
    %c0_86 = arith.constant 0 : index
    %c0_87 = arith.constant 0 : index
    %158 = vector.load %arg8[%c2_85, %c0_86, %c0_87] : memref<7x1x256xf32, #tpu.memory_space<vmem>>, vector<1x1x256xf32>
    %159 = vector.shape_cast %158 : vector<1x1x256xf32> to vector<1x256xf32>
    %160 = vector.broadcast %159 : vector<1x256xf32> to vector<32x256xf32>
    %161 = arith.addf %157, %160 : vector<32x256xf32>
    %cst_88 = arith.constant 0.000000e+00 : f32
    %162 = vector.broadcast %cst_88 : f32 to vector<32x256xf32>
    %163 = arith.maximumf %161, %162 : vector<32x256xf32>
    %164 = arith.addf %163, %112 : vector<32x256xf32>
    %165 = arith.truncf %164 : vector<32x256xf32> to vector<32x256xbf16>
    %c3 = arith.constant 3 : index
    %c0_89 = arith.constant 0 : index
    %c0_90 = arith.constant 0 : index
    %166 = vector.load %arg3[%c3, %c0_89, %c0_90] : memref<7x256x256xbf16, #tpu.memory_space<vmem>>, vector<1x256x256xbf16>
    %167 = vector.shape_cast %166 : vector<1x256x256xbf16> to vector<256x256xbf16>
    %cst_91 = arith.constant dense<0.000000e+00> : vector<32x256xf32>
    %168 = tpu.matmul %165, %167, %cst_91 {dimension_numbers = #tpu.dot_dimension_numbers<[1], [0], [0], [1], [0, 0, 1, 1], [], []>} : vector<32x256xbf16>, vector<256x256xbf16>, vector<32x256xf32> -> vector<32x256xf32>
    %c3_92 = arith.constant 3 : index
    %c0_93 = arith.constant 0 : index
    %c0_94 = arith.constant 0 : index
    %169 = vector.load %arg4[%c3_92, %c0_93, %c0_94] : memref<7x1x256xf32, #tpu.memory_space<vmem>>, vector<1x1x256xf32>
    %170 = vector.shape_cast %169 : vector<1x1x256xf32> to vector<1x256xf32>
    %171 = vector.broadcast %170 : vector<1x256xf32> to vector<32x256xf32>
    %172 = arith.addf %168, %171 : vector<32x256xf32>
    %173 = arith.truncf %172 : vector<32x256xf32> to vector<32x256xbf16>
    %cst_95 = arith.constant dense<0.000000e+00> : vector<32x32xf32>
    %174 = tpu.matmul %173, %165, %cst_95 {dimension_numbers = #tpu.dot_dimension_numbers<[1], [1], [0], [0], [0, 0, 1, 0], [], []>} : vector<32x256xbf16>, vector<32x256xbf16>, vector<32x32xf32> -> vector<32x32xf32>
    %cst_96 = arith.constant dense<0xFF800000> : vector<32xf32>
    %175 = vector.multi_reduction <maximumf>, %174, %cst_96 [1] : vector<32x32xf32> to vector<32xf32>
    %176 = vector.shape_cast %175 : vector<32xf32> to vector<32x1xf32>
    %177 = vector.broadcast %176 : vector<32x1xf32> to vector<32x32xf32>
    %178 = arith.subf %174, %177 : vector<32x32xf32>
    %179 = math.exp %178 : vector<32x32xf32>
    %cst_97 = arith.constant 0.000000e+00 : f32
    %180 = vector.broadcast %cst_97 : f32 to vector<32x1xf32>
    %181 = arith.subf %180, %176 : vector<32x1xf32>
    %182 = math.exp %181 : vector<32x1xf32>
    %cst_98 = arith.constant 9.99999974E-6 : f32
    %183 = vector.broadcast %cst_98 : f32 to vector<32x1xf32>
    %184 = arith.mulf %183, %182 : vector<32x1xf32>
    %185 = vector.broadcast %184 : vector<32x1xf32> to vector<32x32xf32>
    %186 = arith.mulf %185, %8 : vector<32x32xf32>
    %187 = arith.addf %179, %186 : vector<32x32xf32>
    %188 = arith.mulf %187, %3 : vector<32x32xf32>
    %cst_99 = arith.constant dense<0.000000e+00> : vector<32xf32>
    %189 = vector.multi_reduction <add>, %188, %cst_99 [1] : vector<32x32xf32> to vector<32xf32>
    %190 = vector.shape_cast %189 : vector<32xf32> to vector<32x1xf32>
    %191 = tpu.reciprocal %190 {approx = true} : vector<32x1xf32> -> vector<32x1xf32>
    %192 = vector.broadcast %191 : vector<32x1xf32> to vector<32x32xf32>
    %193 = arith.mulf %188, %192 : vector<32x32xf32>
    %194 = arith.truncf %193 : vector<32x32xf32> to vector<32x32xbf16>
    %cst_100 = arith.constant dense<0.000000e+00> : vector<32x256xf32>
    %195 = tpu.matmul %194, %165, %cst_100 {dimension_numbers = #tpu.dot_dimension_numbers<[1], [0], [0], [1], [0, 0, 1, 1], [], []>} : vector<32x32xbf16>, vector<32x256xbf16>, vector<32x256xf32> -> vector<32x256xf32>
    %196 = arith.truncf %195 : vector<32x256xf32> to vector<32x256xbf16>
    %c3_101 = arith.constant 3 : index
    %c0_102 = arith.constant 0 : index
    %c0_103 = arith.constant 0 : index
    %197 = vector.load %arg5[%c3_101, %c0_102, %c0_103] : memref<7x256x256xbf16, #tpu.memory_space<vmem>>, vector<1x256x256xbf16>
    %198 = vector.shape_cast %197 : vector<1x256x256xbf16> to vector<256x256xbf16>
    %cst_104 = arith.constant dense<0.000000e+00> : vector<32x256xf32>
    %199 = tpu.matmul %196, %198, %cst_104 {dimension_numbers = #tpu.dot_dimension_numbers<[1], [0], [0], [1], [0, 0, 1, 1], [], []>} : vector<32x256xbf16>, vector<256x256xbf16>, vector<32x256xf32> -> vector<32x256xf32>
    %c3_105 = arith.constant 3 : index
    %c0_106 = arith.constant 0 : index
    %c0_107 = arith.constant 0 : index
    %200 = vector.load %arg6[%c3_105, %c0_106, %c0_107] : memref<7x1x256xf32, #tpu.memory_space<vmem>>, vector<1x1x256xf32>
    %201 = vector.shape_cast %200 : vector<1x1x256xf32> to vector<1x256xf32>
    %202 = vector.broadcast %201 : vector<1x256xf32> to vector<32x256xf32>
    %203 = arith.addf %199, %202 : vector<32x256xf32>
    %cst_108 = arith.constant 0.000000e+00 : f32
    %204 = vector.broadcast %cst_108 : f32 to vector<32x256xf32>
    %205 = arith.maximumf %203, %204 : vector<32x256xf32>
    %206 = arith.truncf %205 : vector<32x256xf32> to vector<32x256xbf16>
    %c3_109 = arith.constant 3 : index
    %c0_110 = arith.constant 0 : index
    %c0_111 = arith.constant 0 : index
    %207 = vector.load %arg7[%c3_109, %c0_110, %c0_111] : memref<7x256x256xbf16, #tpu.memory_space<vmem>>, vector<1x256x256xbf16>
    %208 = vector.shape_cast %207 : vector<1x256x256xbf16> to vector<256x256xbf16>
    %cst_112 = arith.constant dense<0.000000e+00> : vector<32x256xf32>
    %209 = tpu.matmul %206, %208, %cst_112 {dimension_numbers = #tpu.dot_dimension_numbers<[1], [0], [0], [1], [0, 0, 1, 1], [], []>} : vector<32x256xbf16>, vector<256x256xbf16>, vector<32x256xf32> -> vector<32x256xf32>
    %c3_113 = arith.constant 3 : index
    %c0_114 = arith.constant 0 : index
    %c0_115 = arith.constant 0 : index
    %210 = vector.load %arg8[%c3_113, %c0_114, %c0_115] : memref<7x1x256xf32, #tpu.memory_space<vmem>>, vector<1x1x256xf32>
    %211 = vector.shape_cast %210 : vector<1x1x256xf32> to vector<1x256xf32>
    %212 = vector.broadcast %211 : vector<1x256xf32> to vector<32x256xf32>
    %213 = arith.addf %209, %212 : vector<32x256xf32>
    %cst_116 = arith.constant 0.000000e+00 : f32
    %214 = vector.broadcast %cst_116 : f32 to vector<32x256xf32>
    %215 = arith.maximumf %213, %214 : vector<32x256xf32>
    %216 = arith.addf %215, %164 : vector<32x256xf32>
    %217 = arith.truncf %216 : vector<32x256xf32> to vector<32x256xbf16>
    %c4 = arith.constant 4 : index
    %c0_117 = arith.constant 0 : index
    %c0_118 = arith.constant 0 : index
    %218 = vector.load %arg3[%c4, %c0_117, %c0_118] : memref<7x256x256xbf16, #tpu.memory_space<vmem>>, vector<1x256x256xbf16>
    %219 = vector.shape_cast %218 : vector<1x256x256xbf16> to vector<256x256xbf16>
    %cst_119 = arith.constant dense<0.000000e+00> : vector<32x256xf32>
    %220 = tpu.matmul %217, %219, %cst_119 {dimension_numbers = #tpu.dot_dimension_numbers<[1], [0], [0], [1], [0, 0, 1, 1], [], []>} : vector<32x256xbf16>, vector<256x256xbf16>, vector<32x256xf32> -> vector<32x256xf32>
    %c4_120 = arith.constant 4 : index
    %c0_121 = arith.constant 0 : index
    %c0_122 = arith.constant 0 : index
    %221 = vector.load %arg4[%c4_120, %c0_121, %c0_122] : memref<7x1x256xf32, #tpu.memory_space<vmem>>, vector<1x1x256xf32>
    %222 = vector.shape_cast %221 : vector<1x1x256xf32> to vector<1x256xf32>
    %223 = vector.broadcast %222 : vector<1x256xf32> to vector<32x256xf32>
    %224 = arith.addf %220, %223 : vector<32x256xf32>
    %225 = arith.truncf %224 : vector<32x256xf32> to vector<32x256xbf16>
    %cst_123 = arith.constant dense<0.000000e+00> : vector<32x32xf32>
    %226 = tpu.matmul %225, %217, %cst_123 {dimension_numbers = #tpu.dot_dimension_numbers<[1], [1], [0], [0], [0, 0, 1, 0], [], []>} : vector<32x256xbf16>, vector<32x256xbf16>, vector<32x32xf32> -> vector<32x32xf32>
    %cst_124 = arith.constant dense<0xFF800000> : vector<32xf32>
    %227 = vector.multi_reduction <maximumf>, %226, %cst_124 [1] : vector<32x32xf32> to vector<32xf32>
    %228 = vector.shape_cast %227 : vector<32xf32> to vector<32x1xf32>
    %229 = vector.broadcast %228 : vector<32x1xf32> to vector<32x32xf32>
    %230 = arith.subf %226, %229 : vector<32x32xf32>
    %231 = math.exp %230 : vector<32x32xf32>
    %cst_125 = arith.constant 0.000000e+00 : f32
    %232 = vector.broadcast %cst_125 : f32 to vector<32x1xf32>
    %233 = arith.subf %232, %228 : vector<32x1xf32>
    %234 = math.exp %233 : vector<32x1xf32>
    %cst_126 = arith.constant 9.99999974E-6 : f32
    %235 = vector.broadcast %cst_126 : f32 to vector<32x1xf32>
    %236 = arith.mulf %235, %234 : vector<32x1xf32>
    %237 = vector.broadcast %236 : vector<32x1xf32> to vector<32x32xf32>
    %238 = arith.mulf %237, %8 : vector<32x32xf32>
    %239 = arith.addf %231, %238 : vector<32x32xf32>
    %240 = arith.mulf %239, %3 : vector<32x32xf32>
    %cst_127 = arith.constant dense<0.000000e+00> : vector<32xf32>
    %241 = vector.multi_reduction <add>, %240, %cst_127 [1] : vector<32x32xf32> to vector<32xf32>
    %242 = vector.shape_cast %241 : vector<32xf32> to vector<32x1xf32>
    %243 = tpu.reciprocal %242 {approx = true} : vector<32x1xf32> -> vector<32x1xf32>
    %244 = vector.broadcast %243 : vector<32x1xf32> to vector<32x32xf32>
    %245 = arith.mulf %240, %244 : vector<32x32xf32>
    %246 = arith.truncf %245 : vector<32x32xf32> to vector<32x32xbf16>
    %cst_128 = arith.constant dense<0.000000e+00> : vector<32x256xf32>
    %247 = tpu.matmul %246, %217, %cst_128 {dimension_numbers = #tpu.dot_dimension_numbers<[1], [0], [0], [1], [0, 0, 1, 1], [], []>} : vector<32x32xbf16>, vector<32x256xbf16>, vector<32x256xf32> -> vector<32x256xf32>
    %248 = arith.truncf %247 : vector<32x256xf32> to vector<32x256xbf16>
    %c4_129 = arith.constant 4 : index
    %c0_130 = arith.constant 0 : index
    %c0_131 = arith.constant 0 : index
    %249 = vector.load %arg5[%c4_129, %c0_130, %c0_131] : memref<7x256x256xbf16, #tpu.memory_space<vmem>>, vector<1x256x256xbf16>
    %250 = vector.shape_cast %249 : vector<1x256x256xbf16> to vector<256x256xbf16>
    %cst_132 = arith.constant dense<0.000000e+00> : vector<32x256xf32>
    %251 = tpu.matmul %248, %250, %cst_132 {dimension_numbers = #tpu.dot_dimension_numbers<[1], [0], [0], [1], [0, 0, 1, 1], [], []>} : vector<32x256xbf16>, vector<256x256xbf16>, vector<32x256xf32> -> vector<32x256xf32>
    %c4_133 = arith.constant 4 : index
    %c0_134 = arith.constant 0 : index
    %c0_135 = arith.constant 0 : index
    %252 = vector.load %arg6[%c4_133, %c0_134, %c0_135] : memref<7x1x256xf32, #tpu.memory_space<vmem>>, vector<1x1x256xf32>
    %253 = vector.shape_cast %252 : vector<1x1x256xf32> to vector<1x256xf32>
    %254 = vector.broadcast %253 : vector<1x256xf32> to vector<32x256xf32>
    %255 = arith.addf %251, %254 : vector<32x256xf32>
    %cst_136 = arith.constant 0.000000e+00 : f32
    %256 = vector.broadcast %cst_136 : f32 to vector<32x256xf32>
    %257 = arith.maximumf %255, %256 : vector<32x256xf32>
    %258 = arith.truncf %257 : vector<32x256xf32> to vector<32x256xbf16>
    %c4_137 = arith.constant 4 : index
    %c0_138 = arith.constant 0 : index
    %c0_139 = arith.constant 0 : index
    %259 = vector.load %arg7[%c4_137, %c0_138, %c0_139] : memref<7x256x256xbf16, #tpu.memory_space<vmem>>, vector<1x256x256xbf16>
    %260 = vector.shape_cast %259 : vector<1x256x256xbf16> to vector<256x256xbf16>
    %cst_140 = arith.constant dense<0.000000e+00> : vector<32x256xf32>
    %261 = tpu.matmul %258, %260, %cst_140 {dimension_numbers = #tpu.dot_dimension_numbers<[1], [0], [0], [1], [0, 0, 1, 1], [], []>} : vector<32x256xbf16>, vector<256x256xbf16>, vector<32x256xf32> -> vector<32x256xf32>
    %c4_141 = arith.constant 4 : index
    %c0_142 = arith.constant 0 : index
    %c0_143 = arith.constant 0 : index
    %262 = vector.load %arg8[%c4_141, %c0_142, %c0_143] : memref<7x1x256xf32, #tpu.memory_space<vmem>>, vector<1x1x256xf32>
    %263 = vector.shape_cast %262 : vector<1x1x256xf32> to vector<1x256xf32>
    %264 = vector.broadcast %263 : vector<1x256xf32> to vector<32x256xf32>
    %265 = arith.addf %261, %264 : vector<32x256xf32>
    %cst_144 = arith.constant 0.000000e+00 : f32
    %266 = vector.broadcast %cst_144 : f32 to vector<32x256xf32>
    %267 = arith.maximumf %265, %266 : vector<32x256xf32>
    %268 = arith.addf %267, %216 : vector<32x256xf32>
    %269 = arith.truncf %268 : vector<32x256xf32> to vector<32x256xbf16>
    %c5 = arith.constant 5 : index
    %c0_145 = arith.constant 0 : index
    %c0_146 = arith.constant 0 : index
    %270 = vector.load %arg3[%c5, %c0_145, %c0_146] : memref<7x256x256xbf16, #tpu.memory_space<vmem>>, vector<1x256x256xbf16>
    %271 = vector.shape_cast %270 : vector<1x256x256xbf16> to vector<256x256xbf16>
    %cst_147 = arith.constant dense<0.000000e+00> : vector<32x256xf32>
    %272 = tpu.matmul %269, %271, %cst_147 {dimension_numbers = #tpu.dot_dimension_numbers<[1], [0], [0], [1], [0, 0, 1, 1], [], []>} : vector<32x256xbf16>, vector<256x256xbf16>, vector<32x256xf32> -> vector<32x256xf32>
    %c5_148 = arith.constant 5 : index
    %c0_149 = arith.constant 0 : index
    %c0_150 = arith.constant 0 : index
    %273 = vector.load %arg4[%c5_148, %c0_149, %c0_150] : memref<7x1x256xf32, #tpu.memory_space<vmem>>, vector<1x1x256xf32>
    %274 = vector.shape_cast %273 : vector<1x1x256xf32> to vector<1x256xf32>
    %275 = vector.broadcast %274 : vector<1x256xf32> to vector<32x256xf32>
    %276 = arith.addf %272, %275 : vector<32x256xf32>
    %277 = arith.truncf %276 : vector<32x256xf32> to vector<32x256xbf16>
    %cst_151 = arith.constant dense<0.000000e+00> : vector<32x32xf32>
    %278 = tpu.matmul %277, %269, %cst_151 {dimension_numbers = #tpu.dot_dimension_numbers<[1], [1], [0], [0], [0, 0, 1, 0], [], []>} : vector<32x256xbf16>, vector<32x256xbf16>, vector<32x32xf32> -> vector<32x32xf32>
    %cst_152 = arith.constant dense<0xFF800000> : vector<32xf32>
    %279 = vector.multi_reduction <maximumf>, %278, %cst_152 [1] : vector<32x32xf32> to vector<32xf32>
    %280 = vector.shape_cast %279 : vector<32xf32> to vector<32x1xf32>
    %281 = vector.broadcast %280 : vector<32x1xf32> to vector<32x32xf32>
    %282 = arith.subf %278, %281 : vector<32x32xf32>
    %283 = math.exp %282 : vector<32x32xf32>
    %cst_153 = arith.constant 0.000000e+00 : f32
    %284 = vector.broadcast %cst_153 : f32 to vector<32x1xf32>
    %285 = arith.subf %284, %280 : vector<32x1xf32>
    %286 = math.exp %285 : vector<32x1xf32>
    %cst_154 = arith.constant 9.99999974E-6 : f32
    %287 = vector.broadcast %cst_154 : f32 to vector<32x1xf32>
    %288 = arith.mulf %287, %286 : vector<32x1xf32>
    %289 = vector.broadcast %288 : vector<32x1xf32> to vector<32x32xf32>
    %290 = arith.mulf %289, %8 : vector<32x32xf32>
    %291 = arith.addf %283, %290 : vector<32x32xf32>
    %292 = arith.mulf %291, %3 : vector<32x32xf32>
    %cst_155 = arith.constant dense<0.000000e+00> : vector<32xf32>
    %293 = vector.multi_reduction <add>, %292, %cst_155 [1] : vector<32x32xf32> to vector<32xf32>
    %294 = vector.shape_cast %293 : vector<32xf32> to vector<32x1xf32>
    %295 = tpu.reciprocal %294 {approx = true} : vector<32x1xf32> -> vector<32x1xf32>
    %296 = vector.broadcast %295 : vector<32x1xf32> to vector<32x32xf32>
    %297 = arith.mulf %292, %296 : vector<32x32xf32>
    %298 = arith.truncf %297 : vector<32x32xf32> to vector<32x32xbf16>
    %cst_156 = arith.constant dense<0.000000e+00> : vector<32x256xf32>
    %299 = tpu.matmul %298, %269, %cst_156 {dimension_numbers = #tpu.dot_dimension_numbers<[1], [0], [0], [1], [0, 0, 1, 1], [], []>} : vector<32x32xbf16>, vector<32x256xbf16>, vector<32x256xf32> -> vector<32x256xf32>
    %300 = arith.truncf %299 : vector<32x256xf32> to vector<32x256xbf16>
    %c5_157 = arith.constant 5 : index
    %c0_158 = arith.constant 0 : index
    %c0_159 = arith.constant 0 : index
    %301 = vector.load %arg5[%c5_157, %c0_158, %c0_159] : memref<7x256x256xbf16, #tpu.memory_space<vmem>>, vector<1x256x256xbf16>
    %302 = vector.shape_cast %301 : vector<1x256x256xbf16> to vector<256x256xbf16>
    %cst_160 = arith.constant dense<0.000000e+00> : vector<32x256xf32>
    %303 = tpu.matmul %300, %302, %cst_160 {dimension_numbers = #tpu.dot_dimension_numbers<[1], [0], [0], [1], [0, 0, 1, 1], [], []>} : vector<32x256xbf16>, vector<256x256xbf16>, vector<32x256xf32> -> vector<32x256xf32>
    %c5_161 = arith.constant 5 : index
    %c0_162 = arith.constant 0 : index
    %c0_163 = arith.constant 0 : index
    %304 = vector.load %arg6[%c5_161, %c0_162, %c0_163] : memref<7x1x256xf32, #tpu.memory_space<vmem>>, vector<1x1x256xf32>
    %305 = vector.shape_cast %304 : vector<1x1x256xf32> to vector<1x256xf32>
    %306 = vector.broadcast %305 : vector<1x256xf32> to vector<32x256xf32>
    %307 = arith.addf %303, %306 : vector<32x256xf32>
    %cst_164 = arith.constant 0.000000e+00 : f32
    %308 = vector.broadcast %cst_164 : f32 to vector<32x256xf32>
    %309 = arith.maximumf %307, %308 : vector<32x256xf32>
    %310 = arith.truncf %309 : vector<32x256xf32> to vector<32x256xbf16>
    %c5_165 = arith.constant 5 : index
    %c0_166 = arith.constant 0 : index
    %c0_167 = arith.constant 0 : index
    %311 = vector.load %arg7[%c5_165, %c0_166, %c0_167] : memref<7x256x256xbf16, #tpu.memory_space<vmem>>, vector<1x256x256xbf16>
    %312 = vector.shape_cast %311 : vector<1x256x256xbf16> to vector<256x256xbf16>
    %cst_168 = arith.constant dense<0.000000e+00> : vector<32x256xf32>
    %313 = tpu.matmul %310, %312, %cst_168 {dimension_numbers = #tpu.dot_dimension_numbers<[1], [0], [0], [1], [0, 0, 1, 1], [], []>} : vector<32x256xbf16>, vector<256x256xbf16>, vector<32x256xf32> -> vector<32x256xf32>
    %c5_169 = arith.constant 5 : index
    %c0_170 = arith.constant 0 : index
    %c0_171 = arith.constant 0 : index
    %314 = vector.load %arg8[%c5_169, %c0_170, %c0_171] : memref<7x1x256xf32, #tpu.memory_space<vmem>>, vector<1x1x256xf32>
    %315 = vector.shape_cast %314 : vector<1x1x256xf32> to vector<1x256xf32>
    %316 = vector.broadcast %315 : vector<1x256xf32> to vector<32x256xf32>
    %317 = arith.addf %313, %316 : vector<32x256xf32>
    %cst_172 = arith.constant 0.000000e+00 : f32
    %318 = vector.broadcast %cst_172 : f32 to vector<32x256xf32>
    %319 = arith.maximumf %317, %318 : vector<32x256xf32>
    %320 = arith.addf %319, %268 : vector<32x256xf32>
    %321 = arith.truncf %320 : vector<32x256xf32> to vector<32x256xbf16>
    %c6 = arith.constant 6 : index
    %c0_173 = arith.constant 0 : index
    %c0_174 = arith.constant 0 : index
    %322 = vector.load %arg3[%c6, %c0_173, %c0_174] : memref<7x256x256xbf16, #tpu.memory_space<vmem>>, vector<1x256x256xbf16>
    %323 = vector.shape_cast %322 : vector<1x256x256xbf16> to vector<256x256xbf16>
    %cst_175 = arith.constant dense<0.000000e+00> : vector<32x256xf32>
    %324 = tpu.matmul %321, %323, %cst_175 {dimension_numbers = #tpu.dot_dimension_numbers<[1], [0], [0], [1], [0, 0, 1, 1], [], []>} : vector<32x256xbf16>, vector<256x256xbf16>, vector<32x256xf32> -> vector<32x256xf32>
    %c6_176 = arith.constant 6 : index
    %c0_177 = arith.constant 0 : index
    %c0_178 = arith.constant 0 : index
    %325 = vector.load %arg4[%c6_176, %c0_177, %c0_178] : memref<7x1x256xf32, #tpu.memory_space<vmem>>, vector<1x1x256xf32>
    %326 = vector.shape_cast %325 : vector<1x1x256xf32> to vector<1x256xf32>
    %327 = vector.broadcast %326 : vector<1x256xf32> to vector<32x256xf32>
    %328 = arith.addf %324, %327 : vector<32x256xf32>
    %329 = arith.truncf %328 : vector<32x256xf32> to vector<32x256xbf16>
    %cst_179 = arith.constant dense<0.000000e+00> : vector<32x32xf32>
    %330 = tpu.matmul %329, %321, %cst_179 {dimension_numbers = #tpu.dot_dimension_numbers<[1], [1], [0], [0], [0, 0, 1, 0], [], []>} : vector<32x256xbf16>, vector<32x256xbf16>, vector<32x32xf32> -> vector<32x32xf32>
    %cst_180 = arith.constant dense<0xFF800000> : vector<32xf32>
    %331 = vector.multi_reduction <maximumf>, %330, %cst_180 [1] : vector<32x32xf32> to vector<32xf32>
    %332 = vector.shape_cast %331 : vector<32xf32> to vector<32x1xf32>
    %333 = vector.broadcast %332 : vector<32x1xf32> to vector<32x32xf32>
    %334 = arith.subf %330, %333 : vector<32x32xf32>
    %335 = math.exp %334 : vector<32x32xf32>
    %cst_181 = arith.constant 0.000000e+00 : f32
    %336 = vector.broadcast %cst_181 : f32 to vector<32x1xf32>
    %337 = arith.subf %336, %332 : vector<32x1xf32>
    %338 = math.exp %337 : vector<32x1xf32>
    %cst_182 = arith.constant 9.99999974E-6 : f32
    %339 = vector.broadcast %cst_182 : f32 to vector<32x1xf32>
    %340 = arith.mulf %339, %338 : vector<32x1xf32>
    %341 = vector.broadcast %340 : vector<32x1xf32> to vector<32x32xf32>
    %342 = arith.mulf %341, %8 : vector<32x32xf32>
    %343 = arith.addf %335, %342 : vector<32x32xf32>
    %344 = arith.mulf %343, %3 : vector<32x32xf32>
    %cst_183 = arith.constant dense<0.000000e+00> : vector<32xf32>
    %345 = vector.multi_reduction <add>, %344, %cst_183 [1] : vector<32x32xf32> to vector<32xf32>
    %346 = vector.shape_cast %345 : vector<32xf32> to vector<32x1xf32>
    %347 = tpu.reciprocal %346 {approx = true} : vector<32x1xf32> -> vector<32x1xf32>
    %348 = vector.broadcast %347 : vector<32x1xf32> to vector<32x32xf32>
    %349 = arith.mulf %344, %348 : vector<32x32xf32>
    %350 = arith.truncf %349 : vector<32x32xf32> to vector<32x32xbf16>
    %cst_184 = arith.constant dense<0.000000e+00> : vector<32x256xf32>
    %351 = tpu.matmul %350, %321, %cst_184 {dimension_numbers = #tpu.dot_dimension_numbers<[1], [0], [0], [1], [0, 0, 1, 1], [], []>} : vector<32x32xbf16>, vector<32x256xbf16>, vector<32x256xf32> -> vector<32x256xf32>
    %352 = arith.truncf %351 : vector<32x256xf32> to vector<32x256xbf16>
    %c6_185 = arith.constant 6 : index
    %c0_186 = arith.constant 0 : index
    %c0_187 = arith.constant 0 : index
    %353 = vector.load %arg5[%c6_185, %c0_186, %c0_187] : memref<7x256x256xbf16, #tpu.memory_space<vmem>>, vector<1x256x256xbf16>
    %354 = vector.shape_cast %353 : vector<1x256x256xbf16> to vector<256x256xbf16>
    %cst_188 = arith.constant dense<0.000000e+00> : vector<32x256xf32>
    %355 = tpu.matmul %352, %354, %cst_188 {dimension_numbers = #tpu.dot_dimension_numbers<[1], [0], [0], [1], [0, 0, 1, 1], [], []>} : vector<32x256xbf16>, vector<256x256xbf16>, vector<32x256xf32> -> vector<32x256xf32>
    %c6_189 = arith.constant 6 : index
    %c0_190 = arith.constant 0 : index
    %c0_191 = arith.constant 0 : index
    %356 = vector.load %arg6[%c6_189, %c0_190, %c0_191] : memref<7x1x256xf32, #tpu.memory_space<vmem>>, vector<1x1x256xf32>
    %357 = vector.shape_cast %356 : vector<1x1x256xf32> to vector<1x256xf32>
    %358 = vector.broadcast %357 : vector<1x256xf32> to vector<32x256xf32>
    %359 = arith.addf %355, %358 : vector<32x256xf32>
    %cst_192 = arith.constant 0.000000e+00 : f32
    %360 = vector.broadcast %cst_192 : f32 to vector<32x256xf32>
    %361 = arith.maximumf %359, %360 : vector<32x256xf32>
    %362 = arith.truncf %361 : vector<32x256xf32> to vector<32x256xbf16>
    %c6_193 = arith.constant 6 : index
    %c0_194 = arith.constant 0 : index
    %c0_195 = arith.constant 0 : index
    %363 = vector.load %arg7[%c6_193, %c0_194, %c0_195] : memref<7x256x256xbf16, #tpu.memory_space<vmem>>, vector<1x256x256xbf16>
    %364 = vector.shape_cast %363 : vector<1x256x256xbf16> to vector<256x256xbf16>
    %cst_196 = arith.constant dense<0.000000e+00> : vector<32x256xf32>
    %365 = tpu.matmul %362, %364, %cst_196 {dimension_numbers = #tpu.dot_dimension_numbers<[1], [0], [0], [1], [0, 0, 1, 1], [], []>} : vector<32x256xbf16>, vector<256x256xbf16>, vector<32x256xf32> -> vector<32x256xf32>
    %c6_197 = arith.constant 6 : index
    %c0_198 = arith.constant 0 : index
    %c0_199 = arith.constant 0 : index
    %366 = vector.load %arg8[%c6_197, %c0_198, %c0_199] : memref<7x1x256xf32, #tpu.memory_space<vmem>>, vector<1x1x256xf32>
    %367 = vector.shape_cast %366 : vector<1x1x256xf32> to vector<1x256xf32>
    %368 = vector.broadcast %367 : vector<1x256xf32> to vector<32x256xf32>
    %369 = arith.addf %365, %368 : vector<32x256xf32>
    %cst_200 = arith.constant 0.000000e+00 : f32
    %370 = vector.broadcast %cst_200 : f32 to vector<32x256xf32>
    %371 = arith.maximumf %369, %370 : vector<32x256xf32>
    %372 = arith.addf %371, %320 : vector<32x256xf32>
    %373 = arith.truncf %372 : vector<32x256xf32> to vector<32x256xbf16>
    %c0_201 = arith.constant 0 : index
    %c0_202 = arith.constant 0 : index
    %374 = vector.load %arg9[%c0_201, %c0_202] : memref<256x256xbf16, #tpu.memory_space<vmem>>, vector<256x256xbf16>
    %cst_203 = arith.constant dense<0.000000e+00> : vector<32x256xf32>
    %375 = tpu.matmul %373, %374, %cst_203 {dimension_numbers = #tpu.dot_dimension_numbers<[1], [0], [0], [1], [0, 0, 1, 1], [], []>} : vector<32x256xbf16>, vector<256x256xbf16>, vector<32x256xf32> -> vector<32x256xf32>
    %c0_204 = arith.constant 0 : index
    %c0_205 = arith.constant 0 : index
    %376 = vector.load %arg10[%c0_204, %c0_205] : memref<1x256xf32, #tpu.memory_space<vmem>>, vector<1x256xf32>
    %377 = vector.broadcast %376 : vector<1x256xf32> to vector<32x256xf32>
    %378 = arith.addf %375, %377 : vector<32x256xf32>
    %c0_206 = arith.constant 0 : index
    %c0_207 = arith.constant 0 : index
    %c0_208 = arith.constant 0 : index
    %379 = vector.load %arg11[%c0_206, %c0_207, %c0_208] : memref<1x32x256xf32, #tpu.memory_space<vmem>>, vector<1x32x256xf32>
    %380 = vector.shape_cast %379 : vector<1x32x256xf32> to vector<32x256xf32>
    %381 = vector.shape_cast %378 : vector<32x256xf32> to vector<1x32x256xf32>
    tpu.vector_store %arg11[%c0_206, %c0_207, %c0_208], %381 {strides = array<i32>} : memref<1x32x256xf32, #tpu.memory_space<vmem>>, vector<1x32x256xf32>,
    return
  }
  func.func @transform_0(%arg0: i32) -> (i32, i32, i32) {
    %c0_i32 = arith.constant 0 : i32
    %c0_i32_0 = arith.constant 0 : i32
    %c0_i32_1 = arith.constant 0 : i32
    return %arg0, %c0_i32, %c0_i32_0 : i32, i32, i32
  }
  func.func @transform_1(%arg0: i32) -> (i32, i32, i32) {
    %c0_i32 = arith.constant 0 : i32
    %c0_i32_0 = arith.constant 0 : i32
    %c0_i32_1 = arith.constant 0 : i32
    return %arg0, %c0_i32, %c0_i32_0 : i32, i32, i32
  }
  func.func @transform_2(%arg0: i32) -> (i32, i32, i32) {
    %c0_i32 = arith.constant 0 : i32
    %c0_i32_0 = arith.constant 0 : i32
    %c0_i32_1 = arith.constant 0 : i32
    %c0_i32_2 = arith.constant 0 : i32
    return %c0_i32, %c0_i32_0, %c0_i32_1 : i32, i32, i32
  }
  func.func @transform_3(%arg0: i32) -> (i32, i32, i32) {
    %c0_i32 = arith.constant 0 : i32
    %c0_i32_0 = arith.constant 0 : i32
    %c0_i32_1 = arith.constant 0 : i32
    %c0_i32_2 = arith.constant 0 : i32
    return %c0_i32, %c0_i32_0, %c0_i32_1 : i32, i32, i32
  }
  func.func @transform_4(%arg0: i32) -> (i32, i32, i32) {
    %c0_i32 = arith.constant 0 : i32
    %c0_i32_0 = arith.constant 0 : i32
    %c0_i32_1 = arith.constant 0 : i32
    %c0_i32_2 = arith.constant 0 : i32
    return %c0_i32, %c0_i32_0, %c0_i32_1 : i32, i32, i32
  }
  func.func @transform_5(%arg0: i32) -> (i32, i32, i32) {
    %c0_i32 = arith.constant 0 : i32
    %c0_i32_0 = arith.constant 0 : i32
    %c0_i32_1 = arith.constant 0 : i32
    %c0_i32_2 = arith.constant 0 : i32
    return %c0_i32, %c0_i32_0, %c0_i32_1 : i32, i32, i32
  }
  func.func @transform_6(%arg0: i32) -> (i32, i32, i32) {
    %c0_i32 = arith.constant 0 : i32
    %c0_i32_0 = arith.constant 0 : i32
    %c0_i32_1 = arith.constant 0 : i32
    %c0_i32_2 = arith.constant 0 : i32
    return %c0_i32, %c0_i32_0, %c0_i32_1 : i32, i32, i32
  }
  func.func @transform_7(%arg0: i32) -> (i32, i32, i32) {
    %c0_i32 = arith.constant 0 : i32
    %c0_i32_0 = arith.constant 0 : i32
    %c0_i32_1 = arith.constant 0 : i32
    %c0_i32_2 = arith.constant 0 : i32
    return %c0_i32, %c0_i32_0, %c0_i32_1 : i32, i32, i32
  }
  func.func @transform_8(%arg0: i32) -> (i32, i32) {
    %c0_i32 = arith.constant 0 : i32
    %c0_i32_0 = arith.constant 0 : i32
    %c0_i32_1 = arith.constant 0 : i32
    return %c0_i32, %c0_i32_0 : i32, i32
  }
  func.func @transform_9(%arg0: i32) -> (i32, i32) {
    %c0_i32 = arith.constant 0 : i32
    %c0_i32_0 = arith.constant 0 : i32
    %c0_i32_1 = arith.constant 0 : i32
    return %c0_i32, %c0_i32_0 : i32, i32
  }
  func.func @transform_10(%arg0: i32) -> (i32, i32, i32) {
    %c0_i32 = arith.constant 0 : i32
    %c0_i32_0 = arith.constant 0 : i32
    %c0_i32_1 = arith.constant 0 : i32
    return %arg0, %c0_i32, %c0_i32_0 : i32, i32, i32
  }
}

</mosaic_0001>

<llo_original>
// kernel: tpu_custom_call.1
$region0: #{tpu_custom_call.1}
  #allocation0 [shape = 'u32[]', space=smem, size = 0x4, offset = 0x4, fixed_abs, tag = 'smem constant byte address 0x4 - core index']
  #allocation1 [shape = 'u32[72,128]{1,0:T(1,128)}', space=vmem, size = 0x9000, scoped, tag = 'internal scratch']
  %s0 = inlined_call_operand.hbm [shape: f32[2,32,256], index: 0, kind: input, shape index: {}]
  %s1 = inlined_call_operand.hbm [shape: f32[2,32,32], index: 1, kind: input, shape index: {}]
  %s2 = inlined_call_operand.hbm [shape: bf16[7,256,256], index: 2, kind: input, shape index: {}]
  %s3 = inlined_call_operand.hbm [shape: f32[7,1,256], index: 3, kind: input, shape index: {}]
  %s4 = inlined_call_operand.hbm [shape: bf16[7,256,256], index: 4, kind: input, shape index: {}]
  %s5 = inlined_call_operand.hbm [shape: f32[7,1,256], index: 5, kind: input, shape index: {}]
  %s6 = inlined_call_operand.hbm [shape: bf16[7,256,256], index: 6, kind: input, shape index: {}]
  %s7 = inlined_call_operand.hbm [shape: f32[7,1,256], index: 7, kind: input, shape index: {}]
  %s8 = inlined_call_operand.hbm [shape: bf16[256,256], index: 8, kind: input, shape index: {}]
  %s9 = inlined_call_operand.vmem [shape: f32[1,256], index: 9, kind: input, shape index: {}]
  %s10 = inlined_call_operand.hbm [shape: f32[2,32,256], index: 10, kind: output, shape index: {}]
  %s11 = sld [smem:[#allocation0]]
  $region109: #{tpu_custom_call.1} parent=0
    _
  %s13 = ssub.s32 1, %s11
  %s14 = scalar_select 0, %s13, %s11
  $region1: #{tpu_custom_call.1} parent=0
    #allocation2 [shape = 'u8[65536]{0}', space=vmem, size = 0x10000, scoped, tag = 'input window, operand 0']
    #allocation3 [shape = 's32[2]{0}', space=sflag, size = 0x8, scoped, tag = 'scoped memory for tpu_custom_call.1']
    #allocation4 [shape = 's32[2]{0}', space=sflag, size = 0x8, scoped, tag = 'scoped memory for tpu_custom_call.1']
    #allocation5 [shape = 'u8[32768]{0}', space=vmem, size = 0x8000, scoped, tag = 'input window, operand 1']
    #allocation6 [shape = 's32[2]{0}', space=sflag, size = 0x8, scoped, tag = 'scoped memory for tpu_custom_call.1']
    #allocation7 [shape = 'u8[917504]{0}', space=vmem, size = 0xe0000, scoped, tag = 'input window, operand 2, single buffered']
    #allocation8 [shape = 'u8[7168]{0}', space=vmem, size = 0x1c00, scoped, tag = 'input window, operand 3, single buffered']
    #allocation9 [shape = 's32[1]{0}', space=sflag, size = 0x4, scoped, tag = 'scoped memory for tpu_custom_call.1']
    #allocation10 [shape = 'u8[917504]{0}', space=vmem, size = 0xe0000, scoped, tag = 'input window, operand 4, single buffered']
    #allocation11 [shape = 'u8[7168]{0}', space=vmem, size = 0x1c00, scoped, tag = 'input window, operand 5, single buffered']
    #allocation12 [shape = 's32[1]{0}', space=sflag, size = 0x4, scoped, tag = 'scoped memory for tpu_custom_call.1']
    #allocation13 [shape = 'u8[917504]{0}', space=vmem, size = 0xe0000, scoped, tag = 'input window, operand 6, single buffered']
    #allocation14 [shape = 'u8[7168]{0}', space=vmem, size = 0x1c00, scoped, tag = 'input window, operand 7, single buffered']
    #allocation15 [shape = 's32[1]{0}', space=sflag, size = 0x4, scoped, tag = 'scoped memory for tpu_custom_call.1']
    #allocation16 [shape = 'u8[131072]{0}', space=vmem, size = 0x20000, scoped, tag = 'input window, operand 8, single buffered']
    #allocation17 [shape = 'u8[65536]{0}', space=vmem, size = 0x10000, scoped, tag = 'output window, operand 0']
    %15 = vsyncpa [#allocation3], 0
    %s16 = scalar_lea.sflag [#allocation3], 1
    %17 = vsyncpa %s16, 0
    %18 = vsyncpa [#allocation6], 0
    %s19 = scalar_lea.sflag [#allocation6], 1
    %20 = vsyncpa %s19, 0
    %21 = vsyncpa [#allocation9], 0
    %22 = vsyncpa [#allocation12], 0
    %23 = vsyncpa [#allocation15], 0
    %24 = vsyncpa [#allocation4], 0
    %s25 = scalar_lea.sflag [#allocation4], 1
    %26 = vsyncpa %s25, 0
    loop: start=0, step=1, limit=4
    $region2: #{tpu_custom_call.1} parent=1 // loop_pre_header
      _
    $region3: #{tpu_custom_call.1} parent=1 // loop_header
      %s28 = sphi 0, %s32
      %p29 = scmp.ge.s32.totalorder %s28, 4
      %s38 = sphi 0, %s40
      %s41 = sphi 0, %s38
      %s42 = sphi 0, %s41
      %s58 = sphi 0, %s42
      %s64 = sphi 0, %s66
      %s67 = sphi 0, %s64
      %s68 = sphi 0, %s67
      %s84 = sphi 0, %s68
      %s88 = sphi 0, %s88
      %s90 = sphi 0, %s88
      %s91 = sphi 0, %s90
      %s105 = sphi 0, %s91
      %s109 = sphi 0, %s109
      %s111 = sphi 0, %s109
      %s112 = sphi 0, %s111
      %s126 = sphi 0, %s112
      %s130 = sphi 0, %s130
      %s132 = sphi 0, %s130
      %s133 = sphi 0, %s132
      %s147 = sphi 0, %s133
      %s151 = sphi 0, %s151
      %s153 = sphi 0, %s151
      %s154 = sphi 0, %s153
      %s168 = sphi 0, %s154
      %s172 = sphi 0, %s172
      %s174 = sphi 0, %s172
      %s175 = sphi 0, %s174
      %s189 = sphi 0, %s175
      %s193 = sphi 0, %s193
      %s195 = sphi 0, %s193
      %s196 = sphi 0, %s195
      %s210 = sphi 0, %s196
      %s214 = sphi 0, %s214
      %s216 = sphi 0, %s214
      %s217 = sphi 0, %s216
      %s231 = sphi 0, %s217
      %s235 = sphi 0, %s235
      %s237 = sphi 0, %s235
      %s238 = sphi 0, %s237
      %s252 = sphi 0, %s238
      %s258 = sphi 0, %s260
      %s261 = sphi 0, %s258
      %s262 = sphi 0, %s261
      %s278 = sphi 0, %s262
    $region4: #{tpu_custom_call.1} parent=1 // loop_header_branch
      %31 = sbr.rel (%p29) target = $region8
    $region5: #{tpu_custom_call.1} parent=1 // loop_body
      %s33 = ssub.s32 %s28, 1
      %s34 = ssub.s32 %s28, 2
      %s35 = sadd.s32 %s28, 1
      %s36 = ssub.s32 %s28, %s35
      %p37 = scmp.eq.s32.totalorder %s36, 0
      %s39 = sadd.s32 %s38, 1
      %s40 = scalar_select %p37, %s38, %s39
      %p43 = pneg %p37
      %p44 = scmp.eq.s32.totalorder %s28, 1
      %p45 = por %p43, %p44
      %p46 = scmp.ne.s32.totalorder %s38, %s41
      %p47 = scmp.eq.s32.totalorder %s28, 0
      %p48 = por %p46, %p47
      %p49 = scmp.ne.s32.totalorder %s38, %s41
      %p50 = scmp.eq.s32.totalorder %s33, 1
      %p51 = por %p49, %p50
      %p52 = scmp.ne.s32.totalorder %s41, %s42
      %p53 = scmp.eq.s32.totalorder %s33, 0
      %p54 = por %p52, %p53
      %p55 = scmp.ne.s32.totalorder %s41, %s42
      %p56 = scmp.eq.s32.totalorder %s34, 1
      %p57 = por %p55, %p56
      %p59 = scmp.ne.s32.totalorder %s42, %s58
      %p60 = scmp.eq.s32.totalorder %s34, 0
      %p61 = por %p59, %p60
      %s62 = ssub.s32 %s28, %s35
      %p63 = scmp.eq.s32.totalorder %s62, 0
      %s65 = sadd.s32 %s64, 1
      %s66 = scalar_select %p63, %s64, %s65
      %p69 = pneg %p63
      %p70 = scmp.eq.s32.totalorder %s28, 1
      %p71 = por %p69, %p70
      %p72 = scmp.ne.s32.totalorder %s64, %s67
      %p73 = scmp.eq.s32.totalorder %s28, 0
      %p74 = por %p72, %p73
      %p75 = scmp.ne.s32.totalorder %s64, %s67
      %p76 = scmp.eq.s32.totalorder %s33, 1
      %p77 = por %p75, %p76
      %p78 = scmp.ne.s32.totalorder %s67, %s68
      %p79 = scmp.eq.s32.totalorder %s33, 0
      %p80 = por %p78, %p79
      %p81 = scmp.ne.s32.totalorder %s67, %s68
      %p82 = scmp.eq.s32.totalorder %s34, 1
      %p83 = por %p81, %p82
      %p85 = scmp.ne.s32.totalorder %s68, %s84
      %p86 = scmp.eq.s32.totalorder %s34, 0
      %p87 = por %p85, %p86
      %s89 = sadd.s32 %s88, 1
      %p92 = scmp.eq.s32.totalorder %s28, 1
      %p93 = scmp.ne.s32.totalorder %s88, %s90
      %p94 = scmp.eq.s32.totalorder %s28, 0
      %p95 = por %p93, %p94
      %p96 = scmp.ne.s32.totalorder %s88, %s90
      %p97 = scmp.eq.s32.totalorder %s33, 1
      %p98 = por %p96, %p97
      %p99 = scmp.ne.s32.totalorder %s90, %s91
      %p100 = scmp.eq.s32.totalorder %s33, 0
      %p101 = por %p99, %p100
      %p102 = scmp.ne.s32.totalorder %s90, %s91
      %p103 = scmp.eq.s32.totalorder %s34, 1
      %p104 = por %p102, %p103
      %p106 = scmp.ne.s32.totalorder %s91, %s105
      %p107 = scmp.eq.s32.totalorder %s34, 0
      %p108 = por %p106, %p107
      %s110 = sadd.s32 %s109, 1
      %p113 = scmp.eq.s32.totalorder %s28, 1
      %p114 = scmp.ne.s32.totalorder %s109, %s111
      %p115 = scmp.eq.s32.totalorder %s28, 0
      %p116 = por %p114, %p115
      %p117 = scmp.ne.s32.totalorder %s109, %s111
      %p118 = scmp.eq.s32.totalorder %s33, 1
      %p119 = por %p117, %p118
      %p120 = scmp.ne.s32.totalorder %s111, %s112
      %p121 = scmp.eq.s32.totalorder %s33, 0
      %p122 = por %p120, %p121
      %p123 = scmp.ne.s32.totalorder %s111, %s112
      %p124 = scmp.eq.s32.totalorder %s34, 1
      %p125 = por %p123, %p124
      %p127 = scmp.ne.s32.totalorder %s112, %s126
      %p128 = scmp.eq.s32.totalorder %s34, 0
      %p129 = por %p127, %p128
      %s131 = sadd.s32 %s130, 1
      %p134 = scmp.eq.s32.totalorder %s28, 1
      %p135 = scmp.ne.s32.totalorder %s130, %s132
      %p136 = scmp.eq.s32.totalorder %s28, 0
      %p137 = por %p135, %p136
      %p138 = scmp.ne.s32.totalorder %s130, %s132
      %p139 = scmp.eq.s32.totalorder %s33, 1
      %p140 = por %p138, %p139
      %p141 = scmp.ne.s32.totalorder %s132, %s133
      %p142 = scmp.eq.s32.totalorder %s33, 0
      %p143 = por %p141, %p142
      %p144 = scmp.ne.s32.totalorder %s132, %s133
      %p145 = scmp.eq.s32.totalorder %s34, 1
      %p146 = por %p144, %p145
      %p148 = scmp.ne.s32.totalorder %s133, %s147
      %p149 = scmp.eq.s32.totalorder %s34, 0
      %p150 = por %p148, %p149
      %s152 = sadd.s32 %s151, 1
      %p155 = scmp.eq.s32.totalorder %s28, 1
      %p156 = scmp.ne.s32.totalorder %s151, %s153
      %p157 = scmp.eq.s32.totalorder %s28, 0
      %p158 = por %p156, %p157
      %p159 = scmp.ne.s32.totalorder %s151, %s153
      %p160 = scmp.eq.s32.totalorder %s33, 1
      %p161 = por %p159, %p160
      %p162 = scmp.ne.s32.totalorder %s153, %s154
      %p163 = scmp.eq.s32.totalorder %s33, 0
      %p164 = por %p162, %p163
      %p165 = scmp.ne.s32.totalorder %s153, %s154
      %p166 = scmp.eq.s32.totalorder %s34, 1
      %p167 = por %p165, %p166
      %p169 = scmp.ne.s32.totalorder %s154, %s168
      %p170 = scmp.eq.s32.totalorder %s34, 0
      %p171 = por %p169, %p170
      %s173 = sadd.s32 %s172, 1
      %p176 = scmp.eq.s32.totalorder %s28, 1
      %p177 = scmp.ne.s32.totalorder %s172, %s174
      %p178 = scmp.eq.s32.totalorder %s28, 0
      %p179 = por %p177, %p178
      %p180 = scmp.ne.s32.totalorder %s172, %s174
      %p181 = scmp.eq.s32.totalorder %s33, 1
      %p182 = por %p180, %p181
      %p183 = scmp.ne.s32.totalorder %s174, %s175
      %p184 = scmp.eq.s32.totalorder %s33, 0
      %p185 = por %p183, %p184
      %p186 = scmp.ne.s32.totalorder %s174, %s175
      %p187 = scmp.eq.s32.totalorder %s34, 1
      %p188 = por %p186, %p187
      %p190 = scmp.ne.s32.totalorder %s175, %s189
      %p191 = scmp.eq.s32.totalorder %s34, 0
      %p192 = por %p190, %p191
      %s194 = sadd.s32 %s193, 1
      %p197 = scmp.eq.s32.totalorder %s28, 1
      %p198 = scmp.ne.s32.totalorder %s193, %s195
      %p199 = scmp.eq.s32.totalorder %s28, 0
      %p200 = por %p198, %p199
      %p201 = scmp.ne.s32.totalorder %s193, %s195
      %p202 = scmp.eq.s32.totalorder %s33, 1
      %p203 = por %p201, %p202
      %p204 = scmp.ne.s32.totalorder %s195, %s196
      %p205 = scmp.eq.s32.totalorder %s33, 0
      %p206 = por %p204, %p205
      %p207 = scmp.ne.s32.totalorder %s195, %s196
      %p208 = scmp.eq.s32.totalorder %s34, 1
      %p209 = por %p207, %p208
      %p211 = scmp.ne.s32.totalorder %s196, %s210
      %p212 = scmp.eq.s32.totalorder %s34, 0
      %p213 = por %p211, %p212
      %s215 = sadd.s32 %s214, 1
      %p218 = scmp.eq.s32.totalorder %s28, 1
      %p219 = scmp.ne.s32.totalorder %s214, %s216
      %p220 = scmp.eq.s32.totalorder %s28, 0
      %p221 = por %p219, %p220
      %p222 = scmp.ne.s32.totalorder %s214, %s216
      %p223 = scmp.eq.s32.totalorder %s33, 1
      %p224 = por %p222, %p223
      %p225 = scmp.ne.s32.totalorder %s216, %s217
      %p226 = scmp.eq.s32.totalorder %s33, 0
      %p227 = por %p225, %p226
      %p228 = scmp.ne.s32.totalorder %s216, %s217
      %p229 = scmp.eq.s32.totalorder %s34, 1
      %p230 = por %p228, %p229
      %p232 = scmp.ne.s32.totalorder %s217, %s231
      %p233 = scmp.eq.s32.totalorder %s34, 0
      %p234 = por %p232, %p233
      %s236 = sadd.s32 %s235, 1
      %p239 = scmp.eq.s32.totalorder %s28, 1
      %p240 = scmp.ne.s32.totalorder %s235, %s237
      %p241 = scmp.eq.s32.totalorder %s28, 0
      %p242 = por %p240, %p241
      %p243 = scmp.ne.s32.totalorder %s235, %s237
      %p244 = scmp.eq.s32.totalorder %s33, 1
      %p245 = por %p243, %p244
      %p246 = scmp.ne.s32.totalorder %s237, %s238
      %p247 = scmp.eq.s32.totalorder %s33, 0
      %p248 = por %p246, %p247
      %p249 = scmp.ne.s32.totalorder %s237, %s238
      %p250 = scmp.eq.s32.totalorder %s34, 1
      %p251 = por %p249, %p250
      %p253 = scmp.ne.s32.totalorder %s238, %s252
      %p254 = scmp.eq.s32.totalorder %s34, 0
      %p255 = por %p253, %p254
      %s256 = ssub.s32 %s28, %s35
      %p257 = scmp.eq.s32.totalorder %s256, 0
      %s259 = sadd.s32 %s258, 1
      %s260 = scalar_select %p257, %s258, %s259
      %p263 = pneg %p257
      %p264 = scmp.eq.s32.totalorder %s28, 1
      %p265 = por %p263, %p264
      %p266 = scmp.ne.s32.totalorder %s258, %s261
      %p267 = scmp.eq.s32.totalorder %s28, 0
      %p268 = por %p266, %p267
      %p269 = scmp.ne.s32.totalorder %s258, %s261
      %p270 = scmp.eq.s32.totalorder %s33, 1
      %p271 = por %p269, %p270
      %p272 = scmp.ne.s32.totalorder %s261, %s262
      %p273 = scmp.eq.s32.totalorder %s33, 0
      %p274 = por %p272, %p273
      %p275 = scmp.ne.s32.totalorder %s261, %s262
      %p276 = scmp.eq.s32.totalorder %s34, 1
      %p277 = por %p275, %p276
      %p279 = scmp.ne.s32.totalorder %s262, %s278
      %p280 = scmp.eq.s32.totalorder %s34, 0
      %p281 = por %p279, %p280
      %p282 = scmp.le.s32.totalorder 1, %s28
      %p283 = scmp.lt.s32.totalorder %s28, 3
      %p284 = pnand %p282, %p283
      %p285 = pneg %p284
      // Predicated region
      $region9: #{tpu_custom_call.1} parent=5 // pred_check
        _
      $region10: #{tpu_custom_call.1} parent=5 // pred_check_branch
        %287 = sbr.rel (%p284) target = $region12
      $region11: #{tpu_custom_call.1} parent=5 // pred_region
        %s288 = ssub.s32 %s28, 1
        // Predicated region
        $region13: #{tpu_custom_call.1} parent=11 // pred_check
          %p289 = pneg %p101
        $region14: #{tpu_custom_call.1} parent=11 // pred_check_branch
          %291 = sbr.rel (%p289) target = $region16
        $region15: #{tpu_custom_call.1} parent=11 // pred_region
          %293 = vsyncadd [#allocation6], 0
          %s294 = sshll.u32 %s2, 4
          %s295 = int_to_ptr.hbm [resolvable:$true] %s294
          %s296 = sshll.u32 [#allocation7], 4
          %s297 = int_to_ptr.vmem [resolvable:$true] %s296
          %302 = dma.hbm_to_vmem [thread:$0]  %s295, 28672, %s297, [#allocation6], 128, 128, 8
        $region16: #{tpu_custom_call.1} parent=11 // pred_fallthru
          _
        // Predicated region
        $region17: #{tpu_custom_call.1} parent=11 // pred_check
          %p303 = pneg %p122
        $region18: #{tpu_custom_call.1} parent=11 // pred_check_branch
          %305 = sbr.rel (%p303) target = $region20
        $region19: #{tpu_custom_call.1} parent=11 // pred_region
          %307 = vsyncadd [#allocation9], 0
          %s308 = sshll.u32 %s3, 4
          %s309 = int_to_ptr.hbm [resolvable:$true] %s308
          %s310 = sshll.u32 [#allocation8], 4
          %s311 = int_to_ptr.vmem [resolvable:$true] %s310
          %316 = dma.hbm_to_vmem [thread:$0]  %s309, 224, %s311, [#allocation9], 32, 32, 2
        $region20: #{tpu_custom_call.1} parent=11 // pred_fallthru
          _
        // Predicated region
        $region21: #{tpu_custom_call.1} parent=11 // pred_check
          %p317 = pneg %p143
        $region22: #{tpu_custom_call.1} parent=11 // pred_check_branch
          %319 = sbr.rel (%p317) target = $region24
        $region23: #{tpu_custom_call.1} parent=11 // pred_region
          %321 = vsyncadd [#allocation9], 0
          %s322 = sshll.u32 %s4, 4
          %s323 = int_to_ptr.hbm [resolvable:$true] %s322
          %s324 = sshll.u32 [#allocation10], 4
          %s325 = int_to_ptr.vmem [resolvable:$true] %s324
          %330 = dma.hbm_to_vmem [thread:$0]  %s323, 28672, %s325, [#allocation9], 128, 128, 8
        $region24: #{tpu_custom_call.1} parent=11 // pred_fallthru
          _
        // Predicated region
        $region25: #{tpu_custom_call.1} parent=11 // pred_check
          %p331 = pneg %p164
        $region26: #{tpu_custom_call.1} parent=11 // pred_check_branch
          %333 = sbr.rel (%p331) target = $region28
        $region27: #{tpu_custom_call.1} parent=11 // pred_region
          %335 = vsyncadd [#allocation12], 0
          %s336 = sshll.u32 %s5, 4
          %s337 = int_to_ptr.hbm [resolvable:$true] %s336
          %s338 = sshll.u32 [#allocation11], 4
          %s339 = int_to_ptr.vmem [resolvable:$true] %s338
          %344 = dma.hbm_to_vmem [thread:$0]  %s337, 224, %s339, [#allocation12], 32, 32, 2
        $region28: #{tpu_custom_call.1} parent=11 // pred_fallthru
          _
        // Predicated region
        $region29: #{tpu_custom_call.1} parent=11 // pred_check
          %p345 = pneg %p185
        $region30: #{tpu_custom_call.1} parent=11 // pred_check_branch
          %347 = sbr.rel (%p345) target = $region32
        $region31: #{tpu_custom_call.1} parent=11 // pred_region
          %349 = vsyncadd [#allocation12], 0
          %s350 = sshll.u32 %s6, 4
          %s351 = int_to_ptr.hbm [resolvable:$true] %s350
          %s352 = sshll.u32 [#allocation13], 4
          %s353 = int_to_ptr.vmem [resolvable:$true] %s352
          %358 = dma.hbm_to_vmem [thread:$0]  %s351, 28672, %s353, [#allocation12], 128, 128, 8
        $region32: #{tpu_custom_call.1} parent=11 // pred_fallthru
          _
        // Predicated region
        $region33: #{tpu_custom_call.1} parent=11 // pred_check
          %p359 = pneg %p206
        $region34: #{tpu_custom_call.1} parent=11 // pred_check_branch
          %361 = sbr.rel (%p359) target = $region36
        $region35: #{tpu_custom_call.1} parent=11 // pred_region
          %363 = vsyncadd [#allocation15], 0
          %s364 = sshll.u32 %s7, 4
          %s365 = int_to_ptr.hbm [resolvable:$true] %s364
          %s366 = sshll.u32 [#allocation14], 4
          %s367 = int_to_ptr.vmem [resolvable:$true] %s366
          %372 = dma.hbm_to_vmem [thread:$0]  %s365, 224, %s367, [#allocation15], 32, 32, 2
        $region36: #{tpu_custom_call.1} parent=11 // pred_fallthru
          _
        // Predicated region
        $region37: #{tpu_custom_call.1} parent=11 // pred_check
          %p373 = pneg %p227
        $region38: #{tpu_custom_call.1} parent=11 // pred_check_branch
          %375 = sbr.rel (%p373) target = $region40
        $region39: #{tpu_custom_call.1} parent=11 // pred_region
          %377 = vsyncadd [#allocation15], 0
          %s378 = sshll.u32 %s8, 4
          %s379 = int_to_ptr.hbm [resolvable:$true] %s378
          %s380 = sshll.u32 [#allocation16], 4
          %s381 = int_to_ptr.vmem [resolvable:$true] %s380
          %386 = dma.hbm_to_vmem [thread:$0]  %s379, 4096, %s381, [#allocation15], 128, 128, 8
        $region40: #{tpu_custom_call.1} parent=11 // pred_fallthru
          _
        // Predicated region
        $region41: #{tpu_custom_call.1} parent=11 // pred_check
          %p387 = pneg %p248
        $region42: #{tpu_custom_call.1} parent=11 // pred_check_branch
          %389 = sbr.rel (%p387) target = $region44
        $region43: #{tpu_custom_call.1} parent=11 // pred_region
          _
        $region44: #{tpu_custom_call.1} parent=11 // pred_fallthru
          _
      $region12: #{tpu_custom_call.1} parent=5 // pred_fallthru
        _
      %p390 = scmp.lt.s32.totalorder %s28, 2
      // Predicated region
      $region45: #{tpu_custom_call.1} parent=5 // pred_check
        %p391 = pneg %p390
      $region46: #{tpu_custom_call.1} parent=5 // pred_check_branch
        %393 = sbr.rel (%p391) target = $region48
      $region47: #{tpu_custom_call.1} parent=5 // pred_region
        // Predicated region
        $region49: #{tpu_custom_call.1} parent=47 // pred_check
          %p394 = pneg %p48
        $region50: #{tpu_custom_call.1} parent=47 // pred_check_branch
          %396 = sbr.rel (%p394) target = $region52
        $region51: #{tpu_custom_call.1} parent=47 // pred_region
          %s397 = sand.u32 %s38, 1
          %s398 = scalar_lea.sflag [#allocation3], %s397
          %s399 = sand.u32 %s38, 1
          %s400 = smul.addr %s399, 64
          %s401 = scalar_lea.vmem [#allocation2], %s400
          %403 = vsyncadd %s398, 0
          %s404 = smul.addr %s28, 8
          %s405 = smul.addr %s404, 8
          %s406 = scalar_lea.hbm %s0, %s405
          %s407 = sshll.u32 %s406, 4
          %s408 = int_to_ptr.hbm [resolvable:$true] %s407
          %s409 = sshll.u32 %s401, 4
          %s410 = int_to_ptr.vmem [resolvable:$true] %s409
          %415 = dma.hbm_to_vmem [thread:$0]  %s408, 1024, %s410, %s398, 256, 256, 16
        $region52: #{tpu_custom_call.1} parent=47 // pred_fallthru
          _
        // Predicated region
        $region53: #{tpu_custom_call.1} parent=47 // pred_check
          %p416 = pneg %p74
        $region54: #{tpu_custom_call.1} parent=47 // pred_check_branch
          %418 = sbr.rel (%p416) target = $region56
        $region55: #{tpu_custom_call.1} parent=47 // pred_region
          %s419 = sand.u32 %s28, 1
          %s420 = scalar_lea.sflag [#allocation6], %s419
          %s421 = sand.u32 %s64, 1
          %s422 = smul.addr %s421, 32
          %s423 = scalar_lea.vmem [#allocation5], %s422
          %425 = vsyncadd %s420, 0
          %s426 = smul.addr %s28, 4
          %s427 = smul.addr %s426, 8
          %s428 = scalar_lea.hbm %s1, %s427
          %s429 = sshll.u32 %s428, 4
          %s430 = int_to_ptr.hbm [resolvable:$true] %s429
          %s431 = sshll.u32 %s423, 4
          %s432 = int_to_ptr.vmem [resolvable:$true] %s431
          %437 = dma.hbm_to_vmem [thread:$0]  %s430, 512, %s432, %s420, 128, 128, 8
        $region56: #{tpu_custom_call.1} parent=47 // pred_fallthru
          _
      $region48: #{tpu_custom_call.1} parent=5 // pred_fallthru
        _
      %p438 = scmp.le.s32.totalorder 1, %s28
      %p439 = scmp.lt.s32.totalorder %s28, 3
      %p440 = pnand %p438, %p439
      %p441 = pneg %p440
      // Predicated region
      $region57: #{tpu_custom_call.1} parent=5 // pred_check
        _
      $region58: #{tpu_custom_call.1} parent=5 // pred_check_branch
        %443 = sbr.rel (%p440) target = $region60
      $region59: #{tpu_custom_call.1} parent=5 // pred_region
        %s444 = ssub.s32 %s28, 1
        %s445 = sand.u32 %s41, 1
        %s446 = scalar_lea.sflag [#allocation3], %s445
        %s447 = sand.u32 %s41, 1
        %s448 = smul.addr %s447, 64
        %s449 = scalar_lea.vmem [#allocation2], %s448
        // Predicated region
        $region61: #{tpu_custom_call.1} parent=59 // pred_check
          %p450 = pneg %p54
        $region62: #{tpu_custom_call.1} parent=59 // pred_check_branch
          %452 = sbr.rel (%p450) target = $region64
        $region63: #{tpu_custom_call.1} parent=59 // pred_region
          %454 = dma.done %s446, 1024
        $region64: #{tpu_custom_call.1} parent=59 // pred_fallthru
          _
        %s455 = sand.u32 %s33, 1
        %s456 = scalar_lea.sflag [#allocation6], %s455
        %s457 = sand.u32 %s67, 1
        %s458 = smul.addr %s457, 32
        %s459 = scalar_lea.vmem [#allocation5], %s458
        // Predicated region
        $region65: #{tpu_custom_call.1} parent=59 // pred_check
          %p460 = pneg %p80
        $region66: #{tpu_custom_call.1} parent=59 // pred_check_branch
          %462 = sbr.rel (%p460) target = $region68
        $region67: #{tpu_custom_call.1} parent=59 // pred_region
          %464 = dma.done %s456, 512
        $region68: #{tpu_custom_call.1} parent=59 // pred_fallthru
          _
        // Predicated region
        $region69: #{tpu_custom_call.1} parent=59 // pred_check
          %p465 = pneg %p101
        $region70: #{tpu_custom_call.1} parent=59 // pred_check_branch
          %467 = sbr.rel (%p465) target = $region72
        $region71: #{tpu_custom_call.1} parent=59 // pred_region
          %469 = dma.done [#allocation6], 28672
        $region72: #{tpu_custom_call.1} parent=59 // pred_fallthru
          _
        // Predicated region
        $region73: #{tpu_custom_call.1} parent=59 // pred_check
          %p470 = pneg %p122
        $region74: #{tpu_custom_call.1} parent=59 // pred_check_branch
          %472 = sbr.rel (%p470) target = $region76
        $region75: #{tpu_custom_call.1} parent=59 // pred_region
          %474 = dma.done [#allocation9], 224
        $region76: #{tpu_custom_call.1} parent=59 // pred_fallthru
          _
        // Predicated region
        $region77: #{tpu_custom_call.1} parent=59 // pred_check
          %p475 = pneg %p143
        $region78: #{tpu_custom_call.1} parent=59 // pred_check_branch
          %477 = sbr.rel (%p475) target = $region80
        $region79: #{tpu_custom_call.1} parent=59 // pred_region
          %479 = dma.done [#allocation9], 28672
        $region80: #{tpu_custom_call.1} parent=59 // pred_fallthru
          _
        // Predicated region
        $region81: #{tpu_custom_call.1} parent=59 // pred_check
          %p480 = pneg %p164
        $region82: #{tpu_custom_call.1} parent=59 // pred_check_branch
          %482 = sbr.rel (%p480) target = $region84
        $region83: #{tpu_custom_call.1} parent=59 // pred_region
          %484 = dma.done [#allocation12], 224
        $region84: #{tpu_custom_call.1} parent=59 // pred_fallthru
          _
        // Predicated region
        $region85: #{tpu_custom_call.1} parent=59 // pred_check
          %p485 = pneg %p185
        $region86: #{tpu_custom_call.1} parent=59 // pred_check_branch
          %487 = sbr.rel (%p485) target = $region88
        $region87: #{tpu_custom_call.1} parent=59 // pred_region
          %489 = dma.done [#allocation12], 28672
        $region88: #{tpu_custom_call.1} parent=59 // pred_fallthru
          _
        // Predicated region
        $region89: #{tpu_custom_call.1} parent=59 // pred_check
          %p490 = pneg %p206
        $region90: #{tpu_custom_call.1} parent=59 // pred_check_branch
          %492 = sbr.rel (%p490) target = $region92
        $region91: #{tpu_custom_call.1} parent=59 // pred_region
          %494 = dma.done [#allocation15], 224
        $region92: #{tpu_custom_call.1} parent=59 // pred_fallthru
          _
        // Predicated region
        $region93: #{tpu_custom_call.1} parent=59 // pred_check
          %p495 = pneg %p227
        $region94: #{tpu_custom_call.1} parent=59 // pred_check_branch
          %497 = sbr.rel (%p495) target = $region96
        $region95: #{tpu_custom_call.1} parent=59 // pred_region
          %499 = dma.done [#allocation15], 4096
        $region96: #{tpu_custom_call.1} parent=59 // pred_fallthru
          _
        %s500 = sand.u32 %s41, 1
        %s501 = scalar_lea.sflag [#allocation3], %s500
        %s502 = sand.u32 %s41, 1
        %s503 = smul.addr %s502, 64
        %s504 = scalar_lea.vmem [#allocation2], %s503
        %p505 = pneg %p54
        %p506 = pneg %p51
        %s507 = sand.u32 %s33, 1
        %s508 = scalar_lea.sflag [#allocation6], %s507
        %s509 = sand.u32 %s67, 1
        %s510 = smul.addr %s509, 32
        %s511 = scalar_lea.vmem [#allocation5], %s510
        %p512 = pneg %p80
        %p513 = pneg %p77
        %p514 = pneg %p101
        %p515 = pneg %p98
        %p516 = pneg %p122
        %p517 = pneg %p119
        %p518 = pneg %p143
        %p519 = pneg %p140
        %p520 = pneg %p164
        %p521 = pneg %p161
        %p522 = pneg %p185
        %p523 = pneg %p182
        %p524 = pneg %p206
        %p525 = pneg %p203
        %p526 = pneg %p227
        %p527 = pneg %p224
        %p528 = pneg %p248
        %p529 = pneg %p245
        %p530 = pneg %p274
        %p531 = pneg %p271
        %s532 = sand.u32 %s261, 1
        %s533 = scalar_lea.sflag [#allocation4], %s532
        %s534 = sand.u32 %s261, 1
        %s535 = smul.addr %s534, 64
        %s536 = scalar_lea.vmem [#allocation17], %s535
        %v538 = vld [vmem:[%s449] sm:$0xff]
        %v539 = vld [vmem:[%s449 + $0x8] sm:$0xff]
        %v540 = vld [vmem:[%s449 + $0x10] sm:$0xff]
        %v541 = vld [vmem:[%s449 + $0x18] sm:$0xff]
        %v542 = vld [vmem:[%s449 + $0x20] sm:$0xff]
        %v543 = vld [vmem:[%s449 + $0x28] sm:$0xff]
        %v544 = vld [vmem:[%s449 + $0x30] sm:$0xff]
        %v545 = vld [vmem:[%s449 + $0x38] sm:$0xff]
        %v546 = vld [vmem:[%s459] sm:$0xff]
        %v547 = vld [vmem:[%s459 + $0x8] sm:$0xff]
        %v548 = vld [vmem:[%s459 + $0x10] sm:$0xff]
        %v549 = vld [vmem:[%s459 + $0x18] sm:$0xff]
        %v550 = vlaneseq
        %v551 = vshrl.u32 %v550, 7
        %v552 = vadd.s32 %v551, 8
        %v553 = vadd.s32 %v551, 16
        %v554 = vadd.s32 %v551, 24
        %v555 = vlaneseq
        %v556 = vand.u32 %v555, 127
        %vm557 = vcmp.eq.s32.totalorder %v551, %v556
        %vm558 = vcmp.eq.s32.totalorder %v552, %v556
        %vm559 = vcmp.eq.s32.totalorder %v553, %v556
        %vm560 = vcmp.eq.s32.totalorder %v554, %v556
        %v561 = vsel %vm557, 1, 0
        %v562 = vsel %vm558, 1, 0
        %v563 = vsel %vm559, 1, 0
        %v564 = vsel %vm560, 1, 0
        %v565 = vcvt.s32.f32 %v561
        %v566 = vcvt.s32.f32 %v562
        %v567 = vcvt.s32.f32 %v563
        %v568 = vcvt.s32.f32 %v564
        %v569 = vpack.c.bf16 %v540, %v538
        %v570 = vpack.c.bf16 %v541, %v539
        %v571 = vpack.c.bf16 %v544, %v542
        %v572 = vpack.c.bf16 %v545, %v543
        %v573 = vld [vmem:[#allocation7] sm:$0xff]
        %v574 = vld [vmem:[#allocation7 + $0x8] sm:$0xff]
        %v575 = vld [vmem:[#allocation7 + $0x10] sm:$0xff]
        %v576 = vld [vmem:[#allocation7 + $0x18] sm:$0xff]
        %v577 = vld [vmem:[#allocation7 + $0x20] sm:$0xff]
        %v578 = vld [vmem:[#allocation7 + $0x28] sm:$0xff]
        %v579 = vld [vmem:[#allocation7 + $0x30] sm:$0xff]
        %v580 = vld [vmem:[#allocation7 + $0x38] sm:$0xff]
        %v581 = vld [vmem:[#allocation7 + $0x40] sm:$0xff]
        %v582 = vld [vmem:[#allocation7 + $0x48] sm:$0xff]
        %v583 = vld [vmem:[#allocation7 + $0x50] sm:$0xff]
        %v584 = vld [vmem:[#allocation7 + $0x58] sm:$0xff]
        %v585 = vld [vmem:[#allocation7 + $0x60] sm:$0xff]
        %v586 = vld [vmem:[#allocation7 + $0x68] sm:$0xff]
        %v587 = vld [vmem:[#allocation7 + $0x70] sm:$0xff]
        %v588 = vld [vmem:[#allocation7 + $0x78] sm:$0xff]
        %v589 = vld [vmem:[#allocation7 + $0x80] sm:$0xff]
        %v590 = vld [vmem:[#allocation7 + $0x88] sm:$0xff]
        %v591 = vld [vmem:[#allocation7 + $0x90] sm:$0xff]
        %v592 = vld [vmem:[#allocation7 + $0x98] sm:$0xff]
        %v593 = vld [vmem:[#allocation7 + $0xa0] sm:$0xff]
        %v594 = vld [vmem:[#allocation7 + $0xa8] sm:$0xff]
        %v595 = vld [vmem:[#allocation7 + $0xb0] sm:$0xff]
        %v596 = vld [vmem:[#allocation7 + $0xb8] sm:$0xff]
        %v597 = vld [vmem:[#allocation7 + $0xc0] sm:$0xff]
        %v598 = vld [vmem:[#allocation7 + $0xc8] sm:$0xff]
        %v599 = vld [vmem:[#allocation7 + $0xd0] sm:$0xff]
        %v600 = vld [vmem:[#allocation7 + $0xd8] sm:$0xff]
        %v601 = vld [vmem:[#allocation7 + $0xe0] sm:$0xff]
        %v602 = vld [vmem:[#allocation7 + $0xe8] sm:$0xff]
        %v603 = vld [vmem:[#allocation7 + $0xf0] sm:$0xff]
        %v604 = vld [vmem:[#allocation7 + $0xf8] sm:$0xff]
        %v605 = vld [vmem:[#allocation8] sm:$0x3]
        %v607 = vperm.slane %v605, 0
        %v608 = vperm.slane %v605, 1
        %v643 = vunpack.c.l.b16 %v573
        %v644 = vunpack.c.h.b16 %v573
        %v645 = vunpack.c.l.b16 %v574
        %v646 = vunpack.c.h.b16 %v574
        %v647 = vunpack.c.l.b16 %v575
        %v648 = vunpack.c.h.b16 %v575
        %v649 = vunpack.c.l.b16 %v576
        %v650 = vunpack.c.h.b16 %v576
        %v651 = vunpack.c.l.b16 %v577
        %v652 = vunpack.c.h.b16 %v577
        %v653 = vunpack.c.l.b16 %v578
        %v654 = vunpack.c.h.b16 %v578
        %v655 = vunpack.c.l.b16 %v579
        %v656 = vunpack.c.h.b16 %v579
        %v657 = vunpack.c.l.b16 %v580
        %v658 = vunpack.c.h.b16 %v580
        %v659 = vunpack.c.l.b16 %v581
        %v660 = vunpack.c.h.b16 %v581
        %v661 = vunpack.c.l.b16 %v582
        %v662 = vunpack.c.h.b16 %v582
        %v663 = vunpack.c.l.b16 %v583
        %v664 = vunpack.c.h.b16 %v583
        %v665 = vunpack.c.l.b16 %v584
        %v666 = vunpack.c.h.b16 %v584
        %v667 = vunpack.c.l.b16 %v585
        %v668 = vunpack.c.h.b16 %v585
        %v669 = vunpack.c.l.b16 %v586
        %v670 = vunpack.c.h.b16 %v586
        %v671 = vunpack.c.l.b16 %v587
        %v672 = vunpack.c.h.b16 %v587
        %v673 = vunpack.c.l.b16 %v588
        %v674 = vunpack.c.h.b16 %v588
        %v675 = vunpack.c.l.b16 %v589
        %v676 = vunpack.c.h.b16 %v589
        %v677 = vunpack.c.l.b16 %v590
        %v678 = vunpack.c.h.b16 %v590
        %v679 = vunpack.c.l.b16 %v591
        %v680 = vunpack.c.h.b16 %v591
        %v681 = vunpack.c.l.b16 %v592
        %v682 = vunpack.c.h.b16 %v592
        %v683 = vunpack.c.l.b16 %v593
        %v684 = vunpack.c.h.b16 %v593
        %v685 = vunpack.c.l.b16 %v594
        %v686 = vunpack.c.h.b16 %v594
        %v687 = vunpack.c.l.b16 %v595
        %v688 = vunpack.c.h.b16 %v595
        %v689 = vunpack.c.l.b16 %v596
        %v690 = vunpack.c.h.b16 %v596
        %v691 = vunpack.c.l.b16 %v597
        %v692 = vunpack.c.h.b16 %v597
        %v693 = vunpack.c.l.b16 %v598
        %v694 = vunpack.c.h.b16 %v598
        %v695 = vunpack.c.l.b16 %v599
        %v696 = vunpack.c.h.b16 %v599
        %v697 = vunpack.c.l.b16 %v600
        %v698 = vunpack.c.h.b16 %v600
        %v699 = vunpack.c.l.b16 %v601
        %v700 = vunpack.c.h.b16 %v601
        %v701 = vunpack.c.l.b16 %v602
        %v702 = vunpack.c.h.b16 %v602
        %v703 = vunpack.c.l.b16 %v603
        %v704 = vunpack.c.h.b16 %v603
        %v705 = vunpack.c.l.b16 %v604
        %v706 = vunpack.c.h.b16 %v604
        %v707 = vpack.c.b16 %v645, %v643
        %v708 = vpack.c.b16 %v646, %v644
        %v709 = vpack.c.b16 %v649, %v647
        %v710 = vpack.c.b16 %v650, %v648
        %v711 = vpack.c.b16 %v653, %v651
        %v712 = vpack.c.b16 %v654, %v652
        %v713 = vpack.c.b16 %v657, %v655
        %v714 = vpack.c.b16 %v658, %v656
        %v715 = vpack.c.b16 %v661, %v659
        %v716 = vpack.c.b16 %v662, %v660
        %v717 = vpack.c.b16 %v665, %v663
        %v718 = vpack.c.b16 %v666, %v664
        %v719 = vpack.c.b16 %v669, %v667
        %v720 = vpack.c.b16 %v670, %v668
        %v721 = vpack.c.b16 %v673, %v671
        %v722 = vpack.c.b16 %v674, %v672
        %v723 = vpack.c.b16 %v677, %v675
        %v724 = vpack.c.b16 %v678, %v676
        %v725 = vpack.c.b16 %v681, %v679
        %v726 = vpack.c.b16 %v682, %v680
        %v727 = vpack.c.b16 %v685, %v683
        %v728 = vpack.c.b16 %v686, %v684
        %v729 = vpack.c.b16 %v689, %v687
        %v730 = vpack.c.b16 %v690, %v688
        %v731 = vpack.c.b16 %v693, %v691
        %v732 = vpack.c.b16 %v694, %v692
        %v733 = vpack.c.b16 %v697, %v695
        %v734 = vpack.c.b16 %v698, %v696
        %v735 = vpack.c.b16 %v701, %v699
        %v736 = vpack.c.b16 %v702, %v700
        %v737 = vpack.c.b16 %v705, %v703
        %v738 = vpack.c.b16 %v706, %v704
        %771 = vmatpush.bf16.msra.mxu0 %v721
        %772 = vmatpush.bf16.msra.mxu0 %v719
        %773 = vmatpush.bf16.msra.mxu0 %v717
        %774 = vmatpush.bf16.msra.mxu0 %v715
        %775 = vmatpush.bf16.msra.mxu0 %v713
        %776 = vmatpush.bf16.msra.mxu0 %v711
        %777 = vmatpush.bf16.msra.mxu0 %v709
        %778 = vmatpush.bf16.msra.mxu0 %v707
        %779 = vmatmul.bf16.gmra.mxu0 %v569
        %v780 = vpop.f32.mrf.mxu0
        %v781 = vadd.f32 %v607, %v780
        %v782 = vpop.f32.mrf.mxu0
        %v783 = vadd.f32 %v607, %v782
        %784 = vmatmul.bf16.gmra.mxu0 %v571
        %v785 = vpop.f32.mrf.mxu0
        %v786 = vadd.f32 %v607, %v785
        %v787 = vpop.f32.mrf.mxu0
        %v788 = vadd.f32 %v607, %v787
        %789 = vdwg.mxu0
        %790 = vmatpush.bf16.msra.mxu0 %v737
        %791 = vmatpush.bf16.msra.mxu0 %v735
        %792 = vmatpush.bf16.msra.mxu0 %v733
        %793 = vmatpush.bf16.msra.mxu0 %v731
        %794 = vmatpush.bf16.msra.mxu0 %v729
        %795 = vmatpush.bf16.msra.mxu0 %v727
        %796 = vmatpush.bf16.msra.mxu0 %v725
        %797 = vmatpush.bf16.msra.mxu0 %v723
        %798 = vmatmul.bf16.gmra.mxu0 %v570
        %v799 = vpop.f32.mrf.mxu0
        %v800 = vadd.f32 %v781, %v799
        %v801 = vpop.f32.mrf.mxu0
        %v802 = vadd.f32 %v783, %v801
        %803 = vmatmul.bf16.gmra.mxu0 %v572
        %v804 = vpop.f32.mrf.mxu0
        %v805 = vadd.f32 %v786, %v804
        %v806 = vpop.f32.mrf.mxu0
        %v807 = vadd.f32 %v788, %v806
        %808 = vdwg.mxu0
        %809 = vmatpush.bf16.msra.mxu0 %v722
        %810 = vmatpush.bf16.msra.mxu0 %v720
        %811 = vmatpush.bf16.msra.mxu0 %v718
        %812 = vmatpush.bf16.msra.mxu0 %v716
        %813 = vmatpush.bf16.msra.mxu0 %v714
        %814 = vmatpush.bf16.msra.mxu0 %v712
        %815 = vmatpush.bf16.msra.mxu0 %v710
        %816 = vmatpush.bf16.msra.mxu0 %v708
        %817 = vmatmul.bf16.gmra.mxu0 %v569
        %v818 = vpop.f32.mrf.mxu0
        %v819 = vadd.f32 %v608, %v818
        %v820 = vpop.f32.mrf.mxu0
        %v821 = vadd.f32 %v608, %v820
        %822 = vmatmul.bf16.gmra.mxu0 %v571
        %v823 = vpop.f32.mrf.mxu0
        %v824 = vadd.f32 %v608, %v823
        %v825 = vpop.f32.mrf.mxu0
        %v826 = vadd.f32 %v608, %v825
        %827 = vdwg.mxu0
        %828 = vmatpush.bf16.msra.mxu0 %v738
        %829 = vmatpush.bf16.msra.mxu0 %v736
        %830 = vmatpush.bf16.msra.mxu0 %v734
        %831 = vmatpush.bf16.msra.mxu0 %v732
        %832 = vmatpush.bf16.msra.mxu0 %v730
        %833 = vmatpush.bf16.msra.mxu0 %v728
        %834 = vmatpush.bf16.msra.mxu0 %v726
        %835 = vmatpush.bf16.msra.mxu0 %v724
        %836 = vmatmul.bf16.gmra.mxu0 %v570
        %v837 = vpop.f32.mrf.mxu0
        %v838 = vadd.f32 %v819, %v837
        %v839 = vpop.f32.mrf.mxu0
        %v840 = vadd.f32 %v821, %v839
        %841 = vmatmul.bf16.gmra.mxu0 %v572
        %v842 = vpop.f32.mrf.mxu0
        %v843 = vadd.f32 %v824, %v842
        %v844 = vpop.f32.mrf.mxu0
        %v845 = vadd.f32 %v826, %v844
        %846 = vdwg.mxu0
        %v847 = vpack.c.bf16 %v802, %v800
        %v848 = vpack.c.bf16 %v840, %v838
        %v849 = vpack.c.bf16 %v807, %v805
        %v850 = vpack.c.bf16 %v845, %v843
        %851 = vmatpush.bf16.xpose.msra.mxu0 0
        %852 = vmatpush.bf16.xpose.msra.mxu0 0
        %853 = vmatpush.bf16.xpose.msra.mxu0 0
        %854 = vmatpush.bf16.xpose.msra.mxu0 0
        %855 = vmatpush.bf16.xpose.msra.mxu0 0
        %856 = vmatpush.bf16.xpose.msra.mxu0 0
        %857 = vmatpush.bf16.xpose.msra.mxu0 %v571
        %858 = vmatpush.bf16.xpose.msra.mxu0 %v569
        %859 = vmatmul.bf16.gmra.mxu0 %v847
        %v860 = vpop.f32.mrf.mxu0
        %v861 = vadd.f32 0.0, %v860
        %v862 = vpop.f32.mrf.mxu0
        %v863 = vadd.f32 0.0, %v862
        %864 = vmatmul.bf16.gmra.mxu0 %v849
        %v865 = vpop.f32.mrf.mxu0
        %v866 = vadd.f32 0.0, %v865
        %v867 = vpop.f32.mrf.mxu0
        %v868 = vadd.f32 0.0, %v867
        %869 = vdwg.mxu0
        %870 = vmatpush.bf16.xpose.msra.mxu0 0
        %871 = vmatpush.bf16.xpose.msra.mxu0 0
        %872 = vmatpush.bf16.xpose.msra.mxu0 0
        %873 = vmatpush.bf16.xpose.msra.mxu0 0
        %874 = vmatpush.bf16.xpose.msra.mxu0 0
        %875 = vmatpush.bf16.xpose.msra.mxu0 0
        %876 = vmatpush.bf16.xpose.msra.mxu0 %v572
        %877 = vmatpush.bf16.xpose.msra.mxu0 %v570
        %878 = vmatmul.bf16.gmra.mxu0 %v848
        %v879 = vpop.f32.mrf.mxu0
        %v880 = vadd.f32 %v861, %v879
        %v881 = vpop.f32.mrf.mxu0
        %v882 = vadd.f32 %v863, %v881
        %883 = vmatmul.bf16.gmra.mxu0 %v850
        %v884 = vpop.f32.mrf.mxu0
        %v885 = vadd.f32 %v866, %v884
        %v886 = vpop.f32.mrf.mxu0
        %v887 = vadd.f32 %v868, %v886
        %888 = vdwg.mxu0
        %vm889 = vcmask 261120
        %v890 = vsel %vm889, %v880, -inf
        %891 = vmax.xlane.f32.xlu0 %v890
        %v892 = vpop.xlane.xlu0 %891
        %v893 = vsel %vm889, %v882, -inf
        %894 = vmax.xlane.f32.xlu0 %v893
        %v895 = vpop.xlane.xlu0 %894
        %v896 = vsel %vm889, %v885, -inf
        %897 = vmax.xlane.f32.xlu0 %v896
        %v898 = vpop.xlane.xlu0 %897
        %v899 = vsel %vm889, %v887, -inf
        %900 = vmax.xlane.f32.xlu0 %v899
        %v901 = vpop.xlane.xlu0 %900
        %v902 = vsub.f32 %v880, %v892
        %v903 = vsub.f32 %v882, %v895
        %v904 = vsub.f32 %v885, %v898
        %v905 = vsub.f32 %v887, %v901
        %v906 = vmul.f32 %v902, 1.442695
        %v907 = vpow.pop %v906
        %v908 = vmul.f32 %v903, 1.442695
        %v909 = vpow.pop %v908
        %v910 = vmul.f32 %v904, 1.442695
        %v911 = vpow.pop %v910
        %v912 = vmul.f32 %v905, 1.442695
        %v913 = vpow.pop %v912
        %v914 = vsub.f32 0.0, %v892
        %v915 = vsub.f32 0.0, %v895
        %v916 = vsub.f32 0.0, %v898
        %v917 = vsub.f32 0.0, %v901
        %v918 = vmul.f32 %v914, 1.442695
        %v919 = vpow.pop %v918
        %v920 = vmul.f32 %v915, 1.442695
        %v921 = vpow.pop %v920
        %v922 = vmul.f32 %v916, 1.442695
        %v923 = vpow.pop %v922
        %v924 = vmul.f32 %v917, 1.442695
        %v925 = vpow.pop %v924
        %v926 = vmul.f32 %v919, 1e-05
        %v927 = vmul.f32 %v921, 1e-05
        %v928 = vmul.f32 %v923, 1e-05
        %v929 = vmul.f32 %v925, 1e-05
        %v930 = vmul.f32 %v926, %v565
        %v931 = vmul.f32 %v927, %v566
        %v932 = vmul.f32 %v928, %v567
        %v933 = vmul.f32 %v929, %v568
        %v934 = vadd.f32 %v907, %v930
        %v935 = vadd.f32 %v909, %v931
        %v936 = vadd.f32 %v911, %v932
        %v937 = vadd.f32 %v913, %v933
        %v938 = vmul.f32 %v934, %v546
        %v939 = vmul.f32 %v935, %v547
        %v940 = vmul.f32 %v936, %v548
        %v941 = vmul.f32 %v937, %v549
        %v942 = vsel %vm889, %v938, 0.0
        %943 = vadd.xlane.f32.xlu0 %v942
        %v944 = vpop.xlane.xlu0 %943
        %v945 = vsel %vm889, %v939, 0.0
        %946 = vadd.xlane.f32.xlu0 %v945
        %v947 = vpop.xlane.xlu0 %946
        %v948 = vsel %vm889, %v940, 0.0
        %949 = vadd.xlane.f32.xlu0 %v948
        %v950 = vpop.xlane.xlu0 %949
        %v951 = vsel %vm889, %v941, 0.0
        %952 = vadd.xlane.f32.xlu0 %v951
        %v953 = vpop.xlane.xlu0 %952
        %v954 = vrcp.pop %v944
        %v955 = vrcp.pop %v947
        %v956 = vrcp.pop %v950
        %v957 = vrcp.pop %v953
        %v958 = vmul.f32 %v938, %v954
        %v959 = vmul.f32 %v939, %v955
        %v960 = vmul.f32 %v940, %v956
        %v961 = vmul.f32 %v941, %v957
        %v962 = vpack.c.bf16 %v959, %v958
        %v963 = vpack.c.bf16 %v961, %v960
        %v965 = vsel %vm889, %v962, 0
        %v968 = vsel %vm889, %v963, 0
        %970 = vmatpush.bf16.msra.mxu0 0
        %971 = vmatpush.bf16.msra.mxu0 0
        %972 = vmatpush.bf16.msra.mxu0 0
        %973 = vmatpush.bf16.msra.mxu0 0
        %974 = vmatpush.bf16.msra.mxu0 0
        %975 = vmatpush.bf16.msra.mxu0 0
        %976 = vmatpush.bf16.msra.mxu0 %v571
        %977 = vmatpush.bf16.msra.mxu0 %v569
        %978 = vmatmul.bf16.gmra.mxu0 %v965
        %v979 = vpop.f32.mrf.mxu0
        %v980 = vadd.f32 0.0, %v979
        %v981 = vpop.f32.mrf.mxu0
        %v982 = vadd.f32 0.0, %v981
        %983 = vmatmul.bf16.gmra.mxu0 %v968
        %v984 = vpop.f32.mrf.mxu0
        %v985 = vadd.f32 0.0, %v984
        %v986 = vpop.f32.mrf.mxu0
        %v987 = vadd.f32 0.0, %v986
        %988 = vdwg.mxu0
        %989 = vmatpush.bf16.msra.mxu0 0
        %990 = vmatpush.bf16.msra.mxu0 0
        %991 = vmatpush.bf16.msra.mxu0 0
        %992 = vmatpush.bf16.msra.mxu0 0
        %993 = vmatpush.bf16.msra.mxu0 0
        %994 = vmatpush.bf16.msra.mxu0 0
        %995 = vmatpush.bf16.msra.mxu0 %v572
        %996 = vmatpush.bf16.msra.mxu0 %v570
        %997 = vmatmul.bf16.gmra.mxu0 %v965
        %v998 = vpop.f32.mrf.mxu0
        %v999 = vadd.f32 0.0, %v998
        %v1000 = vpop.f32.mrf.mxu0
        %v1001 = vadd.f32 0.0, %v1000
        %1002 = vmatmul.bf16.gmra.mxu0 %v968
        %v1003 = vpop.f32.mrf.mxu0
        %v1004 = vadd.f32 0.0, %v1003
        %v1005 = vpop.f32.mrf.mxu0
        %v1006 = vadd.f32 0.0, %v1005
        %1007 = vdwg.mxu0
        %v1008 = vpack.c.bf16 %v982, %v980
        %v1009 = vpack.c.bf16 %v1001, %v999
        %v1010 = vpack.c.bf16 %v987, %v985
        %v1011 = vpack.c.bf16 %v1006, %v1004
        %v1012 = vld [vmem:[#allocation10] sm:$0xff]
        %v1013 = vld [vmem:[#allocation10 + $0x8] sm:$0xff]
        %v1014 = vld [vmem:[#allocation10 + $0x10] sm:$0xff]
        %v1015 = vld [vmem:[#allocation10 + $0x18] sm:$0xff]
        %v1016 = vld [vmem:[#allocation10 + $0x20] sm:$0xff]
        %v1017 = vld [vmem:[#allocation10 + $0x28] sm:$0xff]
        %v1018 = vld [vmem:[#allocation10 + $0x30] sm:$0xff]
        %v1019 = vld [vmem:[#allocation10 + $0x38] sm:$0xff]
        %v1020 = vld [vmem:[#allocation10 + $0x40] sm:$0xff]
        %v1021 = vld [vmem:[#allocation10 + $0x48] sm:$0xff]
        %v1022 = vld [vmem:[#allocation10 + $0x50] sm:$0xff]
        %v1023 = vld [vmem:[#allocation10 + $0x58] sm:$0xff]
        %v1024 = vld [vmem:[#allocation10 + $0x60] sm:$0xff]
        %v1025 = vld [vmem:[#allocation10 + $0x68] sm:$0xff]
        %v1026 = vld [vmem:[#allocation10 + $0x70] sm:$0xff]
        %v1027 = vld [vmem:[#allocation10 + $0x78] sm:$0xff]
        %v1028 = vld [vmem:[#allocation10 + $0x80] sm:$0xff]
        %v1029 = vld [vmem:[#allocation10 + $0x88] sm:$0xff]
        %v1030 = vld [vmem:[#allocation10 + $0x90] sm:$0xff]
        %v1031 = vld [vmem:[#allocation10 + $0x98] sm:$0xff]
        %v1032 = vld [vmem:[#allocation10 + $0xa0] sm:$0xff]
        %v1033 = vld [vmem:[#allocation10 + $0xa8] sm:$0xff]
        %v1034 = vld [vmem:[#allocation10 + $0xb0] sm:$0xff]
        %v1035 = vld [vmem:[#allocation10 + $0xb8] sm:$0xff]
        %v1036 = vld [vmem:[#allocation10 + $0xc0] sm:$0xff]
        %v1037 = vld [vmem:[#allocation10 + $0xc8] sm:$0xff]
        %v1038 = vld [vmem:[#allocation10 + $0xd0] sm:$0xff]
        %v1039 = vld [vmem:[#allocation10 + $0xd8] sm:$0xff]
        %v1040 = vld [vmem:[#allocation10 + $0xe0] sm:$0xff]
        %v1041 = vld [vmem:[#allocation10 + $0xe8] sm:$0xff]
        %v1042 = vld [vmem:[#allocation10 + $0xf0] sm:$0xff]
        %v1043 = vld [vmem:[#allocation10 + $0xf8] sm:$0xff]
        %v1044 = vld [vmem:[#allocation11] sm:$0x3]
        %v1046 = vperm.slane %v1044, 0
        %v1047 = vperm.slane %v1044, 1
        %v1082 = vunpack.c.l.b16 %v1012
        %v1083 = vunpack.c.h.b16 %v1012
        %v1084 = vunpack.c.l.b16 %v1013
        %v1085 = vunpack.c.h.b16 %v1013
        %v1086 = vunpack.c.l.b16 %v1014
        %v1087 = vunpack.c.h.b16 %v1014
        %v1088 = vunpack.c.l.b16 %v1015
        %v1089 = vunpack.c.h.b16 %v1015
        %v1090 = vunpack.c.l.b16 %v1016
        %v1091 = vunpack.c.h.b16 %v1016
        %v1092 = vunpack.c.l.b16 %v1017
        %v1093 = vunpack.c.h.b16 %v1017
        %v1094 = vunpack.c.l.b16 %v1018
        %v1095 = vunpack.c.h.b16 %v1018
        %v1096 = vunpack.c.l.b16 %v1019
        %v1097 = vunpack.c.h.b16 %v1019
        %v1098 = vunpack.c.l.b16 %v1020
        %v1099 = vunpack.c.h.b16 %v1020
        %v1100 = vunpack.c.l.b16 %v1021
        %v1101 = vunpack.c.h.b16 %v1021
        %v1102 = vunpack.c.l.b16 %v1022
        %v1103 = vunpack.c.h.b16 %v1022
        %v1104 = vunpack.c.l.b16 %v1023
        %v1105 = vunpack.c.h.b16 %v1023
        %v1106 = vunpack.c.l.b16 %v1024
        %v1107 = vunpack.c.h.b16 %v1024
        %v1108 = vunpack.c.l.b16 %v1025
        %v1109 = vunpack.c.h.b16 %v1025
        %v1110 = vunpack.c.l.b16 %v1026
        %v1111 = vunpack.c.h.b16 %v1026
        %v1112 = vunpack.c.l.b16 %v1027
        %v1113 = vunpack.c.h.b16 %v1027
        %v1114 = vunpack.c.l.b16 %v1028
        %v1115 = vunpack.c.h.b16 %v1028
        %v1116 = vunpack.c.l.b16 %v1029
        %v1117 = vunpack.c.h.b16 %v1029
        %v1118 = vunpack.c.l.b16 %v1030
        %v1119 = vunpack.c.h.b16 %v1030
        %v1120 = vunpack.c.l.b16 %v1031
        %v1121 = vunpack.c.h.b16 %v1031
        %v1122 = vunpack.c.l.b16 %v1032
        %v1123 = vunpack.c.h.b16 %v1032
        %v1124 = vunpack.c.l.b16 %v1033
        %v1125 = vunpack.c.h.b16 %v1033
        %v1126 = vunpack.c.l.b16 %v1034
        %v1127 = vunpack.c.h.b16 %v1034
        %v1128 = vunpack.c.l.b16 %v1035
        %v1129 = vunpack.c.h.b16 %v1035
        %v1130 = vunpack.c.l.b16 %v1036
        %v1131 = vunpack.c.h.b16 %v1036
        %v1132 = vunpack.c.l.b16 %v1037
        %v1133 = vunpack.c.h.b16 %v1037
        %v1134 = vunpack.c.l.b16 %v1038
        %v1135 = vunpack.c.h.b16 %v1038
        %v1136 = vunpack.c.l.b16 %v1039
        %v1137 = vunpack.c.h.b16 %v1039
        %v1138 = vunpack.c.l.b16 %v1040
        %v1139 = vunpack.c.h.b16 %v1040
        %v1140 = vunpack.c.l.b16 %v1041
        %v1141 = vunpack.c.h.b16 %v1041
        %v1142 = vunpack.c.l.b16 %v1042
        %v1143 = vunpack.c.h.b16 %v1042
        %v1144 = vunpack.c.l.b16 %v1043
        %v1145 = vunpack.c.h.b16 %v1043
        %v1146 = vpack.c.b16 %v1084, %v1082
        %v1147 = vpack.c.b16 %v1085, %v1083
        %v1148 = vpack.c.b16 %v1088, %v1086
        %v1149 = vpack.c.b16 %v1089, %v1087
        %v1150 = vpack.c.b16 %v1092, %v1090
        %v1151 = vpack.c.b16 %v1093, %v1091
        %v1152 = vpack.c.b16 %v1096, %v1094
        %v1153 = vpack.c.b16 %v1097, %v1095
        %v1154 = vpack.c.b16 %v1100, %v1098
        %v1155 = vpack.c.b16 %v1101, %v1099
        %v1156 = vpack.c.b16 %v1104, %v1102
        %v1157 = vpack.c.b16 %v1105, %v1103
        %v1158 = vpack.c.b16 %v1108, %v1106
        %v1159 = vpack.c.b16 %v1109, %v1107
        %v1160 = vpack.c.b16 %v1112, %v1110
        %v1161 = vpack.c.b16 %v1113, %v1111
        %v1162 = vpack.c.b16 %v1116, %v1114
        %v1163 = vpack.c.b16 %v1117, %v1115
        %v1164 = vpack.c.b16 %v1120, %v1118
        %v1165 = vpack.c.b16 %v1121, %v1119
        %v1166 = vpack.c.b16 %v1124, %v1122
        %v1167 = vpack.c.b16 %v1125, %v1123
        %v1168 = vpack.c.b16 %v1128, %v1126
        %v1169 = vpack.c.b16 %v1129, %v1127
        %v1170 = vpack.c.b16 %v1132, %v1130
        %v1171 = vpack.c.b16 %v1133, %v1131
        %v1172 = vpack.c.b16 %v1136, %v1134
        %v1173 = vpack.c.b16 %v1137, %v1135
        %v1174 = vpack.c.b16 %v1140, %v1138
        %v1175 = vpack.c.b16 %v1141, %v1139
        %v1176 = vpack.c.b16 %v1144, %v1142
        %v1177 = vpack.c.b16 %v1145, %v1143
        %1210 = vmatpush.bf16.msra.mxu0 %v1160
        %1211 = vmatpush.bf16.msra.mxu0 %v1158
        %1212 = vmatpush.bf16.msra.mxu0 %v1156
        %1213 = vmatpush.bf16.msra.mxu0 %v1154
        %1214 = vmatpush.bf16.msra.mxu0 %v1152
        %1215 = vmatpush.bf16.msra.mxu0 %v1150
        %1216 = vmatpush.bf16.msra.mxu0 %v1148
        %1217 = vmatpush.bf16.msra.mxu0 %v1146
        %1218 = vmatmul.bf16.gmra.mxu0 %v1008
        %v1219 = vpop.f32.mrf.mxu0
        %v1220 = vadd.f32 %v1046, %v1219
        %v1221 = vpop.f32.mrf.mxu0
        %v1222 = vadd.f32 %v1046, %v1221
        %1223 = vmatmul.bf16.gmra.mxu0 %v1010
        %v1224 = vpop.f32.mrf.mxu0
        %v1225 = vadd.f32 %v1046, %v1224
        %v1226 = vpop.f32.mrf.mxu0
        %v1227 = vadd.f32 %v1046, %v1226
        %1228 = vdwg.mxu0
        %1229 = vmatpush.bf16.msra.mxu0 %v1176
        %1230 = vmatpush.bf16.msra.mxu0 %v1174
        %1231 = vmatpush.bf16.msra.mxu0 %v1172
        %1232 = vmatpush.bf16.msra.mxu0 %v1170
        %1233 = vmatpush.bf16.msra.mxu0 %v1168
        %1234 = vmatpush.bf16.msra.mxu0 %v1166
        %1235 = vmatpush.bf16.msra.mxu0 %v1164
        %1236 = vmatpush.bf16.msra.mxu0 %v1162
        %1237 = vmatmul.bf16.gmra.mxu0 %v1009
        %v1238 = vpop.f32.mrf.mxu0
        %v1239 = vadd.f32 %v1220, %v1238
        %v1240 = vpop.f32.mrf.mxu0
        %v1241 = vadd.f32 %v1222, %v1240
        %1242 = vmatmul.bf16.gmra.mxu0 %v1011
        %v1243 = vpop.f32.mrf.mxu0
        %v1244 = vadd.f32 %v1225, %v1243
        %v1245 = vpop.f32.mrf.mxu0
        %v1246 = vadd.f32 %v1227, %v1245
        %1247 = vdwg.mxu0
        %1248 = vmatpush.bf16.msra.mxu0 %v1161
        %1249 = vmatpush.bf16.msra.mxu0 %v1159
        %1250 = vmatpush.bf16.msra.mxu0 %v1157
        %1251 = vmatpush.bf16.msra.mxu0 %v1155
        %1252 = vmatpush.bf16.msra.mxu0 %v1153
        %1253 = vmatpush.bf16.msra.mxu0 %v1151
        %1254 = vmatpush.bf16.msra.mxu0 %v1149
        %1255 = vmatpush.bf16.msra.mxu0 %v1147
        %1256 = vmatmul.bf16.gmra.mxu0 %v1008
        %v1257 = vpop.f32.mrf.mxu0
        %v1258 = vadd.f32 %v1047, %v1257
        %v1259 = vpop.f32.mrf.mxu0
        %v1260 = vadd.f32 %v1047, %v1259
        %1261 = vmatmul.bf16.gmra.mxu0 %v1010
        %v1262 = vpop.f32.mrf.mxu0
        %v1263 = vadd.f32 %v1047, %v1262
        %v1264 = vpop.f32.mrf.mxu0
        %v1265 = vadd.f32 %v1047, %v1264
        %1266 = vdwg.mxu0
        %1267 = vmatpush.bf16.msra.mxu0 %v1177
        %1268 = vmatpush.bf16.msra.mxu0 %v1175
        %1269 = vmatpush.bf16.msra.mxu0 %v1173
        %1270 = vmatpush.bf16.msra.mxu0 %v1171
        %1271 = vmatpush.bf16.msra.mxu0 %v1169
        %1272 = vmatpush.bf16.msra.mxu0 %v1167
        %1273 = vmatpush.bf16.msra.mxu0 %v1165
        %1274 = vmatpush.bf16.msra.mxu0 %v1163
        %1275 = vmatmul.bf16.gmra.mxu0 %v1009
        %v1276 = vpop.f32.mrf.mxu0
        %v1277 = vadd.f32 %v1258, %v1276
        %v1278 = vpop.f32.mrf.mxu0
        %v1279 = vadd.f32 %v1260, %v1278
        %1280 = vmatmul.bf16.gmra.mxu0 %v1011
        %v1281 = vpop.f32.mrf.mxu0
        %v1282 = vadd.f32 %v1263, %v1281
        %v1283 = vpop.f32.mrf.mxu0
        %v1284 = vadd.f32 %v1265, %v1283
        %1285 = vdwg.mxu0
        %v1286 = vmax.f32 %v1239, 0.0
        %v1287 = vmax.f32 %v1277, 0.0
        %v1288 = vmax.f32 %v1241, 0.0
        %v1289 = vmax.f32 %v1279, 0.0
        %v1290 = vmax.f32 %v1244, 0.0
        %v1291 = vmax.f32 %v1282, 0.0
        %v1292 = vmax.f32 %v1246, 0.0
        %v1293 = vmax.f32 %v1284, 0.0
        %v1294 = vpack.c.bf16 %v1288, %v1286
        %v1295 = vpack.c.bf16 %v1289, %v1287
        %v1296 = vpack.c.bf16 %v1292, %v1290
        %v1297 = vpack.c.bf16 %v1293, %v1291
        %v1298 = vld [vmem:[#allocation13] sm:$0xff]
        %v1299 = vld [vmem:[#allocation13 + $0x8] sm:$0xff]
        %v1300 = vld [vmem:[#allocation13 + $0x10] sm:$0xff]
        %v1301 = vld [vmem:[#allocation13 + $0x18] sm:$0xff]
        %v1302 = vld [vmem:[#allocation13 + $0x20] sm:$0xff]
        %v1303 = vld [vmem:[#allocation13 + $0x28] sm:$0xff]
        %v1304 = vld [vmem:[#allocation13 + $0x30] sm:$0xff]
        %v1305 = vld [vmem:[#allocation13 + $0x38] sm:$0xff]
        %v1306 = vld [vmem:[#allocation13 + $0x40] sm:$0xff]
        %v1307 = vld [vmem:[#allocation13 + $0x48] sm:$0xff]
        %v1308 = vld [vmem:[#allocation13 + $0x50] sm:$0xff]
        %v1309 = vld [vmem:[#allocation13 + $0x58] sm:$0xff]
        %v1310 = vld [vmem:[#allocation13 + $0x60] sm:$0xff]
        %v1311 = vld [vmem:[#allocation13 + $0x68] sm:$0xff]
        %v1312 = vld [vmem:[#allocation13 + $0x70] sm:$0xff]
        %v1313 = vld [vmem:[#allocation13 + $0x78] sm:$0xff]
        %v1314 = vld [vmem:[#allocation13 + $0x80] sm:$0xff]
        %v1315 = vld [vmem:[#allocation13 + $0x88] sm:$0xff]
        %v1316 = vld [vmem:[#allocation13 + $0x90] sm:$0xff]
        %v1317 = vld [vmem:[#allocation13 + $0x98] sm:$0xff]
        %v1318 = vld [vmem:[#allocation13 + $0xa0] sm:$0xff]
        %v1319 = vld [vmem:[#allocation13 + $0xa8] sm:$0xff]
        %v1320 = vld [vmem:[#allocation13 + $0xb0] sm:$0xff]
        %v1321 = vld [vmem:[#allocation13 + $0xb8] sm:$0xff]
        %v1322 = vld [vmem:[#allocation13 + $0xc0] sm:$0xff]
        %v1323 = vld [vmem:[#allocation13 + $0xc8] sm:$0xff]
        %v1324 = vld [vmem:[#allocation13 + $0xd0] sm:$0xff]
        %v1325 = vld [vmem:[#allocation13 + $0xd8] sm:$0xff]
        %v1326 = vld [vmem:[#allocation13 + $0xe0] sm:$0xff]
        %v1327 = vld [vmem:[#allocation13 + $0xe8] sm:$0xff]
        %v1328 = vld [vmem:[#allocation13 + $0xf0] sm:$0xff]
        %v1329 = vld [vmem:[#allocation13 + $0xf8] sm:$0xff]
        %v1330 = vld [vmem:[#allocation14] sm:$0x3]
        %v1332 = vperm.slane %v1330, 0
        %v1333 = vperm.slane %v1330, 1
        %v1368 = vunpack.c.l.b16 %v1298
        %v1369 = vunpack.c.h.b16 %v1298
        %v1370 = vunpack.c.l.b16 %v1299
        %v1371 = vunpack.c.h.b16 %v1299
        %v1372 = vunpack.c.l.b16 %v1300
        %v1373 = vunpack.c.h.b16 %v1300
        %v1374 = vunpack.c.l.b16 %v1301
        %v1375 = vunpack.c.h.b16 %v1301
        %v1376 = vunpack.c.l.b16 %v1302
        %v1377 = vunpack.c.h.b16 %v1302
        %v1378 = vunpack.c.l.b16 %v1303
        %v1379 = vunpack.c.h.b16 %v1303
        %v1380 = vunpack.c.l.b16 %v1304
        %v1381 = vunpack.c.h.b16 %v1304
        %v1382 = vunpack.c.l.b16 %v1305
        %v1383 = vunpack.c.h.b16 %v1305
        %v1384 = vunpack.c.l.b16 %v1306
        %v1385 = vunpack.c.h.b16 %v1306
        %v1386 = vunpack.c.l.b16 %v1307
        %v1387 = vunpack.c.h.b16 %v1307
        %v1388 = vunpack.c.l.b16 %v1308
        %v1389 = vunpack.c.h.b16 %v1308
        %v1390 = vunpack.c.l.b16 %v1309
        %v1391 = vunpack.c.h.b16 %v1309
        %v1392 = vunpack.c.l.b16 %v1310
        %v1393 = vunpack.c.h.b16 %v1310
        %v1394 = vunpack.c.l.b16 %v1311
        %v1395 = vunpack.c.h.b16 %v1311
        %v1396 = vunpack.c.l.b16 %v1312
        %v1397 = vunpack.c.h.b16 %v1312
        %v1398 = vunpack.c.l.b16 %v1313
        %v1399 = vunpack.c.h.b16 %v1313
        %v1400 = vunpack.c.l.b16 %v1314
        %v1401 = vunpack.c.h.b16 %v1314
        %v1402 = vunpack.c.l.b16 %v1315
        %v1403 = vunpack.c.h.b16 %v1315
        %v1404 = vunpack.c.l.b16 %v1316
        %v1405 = vunpack.c.h.b16 %v1316
        %v1406 = vunpack.c.l.b16 %v1317
        %v1407 = vunpack.c.h.b16 %v1317
        %v1408 = vunpack.c.l.b16 %v1318
        %v1409 = vunpack.c.h.b16 %v1318
        %v1410 = vunpack.c.l.b16 %v1319
        %v1411 = vunpack.c.h.b16 %v1319
        %v1412 = vunpack.c.l.b16 %v1320
        %v1413 = vunpack.c.h.b16 %v1320
        %v1414 = vunpack.c.l.b16 %v1321
        %v1415 = vunpack.c.h.b16 %v1321
        %v1416 = vunpack.c.l.b16 %v1322
        %v1417 = vunpack.c.h.b16 %v1322
        %v1418 = vunpack.c.l.b16 %v1323
        %v1419 = vunpack.c.h.b16 %v1323
        %v1420 = vunpack.c.l.b16 %v1324
        %v1421 = vunpack.c.h.b16 %v1324
        %v1422 = vunpack.c.l.b16 %v1325
        %v1423 = vunpack.c.h.b16 %v1325
        %v1424 = vunpack.c.l.b16 %v1326
        %v1425 = vunpack.c.h.b16 %v1326
        %v1426 = vunpack.c.l.b16 %v1327
        %v1427 = vunpack.c.h.b16 %v1327
        %v1428 = vunpack.c.l.b16 %v1328
        %v1429 = vunpack.c.h.b16 %v1328
        %v1430 = vunpack.c.l.b16 %v1329
        %v1431 = vunpack.c.h.b16 %v1329
        %v1432 = vpack.c.b16 %v1370, %v1368
        %v1433 = vpack.c.b16 %v1371, %v1369
        %v1434 = vpack.c.b16 %v1374, %v1372
        %v1435 = vpack.c.b16 %v1375, %v1373
        %v1436 = vpack.c.b16 %v1378, %v1376
        %v1437 = vpack.c.b16 %v1379, %v1377
        %v1438 = vpack.c.b16 %v1382, %v1380
        %v1439 = vpack.c.b16 %v1383, %v1381
        %v1440 = vpack.c.b16 %v1386, %v1384
        %v1441 = vpack.c.b16 %v1387, %v1385
        %v1442 = vpack.c.b16 %v1390, %v1388
        %v1443 = vpack.c.b16 %v1391, %v1389
        %v1444 = vpack.c.b16 %v1394, %v1392
        %v1445 = vpack.c.b16 %v1395, %v1393
        %v1446 = vpack.c.b16 %v1398, %v1396
        %v1447 = vpack.c.b16 %v1399, %v1397
        %v1448 = vpack.c.b16 %v1402, %v1400
        %v1449 = vpack.c.b16 %v1403, %v1401
        %v1450 = vpack.c.b16 %v1406, %v1404
        %v1451 = vpack.c.b16 %v1407, %v1405
        %v1452 = vpack.c.b16 %v1410, %v1408
        %v1453 = vpack.c.b16 %v1411, %v1409
        %v1454 = vpack.c.b16 %v1414, %v1412
        %v1455 = vpack.c.b16 %v1415, %v1413
        %v1456 = vpack.c.b16 %v1418, %v1416
        %v1457 = vpack.c.b16 %v1419, %v1417
        %v1458 = vpack.c.b16 %v1422, %v1420
        %v1459 = vpack.c.b16 %v1423, %v1421
        %v1460 = vpack.c.b16 %v1426, %v1424
        %v1461 = vpack.c.b16 %v1427, %v1425
        %v1462 = vpack.c.b16 %v1430, %v1428
        %v1463 = vpack.c.b16 %v1431, %v1429
        %1496 = vmatpush.bf16.msra.mxu0 %v1446
        %1497 = vmatpush.bf16.msra.mxu0 %v1444
        %1498 = vmatpush.bf16.msra.mxu0 %v1442
        %1499 = vmatpush.bf16.msra.mxu0 %v1440
        %1500 = vmatpush.bf16.msra.mxu0 %v1438
        %1501 = vmatpush.bf16.msra.mxu0 %v1436
        %1502 = vmatpush.bf16.msra.mxu0 %v1434
        %1503 = vmatpush.bf16.msra.mxu0 %v1432
        %1504 = vmatmul.bf16.gmra.mxu0 %v1294
        %v1505 = vpop.f32.mrf.mxu0
        %v1506 = vadd.f32 %v1332, %v1505
        %v1507 = vpop.f32.mrf.mxu0
        %v1508 = vadd.f32 %v1332, %v1507
        %1509 = vmatmul.bf16.gmra.mxu0 %v1296
        %v1510 = vpop.f32.mrf.mxu0
        %v1511 = vadd.f32 %v1332, %v1510
        %v1512 = vpop.f32.mrf.mxu0
        %v1513 = vadd.f32 %v1332, %v1512
        %1514 = vdwg.mxu0
        %1515 = vmatpush.bf16.msra.mxu0 %v1462
        %1516 = vmatpush.bf16.msra.mxu0 %v1460
        %1517 = vmatpush.bf16.msra.mxu0 %v1458
        %1518 = vmatpush.bf16.msra.mxu0 %v1456
        %1519 = vmatpush.bf16.msra.mxu0 %v1454
        %1520 = vmatpush.bf16.msra.mxu0 %v1452
        %1521 = vmatpush.bf16.msra.mxu0 %v1450
        %1522 = vmatpush.bf16.msra.mxu0 %v1448
        %1523 = vmatmul.bf16.gmra.mxu0 %v1295
        %v1524 = vpop.f32.mrf.mxu0
        %v1525 = vadd.f32 %v1506, %v1524
        %v1526 = vpop.f32.mrf.mxu0
        %v1527 = vadd.f32 %v1508, %v1526
        %1528 = vmatmul.bf16.gmra.mxu0 %v1297
        %v1529 = vpop.f32.mrf.mxu0
        %v1530 = vadd.f32 %v1511, %v1529
        %v1531 = vpop.f32.mrf.mxu0
        %v1532 = vadd.f32 %v1513, %v1531
        %1533 = vdwg.mxu0
        %1534 = vmatpush.bf16.msra.mxu0 %v1447
        %1535 = vmatpush.bf16.msra.mxu0 %v1445
        %1536 = vmatpush.bf16.msra.mxu0 %v1443
        %1537 = vmatpush.bf16.msra.mxu0 %v1441
        %1538 = vmatpush.bf16.msra.mxu0 %v1439
        %1539 = vmatpush.bf16.msra.mxu0 %v1437
        %1540 = vmatpush.bf16.msra.mxu0 %v1435
        %1541 = vmatpush.bf16.msra.mxu0 %v1433
        %1542 = vmatmul.bf16.gmra.mxu0 %v1294
        %v1543 = vpop.f32.mrf.mxu0
        %v1544 = vadd.f32 %v1333, %v1543
        %v1545 = vpop.f32.mrf.mxu0
        %v1546 = vadd.f32 %v1333, %v1545
        %1547 = vmatmul.bf16.gmra.mxu0 %v1296
        %v1548 = vpop.f32.mrf.mxu0
        %v1549 = vadd.f32 %v1333, %v1548
        %v1550 = vpop.f32.mrf.mxu0
        %v1551 = vadd.f32 %v1333, %v1550
        %1552 = vdwg.mxu0
        %1553 = vmatpush.bf16.msra.mxu0 %v1463
        %1554 = vmatpush.bf16.msra.mxu0 %v1461
        %1555 = vmatpush.bf16.msra.mxu0 %v1459
        %1556 = vmatpush.bf16.msra.mxu0 %v1457
        %1557 = vmatpush.bf16.msra.mxu0 %v1455
        %1558 = vmatpush.bf16.msra.mxu0 %v1453
        %1559 = vmatpush.bf16.msra.mxu0 %v1451
        %1560 = vmatpush.bf16.msra.mxu0 %v1449
        %1561 = vmatmul.bf16.gmra.mxu0 %v1295
        %v1562 = vpop.f32.mrf.mxu0
        %v1563 = vadd.f32 %v1544, %v1562
        %v1564 = vpop.f32.mrf.mxu0
        %v1565 = vadd.f32 %v1546, %v1564
        %1566 = vmatmul.bf16.gmra.mxu0 %v1297
        %v1567 = vpop.f32.mrf.mxu0
        %v1568 = vadd.f32 %v1549, %v1567
        %v1569 = vpop.f32.mrf.mxu0
        %v1570 = vadd.f32 %v1551, %v1569
        %1571 = vdwg.mxu0
        %v1572 = vmax.f32 %v1525, 0.0
        %v1573 = vmax.f32 %v1563, 0.0
        %v1574 = vmax.f32 %v1527, 0.0
        %v1575 = vmax.f32 %v1565, 0.0
        %v1576 = vmax.f32 %v1530, 0.0
        %v1577 = vmax.f32 %v1568, 0.0
        %v1578 = vmax.f32 %v1532, 0.0
        %v1579 = vmax.f32 %v1570, 0.0
        %v1580 = vadd.f32 %v1572, %v538
        %v1581 = vadd.f32 %v1573, %v539
        %v1582 = vadd.f32 %v1574, %v540
        %v1583 = vadd.f32 %v1575, %v541
        %v1584 = vadd.f32 %v1576, %v542
        %v1585 = vadd.f32 %v1577, %v543
        %v1586 = vadd.f32 %v1578, %v544
        %v1587 = vadd.f32 %v1579, %v545
        %v1588 = vpack.c.bf16 %v1582, %v1580
        %v1589 = vpack.c.bf16 %v1583, %v1581
        %v1590 = vpack.c.bf16 %v1586, %v1584
        %v1591 = vpack.c.bf16 %v1587, %v1585
        %s1592 = scalar_lea.vmem [#allocation7], 256
        %v1593 = vld [vmem:[%s1592] sm:$0xff]
        %v1594 = vld [vmem:[%s1592 + $0x8] sm:$0xff]
        %v1595 = vld [vmem:[%s1592 + $0x10] sm:$0xff]
        %v1596 = vld [vmem:[%s1592 + $0x18] sm:$0xff]
        %v1597 = vld [vmem:[%s1592 + $0x20] sm:$0xff]
        %v1598 = vld [vmem:[%s1592 + $0x28] sm:$0xff]
        %v1599 = vld [vmem:[%s1592 + $0x30] sm:$0xff]
        %v1600 = vld [vmem:[%s1592 + $0x38] sm:$0xff]
        %v1601 = vld [vmem:[%s1592 + $0x40] sm:$0xff]
        %v1602 = vld [vmem:[%s1592 + $0x48] sm:$0xff]
        %v1603 = vld [vmem:[%s1592 + $0x50] sm:$0xff]
        %v1604 = vld [vmem:[%s1592 + $0x58] sm:$0xff]
        %v1605 = vld [vmem:[%s1592 + $0x60] sm:$0xff]
        %v1606 = vld [vmem:[%s1592 + $0x68] sm:$0xff]
        %v1607 = vld [vmem:[%s1592 + $0x70] sm:$0xff]
        %v1608 = vld [vmem:[%s1592 + $0x78] sm:$0xff]
        %v1609 = vld [vmem:[%s1592 + $0x80] sm:$0xff]
        %v1610 = vld [vmem:[%s1592 + $0x88] sm:$0xff]
        %v1611 = vld [vmem:[%s1592 + $0x90] sm:$0xff]
        %v1612 = vld [vmem:[%s1592 + $0x98] sm:$0xff]
        %v1613 = vld [vmem:[%s1592 + $0xa0] sm:$0xff]
        %v1614 = vld [vmem:[%s1592 + $0xa8] sm:$0xff]
        %v1615 = vld [vmem:[%s1592 + $0xb0] sm:$0xff]
        %v1616 = vld [vmem:[%s1592 + $0xb8] sm:$0xff]
        %v1617 = vld [vmem:[%s1592 + $0xc0] sm:$0xff]
        %v1618 = vld [vmem:[%s1592 + $0xc8] sm:$0xff]
        %v1619 = vld [vmem:[%s1592 + $0xd0] sm:$0xff]
        %v1620 = vld [vmem:[%s1592 + $0xd8] sm:$0xff]
        %v1621 = vld [vmem:[%s1592 + $0xe0] sm:$0xff]
        %v1622 = vld [vmem:[%s1592 + $0xe8] sm:$0xff]
        %v1623 = vld [vmem:[%s1592 + $0xf0] sm:$0xff]
        %v1624 = vld [vmem:[%s1592 + $0xf8] sm:$0xff]
        %s1625 = scalar_lea.vmem [#allocation8], 2
        %v1626 = vld [vmem:[%s1625] sm:$0x3]
        %v1628 = vperm.slane %v1626, 0
        %v1629 = vperm.slane %v1626, 1
        %v1664 = vunpack.c.l.b16 %v1593
        %v1665 = vunpack.c.h.b16 %v1593
        %v1666 = vunpack.c.l.b16 %v1594
        %v1667 = vunpack.c.h.b16 %v1594
        %v1668 = vunpack.c.l.b16 %v1595
        %v1669 = vunpack.c.h.b16 %v1595
        %v1670 = vunpack.c.l.b16 %v1596
        %v1671 = vunpack.c.h.b16 %v1596
        %v1672 = vunpack.c.l.b16 %v1597
        %v1673 = vunpack.c.h.b16 %v1597
        %v1674 = vunpack.c.l.b16 %v1598
        %v1675 = vunpack.c.h.b16 %v1598
        %v1676 = vunpack.c.l.b16 %v1599
        %v1677 = vunpack.c.h.b16 %v1599
        %v1678 = vunpack.c.l.b16 %v1600
        %v1679 = vunpack.c.h.b16 %v1600
        %v1680 = vunpack.c.l.b16 %v1601
        %v1681 = vunpack.c.h.b16 %v1601
        %v1682 = vunpack.c.l.b16 %v1602
        %v1683 = vunpack.c.h.b16 %v1602
        %v1684 = vunpack.c.l.b16 %v1603
        %v1685 = vunpack.c.h.b16 %v1603
        %v1686 = vunpack.c.l.b16 %v1604
        %v1687 = vunpack.c.h.b16 %v1604
        %v1688 = vunpack.c.l.b16 %v1605
        %v1689 = vunpack.c.h.b16 %v1605
        %v1690 = vunpack.c.l.b16 %v1606
        %v1691 = vunpack.c.h.b16 %v1606
        %v1692 = vunpack.c.l.b16 %v1607
        %v1693 = vunpack.c.h.b16 %v1607
        %v1694 = vunpack.c.l.b16 %v1608
        %v1695 = vunpack.c.h.b16 %v1608
        %v1696 = vunpack.c.l.b16 %v1609
        %v1697 = vunpack.c.h.b16 %v1609
        %v1698 = vunpack.c.l.b16 %v1610
        %v1699 = vunpack.c.h.b16 %v1610
        %v1700 = vunpack.c.l.b16 %v1611
        %v1701 = vunpack.c.h.b16 %v1611
        %v1702 = vunpack.c.l.b16 %v1612
        %v1703 = vunpack.c.h.b16 %v1612
        %v1704 = vunpack.c.l.b16 %v1613
        %v1705 = vunpack.c.h.b16 %v1613
        %v1706 = vunpack.c.l.b16 %v1614
        %v1707 = vunpack.c.h.b16 %v1614
        %v1708 = vunpack.c.l.b16 %v1615
        %v1709 = vunpack.c.h.b16 %v1615
        %v1710 = vunpack.c.l.b16 %v1616
        %v1711 = vunpack.c.h.b16 %v1616
        %v1712 = vunpack.c.l.b16 %v1617
        %v1713 = vunpack.c.h.b16 %v1617
        %v1714 = vunpack.c.l.b16 %v1618
        %v1715 = vunpack.c.h.b16 %v1618
        %v1716 = vunpack.c.l.b16 %v1619
        %v1717 = vunpack.c.h.b16 %v1619
        %v1718 = vunpack.c.l.b16 %v1620
        %v1719 = vunpack.c.h.b16 %v1620
        %v1720 = vunpack.c.l.b16 %v1621
        %v1721 = vunpack.c.h.b16 %v1621
        %v1722 = vunpack.c.l.b16 %v1622
        %v1723 = vunpack.c.h.b16 %v1622
        %v1724 = vunpack.c.l.b16 %v1623
        %v1725 = vunpack.c.h.b16 %v1623
        %v1726 = vunpack.c.l.b16 %v1624
        %v1727 = vunpack.c.h.b16 %v1624
        %v1728 = vpack.c.b16 %v1666, %v1664
        %v1729 = vpack.c.b16 %v1667, %v1665
        %v1730 = vpack.c.b16 %v1670, %v1668
        %v1731 = vpack.c.b16 %v1671, %v1669
        %v1732 = vpack.c.b16 %v1674, %v1672
        %v1733 = vpack.c.b16 %v1675, %v1673
        %v1734 = vpack.c.b16 %v1678, %v1676
        %v1735 = vpack.c.b16 %v1679, %v1677
        %v1736 = vpack.c.b16 %v1682, %v1680
        %v1737 = vpack.c.b16 %v1683, %v1681
        %v1738 = vpack.c.b16 %v1686, %v1684
        %v1739 = vpack.c.b16 %v1687, %v1685
        %v1740 = vpack.c.b16 %v1690, %v1688
        %v1741 = vpack.c.b16 %v1691, %v1689
        %v1742 = vpack.c.b16 %v1694, %v1692
        %v1743 = vpack.c.b16 %v1695, %v1693
        %v1744 = vpack.c.b16 %v1698, %v1696
        %v1745 = vpack.c.b16 %v1699, %v1697
        %v1746 = vpack.c.b16 %v1702, %v1700
        %v1747 = vpack.c.b16 %v1703, %v1701
        %v1748 = vpack.c.b16 %v1706, %v1704
        %v1749 = vpack.c.b16 %v1707, %v1705
        %v1750 = vpack.c.b16 %v1710, %v1708
        %v1751 = vpack.c.b16 %v1711, %v1709
        %v1752 = vpack.c.b16 %v1714, %v1712
        %v1753 = vpack.c.b16 %v1715, %v1713
        %v1754 = vpack.c.b16 %v1718, %v1716
        %v1755 = vpack.c.b16 %v1719, %v1717
        %v1756 = vpack.c.b16 %v1722, %v1720
        %v1757 = vpack.c.b16 %v1723, %v1721
        %v1758 = vpack.c.b16 %v1726, %v1724
        %v1759 = vpack.c.b16 %v1727, %v1725
        %1792 = vmatpush.bf16.msra.mxu0 %v1742
        %1793 = vmatpush.bf16.msra.mxu0 %v1740
        %1794 = vmatpush.bf16.msra.mxu0 %v1738
        %1795 = vmatpush.bf16.msra.mxu0 %v1736
        %1796 = vmatpush.bf16.msra.mxu0 %v1734
        %1797 = vmatpush.bf16.msra.mxu0 %v1732
        %1798 = vmatpush.bf16.msra.mxu0 %v1730
        %1799 = vmatpush.bf16.msra.mxu0 %v1728
        %1800 = vmatmul.bf16.gmra.mxu0 %v1588
        %v1801 = vpop.f32.mrf.mxu0
        %v1802 = vadd.f32 %v1628, %v1801
        %v1803 = vpop.f32.mrf.mxu0
        %v1804 = vadd.f32 %v1628, %v1803
        %1805 = vmatmul.bf16.gmra.mxu0 %v1590
        %v1806 = vpop.f32.mrf.mxu0
        %v1807 = vadd.f32 %v1628, %v1806
        %v1808 = vpop.f32.mrf.mxu0
        %v1809 = vadd.f32 %v1628, %v1808
        %1810 = vdwg.mxu0
        %1811 = vmatpush.bf16.msra.mxu0 %v1758
        %1812 = vmatpush.bf16.msra.mxu0 %v1756
        %1813 = vmatpush.bf16.msra.mxu0 %v1754
        %1814 = vmatpush.bf16.msra.mxu0 %v1752
        %1815 = vmatpush.bf16.msra.mxu0 %v1750
        %1816 = vmatpush.bf16.msra.mxu0 %v1748
        %1817 = vmatpush.bf16.msra.mxu0 %v1746
        %1818 = vmatpush.bf16.msra.mxu0 %v1744
        %1819 = vmatmul.bf16.gmra.mxu0 %v1589
        %v1820 = vpop.f32.mrf.mxu0
        %v1821 = vadd.f32 %v1802, %v1820
        %v1822 = vpop.f32.mrf.mxu0
        %v1823 = vadd.f32 %v1804, %v1822
        %1824 = vmatmul.bf16.gmra.mxu0 %v1591
        %v1825 = vpop.f32.mrf.mxu0
        %v1826 = vadd.f32 %v1807, %v1825
        %v1827 = vpop.f32.mrf.mxu0
        %v1828 = vadd.f32 %v1809, %v1827
        %1829 = vdwg.mxu0
        %1830 = vmatpush.bf16.msra.mxu0 %v1743
        %1831 = vmatpush.bf16.msra.mxu0 %v1741
        %1832 = vmatpush.bf16.msra.mxu0 %v1739
        %1833 = vmatpush.bf16.msra.mxu0 %v1737
        %1834 = vmatpush.bf16.msra.mxu0 %v1735
        %1835 = vmatpush.bf16.msra.mxu0 %v1733
        %1836 = vmatpush.bf16.msra.mxu0 %v1731
        %1837 = vmatpush.bf16.msra.mxu0 %v1729
        %1838 = vmatmul.bf16.gmra.mxu0 %v1588
        %v1839 = vpop.f32.mrf.mxu0
        %v1840 = vadd.f32 %v1629, %v1839
        %v1841 = vpop.f32.mrf.mxu0
        %v1842 = vadd.f32 %v1629, %v1841
        %1843 = vmatmul.bf16.gmra.mxu0 %v1590
        %v1844 = vpop.f32.mrf.mxu0
        %v1845 = vadd.f32 %v1629, %v1844
        %v1846 = vpop.f32.mrf.mxu0
        %v1847 = vadd.f32 %v1629, %v1846
        %1848 = vdwg.mxu0
        %1849 = vmatpush.bf16.msra.mxu0 %v1759
        %1850 = vmatpush.bf16.msra.mxu0 %v1757
        %1851 = vmatpush.bf16.msra.mxu0 %v1755
        %1852 = vmatpush.bf16.msra.mxu0 %v1753
        %1853 = vmatpush.bf16.msra.mxu0 %v1751
        %1854 = vmatpush.bf16.msra.mxu0 %v1749
        %1855 = vmatpush.bf16.msra.mxu0 %v1747
        %1856 = vmatpush.bf16.msra.mxu0 %v1745
        %1857 = vmatmul.bf16.gmra.mxu0 %v1589
        %v1858 = vpop.f32.mrf.mxu0
        %v1859 = vadd.f32 %v1840, %v1858
        %v1860 = vpop.f32.mrf.mxu0
        %v1861 = vadd.f32 %v1842, %v1860
        %1862 = vmatmul.bf16.gmra.mxu0 %v1591
        %v1863 = vpop.f32.mrf.mxu0
        %v1864 = vadd.f32 %v1845, %v1863
        %v1865 = vpop.f32.mrf.mxu0
        %v1866 = vadd.f32 %v1847, %v1865
        %1867 = vdwg.mxu0
        %v1868 = vpack.c.bf16 %v1823, %v1821
        %v1869 = vpack.c.bf16 %v1861, %v1859
        %v1870 = vpack.c.bf16 %v1828, %v1826
        %v1871 = vpack.c.bf16 %v1866, %v1864
        %1872 = vmatpush.bf16.xpose.msra.mxu0 0
        %1873 = vmatpush.bf16.xpose.msra.mxu0 0
        %1874 = vmatpush.bf16.xpose.msra.mxu0 0
        %1875 = vmatpush.bf16.xpose.msra.mxu0 0
        %1876 = vmatpush.bf16.xpose.msra.mxu0 0
        %1877 = vmatpush.bf16.xpose.msra.mxu0 0
        %1878 = vmatpush.bf16.xpose.msra.mxu0 %v1590
        %1879 = vmatpush.bf16.xpose.msra.mxu0 %v1588
        %1880 = vmatmul.bf16.gmra.mxu0 %v1868
        %v1881 = vpop.f32.mrf.mxu0
        %v1882 = vadd.f32 0.0, %v1881
        %v1883 = vpop.f32.mrf.mxu0
        %v1884 = vadd.f32 0.0, %v1883
        %1885 = vmatmul.bf16.gmra.mxu0 %v1870
        %v1886 = vpop.f32.mrf.mxu0
        %v1887 = vadd.f32 0.0, %v1886
        %v1888 = vpop.f32.mrf.mxu0
        %v1889 = vadd.f32 0.0, %v1888
        %1890 = vdwg.mxu0
        %1891 = vmatpush.bf16.xpose.msra.mxu0 0
        %1892 = vmatpush.bf16.xpose.msra.mxu0 0
        %1893 = vmatpush.bf16.xpose.msra.mxu0 0
        %1894 = vmatpush.bf16.xpose.msra.mxu0 0
        %1895 = vmatpush.bf16.xpose.msra.mxu0 0
        %1896 = vmatpush.bf16.xpose.msra.mxu0 0
        %1897 = vmatpush.bf16.xpose.msra.mxu0 %v1591
        %1898 = vmatpush.bf16.xpose.msra.mxu0 %v1589
        %1899 = vmatmul.bf16.gmra.mxu0 %v1869
        %v1900 = vpop.f32.mrf.mxu0
        %v1901 = vadd.f32 %v1882, %v1900
        %v1902 = vpop.f32.mrf.mxu0
        %v1903 = vadd.f32 %v1884, %v1902
        %1904 = vmatmul.bf16.gmra.mxu0 %v1871
        %v1905 = vpop.f32.mrf.mxu0
        %v1906 = vadd.f32 %v1887, %v1905
        %v1907 = vpop.f32.mrf.mxu0
        %v1908 = vadd.f32 %v1889, %v1907
        %1909 = vdwg.mxu0
        %v1910 = vsel %vm889, %v1901, -inf
        %1911 = vmax.xlane.f32.xlu0 %v1910
        %v1912 = vpop.xlane.xlu0 %1911
        %v1913 = vsel %vm889, %v1903, -inf
        %1914 = vmax.xlane.f32.xlu0 %v1913
        %v1915 = vpop.xlane.xlu0 %1914
        %v1916 = vsel %vm889, %v1906, -inf
        %1917 = vmax.xlane.f32.xlu0 %v1916
        %v1918 = vpop.xlane.xlu0 %1917
        %v1919 = vsel %vm889, %v1908, -inf
        %1920 = vmax.xlane.f32.xlu0 %v1919
        %v1921 = vpop.xlane.xlu0 %1920
        %v1922 = vsub.f32 %v1901, %v1912
        %v1923 = vsub.f32 %v1903, %v1915
        %v1924 = vsub.f32 %v1906, %v1918
        %v1925 = vsub.f32 %v1908, %v1921
        %v1926 = vmul.f32 %v1922, 1.442695
        %v1927 = vpow.pop %v1926
        %v1928 = vmul.f32 %v1923, 1.442695
        %v1929 = vpow.pop %v1928
        %v1930 = vmul.f32 %v1924, 1.442695
        %v1931 = vpow.pop %v1930
        %v1932 = vmul.f32 %v1925, 1.442695
        %v1933 = vpow.pop %v1932
        %v1934 = vsub.f32 0.0, %v1912
        %v1935 = vsub.f32 0.0, %v1915
        %v1936 = vsub.f32 0.0, %v1918
        %v1937 = vsub.f32 0.0, %v1921
        %v1938 = vmul.f32 %v1934, 1.442695
        %v1939 = vpow.pop %v1938
        %v1940 = vmul.f32 %v1935, 1.442695
        %v1941 = vpow.pop %v1940
        %v1942 = vmul.f32 %v1936, 1.442695
        %v1943 = vpow.pop %v1942
        %v1944 = vmul.f32 %v1937, 1.442695
        %v1945 = vpow.pop %v1944
        %v1946 = vmul.f32 %v1939, 1e-05
        %v1947 = vmul.f32 %v1941, 1e-05
        %v1948 = vmul.f32 %v1943, 1e-05
        %v1949 = vmul.f32 %v1945, 1e-05
        %v1950 = vmul.f32 %v1946, %v565
        %v1951 = vmul.f32 %v1947, %v566
        %v1952 = vmul.f32 %v1948, %v567
        %v1953 = vmul.f32 %v1949, %v568
        %v1954 = vadd.f32 %v1927, %v1950
        %v1955 = vadd.f32 %v1929, %v1951
        %v1956 = vadd.f32 %v1931, %v1952
        %v1957 = vadd.f32 %v1933, %v1953
        %v1958 = vmul.f32 %v1954, %v546
        %v1959 = vmul.f32 %v1955, %v547
        %v1960 = vmul.f32 %v1956, %v548
        %v1961 = vmul.f32 %v1957, %v549
        %v1962 = vsel %vm889, %v1958, 0.0
        %1963 = vadd.xlane.f32.xlu0 %v1962
        %v1964 = vpop.xlane.xlu0 %1963
        %v1965 = vsel %vm889, %v1959, 0.0
        %1966 = vadd.xlane.f32.xlu0 %v1965
        %v1967 = vpop.xlane.xlu0 %1966
        %v1968 = vsel %vm889, %v1960, 0.0
        %1969 = vadd.xlane.f32.xlu0 %v1968
        %v1970 = vpop.xlane.xlu0 %1969
        %v1971 = vsel %vm889, %v1961, 0.0
        %1972 = vadd.xlane.f32.xlu0 %v1971
        %v1973 = vpop.xlane.xlu0 %1972
        %v1974 = vrcp.pop %v1964
        %v1975 = vrcp.pop %v1967
        %v1976 = vrcp.pop %v1970
        %v1977 = vrcp.pop %v1973
        %v1978 = vmul.f32 %v1958, %v1974
        %v1979 = vmul.f32 %v1959, %v1975
        %v1980 = vmul.f32 %v1960, %v1976
        %v1981 = vmul.f32 %v1961, %v1977
        %v1982 = vpack.c.bf16 %v1979, %v1978
        %v1983 = vpack.c.bf16 %v1981, %v1980
        %v1985 = vsel %vm889, %v1982, 0
        %v1988 = vsel %vm889, %v1983, 0
        %1990 = vmatpush.bf16.msra.mxu0 0
        %1991 = vmatpush.bf16.msra.mxu0 0
        %1992 = vmatpush.bf16.msra.mxu0 0
        %1993 = vmatpush.bf16.msra.mxu0 0
        %1994 = vmatpush.bf16.msra.mxu0 0
        %1995 = vmatpush.bf16.msra.mxu0 0
        %1996 = vmatpush.bf16.msra.mxu0 %v1590
        %1997 = vmatpush.bf16.msra.mxu0 %v1588
        %1998 = vmatmul.bf16.gmra.mxu0 %v1985
        %v1999 = vpop.f32.mrf.mxu0
        %v2000 = vadd.f32 0.0, %v1999
        %v2001 = vpop.f32.mrf.mxu0
        %v2002 = vadd.f32 0.0, %v2001
        %2003 = vmatmul.bf16.gmra.mxu0 %v1988
        %v2004 = vpop.f32.mrf.mxu0
        %v2005 = vadd.f32 0.0, %v2004
        %v2006 = vpop.f32.mrf.mxu0
        %v2007 = vadd.f32 0.0, %v2006
        %2008 = vdwg.mxu0
        %2009 = vmatpush.bf16.msra.mxu0 0
        %2010 = vmatpush.bf16.msra.mxu0 0
        %2011 = vmatpush.bf16.msra.mxu0 0
        %2012 = vmatpush.bf16.msra.mxu0 0
        %2013 = vmatpush.bf16.msra.mxu0 0
        %2014 = vmatpush.bf16.msra.mxu0 0
        %2015 = vmatpush.bf16.msra.mxu0 %v1591
        %2016 = vmatpush.bf16.msra.mxu0 %v1589
        %2017 = vmatmul.bf16.gmra.mxu0 %v1985
        %v2018 = vpop.f32.mrf.mxu0
        %v2019 = vadd.f32 0.0, %v2018
        %v2020 = vpop.f32.mrf.mxu0
        %v2021 = vadd.f32 0.0, %v2020
        %2022 = vmatmul.bf16.gmra.mxu0 %v1988
        %v2023 = vpop.f32.mrf.mxu0
        %v2024 = vadd.f32 0.0, %v2023
        %v2025 = vpop.f32.mrf.mxu0
        %v2026 = vadd.f32 0.0, %v2025
        %2027 = vdwg.mxu0
        %v2028 = vpack.c.bf16 %v2002, %v2000
        %v2029 = vpack.c.bf16 %v2021, %v2019
        %v2030 = vpack.c.bf16 %v2007, %v2005
        %v2031 = vpack.c.bf16 %v2026, %v2024
        %s2032 = scalar_lea.vmem [#allocation10], 256
        %v2033 = vld [vmem:[%s2032] sm:$0xff]
        %v2034 = vld [vmem:[%s2032 + $0x8] sm:$0xff]
        %v2035 = vld [vmem:[%s2032 + $0x10] sm:$0xff]
        %v2036 = vld [vmem:[%s2032 + $0x18] sm:$0xff]
        %v2037 = vld [vmem:[%s2032 + $0x20] sm:$0xff]
        %v2038 = vld [vmem:[%s2032 + $0x28] sm:$0xff]
        %v2039 = vld [vmem:[%s2032 + $0x30] sm:$0xff]
        %v2040 = vld [vmem:[%s2032 + $0x38] sm:$0xff]
        %v2041 = vld [vmem:[%s2032 + $0x40] sm:$0xff]
        %v2042 = vld [vmem:[%s2032 + $0x48] sm:$0xff]
        %v2043 = vld [vmem:[%s2032 + $0x50] sm:$0xff]
        %v2044 = vld [vmem:[%s2032 + $0x58] sm:$0xff]
        %v2045 = vld [vmem:[%s2032 + $0x60] sm:$0xff]
        %v2046 = vld [vmem:[%s2032 + $0x68] sm:$0xff]
        %v2047 = vld [vmem:[%s2032 + $0x70] sm:$0xff]
        %v2048 = vld [vmem:[%s2032 + $0x78] sm:$0xff]
        %v2049 = vld [vmem:[%s2032 + $0x80] sm:$0xff]
        %v2050 = vld [vmem:[%s2032 + $0x88] sm:$0xff]
        %v2051 = vld [vmem:[%s2032 + $0x90] sm:$0xff]
        %v2052 = vld [vmem:[%s2032 + $0x98] sm:$0xff]
        %v2053 = vld [vmem:[%s2032 + $0xa0] sm:$0xff]
        %v2054 = vld [vmem:[%s2032 + $0xa8] sm:$0xff]
        %v2055 = vld [vmem:[%s2032 + $0xb0] sm:$0xff]
        %v2056 = vld [vmem:[%s2032 + $0xb8] sm:$0xff]
        %v2057 = vld [vmem:[%s2032 + $0xc0] sm:$0xff]
        %v2058 = vld [vmem:[%s2032 + $0xc8] sm:$0xff]
        %v2059 = vld [vmem:[%s2032 + $0xd0] sm:$0xff]
        %v2060 = vld [vmem:[%s2032 + $0xd8] sm:$0xff]
        %v2061 = vld [vmem:[%s2032 + $0xe0] sm:$0xff]
        %v2062 = vld [vmem:[%s2032 + $0xe8] sm:$0xff]
        %v2063 = vld [vmem:[%s2032 + $0xf0] sm:$0xff]
        %v2064 = vld [vmem:[%s2032 + $0xf8] sm:$0xff]
        %s2065 = scalar_lea.vmem [#allocation11], 2
        %v2066 = vld [vmem:[%s2065] sm:$0x3]
        %v2068 = vperm.slane %v2066, 0
        %v2069 = vperm.slane %v2066, 1
        %v2104 = vunpack.c.l.b16 %v2033
        %v2105 = vunpack.c.h.b16 %v2033
        %v2106 = vunpack.c.l.b16 %v2034
        %v2107 = vunpack.c.h.b16 %v2034
        %v2108 = vunpack.c.l.b16 %v2035
        %v2109 = vunpack.c.h.b16 %v2035
        %v2110 = vunpack.c.l.b16 %v2036
        %v2111 = vunpack.c.h.b16 %v2036
        %v2112 = vunpack.c.l.b16 %v2037
        %v2113 = vunpack.c.h.b16 %v2037
        %v2114 = vunpack.c.l.b16 %v2038
        %v2115 = vunpack.c.h.b16 %v2038
        %v2116 = vunpack.c.l.b16 %v2039
        %v2117 = vunpack.c.h.b16 %v2039
        %v2118 = vunpack.c.l.b16 %v2040
        %v2119 = vunpack.c.h.b16 %v2040
        %v2120 = vunpack.c.l.b16 %v2041
        %v2121 = vunpack.c.h.b16 %v2041
        %v2122 = vunpack.c.l.b16 %v2042
        %v2123 = vunpack.c.h.b16 %v2042
        %v2124 = vunpack.c.l.b16 %v2043
        %v2125 = vunpack.c.h.b16 %v2043
        %v2126 = vunpack.c.l.b16 %v2044
        %v2127 = vunpack.c.h.b16 %v2044
        %v2128 = vunpack.c.l.b16 %v2045
        %v2129 = vunpack.c.h.b16 %v2045
        %v2130 = vunpack.c.l.b16 %v2046
        %v2131 = vunpack.c.h.b16 %v2046
        %v2132 = vunpack.c.l.b16 %v2047
        %v2133 = vunpack.c.h.b16 %v2047
        %v2134 = vunpack.c.l.b16 %v2048
        %v2135 = vunpack.c.h.b16 %v2048
        %v2136 = vunpack.c.l.b16 %v2049
        %v2137 = vunpack.c.h.b16 %v2049
        %v2138 = vunpack.c.l.b16 %v2050
        %v2139 = vunpack.c.h.b16 %v2050
        %v2140 = vunpack.c.l.b16 %v2051
        %v2141 = vunpack.c.h.b16 %v2051
        %v2142 = vunpack.c.l.b16 %v2052
        %v2143 = vunpack.c.h.b16 %v2052
        %v2144 = vunpack.c.l.b16 %v2053
        %v2145 = vunpack.c.h.b16 %v2053
        %v2146 = vunpack.c.l.b16 %v2054
        %v2147 = vunpack.c.h.b16 %v2054
        %v2148 = vunpack.c.l.b16 %v2055
        %v2149 = vunpack.c.h.b16 %v2055
        %v2150 = vunpack.c.l.b16 %v2056
        %v2151 = vunpack.c.h.b16 %v2056
        %v2152 = vunpack.c.l.b16 %v2057
        %v2153 = vunpack.c.h.b16 %v2057
        %v2154 = vunpack.c.l.b16 %v2058
        %v2155 = vunpack.c.h.b16 %v2058
        %v2156 = vunpack.c.l.b16 %v2059
        %v2157 = vunpack.c.h.b16 %v2059
        %v2158 = vunpack.c.l.b16 %v2060
        %v2159 = vunpack.c.h.b16 %v2060
        %v2160 = vunpack.c.l.b16 %v2061
        %v2161 = vunpack.c.h.b16 %v2061
        %v2162 = vunpack.c.l.b16 %v2062
        %v2163 = vunpack.c.h.b16 %v2062
        %v2164 = vunpack.c.l.b16 %v2063
        %v2165 = vunpack.c.h.b16 %v2063
        %v2166 = vunpack.c.l.b16 %v2064
        %v2167 = vunpack.c.h.b16 %v2064
        %v2168 = vpack.c.b16 %v2106, %v2104
        %v2169 = vpack.c.b16 %v2107, %v2105
        %v2170 = vpack.c.b16 %v2110, %v2108
        %v2171 = vpack.c.b16 %v2111, %v2109
        %v2172 = vpack.c.b16 %v2114, %v2112
        %v2173 = vpack.c.b16 %v2115, %v2113
        %v2174 = vpack.c.b16 %v2118, %v2116
        %v2175 = vpack.c.b16 %v2119, %v2117
        %v2176 = vpack.c.b16 %v2122, %v2120
        %v2177 = vpack.c.b16 %v2123, %v2121
        %v2178 = vpack.c.b16 %v2126, %v2124
        %v2179 = vpack.c.b16 %v2127, %v2125
        %v2180 = vpack.c.b16 %v2130, %v2128
        %v2181 = vpack.c.b16 %v2131, %v2129
        %v2182 = vpack.c.b16 %v2134, %v2132
        %v2183 = vpack.c.b16 %v2135, %v2133
        %v2184 = vpack.c.b16 %v2138, %v2136
        %v2185 = vpack.c.b16 %v2139, %v2137
        %v2186 = vpack.c.b16 %v2142, %v2140
        %v2187 = vpack.c.b16 %v2143, %v2141
        %v2188 = vpack.c.b16 %v2146, %v2144
        %v2189 = vpack.c.b16 %v2147, %v2145
        %v2190 = vpack.c.b16 %v2150, %v2148
        %v2191 = vpack.c.b16 %v2151, %v2149
        %v2192 = vpack.c.b16 %v2154, %v2152
        %v2193 = vpack.c.b16 %v2155, %v2153
        %v2194 = vpack.c.b16 %v2158, %v2156
        %v2195 = vpack.c.b16 %v2159, %v2157
        %v2196 = vpack.c.b16 %v2162, %v2160
        %v2197 = vpack.c.b16 %v2163, %v2161
        %v2198 = vpack.c.b16 %v2166, %v2164
        %v2199 = vpack.c.b16 %v2167, %v2165
        %2232 = vmatpush.bf16.msra.mxu0 %v2182
        %2233 = vmatpush.bf16.msra.mxu0 %v2180
        %2234 = vmatpush.bf16.msra.mxu0 %v2178
        %2235 = vmatpush.bf16.msra.mxu0 %v2176
        %2236 = vmatpush.bf16.msra.mxu0 %v2174
        %2237 = vmatpush.bf16.msra.mxu0 %v2172
        %2238 = vmatpush.bf16.msra.mxu0 %v2170
        %2239 = vmatpush.bf16.msra.mxu0 %v2168
        %2240 = vmatmul.bf16.gmra.mxu0 %v2028
        %v2241 = vpop.f32.mrf.mxu0
        %v2242 = vadd.f32 %v2068, %v2241
        %v2243 = vpop.f32.mrf.mxu0
        %v2244 = vadd.f32 %v2068, %v2243
        %2245 = vmatmul.bf16.gmra.mxu0 %v2030
        %v2246 = vpop.f32.mrf.mxu0
        %v2247 = vadd.f32 %v2068, %v2246
        %v2248 = vpop.f32.mrf.mxu0
        %v2249 = vadd.f32 %v2068, %v2248
        %2250 = vdwg.mxu0
        %2251 = vmatpush.bf16.msra.mxu0 %v2198
        %2252 = vmatpush.bf16.msra.mxu0 %v2196
        %2253 = vmatpush.bf16.msra.mxu0 %v2194
        %2254 = vmatpush.bf16.msra.mxu0 %v2192
        %2255 = vmatpush.bf16.msra.mxu0 %v2190
        %2256 = vmatpush.bf16.msra.mxu0 %v2188
        %2257 = vmatpush.bf16.msra.mxu0 %v2186
        %2258 = vmatpush.bf16.msra.mxu0 %v2184
        %2259 = vmatmul.bf16.gmra.mxu0 %v2029
        %v2260 = vpop.f32.mrf.mxu0
        %v2261 = vadd.f32 %v2242, %v2260
        %v2262 = vpop.f32.mrf.mxu0
        %v2263 = vadd.f32 %v2244, %v2262
        %2264 = vmatmul.bf16.gmra.mxu0 %v2031
        %v2265 = vpop.f32.mrf.mxu0
        %v2266 = vadd.f32 %v2247, %v2265
        %v2267 = vpop.f32.mrf.mxu0
        %v2268 = vadd.f32 %v2249, %v2267
        %2269 = vdwg.mxu0
        %2270 = vmatpush.bf16.msra.mxu0 %v2183
        %2271 = vmatpush.bf16.msra.mxu0 %v2181
        %2272 = vmatpush.bf16.msra.mxu0 %v2179
        %2273 = vmatpush.bf16.msra.mxu0 %v2177
        %2274 = vmatpush.bf16.msra.mxu0 %v2175
        %2275 = vmatpush.bf16.msra.mxu0 %v2173
        %2276 = vmatpush.bf16.msra.mxu0 %v2171
        %2277 = vmatpush.bf16.msra.mxu0 %v2169
        %2278 = vmatmul.bf16.gmra.mxu0 %v2028
        %v2279 = vpop.f32.mrf.mxu0
        %v2280 = vadd.f32 %v2069, %v2279
        %v2281 = vpop.f32.mrf.mxu0
        %v2282 = vadd.f32 %v2069, %v2281
        %2283 = vmatmul.bf16.gmra.mxu0 %v2030
        %v2284 = vpop.f32.mrf.mxu0
        %v2285 = vadd.f32 %v2069, %v2284
        %v2286 = vpop.f32.mrf.mxu0
        %v2287 = vadd.f32 %v2069, %v2286
        %2288 = vdwg.mxu0
        %2289 = vmatpush.bf16.msra.mxu0 %v2199
        %2290 = vmatpush.bf16.msra.mxu0 %v2197
        %2291 = vmatpush.bf16.msra.mxu0 %v2195
        %2292 = vmatpush.bf16.msra.mxu0 %v2193
        %2293 = vmatpush.bf16.msra.mxu0 %v2191
        %2294 = vmatpush.bf16.msra.mxu0 %v2189
        %2295 = vmatpush.bf16.msra.mxu0 %v2187
        %2296 = vmatpush.bf16.msra.mxu0 %v2185
        %2297 = vmatmul.bf16.gmra.mxu0 %v2029
        %v2298 = vpop.f32.mrf.mxu0
        %v2299 = vadd.f32 %v2280, %v2298
        %v2300 = vpop.f32.mrf.mxu0
        %v2301 = vadd.f32 %v2282, %v2300
        %2302 = vmatmul.bf16.gmra.mxu0 %v2031
        %v2303 = vpop.f32.mrf.mxu0
        %v2304 = vadd.f32 %v2285, %v2303
        %v2305 = vpop.f32.mrf.mxu0
        %v2306 = vadd.f32 %v2287, %v2305
        %2307 = vdwg.mxu0
        %v2308 = vmax.f32 %v2261, 0.0
        %v2309 = vmax.f32 %v2299, 0.0
        %v2310 = vmax.f32 %v2263, 0.0
        %v2311 = vmax.f32 %v2301, 0.0
        %v2312 = vmax.f32 %v2266, 0.0
        %v2313 = vmax.f32 %v2304, 0.0
        %v2314 = vmax.f32 %v2268, 0.0
        %v2315 = vmax.f32 %v2306, 0.0
        %v2316 = vpack.c.bf16 %v2310, %v2308
        %v2317 = vpack.c.bf16 %v2311, %v2309
        %v2318 = vpack.c.bf16 %v2314, %v2312
        %v2319 = vpack.c.bf16 %v2315, %v2313
        %s2320 = scalar_lea.vmem [#allocation13], 256
        %v2321 = vld [vmem:[%s2320] sm:$0xff]
        %v2322 = vld [vmem:[%s2320 + $0x8] sm:$0xff]
        %v2323 = vld [vmem:[%s2320 + $0x10] sm:$0xff]
        %v2324 = vld [vmem:[%s2320 + $0x18] sm:$0xff]
        %v2325 = vld [vmem:[%s2320 + $0x20] sm:$0xff]
        %v2326 = vld [vmem:[%s2320 + $0x28] sm:$0xff]
        %v2327 = vld [vmem:[%s2320 + $0x30] sm:$0xff]
        %v2328 = vld [vmem:[%s2320 + $0x38] sm:$0xff]
        %v2329 = vld [vmem:[%s2320 + $0x40] sm:$0xff]
        %v2330 = vld [vmem:[%s2320 + $0x48] sm:$0xff]
        %v2331 = vld [vmem:[%s2320 + $0x50] sm:$0xff]
        %v2332 = vld [vmem:[%s2320 + $0x58] sm:$0xff]
        %v2333 = vld [vmem:[%s2320 + $0x60] sm:$0xff]
        %v2334 = vld [vmem:[%s2320 + $0x68] sm:$0xff]
        %v2335 = vld [vmem:[%s2320 + $0x70] sm:$0xff]
        %v2336 = vld [vmem:[%s2320 + $0x78] sm:$0xff]
        %v2337 = vld [vmem:[%s2320 + $0x80] sm:$0xff]
        %v2338 = vld [vmem:[%s2320 + $0x88] sm:$0xff]
        %v2339 = vld [vmem:[%s2320 + $0x90] sm:$0xff]
        %v2340 = vld [vmem:[%s2320 + $0x98] sm:$0xff]
        %v2341 = vld [vmem:[%s2320 + $0xa0] sm:$0xff]
        %v2342 = vld [vmem:[%s2320 + $0xa8] sm:$0xff]
        %v2343 = vld [vmem:[%s2320 + $0xb0] sm:$0xff]
        %v2344 = vld [vmem:[%s2320 + $0xb8] sm:$0xff]
        %v2345 = vld [vmem:[%s2320 + $0xc0] sm:$0xff]
        %v2346 = vld [vmem:[%s2320 + $0xc8] sm:$0xff]
        %v2347 = vld [vmem:[%s2320 + $0xd0] sm:$0xff]
        %v2348 = vld [vmem:[%s2320 + $0xd8] sm:$0xff]
        %v2349 = vld [vmem:[%s2320 + $0xe0] sm:$0xff]
        %v2350 = vld [vmem:[%s2320 + $0xe8] sm:$0xff]
        %v2351 = vld [vmem:[%s2320 + $0xf0] sm:$0xff]
        %v2352 = vld [vmem:[%s2320 + $0xf8] sm:$0xff]
        %s2353 = scalar_lea.vmem [#allocation14], 2
        %v2354 = vld [vmem:[%s2353] sm:$0x3]
        %v2356 = vperm.slane %v2354, 0
        %v2357 = vperm.slane %v2354, 1
        %v2392 = vunpack.c.l.b16 %v2321
        %v2393 = vunpack.c.h.b16 %v2321
        %v2394 = vunpack.c.l.b16 %v2322
        %v2395 = vunpack.c.h.b16 %v2322
        %v2396 = vunpack.c.l.b16 %v2323
        %v2397 = vunpack.c.h.b16 %v2323
        %v2398 = vunpack.c.l.b16 %v2324
        %v2399 = vunpack.c.h.b16 %v2324
        %v2400 = vunpack.c.l.b16 %v2325
        %v2401 = vunpack.c.h.b16 %v2325
        %v2402 = vunpack.c.l.b16 %v2326
        %v2403 = vunpack.c.h.b16 %v2326
        %v2404 = vunpack.c.l.b16 %v2327
        %v2405 = vunpack.c.h.b16 %v2327
        %v2406 = vunpack.c.l.b16 %v2328
        %v2407 = vunpack.c.h.b16 %v2328
        %v2408 = vunpack.c.l.b16 %v2329
        %v2409 = vunpack.c.h.b16 %v2329
        %v2410 = vunpack.c.l.b16 %v2330
        %v2411 = vunpack.c.h.b16 %v2330
        %v2412 = vunpack.c.l.b16 %v2331
        %v2413 = vunpack.c.h.b16 %v2331
        %v2414 = vunpack.c.l.b16 %v2332
        %v2415 = vunpack.c.h.b16 %v2332
        %v2416 = vunpack.c.l.b16 %v2333
        %v2417 = vunpack.c.h.b16 %v2333
        %v2418 = vunpack.c.l.b16 %v2334
        %v2419 = vunpack.c.h.b16 %v2334
        %v2420 = vunpack.c.l.b16 %v2335
        %v2421 = vunpack.c.h.b16 %v2335
        %v2422 = vunpack.c.l.b16 %v2336
        %v2423 = vunpack.c.h.b16 %v2336
        %v2424 = vunpack.c.l.b16 %v2337
        %v2425 = vunpack.c.h.b16 %v2337
        %v2426 = vunpack.c.l.b16 %v2338
        %v2427 = vunpack.c.h.b16 %v2338
        %v2428 = vunpack.c.l.b16 %v2339
        %v2429 = vunpack.c.h.b16 %v2339
        %v2430 = vunpack.c.l.b16 %v2340
        %v2431 = vunpack.c.h.b16 %v2340
        %v2432 = vunpack.c.l.b16 %v2341
        %v2433 = vunpack.c.h.b16 %v2341
        %v2434 = vunpack.c.l.b16 %v2342
        %v2435 = vunpack.c.h.b16 %v2342
        %v2436 = vunpack.c.l.b16 %v2343
        %v2437 = vunpack.c.h.b16 %v2343
        %v2438 = vunpack.c.l.b16 %v2344
        %v2439 = vunpack.c.h.b16 %v2344
        %v2440 = vunpack.c.l.b16 %v2345
        %v2441 = vunpack.c.h.b16 %v2345
        %v2442 = vunpack.c.l.b16 %v2346
        %v2443 = vunpack.c.h.b16 %v2346
        %v2444 = vunpack.c.l.b16 %v2347
        %v2445 = vunpack.c.h.b16 %v2347
        %v2446 = vunpack.c.l.b16 %v2348
        %v2447 = vunpack.c.h.b16 %v2348
        %v2448 = vunpack.c.l.b16 %v2349
        %v2449 = vunpack.c.h.b16 %v2349
        %v2450 = vunpack.c.l.b16 %v2350
        %v2451 = vunpack.c.h.b16 %v2350
        %v2452 = vunpack.c.l.b16 %v2351
        %v2453 = vunpack.c.h.b16 %v2351
        %v2454 = vunpack.c.l.b16 %v2352
        %v2455 = vunpack.c.h.b16 %v2352
        %v2456 = vpack.c.b16 %v2394, %v2392
        %v2457 = vpack.c.b16 %v2395, %v2393
        %v2458 = vpack.c.b16 %v2398, %v2396
        %v2459 = vpack.c.b16 %v2399, %v2397
        %v2460 = vpack.c.b16 %v2402, %v2400
        %v2461 = vpack.c.b16 %v2403, %v2401
        %v2462 = vpack.c.b16 %v2406, %v2404
        %v2463 = vpack.c.b16 %v2407, %v2405
        %v2464 = vpack.c.b16 %v2410, %v2408
        %v2465 = vpack.c.b16 %v2411, %v2409
        %v2466 = vpack.c.b16 %v2414, %v2412
        %v2467 = vpack.c.b16 %v2415, %v2413
        %v2468 = vpack.c.b16 %v2418, %v2416
        %v2469 = vpack.c.b16 %v2419, %v2417
        %v2470 = vpack.c.b16 %v2422, %v2420
        %v2471 = vpack.c.b16 %v2423, %v2421
        %v2472 = vpack.c.b16 %v2426, %v2424
        %v2473 = vpack.c.b16 %v2427, %v2425
        %v2474 = vpack.c.b16 %v2430, %v2428
        %v2475 = vpack.c.b16 %v2431, %v2429
        %v2476 = vpack.c.b16 %v2434, %v2432
        %v2477 = vpack.c.b16 %v2435, %v2433
        %v2478 = vpack.c.b16 %v2438, %v2436
        %v2479 = vpack.c.b16 %v2439, %v2437
        %v2480 = vpack.c.b16 %v2442, %v2440
        %v2481 = vpack.c.b16 %v2443, %v2441
        %v2482 = vpack.c.b16 %v2446, %v2444
        %v2483 = vpack.c.b16 %v2447, %v2445
        %v2484 = vpack.c.b16 %v2450, %v2448
        %v2485 = vpack.c.b16 %v2451, %v2449
        %v2486 = vpack.c.b16 %v2454, %v2452
        %v2487 = vpack.c.b16 %v2455, %v2453
        %2520 = vmatpush.bf16.msra.mxu0 %v2470
        %2521 = vmatpush.bf16.msra.mxu0 %v2468
        %2522 = vmatpush.bf16.msra.mxu0 %v2466
        %2523 = vmatpush.bf16.msra.mxu0 %v2464
        %2524 = vmatpush.bf16.msra.mxu0 %v2462
        %2525 = vmatpush.bf16.msra.mxu0 %v2460
        %2526 = vmatpush.bf16.msra.mxu0 %v2458
        %2527 = vmatpush.bf16.msra.mxu0 %v2456
        %2528 = vmatmul.bf16.gmra.mxu0 %v2316
        %v2529 = vpop.f32.mrf.mxu0
        %v2530 = vadd.f32 %v2356, %v2529
        %v2531 = vpop.f32.mrf.mxu0
        %v2532 = vadd.f32 %v2356, %v2531
        %2533 = vmatmul.bf16.gmra.mxu0 %v2318
        %v2534 = vpop.f32.mrf.mxu0
        %v2535 = vadd.f32 %v2356, %v2534
        %v2536 = vpop.f32.mrf.mxu0
        %v2537 = vadd.f32 %v2356, %v2536
        %2538 = vdwg.mxu0
        %2539 = vmatpush.bf16.msra.mxu0 %v2486
        %2540 = vmatpush.bf16.msra.mxu0 %v2484
        %2541 = vmatpush.bf16.msra.mxu0 %v2482
        %2542 = vmatpush.bf16.msra.mxu0 %v2480
        %2543 = vmatpush.bf16.msra.mxu0 %v2478
        %2544 = vmatpush.bf16.msra.mxu0 %v2476
        %2545 = vmatpush.bf16.msra.mxu0 %v2474
        %2546 = vmatpush.bf16.msra.mxu0 %v2472
        %2547 = vmatmul.bf16.gmra.mxu0 %v2317
        %v2548 = vpop.f32.mrf.mxu0
        %v2549 = vadd.f32 %v2530, %v2548
        %v2550 = vpop.f32.mrf.mxu0
        %v2551 = vadd.f32 %v2532, %v2550
        %2552 = vmatmul.bf16.gmra.mxu0 %v2319
        %v2553 = vpop.f32.mrf.mxu0
        %v2554 = vadd.f32 %v2535, %v2553
        %v2555 = vpop.f32.mrf.mxu0
        %v2556 = vadd.f32 %v2537, %v2555
        %2557 = vdwg.mxu0
        %2558 = vmatpush.bf16.msra.mxu0 %v2471
        %2559 = vmatpush.bf16.msra.mxu0 %v2469
        %2560 = vmatpush.bf16.msra.mxu0 %v2467
        %2561 = vmatpush.bf16.msra.mxu0 %v2465
        %2562 = vmatpush.bf16.msra.mxu0 %v2463
        %2563 = vmatpush.bf16.msra.mxu0 %v2461
        %2564 = vmatpush.bf16.msra.mxu0 %v2459
        %2565 = vmatpush.bf16.msra.mxu0 %v2457
        %2566 = vmatmul.bf16.gmra.mxu0 %v2316
        %v2567 = vpop.f32.mrf.mxu0
        %v2568 = vadd.f32 %v2357, %v2567
        %v2569 = vpop.f32.mrf.mxu0
        %v2570 = vadd.f32 %v2357, %v2569
        %2571 = vmatmul.bf16.gmra.mxu0 %v2318
        %v2572 = vpop.f32.mrf.mxu0
        %v2573 = vadd.f32 %v2357, %v2572
        %v2574 = vpop.f32.mrf.mxu0
        %v2575 = vadd.f32 %v2357, %v2574
        %2576 = vdwg.mxu0
        %2577 = vmatpush.bf16.msra.mxu0 %v2487
        %2578 = vmatpush.bf16.msra.mxu0 %v2485
        %2579 = vmatpush.bf16.msra.mxu0 %v2483
        %2580 = vmatpush.bf16.msra.mxu0 %v2481
        %2581 = vmatpush.bf16.msra.mxu0 %v2479
        %2582 = vmatpush.bf16.msra.mxu0 %v2477
        %2583 = vmatpush.bf16.msra.mxu0 %v2475
        %2584 = vmatpush.bf16.msra.mxu0 %v2473
        %2585 = vmatmul.bf16.gmra.mxu0 %v2317
        %v2586 = vpop.f32.mrf.mxu0
        %v2587 = vadd.f32 %v2568, %v2586
        %v2588 = vpop.f32.mrf.mxu0
        %v2589 = vadd.f32 %v2570, %v2588
        %2590 = vmatmul.bf16.gmra.mxu0 %v2319
        %v2591 = vpop.f32.mrf.mxu0
        %v2592 = vadd.f32 %v2573, %v2591
        %v2593 = vpop.f32.mrf.mxu0
        %v2594 = vadd.f32 %v2575, %v2593
        %2595 = vdwg.mxu0
        %v2596 = vmax.f32 %v2549, 0.0
        %v2597 = vmax.f32 %v2587, 0.0
        %v2598 = vmax.f32 %v2551, 0.0
        %v2599 = vmax.f32 %v2589, 0.0
        %v2600 = vmax.f32 %v2554, 0.0
        %v2601 = vmax.f32 %v2592, 0.0
        %v2602 = vmax.f32 %v2556, 0.0
        %v2603 = vmax.f32 %v2594, 0.0
        %v2604 = vadd.f32 %v2596, %v1580
        %v2605 = vadd.f32 %v2597, %v1581
        %v2606 = vadd.f32 %v2598, %v1582
        %v2607 = vadd.f32 %v2599, %v1583
        %v2608 = vadd.f32 %v2600, %v1584
        %v2609 = vadd.f32 %v2601, %v1585
        %v2610 = vadd.f32 %v2602, %v1586
        %v2611 = vadd.f32 %v2603, %v1587
        %v2612 = vpack.c.bf16 %v2606, %v2604
        %v2613 = vpack.c.bf16 %v2607, %v2605
        %v2614 = vpack.c.bf16 %v2610, %v2608
        %v2615 = vpack.c.bf16 %v2611, %v2609
        %s2616 = scalar_lea.vmem [#allocation7], 512
        %v2617 = vld [vmem:[%s2616] sm:$0xff]
        %v2618 = vld [vmem:[%s2616 + $0x8] sm:$0xff]
        %v2619 = vld [vmem:[%s2616 + $0x10] sm:$0xff]
        %v2620 = vld [vmem:[%s2616 + $0x18] sm:$0xff]
        %v2621 = vld [vmem:[%s2616 + $0x20] sm:$0xff]
        %v2622 = vld [vmem:[%s2616 + $0x28] sm:$0xff]
        %v2623 = vld [vmem:[%s2616 + $0x30] sm:$0xff]
        %v2624 = vld [vmem:[%s2616 + $0x38] sm:$0xff]
        %v2625 = vld [vmem:[%s2616 + $0x40] sm:$0xff]
        %v2626 = vld [vmem:[%s2616 + $0x48] sm:$0xff]
        %v2627 = vld [vmem:[%s2616 + $0x50] sm:$0xff]
        %v2628 = vld [vmem:[%s2616 + $0x58] sm:$0xff]
        %v2629 = vld [vmem:[%s2616 + $0x60] sm:$0xff]
        %v2630 = vld [vmem:[%s2616 + $0x68] sm:$0xff]
        %v2631 = vld [vmem:[%s2616 + $0x70] sm:$0xff]
        %v2632 = vld [vmem:[%s2616 + $0x78] sm:$0xff]
        %v2633 = vld [vmem:[%s2616 + $0x80] sm:$0xff]
        %v2634 = vld [vmem:[%s2616 + $0x88] sm:$0xff]
        %v2635 = vld [vmem:[%s2616 + $0x90] sm:$0xff]
        %v2636 = vld [vmem:[%s2616 + $0x98] sm:$0xff]
        %v2637 = vld [vmem:[%s2616 + $0xa0] sm:$0xff]
        %v2638 = vld [vmem:[%s2616 + $0xa8] sm:$0xff]
        %v2639 = vld [vmem:[%s2616 + $0xb0] sm:$0xff]
        %v2640 = vld [vmem:[%s2616 + $0xb8] sm:$0xff]
        %v2641 = vld [vmem:[%s2616 + $0xc0] sm:$0xff]
        %v2642 = vld [vmem:[%s2616 + $0xc8] sm:$0xff]
        %v2643 = vld [vmem:[%s2616 + $0xd0] sm:$0xff]
        %v2644 = vld [vmem:[%s2616 + $0xd8] sm:$0xff]
        %v2645 = vld [vmem:[%s2616 + $0xe0] sm:$0xff]
        %v2646 = vld [vmem:[%s2616 + $0xe8] sm:$0xff]
        %v2647 = vld [vmem:[%s2616 + $0xf0] sm:$0xff]
        %v2648 = vld [vmem:[%s2616 + $0xf8] sm:$0xff]
        %s2649 = scalar_lea.vmem [#allocation8], 4
        %v2650 = vld [vmem:[%s2649] sm:$0x3]
        %v2652 = vperm.slane %v2650, 0
        %v2653 = vperm.slane %v2650, 1
        %v2688 = vunpack.c.l.b16 %v2617
        %v2689 = vunpack.c.h.b16 %v2617
        %v2690 = vunpack.c.l.b16 %v2618
        %v2691 = vunpack.c.h.b16 %v2618
        %v2692 = vunpack.c.l.b16 %v2619
        %v2693 = vunpack.c.h.b16 %v2619
        %v2694 = vunpack.c.l.b16 %v2620
        %v2695 = vunpack.c.h.b16 %v2620
        %v2696 = vunpack.c.l.b16 %v2621
        %v2697 = vunpack.c.h.b16 %v2621
        %v2698 = vunpack.c.l.b16 %v2622
        %v2699 = vunpack.c.h.b16 %v2622
        %v2700 = vunpack.c.l.b16 %v2623
        %v2701 = vunpack.c.h.b16 %v2623
        %v2702 = vunpack.c.l.b16 %v2624
        %v2703 = vunpack.c.h.b16 %v2624
        %v2704 = vunpack.c.l.b16 %v2625
        %v2705 = vunpack.c.h.b16 %v2625
        %v2706 = vunpack.c.l.b16 %v2626
        %v2707 = vunpack.c.h.b16 %v2626
        %v2708 = vunpack.c.l.b16 %v2627
        %v2709 = vunpack.c.h.b16 %v2627
        %v2710 = vunpack.c.l.b16 %v2628
        %v2711 = vunpack.c.h.b16 %v2628
        %v2712 = vunpack.c.l.b16 %v2629
        %v2713 = vunpack.c.h.b16 %v2629
        %v2714 = vunpack.c.l.b16 %v2630
        %v2715 = vunpack.c.h.b16 %v2630
        %v2716 = vunpack.c.l.b16 %v2631
        %v2717 = vunpack.c.h.b16 %v2631
        %v2718 = vunpack.c.l.b16 %v2632
        %v2719 = vunpack.c.h.b16 %v2632
        %v2720 = vunpack.c.l.b16 %v2633
        %v2721 = vunpack.c.h.b16 %v2633
        %v2722 = vunpack.c.l.b16 %v2634
        %v2723 = vunpack.c.h.b16 %v2634
        %v2724 = vunpack.c.l.b16 %v2635
        %v2725 = vunpack.c.h.b16 %v2635
        %v2726 = vunpack.c.l.b16 %v2636
        %v2727 = vunpack.c.h.b16 %v2636
        %v2728 = vunpack.c.l.b16 %v2637
        %v2729 = vunpack.c.h.b16 %v2637
        %v2730 = vunpack.c.l.b16 %v2638
        %v2731 = vunpack.c.h.b16 %v2638
        %v2732 = vunpack.c.l.b16 %v2639
        %v2733 = vunpack.c.h.b16 %v2639
        %v2734 = vunpack.c.l.b16 %v2640
        %v2735 = vunpack.c.h.b16 %v2640
        %v2736 = vunpack.c.l.b16 %v2641
        %v2737 = vunpack.c.h.b16 %v2641
        %v2738 = vunpack.c.l.b16 %v2642
        %v2739 = vunpack.c.h.b16 %v2642
        %v2740 = vunpack.c.l.b16 %v2643
        %v2741 = vunpack.c.h.b16 %v2643
        %v2742 = vunpack.c.l.b16 %v2644
        %v2743 = vunpack.c.h.b16 %v2644
        %v2744 = vunpack.c.l.b16 %v2645
        %v2745 = vunpack.c.h.b16 %v2645
        %v2746 = vunpack.c.l.b16 %v2646
        %v2747 = vunpack.c.h.b16 %v2646
        %v2748 = vunpack.c.l.b16 %v2647
        %v2749 = vunpack.c.h.b16 %v2647
        %v2750 = vunpack.c.l.b16 %v2648
        %v2751 = vunpack.c.h.b16 %v2648
        %v2752 = vpack.c.b16 %v2690, %v2688
        %v2753 = vpack.c.b16 %v2691, %v2689
        %v2754 = vpack.c.b16 %v2694, %v2692
        %v2755 = vpack.c.b16 %v2695, %v2693
        %v2756 = vpack.c.b16 %v2698, %v2696
        %v2757 = vpack.c.b16 %v2699, %v2697
        %v2758 = vpack.c.b16 %v2702, %v2700
        %v2759 = vpack.c.b16 %v2703, %v2701
        %v2760 = vpack.c.b16 %v2706, %v2704
        %v2761 = vpack.c.b16 %v2707, %v2705
        %v2762 = vpack.c.b16 %v2710, %v2708
        %v2763 = vpack.c.b16 %v2711, %v2709
        %v2764 = vpack.c.b16 %v2714, %v2712
        %v2765 = vpack.c.b16 %v2715, %v2713
        %v2766 = vpack.c.b16 %v2718, %v2716
        %v2767 = vpack.c.b16 %v2719, %v2717
        %v2768 = vpack.c.b16 %v2722, %v2720
        %v2769 = vpack.c.b16 %v2723, %v2721
        %v2770 = vpack.c.b16 %v2726, %v2724
        %v2771 = vpack.c.b16 %v2727, %v2725
        %v2772 = vpack.c.b16 %v2730, %v2728
        %v2773 = vpack.c.b16 %v2731, %v2729
        %v2774 = vpack.c.b16 %v2734, %v2732
        %v2775 = vpack.c.b16 %v2735, %v2733
        %v2776 = vpack.c.b16 %v2738, %v2736
        %v2777 = vpack.c.b16 %v2739, %v2737
        %v2778 = vpack.c.b16 %v2742, %v2740
        %v2779 = vpack.c.b16 %v2743, %v2741
        %v2780 = vpack.c.b16 %v2746, %v2744
        %v2781 = vpack.c.b16 %v2747, %v2745
        %v2782 = vpack.c.b16 %v2750, %v2748
        %v2783 = vpack.c.b16 %v2751, %v2749
        %2816 = vmatpush.bf16.msra.mxu0 %v2766
        %2817 = vmatpush.bf16.msra.mxu0 %v2764
        %2818 = vmatpush.bf16.msra.mxu0 %v2762
        %2819 = vmatpush.bf16.msra.mxu0 %v2760
        %2820 = vmatpush.bf16.msra.mxu0 %v2758
        %2821 = vmatpush.bf16.msra.mxu0 %v2756
        %2822 = vmatpush.bf16.msra.mxu0 %v2754
        %2823 = vmatpush.bf16.msra.mxu0 %v2752
        %2824 = vmatmul.bf16.gmra.mxu0 %v2612
        %v2825 = vpop.f32.mrf.mxu0
        %v2826 = vadd.f32 %v2652, %v2825
        %v2827 = vpop.f32.mrf.mxu0
        %v2828 = vadd.f32 %v2652, %v2827
        %2829 = vmatmul.bf16.gmra.mxu0 %v2614
        %v2830 = vpop.f32.mrf.mxu0
        %v2831 = vadd.f32 %v2652, %v2830
        %v2832 = vpop.f32.mrf.mxu0
        %v2833 = vadd.f32 %v2652, %v2832
        %2834 = vdwg.mxu0
        %2835 = vmatpush.bf16.msra.mxu0 %v2782
        %2836 = vmatpush.bf16.msra.mxu0 %v2780
        %2837 = vmatpush.bf16.msra.mxu0 %v2778
        %2838 = vmatpush.bf16.msra.mxu0 %v2776
        %2839 = vmatpush.bf16.msra.mxu0 %v2774
        %2840 = vmatpush.bf16.msra.mxu0 %v2772
        %2841 = vmatpush.bf16.msra.mxu0 %v2770
        %2842 = vmatpush.bf16.msra.mxu0 %v2768
        %2843 = vmatmul.bf16.gmra.mxu0 %v2613
        %v2844 = vpop.f32.mrf.mxu0
        %v2845 = vadd.f32 %v2826, %v2844
        %v2846 = vpop.f32.mrf.mxu0
        %v2847 = vadd.f32 %v2828, %v2846
        %2848 = vmatmul.bf16.gmra.mxu0 %v2615
        %v2849 = vpop.f32.mrf.mxu0
        %v2850 = vadd.f32 %v2831, %v2849
        %v2851 = vpop.f32.mrf.mxu0
        %v2852 = vadd.f32 %v2833, %v2851
        %2853 = vdwg.mxu0
        %2854 = vmatpush.bf16.msra.mxu0 %v2767
        %2855 = vmatpush.bf16.msra.mxu0 %v2765
        %2856 = vmatpush.bf16.msra.mxu0 %v2763
        %2857 = vmatpush.bf16.msra.mxu0 %v2761
        %2858 = vmatpush.bf16.msra.mxu0 %v2759
        %2859 = vmatpush.bf16.msra.mxu0 %v2757
        %2860 = vmatpush.bf16.msra.mxu0 %v2755
        %2861 = vmatpush.bf16.msra.mxu0 %v2753
        %2862 = vmatmul.bf16.gmra.mxu0 %v2612
        %v2863 = vpop.f32.mrf.mxu0
        %v2864 = vadd.f32 %v2653, %v2863
        %v2865 = vpop.f32.mrf.mxu0
        %v2866 = vadd.f32 %v2653, %v2865
        %2867 = vmatmul.bf16.gmra.mxu0 %v2614
        %v2868 = vpop.f32.mrf.mxu0
        %v2869 = vadd.f32 %v2653, %v2868
        %v2870 = vpop.f32.mrf.mxu0
        %v2871 = vadd.f32 %v2653, %v2870
        %2872 = vdwg.mxu0
        %2873 = vmatpush.bf16.msra.mxu0 %v2783
        %2874 = vmatpush.bf16.msra.mxu0 %v2781
        %2875 = vmatpush.bf16.msra.mxu0 %v2779
        %2876 = vmatpush.bf16.msra.mxu0 %v2777
        %2877 = vmatpush.bf16.msra.mxu0 %v2775
        %2878 = vmatpush.bf16.msra.mxu0 %v2773
        %2879 = vmatpush.bf16.msra.mxu0 %v2771
        %2880 = vmatpush.bf16.msra.mxu0 %v2769
        %2881 = vmatmul.bf16.gmra.mxu0 %v2613
        %v2882 = vpop.f32.mrf.mxu0
        %v2883 = vadd.f32 %v2864, %v2882
        %v2884 = vpop.f32.mrf.mxu0
        %v2885 = vadd.f32 %v2866, %v2884
        %2886 = vmatmul.bf16.gmra.mxu0 %v2615
        %v2887 = vpop.f32.mrf.mxu0
        %v2888 = vadd.f32 %v2869, %v2887
        %v2889 = vpop.f32.mrf.mxu0
        %v2890 = vadd.f32 %v2871, %v2889
        %2891 = vdwg.mxu0
        %v2892 = vpack.c.bf16 %v2847, %v2845
        %v2893 = vpack.c.bf16 %v2885, %v2883
        %v2894 = vpack.c.bf16 %v2852, %v2850
        %v2895 = vpack.c.bf16 %v2890, %v2888
        %2896 = vmatpush.bf16.xpose.msra.mxu0 0
        %2897 = vmatpush.bf16.xpose.msra.mxu0 0
        %2898 = vmatpush.bf16.xpose.msra.mxu0 0
        %2899 = vmatpush.bf16.xpose.msra.mxu0 0
        %2900 = vmatpush.bf16.xpose.msra.mxu0 0
        %2901 = vmatpush.bf16.xpose.msra.mxu0 0
        %2902 = vmatpush.bf16.xpose.msra.mxu0 %v2614
        %2903 = vmatpush.bf16.xpose.msra.mxu0 %v2612
        %2904 = vmatmul.bf16.gmra.mxu0 %v2892
        %v2905 = vpop.f32.mrf.mxu0
        %v2906 = vadd.f32 0.0, %v2905
        %v2907 = vpop.f32.mrf.mxu0
        %v2908 = vadd.f32 0.0, %v2907
        %2909 = vmatmul.bf16.gmra.mxu0 %v2894
        %v2910 = vpop.f32.mrf.mxu0
        %v2911 = vadd.f32 0.0, %v2910
        %v2912 = vpop.f32.mrf.mxu0
        %v2913 = vadd.f32 0.0, %v2912
        %2914 = vdwg.mxu0
        %2915 = vmatpush.bf16.xpose.msra.mxu0 0
        %2916 = vmatpush.bf16.xpose.msra.mxu0 0
        %2917 = vmatpush.bf16.xpose.msra.mxu0 0
        %2918 = vmatpush.bf16.xpose.msra.mxu0 0
        %2919 = vmatpush.bf16.xpose.msra.mxu0 0
        %2920 = vmatpush.bf16.xpose.msra.mxu0 0
        %2921 = vmatpush.bf16.xpose.msra.mxu0 %v2615
        %2922 = vmatpush.bf16.xpose.msra.mxu0 %v2613
        %2923 = vmatmul.bf16.gmra.mxu0 %v2893
        %v2924 = vpop.f32.mrf.mxu0
        %v2925 = vadd.f32 %v2906, %v2924
        %v2926 = vpop.f32.mrf.mxu0
        %v2927 = vadd.f32 %v2908, %v2926
        %2928 = vmatmul.bf16.gmra.mxu0 %v2895
        %v2929 = vpop.f32.mrf.mxu0
        %v2930 = vadd.f32 %v2911, %v2929
        %v2931 = vpop.f32.mrf.mxu0
        %v2932 = vadd.f32 %v2913, %v2931
        %2933 = vdwg.mxu0
        %v2934 = vsel %vm889, %v2925, -inf
        %2935 = vmax.xlane.f32.xlu0 %v2934
        %v2936 = vpop.xlane.xlu0 %2935
        %v2937 = vsel %vm889, %v2927, -inf
        %2938 = vmax.xlane.f32.xlu0 %v2937
        %v2939 = vpop.xlane.xlu0 %2938
        %v2940 = vsel %vm889, %v2930, -inf
        %2941 = vmax.xlane.f32.xlu0 %v2940
        %v2942 = vpop.xlane.xlu0 %2941
        %v2943 = vsel %vm889, %v2932, -inf
        %2944 = vmax.xlane.f32.xlu0 %v2943
        %v2945 = vpop.xlane.xlu0 %2944
        %v2946 = vsub.f32 %v2925, %v2936
        %v2947 = vsub.f32 %v2927, %v2939
        %v2948 = vsub.f32 %v2930, %v2942
        %v2949 = vsub.f32 %v2932, %v2945
        %v2950 = vmul.f32 %v2946, 1.442695
        %v2951 = vpow.pop %v2950
        %v2952 = vmul.f32 %v2947, 1.442695
        %v2953 = vpow.pop %v2952
        %v2954 = vmul.f32 %v2948, 1.442695
        %v2955 = vpow.pop %v2954
        %v2956 = vmul.f32 %v2949, 1.442695
        %v2957 = vpow.pop %v2956
        %v2958 = vsub.f32 0.0, %v2936
        %v2959 = vsub.f32 0.0, %v2939
        %v2960 = vsub.f32 0.0, %v2942
        %v2961 = vsub.f32 0.0, %v2945
        %v2962 = vmul.f32 %v2958, 1.442695
        %v2963 = vpow.pop %v2962
        %v2964 = vmul.f32 %v2959, 1.442695
        %v2965 = vpow.pop %v2964
        %v2966 = vmul.f32 %v2960, 1.442695
        %v2967 = vpow.pop %v2966
        %v2968 = vmul.f32 %v2961, 1.442695
        %v2969 = vpow.pop %v2968
        %v2970 = vmul.f32 %v2963, 1e-05
        %v2971 = vmul.f32 %v2965, 1e-05
        %v2972 = vmul.f32 %v2967, 1e-05
        %v2973 = vmul.f32 %v2969, 1e-05
        %v2974 = vmul.f32 %v2970, %v565
        %v2975 = vmul.f32 %v2971, %v566
        %v2976 = vmul.f32 %v2972, %v567
        %v2977 = vmul.f32 %v2973, %v568
        %v2978 = vadd.f32 %v2951, %v2974
        %v2979 = vadd.f32 %v2953, %v2975
        %v2980 = vadd.f32 %v2955, %v2976
        %v2981 = vadd.f32 %v2957, %v2977
        %v2982 = vmul.f32 %v2978, %v546
        %v2983 = vmul.f32 %v2979, %v547
        %v2984 = vmul.f32 %v2980, %v548
        %v2985 = vmul.f32 %v2981, %v549
        %v2986 = vsel %vm889, %v2982, 0.0
        %2987 = vadd.xlane.f32.xlu0 %v2986
        %v2988 = vpop.xlane.xlu0 %2987
        %v2989 = vsel %vm889, %v2983, 0.0
        %2990 = vadd.xlane.f32.xlu0 %v2989
        %v2991 = vpop.xlane.xlu0 %2990
        %v2992 = vsel %vm889, %v2984, 0.0
        %2993 = vadd.xlane.f32.xlu0 %v2992
        %v2994 = vpop.xlane.xlu0 %2993
        %v2995 = vsel %vm889, %v2985, 0.0
        %2996 = vadd.xlane.f32.xlu0 %v2995
        %v2997 = vpop.xlane.xlu0 %2996
        %v2998 = vrcp.pop %v2988
        %v2999 = vrcp.pop %v2991
        %v3000 = vrcp.pop %v2994
        %v3001 = vrcp.pop %v2997
        %v3002 = vmul.f32 %v2982, %v2998
        %v3003 = vmul.f32 %v2983, %v2999
        %v3004 = vmul.f32 %v2984, %v3000
        %v3005 = vmul.f32 %v2985, %v3001
        %v3006 = vpack.c.bf16 %v3003, %v3002
        %v3007 = vpack.c.bf16 %v3005, %v3004
        %v3009 = vsel %vm889, %v3006, 0
        %v3012 = vsel %vm889, %v3007, 0
        %3014 = vmatpush.bf16.msra.mxu0 0
        %3015 = vmatpush.bf16.msra.mxu0 0
        %3016 = vmatpush.bf16.msra.mxu0 0
        %3017 = vmatpush.bf16.msra.mxu0 0
        %3018 = vmatpush.bf16.msra.mxu0 0
        %3019 = vmatpush.bf16.msra.mxu0 0
        %3020 = vmatpush.bf16.msra.mxu0 %v2614
        %3021 = vmatpush.bf16.msra.mxu0 %v2612
        %3022 = vmatmul.bf16.gmra.mxu0 %v3009
        %v3023 = vpop.f32.mrf.mxu0
        %v3024 = vadd.f32 0.0, %v3023
        %v3025 = vpop.f32.mrf.mxu0
        %v3026 = vadd.f32 0.0, %v3025
        %3027 = vmatmul.bf16.gmra.mxu0 %v3012
        %v3028 = vpop.f32.mrf.mxu0
        %v3029 = vadd.f32 0.0, %v3028
        %v3030 = vpop.f32.mrf.mxu0
        %v3031 = vadd.f32 0.0, %v3030
        %3032 = vdwg.mxu0
        %3033 = vmatpush.bf16.msra.mxu0 0
        %3034 = vmatpush.bf16.msra.mxu0 0
        %3035 = vmatpush.bf16.msra.mxu0 0
        %3036 = vmatpush.bf16.msra.mxu0 0
        %3037 = vmatpush.bf16.msra.mxu0 0
        %3038 = vmatpush.bf16.msra.mxu0 0
        %3039 = vmatpush.bf16.msra.mxu0 %v2615
        %3040 = vmatpush.bf16.msra.mxu0 %v2613
        %3041 = vmatmul.bf16.gmra.mxu0 %v3009
        %v3042 = vpop.f32.mrf.mxu0
        %v3043 = vadd.f32 0.0, %v3042
        %v3044 = vpop.f32.mrf.mxu0
        %v3045 = vadd.f32 0.0, %v3044
        %3046 = vmatmul.bf16.gmra.mxu0 %v3012
        %v3047 = vpop.f32.mrf.mxu0
        %v3048 = vadd.f32 0.0, %v3047
        %v3049 = vpop.f32.mrf.mxu0
        %v3050 = vadd.f32 0.0, %v3049
        %3051 = vdwg.mxu0
        %v3052 = vpack.c.bf16 %v3026, %v3024
        %v3053 = vpack.c.bf16 %v3045, %v3043
        %v3054 = vpack.c.bf16 %v3031, %v3029
        %v3055 = vpack.c.bf16 %v3050, %v3048
        %s3056 = scalar_lea.vmem [#allocation10], 512
        %v3057 = vld [vmem:[%s3056] sm:$0xff]
        %v3058 = vld [vmem:[%s3056 + $0x8] sm:$0xff]
        %v3059 = vld [vmem:[%s3056 + $0x10] sm:$0xff]
        %v3060 = vld [vmem:[%s3056 + $0x18] sm:$0xff]
        %v3061 = vld [vmem:[%s3056 + $0x20] sm:$0xff]
        %v3062 = vld [vmem:[%s3056 + $0x28] sm:$0xff]
        %v3063 = vld [vmem:[%s3056 + $0x30] sm:$0xff]
        %v3064 = vld [vmem:[%s3056 + $0x38] sm:$0xff]
        %v3065 = vld [vmem:[%s3056 + $0x40] sm:$0xff]
        %v3066 = vld [vmem:[%s3056 + $0x48] sm:$0xff]
        %v3067 = vld [vmem:[%s3056 + $0x50] sm:$0xff]
        %v3068 = vld [vmem:[%s3056 + $0x58] sm:$0xff]
        %v3069 = vld [vmem:[%s3056 + $0x60] sm:$0xff]
        %v3070 = vld [vmem:[%s3056 + $0x68] sm:$0xff]
        %v3071 = vld [vmem:[%s3056 + $0x70] sm:$0xff]
        %v3072 = vld [vmem:[%s3056 + $0x78] sm:$0xff]
        %v3073 = vld [vmem:[%s3056 + $0x80] sm:$0xff]
        %v3074 = vld [vmem:[%s3056 + $0x88] sm:$0xff]
        %v3075 = vld [vmem:[%s3056 + $0x90] sm:$0xff]
        %v3076 = vld [vmem:[%s3056 + $0x98] sm:$0xff]
        %v3077 = vld [vmem:[%s3056 + $0xa0] sm:$0xff]
        %v3078 = vld [vmem:[%s3056 + $0xa8] sm:$0xff]
        %v3079 = vld [vmem:[%s3056 + $0xb0] sm:$0xff]
        %v3080 = vld [vmem:[%s3056 + $0xb8] sm:$0xff]
        %v3081 = vld [vmem:[%s3056 + $0xc0] sm:$0xff]
        %v3082 = vld [vmem:[%s3056 + $0xc8] sm:$0xff]
        %v3083 = vld [vmem:[%s3056 + $0xd0] sm:$0xff]
        %v3084 = vld [vmem:[%s3056 + $0xd8] sm:$0xff]
        %v3085 = vld [vmem:[%s3056 + $0xe0] sm:$0xff]
        %v3086 = vld [vmem:[%s3056 + $0xe8] sm:$0xff]
        %v3087 = vld [vmem:[%s3056 + $0xf0] sm:$0xff]
        %v3088 = vld [vmem:[%s3056 + $0xf8] sm:$0xff]
        %s3089 = scalar_lea.vmem [#allocation11], 4
        %v3090 = vld [vmem:[%s3089] sm:$0x3]
        %v3092 = vperm.slane %v3090, 0
        %v3093 = vperm.slane %v3090, 1
        %v3128 = vunpack.c.l.b16 %v3057
        %v3129 = vunpack.c.h.b16 %v3057
        %v3130 = vunpack.c.l.b16 %v3058
        %v3131 = vunpack.c.h.b16 %v3058
        %v3132 = vunpack.c.l.b16 %v3059
        %v3133 = vunpack.c.h.b16 %v3059
        %v3134 = vunpack.c.l.b16 %v3060
        %v3135 = vunpack.c.h.b16 %v3060
        %v3136 = vunpack.c.l.b16 %v3061
        %v3137 = vunpack.c.h.b16 %v3061
        %v3138 = vunpack.c.l.b16 %v3062
        %v3139 = vunpack.c.h.b16 %v3062
        %v3140 = vunpack.c.l.b16 %v3063
        %v3141 = vunpack.c.h.b16 %v3063
        %v3142 = vunpack.c.l.b16 %v3064
        %v3143 = vunpack.c.h.b16 %v3064
        %v3144 = vunpack.c.l.b16 %v3065
        %v3145 = vunpack.c.h.b16 %v3065
        %v3146 = vunpack.c.l.b16 %v3066
        %v3147 = vunpack.c.h.b16 %v3066
        %v3148 = vunpack.c.l.b16 %v3067
        %v3149 = vunpack.c.h.b16 %v3067
        %v3150 = vunpack.c.l.b16 %v3068
        %v3151 = vunpack.c.h.b16 %v3068
        %v3152 = vunpack.c.l.b16 %v3069
        %v3153 = vunpack.c.h.b16 %v3069
        %v3154 = vunpack.c.l.b16 %v3070
        %v3155 = vunpack.c.h.b16 %v3070
        %v3156 = vunpack.c.l.b16 %v3071
        %v3157 = vunpack.c.h.b16 %v3071
        %v3158 = vunpack.c.l.b16 %v3072
        %v3159 = vunpack.c.h.b16 %v3072
        %v3160 = vunpack.c.l.b16 %v3073
        %v3161 = vunpack.c.h.b16 %v3073
        %v3162 = vunpack.c.l.b16 %v3074
        %v3163 = vunpack.c.h.b16 %v3074
        %v3164 = vunpack.c.l.b16 %v3075
        %v3165 = vunpack.c.h.b16 %v3075
        %v3166 = vunpack.c.l.b16 %v3076
        %v3167 = vunpack.c.h.b16 %v3076
        %v3168 = vunpack.c.l.b16 %v3077
        %v3169 = vunpack.c.h.b16 %v3077
        %v3170 = vunpack.c.l.b16 %v3078
        %v3171 = vunpack.c.h.b16 %v3078
        %v3172 = vunpack.c.l.b16 %v3079
        %v3173 = vunpack.c.h.b16 %v3079
        %v3174 = vunpack.c.l.b16 %v3080
        %v3175 = vunpack.c.h.b16 %v3080
        %v3176 = vunpack.c.l.b16 %v3081
        %v3177 = vunpack.c.h.b16 %v3081
        %v3178 = vunpack.c.l.b16 %v3082
        %v3179 = vunpack.c.h.b16 %v3082
        %v3180 = vunpack.c.l.b16 %v3083
        %v3181 = vunpack.c.h.b16 %v3083
        %v3182 = vunpack.c.l.b16 %v3084
        %v3183 = vunpack.c.h.b16 %v3084
        %v3184 = vunpack.c.l.b16 %v3085
        %v3185 = vunpack.c.h.b16 %v3085
        %v3186 = vunpack.c.l.b16 %v3086
        %v3187 = vunpack.c.h.b16 %v3086
        %v3188 = vunpack.c.l.b16 %v3087
        %v3189 = vunpack.c.h.b16 %v3087
        %v3190 = vunpack.c.l.b16 %v3088
        %v3191 = vunpack.c.h.b16 %v3088
        %v3192 = vpack.c.b16 %v3130, %v3128
        %v3193 = vpack.c.b16 %v3131, %v3129
        %v3194 = vpack.c.b16 %v3134, %v3132
        %v3195 = vpack.c.b16 %v3135, %v3133
        %v3196 = vpack.c.b16 %v3138, %v3136
        %v3197 = vpack.c.b16 %v3139, %v3137
        %v3198 = vpack.c.b16 %v3142, %v3140
        %v3199 = vpack.c.b16 %v3143, %v3141
        %v3200 = vpack.c.b16 %v3146, %v3144
        %v3201 = vpack.c.b16 %v3147, %v3145
        %v3202 = vpack.c.b16 %v3150, %v3148
        %v3203 = vpack.c.b16 %v3151, %v3149
        %v3204 = vpack.c.b16 %v3154, %v3152
        %v3205 = vpack.c.b16 %v3155, %v3153
        %v3206 = vpack.c.b16 %v3158, %v3156
        %v3207 = vpack.c.b16 %v3159, %v3157
        %v3208 = vpack.c.b16 %v3162, %v3160
        %v3209 = vpack.c.b16 %v3163, %v3161
        %v3210 = vpack.c.b16 %v3166, %v3164
        %v3211 = vpack.c.b16 %v3167, %v3165
        %v3212 = vpack.c.b16 %v3170, %v3168
        %v3213 = vpack.c.b16 %v3171, %v3169
        %v3214 = vpack.c.b16 %v3174, %v3172
        %v3215 = vpack.c.b16 %v3175, %v3173
        %v3216 = vpack.c.b16 %v3178, %v3176
        %v3217 = vpack.c.b16 %v3179, %v3177
        %v3218 = vpack.c.b16 %v3182, %v3180
        %v3219 = vpack.c.b16 %v3183, %v3181
        %v3220 = vpack.c.b16 %v3186, %v3184
        %v3221 = vpack.c.b16 %v3187, %v3185
        %v3222 = vpack.c.b16 %v3190, %v3188
        %v3223 = vpack.c.b16 %v3191, %v3189
        %3256 = vmatpush.bf16.msra.mxu0 %v3206
        %3257 = vmatpush.bf16.msra.mxu0 %v3204
        %3258 = vmatpush.bf16.msra.mxu0 %v3202
        %3259 = vmatpush.bf16.msra.mxu0 %v3200
        %3260 = vmatpush.bf16.msra.mxu0 %v3198
        %3261 = vmatpush.bf16.msra.mxu0 %v3196
        %3262 = vmatpush.bf16.msra.mxu0 %v3194
        %3263 = vmatpush.bf16.msra.mxu0 %v3192
        %3264 = vmatmul.bf16.gmra.mxu0 %v3052
        %v3265 = vpop.f32.mrf.mxu0
        %v3266 = vadd.f32 %v3092, %v3265
        %v3267 = vpop.f32.mrf.mxu0
        %v3268 = vadd.f32 %v3092, %v3267
        %3269 = vmatmul.bf16.gmra.mxu0 %v3054
        %v3270 = vpop.f32.mrf.mxu0
        %v3271 = vadd.f32 %v3092, %v3270
        %v3272 = vpop.f32.mrf.mxu0
        %v3273 = vadd.f32 %v3092, %v3272
        %3274 = vdwg.mxu0
        %3275 = vmatpush.bf16.msra.mxu0 %v3222
        %3276 = vmatpush.bf16.msra.mxu0 %v3220
        %3277 = vmatpush.bf16.msra.mxu0 %v3218
        %3278 = vmatpush.bf16.msra.mxu0 %v3216
        %3279 = vmatpush.bf16.msra.mxu0 %v3214
        %3280 = vmatpush.bf16.msra.mxu0 %v3212
        %3281 = vmatpush.bf16.msra.mxu0 %v3210
        %3282 = vmatpush.bf16.msra.mxu0 %v3208
        %3283 = vmatmul.bf16.gmra.mxu0 %v3053
        %v3284 = vpop.f32.mrf.mxu0
        %v3285 = vadd.f32 %v3266, %v3284
        %v3286 = vpop.f32.mrf.mxu0
        %v3287 = vadd.f32 %v3268, %v3286
        %3288 = vmatmul.bf16.gmra.mxu0 %v3055
        %v3289 = vpop.f32.mrf.mxu0
        %v3290 = vadd.f32 %v3271, %v3289
        %v3291 = vpop.f32.mrf.mxu0
        %v3292 = vadd.f32 %v3273, %v3291
        %3293 = vdwg.mxu0
        %3294 = vmatpush.bf16.msra.mxu0 %v3207
        %3295 = vmatpush.bf16.msra.mxu0 %v3205
        %3296 = vmatpush.bf16.msra.mxu0 %v3203
        %3297 = vmatpush.bf16.msra.mxu0 %v3201
        %3298 = vmatpush.bf16.msra.mxu0 %v3199
        %3299 = vmatpush.bf16.msra.mxu0 %v3197
        %3300 = vmatpush.bf16.msra.mxu0 %v3195
        %3301 = vmatpush.bf16.msra.mxu0 %v3193
        %3302 = vmatmul.bf16.gmra.mxu0 %v3052
        %v3303 = vpop.f32.mrf.mxu0
        %v3304 = vadd.f32 %v3093, %v3303
        %v3305 = vpop.f32.mrf.mxu0
        %v3306 = vadd.f32 %v3093, %v3305
        %3307 = vmatmul.bf16.gmra.mxu0 %v3054
        %v3308 = vpop.f32.mrf.mxu0
        %v3309 = vadd.f32 %v3093, %v3308
        %v3310 = vpop.f32.mrf.mxu0
        %v3311 = vadd.f32 %v3093, %v3310
        %3312 = vdwg.mxu0
        %3313 = vmatpush.bf16.msra.mxu0 %v3223
        %3314 = vmatpush.bf16.msra.mxu0 %v3221
        %3315 = vmatpush.bf16.msra.mxu0 %v3219
        %3316 = vmatpush.bf16.msra.mxu0 %v3217
        %3317 = vmatpush.bf16.msra.mxu0 %v3215
        %3318 = vmatpush.bf16.msra.mxu0 %v3213
        %3319 = vmatpush.bf16.msra.mxu0 %v3211
        %3320 = vmatpush.bf16.msra.mxu0 %v3209
        %3321 = vmatmul.bf16.gmra.mxu0 %v3053
        %v3322 = vpop.f32.mrf.mxu0
        %v3323 = vadd.f32 %v3304, %v3322
        %v3324 = vpop.f32.mrf.mxu0
        %v3325 = vadd.f32 %v3306, %v3324
        %3326 = vmatmul.bf16.gmra.mxu0 %v3055
        %v3327 = vpop.f32.mrf.mxu0
        %v3328 = vadd.f32 %v3309, %v3327
        %v3329 = vpop.f32.mrf.mxu0
        %v3330 = vadd.f32 %v3311, %v3329
        %3331 = vdwg.mxu0
        %v3332 = vmax.f32 %v3285, 0.0
        %v3333 = vmax.f32 %v3323, 0.0
        %v3334 = vmax.f32 %v3287, 0.0
        %v3335 = vmax.f32 %v3325, 0.0
        %v3336 = vmax.f32 %v3290, 0.0
        %v3337 = vmax.f32 %v3328, 0.0
        %v3338 = vmax.f32 %v3292, 0.0
        %v3339 = vmax.f32 %v3330, 0.0
        %v3340 = vpack.c.bf16 %v3334, %v3332
        %v3341 = vpack.c.bf16 %v3335, %v3333
        %v3342 = vpack.c.bf16 %v3338, %v3336
        %v3343 = vpack.c.bf16 %v3339, %v3337
        %s3344 = scalar_lea.vmem [#allocation13], 512
        %v3345 = vld [vmem:[%s3344] sm:$0xff]
        %v3346 = vld [vmem:[%s3344 + $0x8] sm:$0xff]
        %v3347 = vld [vmem:[%s3344 + $0x10] sm:$0xff]
        %v3348 = vld [vmem:[%s3344 + $0x18] sm:$0xff]
        %v3349 = vld [vmem:[%s3344 + $0x20] sm:$0xff]
        %v3350 = vld [vmem:[%s3344 + $0x28] sm:$0xff]
        %v3351 = vld [vmem:[%s3344 + $0x30] sm:$0xff]
        %v3352 = vld [vmem:[%s3344 + $0x38] sm:$0xff]
        %v3353 = vld [vmem:[%s3344 + $0x40] sm:$0xff]
        %v3354 = vld [vmem:[%s3344 + $0x48] sm:$0xff]
        %v3355 = vld [vmem:[%s3344 + $0x50] sm:$0xff]
        %v3356 = vld [vmem:[%s3344 + $0x58] sm:$0xff]
        %v3357 = vld [vmem:[%s3344 + $0x60] sm:$0xff]
        %v3358 = vld [vmem:[%s3344 + $0x68] sm:$0xff]
        %v3359 = vld [vmem:[%s3344 + $0x70] sm:$0xff]
        %v3360 = vld [vmem:[%s3344 + $0x78] sm:$0xff]
        %v3361 = vld [vmem:[%s3344 + $0x80] sm:$0xff]
        %v3362 = vld [vmem:[%s3344 + $0x88] sm:$0xff]
        %v3363 = vld [vmem:[%s3344 + $0x90] sm:$0xff]
        %v3364 = vld [vmem:[%s3344 + $0x98] sm:$0xff]
        %v3365 = vld [vmem:[%s3344 + $0xa0] sm:$0xff]
        %v3366 = vld [vmem:[%s3344 + $0xa8] sm:$0xff]
        %v3367 = vld [vmem:[%s3344 + $0xb0] sm:$0xff]
        %v3368 = vld [vmem:[%s3344 + $0xb8] sm:$0xff]
        %v3369 = vld [vmem:[%s3344 + $0xc0] sm:$0xff]
        %v3370 = vld [vmem:[%s3344 + $0xc8] sm:$0xff]
        %v3371 = vld [vmem:[%s3344 + $0xd0] sm:$0xff]
        %v3372 = vld [vmem:[%s3344 + $0xd8] sm:$0xff]
        %v3373 = vld [vmem:[%s3344 + $0xe0] sm:$0xff]
        %v3374 = vld [vmem:[%s3344 + $0xe8] sm:$0xff]
        %v3375 = vld [vmem:[%s3344 + $0xf0] sm:$0xff]
        %v3376 = vld [vmem:[%s3344 + $0xf8] sm:$0xff]
        %s3377 = scalar_lea.vmem [#allocation14], 4
        %v3378 = vld [vmem:[%s3377] sm:$0x3]
        %v3380 = vperm.slane %v3378, 0
        %v3381 = vperm.slane %v3378, 1
        %v3416 = vunpack.c.l.b16 %v3345
        %v3417 = vunpack.c.h.b16 %v3345
        %v3418 = vunpack.c.l.b16 %v3346
        %v3419 = vunpack.c.h.b16 %v3346
        %v3420 = vunpack.c.l.b16 %v3347
        %v3421 = vunpack.c.h.b16 %v3347
        %v3422 = vunpack.c.l.b16 %v3348
        %v3423 = vunpack.c.h.b16 %v3348
        %v3424 = vunpack.c.l.b16 %v3349
        %v3425 = vunpack.c.h.b16 %v3349
        %v3426 = vunpack.c.l.b16 %v3350
        %v3427 = vunpack.c.h.b16 %v3350
        %v3428 = vunpack.c.l.b16 %v3351
        %v3429 = vunpack.c.h.b16 %v3351
        %v3430 = vunpack.c.l.b16 %v3352
        %v3431 = vunpack.c.h.b16 %v3352
        %v3432 = vunpack.c.l.b16 %v3353
        %v3433 = vunpack.c.h.b16 %v3353
        %v3434 = vunpack.c.l.b16 %v3354
        %v3435 = vunpack.c.h.b16 %v3354
        %v3436 = vunpack.c.l.b16 %v3355
        %v3437 = vunpack.c.h.b16 %v3355
        %v3438 = vunpack.c.l.b16 %v3356
        %v3439 = vunpack.c.h.b16 %v3356
        %v3440 = vunpack.c.l.b16 %v3357
        %v3441 = vunpack.c.h.b16 %v3357
        %v3442 = vunpack.c.l.b16 %v3358
        %v3443 = vunpack.c.h.b16 %v3358
        %v3444 = vunpack.c.l.b16 %v3359
        %v3445 = vunpack.c.h.b16 %v3359
        %v3446 = vunpack.c.l.b16 %v3360
        %v3447 = vunpack.c.h.b16 %v3360
        %v3448 = vunpack.c.l.b16 %v3361
        %v3449 = vunpack.c.h.b16 %v3361
        %v3450 = vunpack.c.l.b16 %v3362
        %v3451 = vunpack.c.h.b16 %v3362
        %v3452 = vunpack.c.l.b16 %v3363
        %v3453 = vunpack.c.h.b16 %v3363
        %v3454 = vunpack.c.l.b16 %v3364
        %v3455 = vunpack.c.h.b16 %v3364
        %v3456 = vunpack.c.l.b16 %v3365
        %v3457 = vunpack.c.h.b16 %v3365
        %v3458 = vunpack.c.l.b16 %v3366
        %v3459 = vunpack.c.h.b16 %v3366
        %v3460 = vunpack.c.l.b16 %v3367
        %v3461 = vunpack.c.h.b16 %v3367
        %v3462 = vunpack.c.l.b16 %v3368
        %v3463 = vunpack.c.h.b16 %v3368
        %v3464 = vunpack.c.l.b16 %v3369
        %v3465 = vunpack.c.h.b16 %v3369
        %v3466 = vunpack.c.l.b16 %v3370
        %v3467 = vunpack.c.h.b16 %v3370
        %v3468 = vunpack.c.l.b16 %v3371
        %v3469 = vunpack.c.h.b16 %v3371
        %v3470 = vunpack.c.l.b16 %v3372
        %v3471 = vunpack.c.h.b16 %v3372
        %v3472 = vunpack.c.l.b16 %v3373
        %v3473 = vunpack.c.h.b16 %v3373
        %v3474 = vunpack.c.l.b16 %v3374
        %v3475 = vunpack.c.h.b16 %v3374
        %v3476 = vunpack.c.l.b16 %v3375
        %v3477 = vunpack.c.h.b16 %v3375
        %v3478 = vunpack.c.l.b16 %v3376
        %v3479 = vunpack.c.h.b16 %v3376
        %v3480 = vpack.c.b16 %v3418, %v3416
        %v3481 = vpack.c.b16 %v3419, %v3417
        %v3482 = vpack.c.b16 %v3422, %v3420
        %v3483 = vpack.c.b16 %v3423, %v3421
        %v3484 = vpack.c.b16 %v3426, %v3424
        %v3485 = vpack.c.b16 %v3427, %v3425
        %v3486 = vpack.c.b16 %v3430, %v3428
        %v3487 = vpack.c.b16 %v3431, %v3429
        %v3488 = vpack.c.b16 %v3434, %v3432
        %v3489 = vpack.c.b16 %v3435, %v3433
        %v3490 = vpack.c.b16 %v3438, %v3436
        %v3491 = vpack.c.b16 %v3439, %v3437
        %v3492 = vpack.c.b16 %v3442, %v3440
        %v3493 = vpack.c.b16 %v3443, %v3441
        %v3494 = vpack.c.b16 %v3446, %v3444
        %v3495 = vpack.c.b16 %v3447, %v3445
        %v3496 = vpack.c.b16 %v3450, %v3448
        %v3497 = vpack.c.b16 %v3451, %v3449
        %v3498 = vpack.c.b16 %v3454, %v3452
        %v3499 = vpack.c.b16 %v3455, %v3453
        %v3500 = vpack.c.b16 %v3458, %v3456
        %v3501 = vpack.c.b16 %v3459, %v3457
        %v3502 = vpack.c.b16 %v3462, %v3460
        %v3503 = vpack.c.b16 %v3463, %v3461
        %v3504 = vpack.c.b16 %v3466, %v3464
        %v3505 = vpack.c.b16 %v3467, %v3465
        %v3506 = vpack.c.b16 %v3470, %v3468
        %v3507 = vpack.c.b16 %v3471, %v3469
        %v3508 = vpack.c.b16 %v3474, %v3472
        %v3509 = vpack.c.b16 %v3475, %v3473
        %v3510 = vpack.c.b16 %v3478, %v3476
        %v3511 = vpack.c.b16 %v3479, %v3477
        %3544 = vmatpush.bf16.msra.mxu0 %v3494
        %3545 = vmatpush.bf16.msra.mxu0 %v3492
        %3546 = vmatpush.bf16.msra.mxu0 %v3490
        %3547 = vmatpush.bf16.msra.mxu0 %v3488
        %3548 = vmatpush.bf16.msra.mxu0 %v3486
        %3549 = vmatpush.bf16.msra.mxu0 %v3484
        %3550 = vmatpush.bf16.msra.mxu0 %v3482
        %3551 = vmatpush.bf16.msra.mxu0 %v3480
        %3552 = vmatmul.bf16.gmra.mxu0 %v3340
        %v3553 = vpop.f32.mrf.mxu0
        %v3554 = vadd.f32 %v3380, %v3553
        %v3555 = vpop.f32.mrf.mxu0
        %v3556 = vadd.f32 %v3380, %v3555
        %3557 = vmatmul.bf16.gmra.mxu0 %v3342
        %v3558 = vpop.f32.mrf.mxu0
        %v3559 = vadd.f32 %v3380, %v3558
        %v3560 = vpop.f32.mrf.mxu0
        %v3561 = vadd.f32 %v3380, %v3560
        %3562 = vdwg.mxu0
        %3563 = vmatpush.bf16.msra.mxu0 %v3510
        %3564 = vmatpush.bf16.msra.mxu0 %v3508
        %3565 = vmatpush.bf16.msra.mxu0 %v3506
        %3566 = vmatpush.bf16.msra.mxu0 %v3504
        %3567 = vmatpush.bf16.msra.mxu0 %v3502
        %3568 = vmatpush.bf16.msra.mxu0 %v3500
        %3569 = vmatpush.bf16.msra.mxu0 %v3498
        %3570 = vmatpush.bf16.msra.mxu0 %v3496
        %3571 = vmatmul.bf16.gmra.mxu0 %v3341
        %v3572 = vpop.f32.mrf.mxu0
        %v3573 = vadd.f32 %v3554, %v3572
        %v3574 = vpop.f32.mrf.mxu0
        %v3575 = vadd.f32 %v3556, %v3574
        %3576 = vmatmul.bf16.gmra.mxu0 %v3343
        %v3577 = vpop.f32.mrf.mxu0
        %v3578 = vadd.f32 %v3559, %v3577
        %v3579 = vpop.f32.mrf.mxu0
        %v3580 = vadd.f32 %v3561, %v3579
        %3581 = vdwg.mxu0
        %3582 = vmatpush.bf16.msra.mxu0 %v3495
        %3583 = vmatpush.bf16.msra.mxu0 %v3493
        %3584 = vmatpush.bf16.msra.mxu0 %v3491
        %3585 = vmatpush.bf16.msra.mxu0 %v3489
        %3586 = vmatpush.bf16.msra.mxu0 %v3487
        %3587 = vmatpush.bf16.msra.mxu0 %v3485
        %3588 = vmatpush.bf16.msra.mxu0 %v3483
        %3589 = vmatpush.bf16.msra.mxu0 %v3481
        %3590 = vmatmul.bf16.gmra.mxu0 %v3340
        %v3591 = vpop.f32.mrf.mxu0
        %v3592 = vadd.f32 %v3381, %v3591
        %v3593 = vpop.f32.mrf.mxu0
        %v3594 = vadd.f32 %v3381, %v3593
        %3595 = vmatmul.bf16.gmra.mxu0 %v3342
        %v3596 = vpop.f32.mrf.mxu0
        %v3597 = vadd.f32 %v3381, %v3596
        %v3598 = vpop.f32.mrf.mxu0
        %v3599 = vadd.f32 %v3381, %v3598
        %3600 = vdwg.mxu0
        %3601 = vmatpush.bf16.msra.mxu0 %v3511
        %3602 = vmatpush.bf16.msra.mxu0 %v3509
        %3603 = vmatpush.bf16.msra.mxu0 %v3507
        %3604 = vmatpush.bf16.msra.mxu0 %v3505
        %3605 = vmatpush.bf16.msra.mxu0 %v3503
        %3606 = vmatpush.bf16.msra.mxu0 %v3501
        %3607 = vmatpush.bf16.msra.mxu0 %v3499
        %3608 = vmatpush.bf16.msra.mxu0 %v3497
        %3609 = vmatmul.bf16.gmra.mxu0 %v3341
        %v3610 = vpop.f32.mrf.mxu0
        %v3611 = vadd.f32 %v3592, %v3610
        %v3612 = vpop.f32.mrf.mxu0
        %v3613 = vadd.f32 %v3594, %v3612
        %3614 = vmatmul.bf16.gmra.mxu0 %v3343
        %v3615 = vpop.f32.mrf.mxu0
        %v3616 = vadd.f32 %v3597, %v3615
        %v3617 = vpop.f32.mrf.mxu0
        %v3618 = vadd.f32 %v3599, %v3617
        %3619 = vdwg.mxu0
        %v3620 = vmax.f32 %v3573, 0.0
        %v3621 = vmax.f32 %v3611, 0.0
        %v3622 = vmax.f32 %v3575, 0.0
        %v3623 = vmax.f32 %v3613, 0.0
        %v3624 = vmax.f32 %v3578, 0.0
        %v3625 = vmax.f32 %v3616, 0.0
        %v3626 = vmax.f32 %v3580, 0.0
        %v3627 = vmax.f32 %v3618, 0.0
        %v3628 = vadd.f32 %v3620, %v2604
        %v3629 = vadd.f32 %v3621, %v2605
        %v3630 = vadd.f32 %v3622, %v2606
        %v3631 = vadd.f32 %v3623, %v2607
        %v3632 = vadd.f32 %v3624, %v2608
        %v3633 = vadd.f32 %v3625, %v2609
        %v3634 = vadd.f32 %v3626, %v2610
        %v3635 = vadd.f32 %v3627, %v2611
        %v3636 = vpack.c.bf16 %v3630, %v3628
        %v3637 = vpack.c.bf16 %v3631, %v3629
        %v3638 = vpack.c.bf16 %v3634, %v3632
        %v3639 = vpack.c.bf16 %v3635, %v3633
        %s3640 = scalar_lea.vmem [#allocation7], 768
        %v3641 = vld [vmem:[%s3640] sm:$0xff]
        %v3642 = vld [vmem:[%s3640 + $0x8] sm:$0xff]
        %v3643 = vld [vmem:[%s3640 + $0x10] sm:$0xff]
        %v3644 = vld [vmem:[%s3640 + $0x18] sm:$0xff]
        %v3645 = vld [vmem:[%s3640 + $0x20] sm:$0xff]
        %v3646 = vld [vmem:[%s3640 + $0x28] sm:$0xff]
        %v3647 = vld [vmem:[%s3640 + $0x30] sm:$0xff]
        %v3648 = vld [vmem:[%s3640 + $0x38] sm:$0xff]
        %v3649 = vld [vmem:[%s3640 + $0x40] sm:$0xff]
        %v3650 = vld [vmem:[%s3640 + $0x48] sm:$0xff]
        %v3651 = vld [vmem:[%s3640 + $0x50] sm:$0xff]
        %v3652 = vld [vmem:[%s3640 + $0x58] sm:$0xff]
        %v3653 = vld [vmem:[%s3640 + $0x60] sm:$0xff]
        %v3654 = vld [vmem:[%s3640 + $0x68] sm:$0xff]
        %v3655 = vld [vmem:[%s3640 + $0x70] sm:$0xff]
        %v3656 = vld [vmem:[%s3640 + $0x78] sm:$0xff]
        %v3657 = vld [vmem:[%s3640 + $0x80] sm:$0xff]
        %v3658 = vld [vmem:[%s3640 + $0x88] sm:$0xff]
        %v3659 = vld [vmem:[%s3640 + $0x90] sm:$0xff]
        %v3660 = vld [vmem:[%s3640 + $0x98] sm:$0xff]
        %v3661 = vld [vmem:[%s3640 + $0xa0] sm:$0xff]
        %v3662 = vld [vmem:[%s3640 + $0xa8] sm:$0xff]
        %v3663 = vld [vmem:[%s3640 + $0xb0] sm:$0xff]
        %v3664 = vld [vmem:[%s3640 + $0xb8] sm:$0xff]
        %v3665 = vld [vmem:[%s3640 + $0xc0] sm:$0xff]
        %v3666 = vld [vmem:[%s3640 + $0xc8] sm:$0xff]
        %v3667 = vld [vmem:[%s3640 + $0xd0] sm:$0xff]
        %v3668 = vld [vmem:[%s3640 + $0xd8] sm:$0xff]
        %v3669 = vld [vmem:[%s3640 + $0xe0] sm:$0xff]
        %v3670 = vld [vmem:[%s3640 + $0xe8] sm:$0xff]
        %v3671 = vld [vmem:[%s3640 + $0xf0] sm:$0xff]
        %v3672 = vld [vmem:[%s3640 + $0xf8] sm:$0xff]
        %s3673 = scalar_lea.vmem [#allocation8], 6
        %v3674 = vld [vmem:[%s3673] sm:$0x3]
        %v3676 = vperm.slane %v3674, 0
        %v3677 = vperm.slane %v3674, 1
        %v3712 = vunpack.c.l.b16 %v3641
        %v3713 = vunpack.c.h.b16 %v3641
        %v3714 = vunpack.c.l.b16 %v3642
        %v3715 = vunpack.c.h.b16 %v3642
        %v3716 = vunpack.c.l.b16 %v3643
        %v3717 = vunpack.c.h.b16 %v3643
        %v3718 = vunpack.c.l.b16 %v3644
        %v3719 = vunpack.c.h.b16 %v3644
        %v3720 = vunpack.c.l.b16 %v3645
        %v3721 = vunpack.c.h.b16 %v3645
        %v3722 = vunpack.c.l.b16 %v3646
        %v3723 = vunpack.c.h.b16 %v3646
        %v3724 = vunpack.c.l.b16 %v3647
        %v3725 = vunpack.c.h.b16 %v3647
        %v3726 = vunpack.c.l.b16 %v3648
        %v3727 = vunpack.c.h.b16 %v3648
        %v3728 = vunpack.c.l.b16 %v3649
        %v3729 = vunpack.c.h.b16 %v3649
        %v3730 = vunpack.c.l.b16 %v3650
        %v3731 = vunpack.c.h.b16 %v3650
        %v3732 = vunpack.c.l.b16 %v3651
        %v3733 = vunpack.c.h.b16 %v3651
        %v3734 = vunpack.c.l.b16 %v3652
        %v3735 = vunpack.c.h.b16 %v3652
        %v3736 = vunpack.c.l.b16 %v3653
        %v3737 = vunpack.c.h.b16 %v3653
        %v3738 = vunpack.c.l.b16 %v3654
        %v3739 = vunpack.c.h.b16 %v3654
        %v3740 = vunpack.c.l.b16 %v3655
        %v3741 = vunpack.c.h.b16 %v3655
        %v3742 = vunpack.c.l.b16 %v3656
        %v3743 = vunpack.c.h.b16 %v3656
        %v3744 = vunpack.c.l.b16 %v3657
        %v3745 = vunpack.c.h.b16 %v3657
        %v3746 = vunpack.c.l.b16 %v3658
        %v3747 = vunpack.c.h.b16 %v3658
        %v3748 = vunpack.c.l.b16 %v3659
        %v3749 = vunpack.c.h.b16 %v3659
        %v3750 = vunpack.c.l.b16 %v3660
        %v3751 = vunpack.c.h.b16 %v3660
        %v3752 = vunpack.c.l.b16 %v3661
        %v3753 = vunpack.c.h.b16 %v3661
        %v3754 = vunpack.c.l.b16 %v3662
        %v3755 = vunpack.c.h.b16 %v3662
        %v3756 = vunpack.c.l.b16 %v3663
        %v3757 = vunpack.c.h.b16 %v3663
        %v3758 = vunpack.c.l.b16 %v3664
        %v3759 = vunpack.c.h.b16 %v3664
        %v3760 = vunpack.c.l.b16 %v3665
        %v3761 = vunpack.c.h.b16 %v3665
        %v3762 = vunpack.c.l.b16 %v3666
        %v3763 = vunpack.c.h.b16 %v3666
        %v3764 = vunpack.c.l.b16 %v3667
        %v3765 = vunpack.c.h.b16 %v3667
        %v3766 = vunpack.c.l.b16 %v3668
        %v3767 = vunpack.c.h.b16 %v3668
        %v3768 = vunpack.c.l.b16 %v3669
        %v3769 = vunpack.c.h.b16 %v3669
        %v3770 = vunpack.c.l.b16 %v3670
        %v3771 = vunpack.c.h.b16 %v3670
        %v3772 = vunpack.c.l.b16 %v3671
        %v3773 = vunpack.c.h.b16 %v3671
        %v3774 = vunpack.c.l.b16 %v3672
        %v3775 = vunpack.c.h.b16 %v3672
        %v3776 = vpack.c.b16 %v3714, %v3712
        %v3777 = vpack.c.b16 %v3715, %v3713
        %v3778 = vpack.c.b16 %v3718, %v3716
        %v3779 = vpack.c.b16 %v3719, %v3717
        %v3780 = vpack.c.b16 %v3722, %v3720
        %v3781 = vpack.c.b16 %v3723, %v3721
        %v3782 = vpack.c.b16 %v3726, %v3724
        %v3783 = vpack.c.b16 %v3727, %v3725
        %v3784 = vpack.c.b16 %v3730, %v3728
        %v3785 = vpack.c.b16 %v3731, %v3729
        %v3786 = vpack.c.b16 %v3734, %v3732
        %v3787 = vpack.c.b16 %v3735, %v3733
        %v3788 = vpack.c.b16 %v3738, %v3736
        %v3789 = vpack.c.b16 %v3739, %v3737
        %v3790 = vpack.c.b16 %v3742, %v3740
        %v3791 = vpack.c.b16 %v3743, %v3741
        %v3792 = vpack.c.b16 %v3746, %v3744
        %v3793 = vpack.c.b16 %v3747, %v3745
        %v3794 = vpack.c.b16 %v3750, %v3748
        %v3795 = vpack.c.b16 %v3751, %v3749
        %v3796 = vpack.c.b16 %v3754, %v3752
        %v3797 = vpack.c.b16 %v3755, %v3753
        %v3798 = vpack.c.b16 %v3758, %v3756
        %v3799 = vpack.c.b16 %v3759, %v3757
        %v3800 = vpack.c.b16 %v3762, %v3760
        %v3801 = vpack.c.b16 %v3763, %v3761
        %v3802 = vpack.c.b16 %v3766, %v3764
        %v3803 = vpack.c.b16 %v3767, %v3765
        %v3804 = vpack.c.b16 %v3770, %v3768
        %v3805 = vpack.c.b16 %v3771, %v3769
        %v3806 = vpack.c.b16 %v3774, %v3772
        %v3807 = vpack.c.b16 %v3775, %v3773
        %3840 = vmatpush.bf16.msra.mxu0 %v3790
        %3841 = vmatpush.bf16.msra.mxu0 %v3788
        %3842 = vmatpush.bf16.msra.mxu0 %v3786
        %3843 = vmatpush.bf16.msra.mxu0 %v3784
        %3844 = vmatpush.bf16.msra.mxu0 %v3782
        %3845 = vmatpush.bf16.msra.mxu0 %v3780
        %3846 = vmatpush.bf16.msra.mxu0 %v3778
        %3847 = vmatpush.bf16.msra.mxu0 %v3776
        %3848 = vmatmul.bf16.gmra.mxu0 %v3636
        %v3849 = vpop.f32.mrf.mxu0
        %v3850 = vadd.f32 %v3676, %v3849
        %v3851 = vpop.f32.mrf.mxu0
        %v3852 = vadd.f32 %v3676, %v3851
        %3853 = vmatmul.bf16.gmra.mxu0 %v3638
        %v3854 = vpop.f32.mrf.mxu0
        %v3855 = vadd.f32 %v3676, %v3854
        %v3856 = vpop.f32.mrf.mxu0
        %v3857 = vadd.f32 %v3676, %v3856
        %3858 = vdwg.mxu0
        %3859 = vmatpush.bf16.msra.mxu0 %v3806
        %3860 = vmatpush.bf16.msra.mxu0 %v3804
        %3861 = vmatpush.bf16.msra.mxu0 %v3802
        %3862 = vmatpush.bf16.msra.mxu0 %v3800
        %3863 = vmatpush.bf16.msra.mxu0 %v3798
        %3864 = vmatpush.bf16.msra.mxu0 %v3796
        %3865 = vmatpush.bf16.msra.mxu0 %v3794
        %3866 = vmatpush.bf16.msra.mxu0 %v3792
        %3867 = vmatmul.bf16.gmra.mxu0 %v3637
        %v3868 = vpop.f32.mrf.mxu0
        %v3869 = vadd.f32 %v3850, %v3868
        %v3870 = vpop.f32.mrf.mxu0
        %v3871 = vadd.f32 %v3852, %v3870
        %3872 = vmatmul.bf16.gmra.mxu0 %v3639
        %v3873 = vpop.f32.mrf.mxu0
        %v3874 = vadd.f32 %v3855, %v3873
        %v3875 = vpop.f32.mrf.mxu0
        %v3876 = vadd.f32 %v3857, %v3875
        %3877 = vdwg.mxu0
        %3878 = vmatpush.bf16.msra.mxu0 %v3791
        %3879 = vmatpush.bf16.msra.mxu0 %v3789
        %3880 = vmatpush.bf16.msra.mxu0 %v3787
        %3881 = vmatpush.bf16.msra.mxu0 %v3785
        %3882 = vmatpush.bf16.msra.mxu0 %v3783
        %3883 = vmatpush.bf16.msra.mxu0 %v3781
        %3884 = vmatpush.bf16.msra.mxu0 %v3779
        %3885 = vmatpush.bf16.msra.mxu0 %v3777
        %3886 = vmatmul.bf16.gmra.mxu0 %v3636
        %v3887 = vpop.f32.mrf.mxu0
        %v3888 = vadd.f32 %v3677, %v3887
        %v3889 = vpop.f32.mrf.mxu0
        %v3890 = vadd.f32 %v3677, %v3889
        %3891 = vmatmul.bf16.gmra.mxu0 %v3638
        %v3892 = vpop.f32.mrf.mxu0
        %v3893 = vadd.f32 %v3677, %v3892
        %v3894 = vpop.f32.mrf.mxu0
        %v3895 = vadd.f32 %v3677, %v3894
        %3896 = vdwg.mxu0
        %3897 = vmatpush.bf16.msra.mxu0 %v3807
        %3898 = vmatpush.bf16.msra.mxu0 %v3805
        %3899 = vmatpush.bf16.msra.mxu0 %v3803
        %3900 = vmatpush.bf16.msra.mxu0 %v3801
        %3901 = vmatpush.bf16.msra.mxu0 %v3799
        %3902 = vmatpush.bf16.msra.mxu0 %v3797
        %3903 = vmatpush.bf16.msra.mxu0 %v3795
        %3904 = vmatpush.bf16.msra.mxu0 %v3793
        %3905 = vmatmul.bf16.gmra.mxu0 %v3637
        %v3906 = vpop.f32.mrf.mxu0
        %v3907 = vadd.f32 %v3888, %v3906
        %v3908 = vpop.f32.mrf.mxu0
        %v3909 = vadd.f32 %v3890, %v3908
        %3910 = vmatmul.bf16.gmra.mxu0 %v3639
        %v3911 = vpop.f32.mrf.mxu0
        %v3912 = vadd.f32 %v3893, %v3911
        %v3913 = vpop.f32.mrf.mxu0
        %v3914 = vadd.f32 %v3895, %v3913
        %3915 = vdwg.mxu0
        %v3916 = vpack.c.bf16 %v3871, %v3869
        %v3917 = vpack.c.bf16 %v3909, %v3907
        %v3918 = vpack.c.bf16 %v3876, %v3874
        %v3919 = vpack.c.bf16 %v3914, %v3912
        %3920 = vmatpush.bf16.xpose.msra.mxu0 0
        %3921 = vmatpush.bf16.xpose.msra.mxu0 0
        %3922 = vmatpush.bf16.xpose.msra.mxu0 0
        %3923 = vmatpush.bf16.xpose.msra.mxu0 0
        %3924 = vmatpush.bf16.xpose.msra.mxu0 0
        %3925 = vmatpush.bf16.xpose.msra.mxu0 0
        %3926 = vmatpush.bf16.xpose.msra.mxu0 %v3638
        %3927 = vmatpush.bf16.xpose.msra.mxu0 %v3636
        %3928 = vmatmul.bf16.gmra.mxu0 %v3916
        %v3929 = vpop.f32.mrf.mxu0
        %v3930 = vadd.f32 0.0, %v3929
        %v3931 = vpop.f32.mrf.mxu0
        %v3932 = vadd.f32 0.0, %v3931
        %3933 = vmatmul.bf16.gmra.mxu0 %v3918
        %v3934 = vpop.f32.mrf.mxu0
        %v3935 = vadd.f32 0.0, %v3934
        %v3936 = vpop.f32.mrf.mxu0
        %v3937 = vadd.f32 0.0, %v3936
        %3938 = vdwg.mxu0
        %3939 = vmatpush.bf16.xpose.msra.mxu0 0
        %3940 = vmatpush.bf16.xpose.msra.mxu0 0
        %3941 = vmatpush.bf16.xpose.msra.mxu0 0
        %3942 = vmatpush.bf16.xpose.msra.mxu0 0
        %3943 = vmatpush.bf16.xpose.msra.mxu0 0
        %3944 = vmatpush.bf16.xpose.msra.mxu0 0
        %3945 = vmatpush.bf16.xpose.msra.mxu0 %v3639
        %3946 = vmatpush.bf16.xpose.msra.mxu0 %v3637
        %3947 = vmatmul.bf16.gmra.mxu0 %v3917
        %v3948 = vpop.f32.mrf.mxu0
        %v3949 = vadd.f32 %v3930, %v3948
        %v3950 = vpop.f32.mrf.mxu0
        %v3951 = vadd.f32 %v3932, %v3950
        %3952 = vmatmul.bf16.gmra.mxu0 %v3919
        %v3953 = vpop.f32.mrf.mxu0
        %v3954 = vadd.f32 %v3935, %v3953
        %v3955 = vpop.f32.mrf.mxu0
        %v3956 = vadd.f32 %v3937, %v3955
        %3957 = vdwg.mxu0
        %v3958 = vsel %vm889, %v3949, -inf
        %3959 = vmax.xlane.f32.xlu0 %v3958
        %v3960 = vpop.xlane.xlu0 %3959
        %v3961 = vsel %vm889, %v3951, -inf
        %3962 = vmax.xlane.f32.xlu0 %v3961
        %v3963 = vpop.xlane.xlu0 %3962
        %v3964 = vsel %vm889, %v3954, -inf
        %3965 = vmax.xlane.f32.xlu0 %v3964
        %v3966 = vpop.xlane.xlu0 %3965
        %v3967 = vsel %vm889, %v3956, -inf
        %3968 = vmax.xlane.f32.xlu0 %v3967
        %v3969 = vpop.xlane.xlu0 %3968
        %v3970 = vsub.f32 %v3949, %v3960
        %v3971 = vsub.f32 %v3951, %v3963
        %v3972 = vsub.f32 %v3954, %v3966
        %v3973 = vsub.f32 %v3956, %v3969
        %v3974 = vmul.f32 %v3970, 1.442695
        %v3975 = vpow.pop %v3974
        %v3976 = vmul.f32 %v3971, 1.442695
        %v3977 = vpow.pop %v3976
        %v3978 = vmul.f32 %v3972, 1.442695
        %v3979 = vpow.pop %v3978
        %v3980 = vmul.f32 %v3973, 1.442695
        %v3981 = vpow.pop %v3980
        %v3982 = vsub.f32 0.0, %v3960
        %v3983 = vsub.f32 0.0, %v3963
        %v3984 = vsub.f32 0.0, %v3966
        %v3985 = vsub.f32 0.0, %v3969
        %v3986 = vmul.f32 %v3982, 1.442695
        %v3987 = vpow.pop %v3986
        %v3988 = vmul.f32 %v3983, 1.442695
        %v3989 = vpow.pop %v3988
        %v3990 = vmul.f32 %v3984, 1.442695
        %v3991 = vpow.pop %v3990
        %v3992 = vmul.f32 %v3985, 1.442695
        %v3993 = vpow.pop %v3992
        %v3994 = vmul.f32 %v3987, 1e-05
        %v3995 = vmul.f32 %v3989, 1e-05
        %v3996 = vmul.f32 %v3991, 1e-05
        %v3997 = vmul.f32 %v3993, 1e-05
        %v3998 = vmul.f32 %v3994, %v565
        %v3999 = vmul.f32 %v3995, %v566
        %v4000 = vmul.f32 %v3996, %v567
        %v4001 = vmul.f32 %v3997, %v568
        %v4002 = vadd.f32 %v3975, %v3998
        %v4003 = vadd.f32 %v3977, %v3999
        %v4004 = vadd.f32 %v3979, %v4000
        %v4005 = vadd.f32 %v3981, %v4001
        %v4006 = vmul.f32 %v4002, %v546
        %v4007 = vmul.f32 %v4003, %v547
        %v4008 = vmul.f32 %v4004, %v548
        %v4009 = vmul.f32 %v4005, %v549
        %v4010 = vsel %vm889, %v4006, 0.0
        %4011 = vadd.xlane.f32.xlu0 %v4010
        %v4012 = vpop.xlane.xlu0 %4011
        %v4013 = vsel %vm889, %v4007, 0.0
        %4014 = vadd.xlane.f32.xlu0 %v4013
        %v4015 = vpop.xlane.xlu0 %4014
        %v4016 = vsel %vm889, %v4008, 0.0
        %4017 = vadd.xlane.f32.xlu0 %v4016
        %v4018 = vpop.xlane.xlu0 %4017
        %v4019 = vsel %vm889, %v4009, 0.0
        %4020 = vadd.xlane.f32.xlu0 %v4019
        %v4021 = vpop.xlane.xlu0 %4020
        %v4022 = vrcp.pop %v4012
        %v4023 = vrcp.pop %v4015
        %v4024 = vrcp.pop %v4018
        %v4025 = vrcp.pop %v4021
        %v4026 = vmul.f32 %v4006, %v4022
        %v4027 = vmul.f32 %v4007, %v4023
        %v4028 = vmul.f32 %v4008, %v4024
        %v4029 = vmul.f32 %v4009, %v4025
        %v4030 = vpack.c.bf16 %v4027, %v4026
        %v4031 = vpack.c.bf16 %v4029, %v4028
        %v4033 = vsel %vm889, %v4030, 0
        %v4036 = vsel %vm889, %v4031, 0
        %4038 = vmatpush.bf16.msra.mxu0 0
        %4039 = vmatpush.bf16.msra.mxu0 0
        %4040 = vmatpush.bf16.msra.mxu0 0
        %4041 = vmatpush.bf16.msra.mxu0 0
        %4042 = vmatpush.bf16.msra.mxu0 0
        %4043 = vmatpush.bf16.msra.mxu0 0
        %4044 = vmatpush.bf16.msra.mxu0 %v3638
        %4045 = vmatpush.bf16.msra.mxu0 %v3636
        %4046 = vmatmul.bf16.gmra.mxu0 %v4033
        %v4047 = vpop.f32.mrf.mxu0
        %v4048 = vadd.f32 0.0, %v4047
        %v4049 = vpop.f32.mrf.mxu0
        %v4050 = vadd.f32 0.0, %v4049
        %4051 = vmatmul.bf16.gmra.mxu0 %v4036
        %v4052 = vpop.f32.mrf.mxu0
        %v4053 = vadd.f32 0.0, %v4052
        %v4054 = vpop.f32.mrf.mxu0
        %v4055 = vadd.f32 0.0, %v4054
        %4056 = vdwg.mxu0
        %4057 = vmatpush.bf16.msra.mxu0 0
        %4058 = vmatpush.bf16.msra.mxu0 0
        %4059 = vmatpush.bf16.msra.mxu0 0
        %4060 = vmatpush.bf16.msra.mxu0 0
        %4061 = vmatpush.bf16.msra.mxu0 0
        %4062 = vmatpush.bf16.msra.mxu0 0
        %4063 = vmatpush.bf16.msra.mxu0 %v3639
        %4064 = vmatpush.bf16.msra.mxu0 %v3637
        %4065 = vmatmul.bf16.gmra.mxu0 %v4033
        %v4066 = vpop.f32.mrf.mxu0
        %v4067 = vadd.f32 0.0, %v4066
        %v4068 = vpop.f32.mrf.mxu0
        %v4069 = vadd.f32 0.0, %v4068
        %4070 = vmatmul.bf16.gmra.mxu0 %v4036
        %v4071 = vpop.f32.mrf.mxu0
        %v4072 = vadd.f32 0.0, %v4071
        %v4073 = vpop.f32.mrf.mxu0
        %v4074 = vadd.f32 0.0, %v4073
        %4075 = vdwg.mxu0
        %v4076 = vpack.c.bf16 %v4050, %v4048
        %v4077 = vpack.c.bf16 %v4069, %v4067
        %v4078 = vpack.c.bf16 %v4055, %v4053
        %v4079 = vpack.c.bf16 %v4074, %v4072
        %s4080 = scalar_lea.vmem [#allocation10], 768
        %v4081 = vld [vmem:[%s4080] sm:$0xff]
        %v4082 = vld [vmem:[%s4080 + $0x8] sm:$0xff]
        %v4083 = vld [vmem:[%s4080 + $0x10] sm:$0xff]
        %v4084 = vld [vmem:[%s4080 + $0x18] sm:$0xff]
        %v4085 = vld [vmem:[%s4080 + $0x20] sm:$0xff]
        %v4086 = vld [vmem:[%s4080 + $0x28] sm:$0xff]
        %v4087 = vld [vmem:[%s4080 + $0x30] sm:$0xff]
        %v4088 = vld [vmem:[%s4080 + $0x38] sm:$0xff]
        %v4089 = vld [vmem:[%s4080 + $0x40] sm:$0xff]
        %v4090 = vld [vmem:[%s4080 + $0x48] sm:$0xff]
        %v4091 = vld [vmem:[%s4080 + $0x50] sm:$0xff]
        %v4092 = vld [vmem:[%s4080 + $0x58] sm:$0xff]
        %v4093 = vld [vmem:[%s4080 + $0x60] sm:$0xff]
        %v4094 = vld [vmem:[%s4080 + $0x68] sm:$0xff]
        %v4095 = vld [vmem:[%s4080 + $0x70] sm:$0xff]
        %v4096 = vld [vmem:[%s4080 + $0x78] sm:$0xff]
        %v4097 = vld [vmem:[%s4080 + $0x80] sm:$0xff]
        %v4098 = vld [vmem:[%s4080 + $0x88] sm:$0xff]
        %v4099 = vld [vmem:[%s4080 + $0x90] sm:$0xff]
        %v4100 = vld [vmem:[%s4080 + $0x98] sm:$0xff]
        %v4101 = vld [vmem:[%s4080 + $0xa0] sm:$0xff]
        %v4102 = vld [vmem:[%s4080 + $0xa8] sm:$0xff]
        %v4103 = vld [vmem:[%s4080 + $0xb0] sm:$0xff]
        %v4104 = vld [vmem:[%s4080 + $0xb8] sm:$0xff]
        %v4105 = vld [vmem:[%s4080 + $0xc0] sm:$0xff]
        %v4106 = vld [vmem:[%s4080 + $0xc8] sm:$0xff]
        %v4107 = vld [vmem:[%s4080 + $0xd0] sm:$0xff]
        %v4108 = vld [vmem:[%s4080 + $0xd8] sm:$0xff]
        %v4109 = vld [vmem:[%s4080 + $0xe0] sm:$0xff]
        %v4110 = vld [vmem:[%s4080 + $0xe8] sm:$0xff]
        %v4111 = vld [vmem:[%s4080 + $0xf0] sm:$0xff]
        %v4112 = vld [vmem:[%s4080 + $0xf8] sm:$0xff]
        %s4113 = scalar_lea.vmem [#allocation11], 6
        %v4114 = vld [vmem:[%s4113] sm:$0x3]
        %v4116 = vperm.slane %v4114, 0
        %v4117 = vperm.slane %v4114, 1
        %v4152 = vunpack.c.l.b16 %v4081
        %v4153 = vunpack.c.h.b16 %v4081
        %v4154 = vunpack.c.l.b16 %v4082
        %v4155 = vunpack.c.h.b16 %v4082
        %v4156 = vunpack.c.l.b16 %v4083
        %v4157 = vunpack.c.h.b16 %v4083
        %v4158 = vunpack.c.l.b16 %v4084
        %v4159 = vunpack.c.h.b16 %v4084
        %v4160 = vunpack.c.l.b16 %v4085
        %v4161 = vunpack.c.h.b16 %v4085
        %v4162 = vunpack.c.l.b16 %v4086
        %v4163 = vunpack.c.h.b16 %v4086
        %v4164 = vunpack.c.l.b16 %v4087
        %v4165 = vunpack.c.h.b16 %v4087
        %v4166 = vunpack.c.l.b16 %v4088
        %v4167 = vunpack.c.h.b16 %v4088
        %v4168 = vunpack.c.l.b16 %v4089
        %v4169 = vunpack.c.h.b16 %v4089
        %v4170 = vunpack.c.l.b16 %v4090
        %v4171 = vunpack.c.h.b16 %v4090
        %v4172 = vunpack.c.l.b16 %v4091
        %v4173 = vunpack.c.h.b16 %v4091
        %v4174 = vunpack.c.l.b16 %v4092
        %v4175 = vunpack.c.h.b16 %v4092
        %v4176 = vunpack.c.l.b16 %v4093
        %v4177 = vunpack.c.h.b16 %v4093
        %v4178 = vunpack.c.l.b16 %v4094
        %v4179 = vunpack.c.h.b16 %v4094
        %v4180 = vunpack.c.l.b16 %v4095
        %v4181 = vunpack.c.h.b16 %v4095
        %v4182 = vunpack.c.l.b16 %v4096
        %v4183 = vunpack.c.h.b16 %v4096
        %v4184 = vunpack.c.l.b16 %v4097
        %v4185 = vunpack.c.h.b16 %v4097
        %v4186 = vunpack.c.l.b16 %v4098
        %v4187 = vunpack.c.h.b16 %v4098
        %v4188 = vunpack.c.l.b16 %v4099
        %v4189 = vunpack.c.h.b16 %v4099
        %v4190 = vunpack.c.l.b16 %v4100
        %v4191 = vunpack.c.h.b16 %v4100
        %v4192 = vunpack.c.l.b16 %v4101
        %v4193 = vunpack.c.h.b16 %v4101
        %v4194 = vunpack.c.l.b16 %v4102
        %v4195 = vunpack.c.h.b16 %v4102
        %v4196 = vunpack.c.l.b16 %v4103
        %v4197 = vunpack.c.h.b16 %v4103
        %v4198 = vunpack.c.l.b16 %v4104
        %v4199 = vunpack.c.h.b16 %v4104
        %v4200 = vunpack.c.l.b16 %v4105
        %v4201 = vunpack.c.h.b16 %v4105
        %v4202 = vunpack.c.l.b16 %v4106
        %v4203 = vunpack.c.h.b16 %v4106
        %v4204 = vunpack.c.l.b16 %v4107
        %v4205 = vunpack.c.h.b16 %v4107
        %v4206 = vunpack.c.l.b16 %v4108
        %v4207 = vunpack.c.h.b16 %v4108
        %v4208 = vunpack.c.l.b16 %v4109
        %v4209 = vunpack.c.h.b16 %v4109
        %v4210 = vunpack.c.l.b16 %v4110
        %v4211 = vunpack.c.h.b16 %v4110
        %v4212 = vunpack.c.l.b16 %v4111
        %v4213 = vunpack.c.h.b16 %v4111
        %v4214 = vunpack.c.l.b16 %v4112
        %v4215 = vunpack.c.h.b16 %v4112
        %v4216 = vpack.c.b16 %v4154, %v4152
        %v4217 = vpack.c.b16 %v4155, %v4153
        %v4218 = vpack.c.b16 %v4158, %v4156
        %v4219 = vpack.c.b16 %v4159, %v4157
        %v4220 = vpack.c.b16 %v4162, %v4160
        %v4221 = vpack.c.b16 %v4163, %v4161
        %v4222 = vpack.c.b16 %v4166, %v4164
        %v4223 = vpack.c.b16 %v4167, %v4165
        %v4224 = vpack.c.b16 %v4170, %v4168
        %v4225 = vpack.c.b16 %v4171, %v4169
        %v4226 = vpack.c.b16 %v4174, %v4172
        %v4227 = vpack.c.b16 %v4175, %v4173
        %v4228 = vpack.c.b16 %v4178, %v4176
        %v4229 = vpack.c.b16 %v4179, %v4177
        %v4230 = vpack.c.b16 %v4182, %v4180
        %v4231 = vpack.c.b16 %v4183, %v4181
        %v4232 = vpack.c.b16 %v4186, %v4184
        %v4233 = vpack.c.b16 %v4187, %v4185
        %v4234 = vpack.c.b16 %v4190, %v4188
        %v4235 = vpack.c.b16 %v4191, %v4189
        %v4236 = vpack.c.b16 %v4194, %v4192
        %v4237 = vpack.c.b16 %v4195, %v4193
        %v4238 = vpack.c.b16 %v4198, %v4196
        %v4239 = vpack.c.b16 %v4199, %v4197
        %v4240 = vpack.c.b16 %v4202, %v4200
        %v4241 = vpack.c.b16 %v4203, %v4201
        %v4242 = vpack.c.b16 %v4206, %v4204
        %v4243 = vpack.c.b16 %v4207, %v4205
        %v4244 = vpack.c.b16 %v4210, %v4208
        %v4245 = vpack.c.b16 %v4211, %v4209
        %v4246 = vpack.c.b16 %v4214, %v4212
        %v4247 = vpack.c.b16 %v4215, %v4213
        %4280 = vmatpush.bf16.msra.mxu0 %v4230
        %4281 = vmatpush.bf16.msra.mxu0 %v4228
        %4282 = vmatpush.bf16.msra.mxu0 %v4226
        %4283 = vmatpush.bf16.msra.mxu0 %v4224
        %4284 = vmatpush.bf16.msra.mxu0 %v4222
        %4285 = vmatpush.bf16.msra.mxu0 %v4220
        %4286 = vmatpush.bf16.msra.mxu0 %v4218
        %4287 = vmatpush.bf16.msra.mxu0 %v4216
        %4288 = vmatmul.bf16.gmra.mxu0 %v4076
        %v4289 = vpop.f32.mrf.mxu0
        %v4290 = vadd.f32 %v4116, %v4289
        %v4291 = vpop.f32.mrf.mxu0
        %v4292 = vadd.f32 %v4116, %v4291
        %4293 = vmatmul.bf16.gmra.mxu0 %v4078
        %v4294 = vpop.f32.mrf.mxu0
        %v4295 = vadd.f32 %v4116, %v4294
        %v4296 = vpop.f32.mrf.mxu0
        %v4297 = vadd.f32 %v4116, %v4296
        %4298 = vdwg.mxu0
        %4299 = vmatpush.bf16.msra.mxu0 %v4246
        %4300 = vmatpush.bf16.msra.mxu0 %v4244
        %4301 = vmatpush.bf16.msra.mxu0 %v4242
        %4302 = vmatpush.bf16.msra.mxu0 %v4240
        %4303 = vmatpush.bf16.msra.mxu0 %v4238
        %4304 = vmatpush.bf16.msra.mxu0 %v4236
        %4305 = vmatpush.bf16.msra.mxu0 %v4234
        %4306 = vmatpush.bf16.msra.mxu0 %v4232
        %4307 = vmatmul.bf16.gmra.mxu0 %v4077
        %v4308 = vpop.f32.mrf.mxu0
        %v4309 = vadd.f32 %v4290, %v4308
        %v4310 = vpop.f32.mrf.mxu0
        %v4311 = vadd.f32 %v4292, %v4310
        %4312 = vmatmul.bf16.gmra.mxu0 %v4079
        %v4313 = vpop.f32.mrf.mxu0
        %v4314 = vadd.f32 %v4295, %v4313
        %v4315 = vpop.f32.mrf.mxu0
        %v4316 = vadd.f32 %v4297, %v4315
        %4317 = vdwg.mxu0
        %4318 = vmatpush.bf16.msra.mxu0 %v4231
        %4319 = vmatpush.bf16.msra.mxu0 %v4229
        %4320 = vmatpush.bf16.msra.mxu0 %v4227
        %4321 = vmatpush.bf16.msra.mxu0 %v4225
        %4322 = vmatpush.bf16.msra.mxu0 %v4223
        %4323 = vmatpush.bf16.msra.mxu0 %v4221
        %4324 = vmatpush.bf16.msra.mxu0 %v4219
        %4325 = vmatpush.bf16.msra.mxu0 %v4217
        %4326 = vmatmul.bf16.gmra.mxu0 %v4076
        %v4327 = vpop.f32.mrf.mxu0
        %v4328 = vadd.f32 %v4117, %v4327
        %v4329 = vpop.f32.mrf.mxu0
        %v4330 = vadd.f32 %v4117, %v4329
        %4331 = vmatmul.bf16.gmra.mxu0 %v4078
        %v4332 = vpop.f32.mrf.mxu0
        %v4333 = vadd.f32 %v4117, %v4332
        %v4334 = vpop.f32.mrf.mxu0
        %v4335 = vadd.f32 %v4117, %v4334
        %4336 = vdwg.mxu0
        %4337 = vmatpush.bf16.msra.mxu0 %v4247
        %4338 = vmatpush.bf16.msra.mxu0 %v4245
        %4339 = vmatpush.bf16.msra.mxu0 %v4243
        %4340 = vmatpush.bf16.msra.mxu0 %v4241
        %4341 = vmatpush.bf16.msra.mxu0 %v4239
        %4342 = vmatpush.bf16.msra.mxu0 %v4237
        %4343 = vmatpush.bf16.msra.mxu0 %v4235
        %4344 = vmatpush.bf16.msra.mxu0 %v4233
        %4345 = vmatmul.bf16.gmra.mxu0 %v4077
        %v4346 = vpop.f32.mrf.mxu0
        %v4347 = vadd.f32 %v4328, %v4346
        %v4348 = vpop.f32.mrf.mxu0
        %v4349 = vadd.f32 %v4330, %v4348
        %4350 = vmatmul.bf16.gmra.mxu0 %v4079
        %v4351 = vpop.f32.mrf.mxu0
        %v4352 = vadd.f32 %v4333, %v4351
        %v4353 = vpop.f32.mrf.mxu0
        %v4354 = vadd.f32 %v4335, %v4353
        %4355 = vdwg.mxu0
        %v4356 = vmax.f32 %v4309, 0.0
        %v4357 = vmax.f32 %v4347, 0.0
        %v4358 = vmax.f32 %v4311, 0.0
        %v4359 = vmax.f32 %v4349, 0.0
        %v4360 = vmax.f32 %v4314, 0.0
        %v4361 = vmax.f32 %v4352, 0.0
        %v4362 = vmax.f32 %v4316, 0.0
        %v4363 = vmax.f32 %v4354, 0.0
        %v4364 = vpack.c.bf16 %v4358, %v4356
        %v4365 = vpack.c.bf16 %v4359, %v4357
        %v4366 = vpack.c.bf16 %v4362, %v4360
        %v4367 = vpack.c.bf16 %v4363, %v4361
        %s4368 = scalar_lea.vmem [#allocation13], 768
        %v4369 = vld [vmem:[%s4368] sm:$0xff]
        %v4370 = vld [vmem:[%s4368 + $0x8] sm:$0xff]
        %v4371 = vld [vmem:[%s4368 + $0x10] sm:$0xff]
        %v4372 = vld [vmem:[%s4368 + $0x18] sm:$0xff]
        %v4373 = vld [vmem:[%s4368 + $0x20] sm:$0xff]
        %v4374 = vld [vmem:[%s4368 + $0x28] sm:$0xff]
        %v4375 = vld [vmem:[%s4368 + $0x30] sm:$0xff]
        %v4376 = vld [vmem:[%s4368 + $0x38] sm:$0xff]
        %v4377 = vld [vmem:[%s4368 + $0x40] sm:$0xff]
        %v4378 = vld [vmem:[%s4368 + $0x48] sm:$0xff]
        %v4379 = vld [vmem:[%s4368 + $0x50] sm:$0xff]
        %v4380 = vld [vmem:[%s4368 + $0x58] sm:$0xff]
        %v4381 = vld [vmem:[%s4368 + $0x60] sm:$0xff]
        %v4382 = vld [vmem:[%s4368 + $0x68] sm:$0xff]
        %v4383 = vld [vmem:[%s4368 + $0x70] sm:$0xff]
        %v4384 = vld [vmem:[%s4368 + $0x78] sm:$0xff]
        %v4385 = vld [vmem:[%s4368 + $0x80] sm:$0xff]
        %v4386 = vld [vmem:[%s4368 + $0x88] sm:$0xff]
        %v4387 = vld [vmem:[%s4368 + $0x90] sm:$0xff]
        %v4388 = vld [vmem:[%s4368 + $0x98] sm:$0xff]
        %v4389 = vld [vmem:[%s4368 + $0xa0] sm:$0xff]
        %v4390 = vld [vmem:[%s4368 + $0xa8] sm:$0xff]
        %v4391 = vld [vmem:[%s4368 + $0xb0] sm:$0xff]
        %v4392 = vld [vmem:[%s4368 + $0xb8] sm:$0xff]
        %v4393 = vld [vmem:[%s4368 + $0xc0] sm:$0xff]
        %v4394 = vld [vmem:[%s4368 + $0xc8] sm:$0xff]
        %v4395 = vld [vmem:[%s4368 + $0xd0] sm:$0xff]
        %v4396 = vld [vmem:[%s4368 + $0xd8] sm:$0xff]
        %v4397 = vld [vmem:[%s4368 + $0xe0] sm:$0xff]
        %v4398 = vld [vmem:[%s4368 + $0xe8] sm:$0xff]
        %v4399 = vld [vmem:[%s4368 + $0xf0] sm:$0xff]
        %v4400 = vld [vmem:[%s4368 + $0xf8] sm:$0xff]
        %s4401 = scalar_lea.vmem [#allocation14], 6
        %v4402 = vld [vmem:[%s4401] sm:$0x3]
        %v4404 = vperm.slane %v4402, 0
        %v4405 = vperm.slane %v4402, 1
        %v4440 = vunpack.c.l.b16 %v4369
        %v4441 = vunpack.c.h.b16 %v4369
        %v4442 = vunpack.c.l.b16 %v4370
        %v4443 = vunpack.c.h.b16 %v4370
        %v4444 = vunpack.c.l.b16 %v4371
        %v4445 = vunpack.c.h.b16 %v4371
        %v4446 = vunpack.c.l.b16 %v4372
        %v4447 = vunpack.c.h.b16 %v4372
        %v4448 = vunpack.c.l.b16 %v4373
        %v4449 = vunpack.c.h.b16 %v4373
        %v4450 = vunpack.c.l.b16 %v4374
        %v4451 = vunpack.c.h.b16 %v4374
        %v4452 = vunpack.c.l.b16 %v4375
        %v4453 = vunpack.c.h.b16 %v4375
        %v4454 = vunpack.c.l.b16 %v4376
        %v4455 = vunpack.c.h.b16 %v4376
        %v4456 = vunpack.c.l.b16 %v4377
        %v4457 = vunpack.c.h.b16 %v4377
        %v4458 = vunpack.c.l.b16 %v4378
        %v4459 = vunpack.c.h.b16 %v4378
        %v4460 = vunpack.c.l.b16 %v4379
        %v4461 = vunpack.c.h.b16 %v4379
        %v4462 = vunpack.c.l.b16 %v4380
        %v4463 = vunpack.c.h.b16 %v4380
        %v4464 = vunpack.c.l.b16 %v4381
        %v4465 = vunpack.c.h.b16 %v4381
        %v4466 = vunpack.c.l.b16 %v4382
        %v4467 = vunpack.c.h.b16 %v4382
        %v4468 = vunpack.c.l.b16 %v4383
        %v4469 = vunpack.c.h.b16 %v4383
        %v4470 = vunpack.c.l.b16 %v4384
        %v4471 = vunpack.c.h.b16 %v4384
        %v4472 = vunpack.c.l.b16 %v4385
        %v4473 = vunpack.c.h.b16 %v4385
        %v4474 = vunpack.c.l.b16 %v4386
        %v4475 = vunpack.c.h.b16 %v4386
        %v4476 = vunpack.c.l.b16 %v4387
        %v4477 = vunpack.c.h.b16 %v4387
        %v4478 = vunpack.c.l.b16 %v4388
        %v4479 = vunpack.c.h.b16 %v4388
        %v4480 = vunpack.c.l.b16 %v4389
        %v4481 = vunpack.c.h.b16 %v4389
        %v4482 = vunpack.c.l.b16 %v4390
        %v4483 = vunpack.c.h.b16 %v4390
        %v4484 = vunpack.c.l.b16 %v4391
        %v4485 = vunpack.c.h.b16 %v4391
        %v4486 = vunpack.c.l.b16 %v4392
        %v4487 = vunpack.c.h.b16 %v4392
        %v4488 = vunpack.c.l.b16 %v4393
        %v4489 = vunpack.c.h.b16 %v4393
        %v4490 = vunpack.c.l.b16 %v4394
        %v4491 = vunpack.c.h.b16 %v4394
        %v4492 = vunpack.c.l.b16 %v4395
        %v4493 = vunpack.c.h.b16 %v4395
        %v4494 = vunpack.c.l.b16 %v4396
        %v4495 = vunpack.c.h.b16 %v4396
        %v4496 = vunpack.c.l.b16 %v4397
        %v4497 = vunpack.c.h.b16 %v4397
        %v4498 = vunpack.c.l.b16 %v4398
        %v4499 = vunpack.c.h.b16 %v4398
        %v4500 = vunpack.c.l.b16 %v4399
        %v4501 = vunpack.c.h.b16 %v4399
        %v4502 = vunpack.c.l.b16 %v4400
        %v4503 = vunpack.c.h.b16 %v4400
        %v4504 = vpack.c.b16 %v4442, %v4440
        %v4505 = vpack.c.b16 %v4443, %v4441
        %v4506 = vpack.c.b16 %v4446, %v4444
        %v4507 = vpack.c.b16 %v4447, %v4445
        %v4508 = vpack.c.b16 %v4450, %v4448
        %v4509 = vpack.c.b16 %v4451, %v4449
        %v4510 = vpack.c.b16 %v4454, %v4452
        %v4511 = vpack.c.b16 %v4455, %v4453
        %v4512 = vpack.c.b16 %v4458, %v4456
        %v4513 = vpack.c.b16 %v4459, %v4457
        %v4514 = vpack.c.b16 %v4462, %v4460
        %v4515 = vpack.c.b16 %v4463, %v4461
        %v4516 = vpack.c.b16 %v4466, %v4464
        %v4517 = vpack.c.b16 %v4467, %v4465
        %v4518 = vpack.c.b16 %v4470, %v4468
        %v4519 = vpack.c.b16 %v4471, %v4469
        %v4520 = vpack.c.b16 %v4474, %v4472
        %v4521 = vpack.c.b16 %v4475, %v4473
        %v4522 = vpack.c.b16 %v4478, %v4476
        %v4523 = vpack.c.b16 %v4479, %v4477
        %v4524 = vpack.c.b16 %v4482, %v4480
        %v4525 = vpack.c.b16 %v4483, %v4481
        %v4526 = vpack.c.b16 %v4486, %v4484
        %v4527 = vpack.c.b16 %v4487, %v4485
        %v4528 = vpack.c.b16 %v4490, %v4488
        %v4529 = vpack.c.b16 %v4491, %v4489
        %v4530 = vpack.c.b16 %v4494, %v4492
        %v4531 = vpack.c.b16 %v4495, %v4493
        %v4532 = vpack.c.b16 %v4498, %v4496
        %v4533 = vpack.c.b16 %v4499, %v4497
        %v4534 = vpack.c.b16 %v4502, %v4500
        %v4535 = vpack.c.b16 %v4503, %v4501
        %4568 = vmatpush.bf16.msra.mxu0 %v4518
        %4569 = vmatpush.bf16.msra.mxu0 %v4516
        %4570 = vmatpush.bf16.msra.mxu0 %v4514
        %4571 = vmatpush.bf16.msra.mxu0 %v4512
        %4572 = vmatpush.bf16.msra.mxu0 %v4510
        %4573 = vmatpush.bf16.msra.mxu0 %v4508
        %4574 = vmatpush.bf16.msra.mxu0 %v4506
        %4575 = vmatpush.bf16.msra.mxu0 %v4504
        %4576 = vmatmul.bf16.gmra.mxu0 %v4364
        %v4577 = vpop.f32.mrf.mxu0
        %v4578 = vadd.f32 %v4404, %v4577
        %v4579 = vpop.f32.mrf.mxu0
        %v4580 = vadd.f32 %v4404, %v4579
        %4581 = vmatmul.bf16.gmra.mxu0 %v4366
        %v4582 = vpop.f32.mrf.mxu0
        %v4583 = vadd.f32 %v4404, %v4582
        %v4584 = vpop.f32.mrf.mxu0
        %v4585 = vadd.f32 %v4404, %v4584
        %4586 = vdwg.mxu0
        %4587 = vmatpush.bf16.msra.mxu0 %v4534
        %4588 = vmatpush.bf16.msra.mxu0 %v4532
        %4589 = vmatpush.bf16.msra.mxu0 %v4530
        %4590 = vmatpush.bf16.msra.mxu0 %v4528
        %4591 = vmatpush.bf16.msra.mxu0 %v4526
        %4592 = vmatpush.bf16.msra.mxu0 %v4524
        %4593 = vmatpush.bf16.msra.mxu0 %v4522
        %4594 = vmatpush.bf16.msra.mxu0 %v4520
        %4595 = vmatmul.bf16.gmra.mxu0 %v4365
        %v4596 = vpop.f32.mrf.mxu0
        %v4597 = vadd.f32 %v4578, %v4596
        %v4598 = vpop.f32.mrf.mxu0
        %v4599 = vadd.f32 %v4580, %v4598
        %4600 = vmatmul.bf16.gmra.mxu0 %v4367
        %v4601 = vpop.f32.mrf.mxu0
        %v4602 = vadd.f32 %v4583, %v4601
        %v4603 = vpop.f32.mrf.mxu0
        %v4604 = vadd.f32 %v4585, %v4603
        %4605 = vdwg.mxu0
        %4606 = vmatpush.bf16.msra.mxu0 %v4519
        %4607 = vmatpush.bf16.msra.mxu0 %v4517
        %4608 = vmatpush.bf16.msra.mxu0 %v4515
        %4609 = vmatpush.bf16.msra.mxu0 %v4513
        %4610 = vmatpush.bf16.msra.mxu0 %v4511
        %4611 = vmatpush.bf16.msra.mxu0 %v4509
        %4612 = vmatpush.bf16.msra.mxu0 %v4507
        %4613 = vmatpush.bf16.msra.mxu0 %v4505
        %4614 = vmatmul.bf16.gmra.mxu0 %v4364
        %v4615 = vpop.f32.mrf.mxu0
        %v4616 = vadd.f32 %v4405, %v4615
        %v4617 = vpop.f32.mrf.mxu0
        %v4618 = vadd.f32 %v4405, %v4617
        %4619 = vmatmul.bf16.gmra.mxu0 %v4366
        %v4620 = vpop.f32.mrf.mxu0
        %v4621 = vadd.f32 %v4405, %v4620
        %v4622 = vpop.f32.mrf.mxu0
        %v4623 = vadd.f32 %v4405, %v4622
        %4624 = vdwg.mxu0
        %4625 = vmatpush.bf16.msra.mxu0 %v4535
        %4626 = vmatpush.bf16.msra.mxu0 %v4533
        %4627 = vmatpush.bf16.msra.mxu0 %v4531
        %4628 = vmatpush.bf16.msra.mxu0 %v4529
        %4629 = vmatpush.bf16.msra.mxu0 %v4527
        %4630 = vmatpush.bf16.msra.mxu0 %v4525
        %4631 = vmatpush.bf16.msra.mxu0 %v4523
        %4632 = vmatpush.bf16.msra.mxu0 %v4521
        %4633 = vmatmul.bf16.gmra.mxu0 %v4365
        %v4634 = vpop.f32.mrf.mxu0
        %v4635 = vadd.f32 %v4616, %v4634
        %v4636 = vpop.f32.mrf.mxu0
        %v4637 = vadd.f32 %v4618, %v4636
        %4638 = vmatmul.bf16.gmra.mxu0 %v4367
        %v4639 = vpop.f32.mrf.mxu0
        %v4640 = vadd.f32 %v4621, %v4639
        %v4641 = vpop.f32.mrf.mxu0
        %v4642 = vadd.f32 %v4623, %v4641
        %4643 = vdwg.mxu0
        %v4644 = vmax.f32 %v4597, 0.0
        %v4645 = vmax.f32 %v4635, 0.0
        %v4646 = vmax.f32 %v4599, 0.0
        %v4647 = vmax.f32 %v4637, 0.0
        %v4648 = vmax.f32 %v4602, 0.0
        %v4649 = vmax.f32 %v4640, 0.0
        %v4650 = vmax.f32 %v4604, 0.0
        %v4651 = vmax.f32 %v4642, 0.0
        %v4652 = vadd.f32 %v4644, %v3628
        %v4653 = vadd.f32 %v4645, %v3629
        %v4654 = vadd.f32 %v4646, %v3630
        %v4655 = vadd.f32 %v4647, %v3631
        %v4656 = vadd.f32 %v4648, %v3632
        %v4657 = vadd.f32 %v4649, %v3633
        %v4658 = vadd.f32 %v4650, %v3634
        %v4659 = vadd.f32 %v4651, %v3635
        %v4660 = vpack.c.bf16 %v4654, %v4652
        %v4661 = vpack.c.bf16 %v4655, %v4653
        %v4662 = vpack.c.bf16 %v4658, %v4656
        %v4663 = vpack.c.bf16 %v4659, %v4657
        %s4664 = scalar_lea.vmem [#allocation7], 1024
        %v4665 = vld [vmem:[%s4664] sm:$0xff]
        %v4666 = vld [vmem:[%s4664 + $0x8] sm:$0xff]
        %v4667 = vld [vmem:[%s4664 + $0x10] sm:$0xff]
        %v4668 = vld [vmem:[%s4664 + $0x18] sm:$0xff]
        %v4669 = vld [vmem:[%s4664 + $0x20] sm:$0xff]
        %v4670 = vld [vmem:[%s4664 + $0x28] sm:$0xff]
        %v4671 = vld [vmem:[%s4664 + $0x30] sm:$0xff]
        %v4672 = vld [vmem:[%s4664 + $0x38] sm:$0xff]
        %v4673 = vld [vmem:[%s4664 + $0x40] sm:$0xff]
        %v4674 = vld [vmem:[%s4664 + $0x48] sm:$0xff]
        %v4675 = vld [vmem:[%s4664 + $0x50] sm:$0xff]
        %v4676 = vld [vmem:[%s4664 + $0x58] sm:$0xff]
        %v4677 = vld [vmem:[%s4664 + $0x60] sm:$0xff]
        %v4678 = vld [vmem:[%s4664 + $0x68] sm:$0xff]
        %v4679 = vld [vmem:[%s4664 + $0x70] sm:$0xff]
        %v4680 = vld [vmem:[%s4664 + $0x78] sm:$0xff]
        %v4681 = vld [vmem:[%s4664 + $0x80] sm:$0xff]
        %v4682 = vld [vmem:[%s4664 + $0x88] sm:$0xff]
        %v4683 = vld [vmem:[%s4664 + $0x90] sm:$0xff]
        %v4684 = vld [vmem:[%s4664 + $0x98] sm:$0xff]
        %v4685 = vld [vmem:[%s4664 + $0xa0] sm:$0xff]
        %v4686 = vld [vmem:[%s4664 + $0xa8] sm:$0xff]
        %v4687 = vld [vmem:[%s4664 + $0xb0] sm:$0xff]
        %v4688 = vld [vmem:[%s4664 + $0xb8] sm:$0xff]
        %v4689 = vld [vmem:[%s4664 + $0xc0] sm:$0xff]
        %v4690 = vld [vmem:[%s4664 + $0xc8] sm:$0xff]
        %v4691 = vld [vmem:[%s4664 + $0xd0] sm:$0xff]
        %v4692 = vld [vmem:[%s4664 + $0xd8] sm:$0xff]
        %v4693 = vld [vmem:[%s4664 + $0xe0] sm:$0xff]
        %v4694 = vld [vmem:[%s4664 + $0xe8] sm:$0xff]
        %v4695 = vld [vmem:[%s4664 + $0xf0] sm:$0xff]
        %v4696 = vld [vmem:[%s4664 + $0xf8] sm:$0xff]
        %s4697 = scalar_lea.vmem [#allocation8], 8
        %v4698 = vld [vmem:[%s4697] sm:$0x3]
        %v4700 = vperm.slane %v4698, 0
        %v4701 = vperm.slane %v4698, 1
        %v4736 = vunpack.c.l.b16 %v4665
        %v4737 = vunpack.c.h.b16 %v4665
        %v4738 = vunpack.c.l.b16 %v4666
        %v4739 = vunpack.c.h.b16 %v4666
        %v4740 = vunpack.c.l.b16 %v4667
        %v4741 = vunpack.c.h.b16 %v4667
        %v4742 = vunpack.c.l.b16 %v4668
        %v4743 = vunpack.c.h.b16 %v4668
        %v4744 = vunpack.c.l.b16 %v4669
        %v4745 = vunpack.c.h.b16 %v4669
        %v4746 = vunpack.c.l.b16 %v4670
        %v4747 = vunpack.c.h.b16 %v4670
        %v4748 = vunpack.c.l.b16 %v4671
        %v4749 = vunpack.c.h.b16 %v4671
        %v4750 = vunpack.c.l.b16 %v4672
        %v4751 = vunpack.c.h.b16 %v4672
        %v4752 = vunpack.c.l.b16 %v4673
        %v4753 = vunpack.c.h.b16 %v4673
        %v4754 = vunpack.c.l.b16 %v4674
        %v4755 = vunpack.c.h.b16 %v4674
        %v4756 = vunpack.c.l.b16 %v4675
        %v4757 = vunpack.c.h.b16 %v4675
        %v4758 = vunpack.c.l.b16 %v4676
        %v4759 = vunpack.c.h.b16 %v4676
        %v4760 = vunpack.c.l.b16 %v4677
        %v4761 = vunpack.c.h.b16 %v4677
        %v4762 = vunpack.c.l.b16 %v4678
        %v4763 = vunpack.c.h.b16 %v4678
        %v4764 = vunpack.c.l.b16 %v4679
        %v4765 = vunpack.c.h.b16 %v4679
        %v4766 = vunpack.c.l.b16 %v4680
        %v4767 = vunpack.c.h.b16 %v4680
        %v4768 = vunpack.c.l.b16 %v4681
        %v4769 = vunpack.c.h.b16 %v4681
        %v4770 = vunpack.c.l.b16 %v4682
        %v4771 = vunpack.c.h.b16 %v4682
        %v4772 = vunpack.c.l.b16 %v4683
        %v4773 = vunpack.c.h.b16 %v4683
        %v4774 = vunpack.c.l.b16 %v4684
        %v4775 = vunpack.c.h.b16 %v4684
        %v4776 = vunpack.c.l.b16 %v4685
        %v4777 = vunpack.c.h.b16 %v4685
        %v4778 = vunpack.c.l.b16 %v4686
        %v4779 = vunpack.c.h.b16 %v4686
        %v4780 = vunpack.c.l.b16 %v4687
        %v4781 = vunpack.c.h.b16 %v4687
        %v4782 = vunpack.c.l.b16 %v4688
        %v4783 = vunpack.c.h.b16 %v4688
        %v4784 = vunpack.c.l.b16 %v4689
        %v4785 = vunpack.c.h.b16 %v4689
        %v4786 = vunpack.c.l.b16 %v4690
        %v4787 = vunpack.c.h.b16 %v4690
        %v4788 = vunpack.c.l.b16 %v4691
        %v4789 = vunpack.c.h.b16 %v4691
        %v4790 = vunpack.c.l.b16 %v4692
        %v4791 = vunpack.c.h.b16 %v4692
        %v4792 = vunpack.c.l.b16 %v4693
        %v4793 = vunpack.c.h.b16 %v4693
        %v4794 = vunpack.c.l.b16 %v4694
        %v4795 = vunpack.c.h.b16 %v4694
        %v4796 = vunpack.c.l.b16 %v4695
        %v4797 = vunpack.c.h.b16 %v4695
        %v4798 = vunpack.c.l.b16 %v4696
        %v4799 = vunpack.c.h.b16 %v4696
        %v4800 = vpack.c.b16 %v4738, %v4736
        %v4801 = vpack.c.b16 %v4739, %v4737
        %v4802 = vpack.c.b16 %v4742, %v4740
        %v4803 = vpack.c.b16 %v4743, %v4741
        %v4804 = vpack.c.b16 %v4746, %v4744
        %v4805 = vpack.c.b16 %v4747, %v4745
        %v4806 = vpack.c.b16 %v4750, %v4748
        %v4807 = vpack.c.b16 %v4751, %v4749
        %v4808 = vpack.c.b16 %v4754, %v4752
        %v4809 = vpack.c.b16 %v4755, %v4753
        %v4810 = vpack.c.b16 %v4758, %v4756
        %v4811 = vpack.c.b16 %v4759, %v4757
        %v4812 = vpack.c.b16 %v4762, %v4760
        %v4813 = vpack.c.b16 %v4763, %v4761
        %v4814 = vpack.c.b16 %v4766, %v4764
        %v4815 = vpack.c.b16 %v4767, %v4765
        %v4816 = vpack.c.b16 %v4770, %v4768
        %v4817 = vpack.c.b16 %v4771, %v4769
        %v4818 = vpack.c.b16 %v4774, %v4772
        %v4819 = vpack.c.b16 %v4775, %v4773
        %v4820 = vpack.c.b16 %v4778, %v4776
        %v4821 = vpack.c.b16 %v4779, %v4777
        %v4822 = vpack.c.b16 %v4782, %v4780
        %v4823 = vpack.c.b16 %v4783, %v4781
        %v4824 = vpack.c.b16 %v4786, %v4784
        %v4825 = vpack.c.b16 %v4787, %v4785
        %v4826 = vpack.c.b16 %v4790, %v4788
        %v4827 = vpack.c.b16 %v4791, %v4789
        %v4828 = vpack.c.b16 %v4794, %v4792
        %v4829 = vpack.c.b16 %v4795, %v4793
        %v4830 = vpack.c.b16 %v4798, %v4796
        %v4831 = vpack.c.b16 %v4799, %v4797
        %4864 = vmatpush.bf16.msra.mxu0 %v4814
        %4865 = vmatpush.bf16.msra.mxu0 %v4812
        %4866 = vmatpush.bf16.msra.mxu0 %v4810
        %4867 = vmatpush.bf16.msra.mxu0 %v4808
        %4868 = vmatpush.bf16.msra.mxu0 %v4806
        %4869 = vmatpush.bf16.msra.mxu0 %v4804
        %4870 = vmatpush.bf16.msra.mxu0 %v4802
        %4871 = vmatpush.bf16.msra.mxu0 %v4800
        %4872 = vmatmul.bf16.gmra.mxu0 %v4660
        %v4873 = vpop.f32.mrf.mxu0
        %v4874 = vadd.f32 %v4700, %v4873
        %v4875 = vpop.f32.mrf.mxu0
        %v4876 = vadd.f32 %v4700, %v4875
        %4877 = vmatmul.bf16.gmra.mxu0 %v4662
        %v4878 = vpop.f32.mrf.mxu0
        %v4879 = vadd.f32 %v4700, %v4878
        %v4880 = vpop.f32.mrf.mxu0
        %v4881 = vadd.f32 %v4700, %v4880
        %4882 = vdwg.mxu0
        %4883 = vmatpush.bf16.msra.mxu0 %v4830
        %4884 = vmatpush.bf16.msra.mxu0 %v4828
        %4885 = vmatpush.bf16.msra.mxu0 %v4826
        %4886 = vmatpush.bf16.msra.mxu0 %v4824
        %4887 = vmatpush.bf16.msra.mxu0 %v4822
        %4888 = vmatpush.bf16.msra.mxu0 %v4820
        %4889 = vmatpush.bf16.msra.mxu0 %v4818
        %4890 = vmatpush.bf16.msra.mxu0 %v4816
        %4891 = vmatmul.bf16.gmra.mxu0 %v4661
        %v4892 = vpop.f32.mrf.mxu0
        %v4893 = vadd.f32 %v4874, %v4892
        %v4894 = vpop.f32.mrf.mxu0
        %v4895 = vadd.f32 %v4876, %v4894
        %4896 = vmatmul.bf16.gmra.mxu0 %v4663
        %v4897 = vpop.f32.mrf.mxu0
        %v4898 = vadd.f32 %v4879, %v4897
        %v4899 = vpop.f32.mrf.mxu0
        %v4900 = vadd.f32 %v4881, %v4899
        %4901 = vdwg.mxu0
        %4902 = vmatpush.bf16.msra.mxu0 %v4815
        %4903 = vmatpush.bf16.msra.mxu0 %v4813
        %4904 = vmatpush.bf16.msra.mxu0 %v4811
        %4905 = vmatpush.bf16.msra.mxu0 %v4809
        %4906 = vmatpush.bf16.msra.mxu0 %v4807
        %4907 = vmatpush.bf16.msra.mxu0 %v4805
        %4908 = vmatpush.bf16.msra.mxu0 %v4803
        %4909 = vmatpush.bf16.msra.mxu0 %v4801
        %4910 = vmatmul.bf16.gmra.mxu0 %v4660
        %v4911 = vpop.f32.mrf.mxu0
        %v4912 = vadd.f32 %v4701, %v4911
        %v4913 = vpop.f32.mrf.mxu0
        %v4914 = vadd.f32 %v4701, %v4913
        %4915 = vmatmul.bf16.gmra.mxu0 %v4662
        %v4916 = vpop.f32.mrf.mxu0
        %v4917 = vadd.f32 %v4701, %v4916
        %v4918 = vpop.f32.mrf.mxu0
        %v4919 = vadd.f32 %v4701, %v4918
        %4920 = vdwg.mxu0
        %4921 = vmatpush.bf16.msra.mxu0 %v4831
        %4922 = vmatpush.bf16.msra.mxu0 %v4829
        %4923 = vmatpush.bf16.msra.mxu0 %v4827
        %4924 = vmatpush.bf16.msra.mxu0 %v4825
        %4925 = vmatpush.bf16.msra.mxu0 %v4823
        %4926 = vmatpush.bf16.msra.mxu0 %v4821
        %4927 = vmatpush.bf16.msra.mxu0 %v4819
        %4928 = vmatpush.bf16.msra.mxu0 %v4817
        %4929 = vmatmul.bf16.gmra.mxu0 %v4661
        %v4930 = vpop.f32.mrf.mxu0
        %v4931 = vadd.f32 %v4912, %v4930
        %v4932 = vpop.f32.mrf.mxu0
        %v4933 = vadd.f32 %v4914, %v4932
        %4934 = vmatmul.bf16.gmra.mxu0 %v4663
        %v4935 = vpop.f32.mrf.mxu0
        %v4936 = vadd.f32 %v4917, %v4935
        %v4937 = vpop.f32.mrf.mxu0
        %v4938 = vadd.f32 %v4919, %v4937
        %4939 = vdwg.mxu0
        %v4940 = vpack.c.bf16 %v4895, %v4893
        %v4941 = vpack.c.bf16 %v4933, %v4931
        %v4942 = vpack.c.bf16 %v4900, %v4898
        %v4943 = vpack.c.bf16 %v4938, %v4936
        %4944 = vmatpush.bf16.xpose.msra.mxu0 0
        %4945 = vmatpush.bf16.xpose.msra.mxu0 0
        %4946 = vmatpush.bf16.xpose.msra.mxu0 0
        %4947 = vmatpush.bf16.xpose.msra.mxu0 0
        %4948 = vmatpush.bf16.xpose.msra.mxu0 0
        %4949 = vmatpush.bf16.xpose.msra.mxu0 0
        %4950 = vmatpush.bf16.xpose.msra.mxu0 %v4662
        %4951 = vmatpush.bf16.xpose.msra.mxu0 %v4660
        %4952 = vmatmul.bf16.gmra.mxu0 %v4940
        %v4953 = vpop.f32.mrf.mxu0
        %v4954 = vadd.f32 0.0, %v4953
        %v4955 = vpop.f32.mrf.mxu0
        %v4956 = vadd.f32 0.0, %v4955
        %4957 = vmatmul.bf16.gmra.mxu0 %v4942
        %v4958 = vpop.f32.mrf.mxu0
        %v4959 = vadd.f32 0.0, %v4958
        %v4960 = vpop.f32.mrf.mxu0
        %v4961 = vadd.f32 0.0, %v4960
        %4962 = vdwg.mxu0
        %4963 = vmatpush.bf16.xpose.msra.mxu0 0
        %4964 = vmatpush.bf16.xpose.msra.mxu0 0
        %4965 = vmatpush.bf16.xpose.msra.mxu0 0
        %4966 = vmatpush.bf16.xpose.msra.mxu0 0
        %4967 = vmatpush.bf16.xpose.msra.mxu0 0
        %4968 = vmatpush.bf16.xpose.msra.mxu0 0
        %4969 = vmatpush.bf16.xpose.msra.mxu0 %v4663
        %4970 = vmatpush.bf16.xpose.msra.mxu0 %v4661
        %4971 = vmatmul.bf16.gmra.mxu0 %v4941
        %v4972 = vpop.f32.mrf.mxu0
        %v4973 = vadd.f32 %v4954, %v4972
        %v4974 = vpop.f32.mrf.mxu0
        %v4975 = vadd.f32 %v4956, %v4974
        %4976 = vmatmul.bf16.gmra.mxu0 %v4943
        %v4977 = vpop.f32.mrf.mxu0
        %v4978 = vadd.f32 %v4959, %v4977
        %v4979 = vpop.f32.mrf.mxu0
        %v4980 = vadd.f32 %v4961, %v4979
        %4981 = vdwg.mxu0
        %v4982 = vsel %vm889, %v4973, -inf
        %4983 = vmax.xlane.f32.xlu0 %v4982
        %v4984 = vpop.xlane.xlu0 %4983
        %v4985 = vsel %vm889, %v4975, -inf
        %4986 = vmax.xlane.f32.xlu0 %v4985
        %v4987 = vpop.xlane.xlu0 %4986
        %v4988 = vsel %vm889, %v4978, -inf
        %4989 = vmax.xlane.f32.xlu0 %v4988
        %v4990 = vpop.xlane.xlu0 %4989
        %v4991 = vsel %vm889, %v4980, -inf
        %4992 = vmax.xlane.f32.xlu0 %v4991
        %v4993 = vpop.xlane.xlu0 %4992
        %v4994 = vsub.f32 %v4973, %v4984
        %v4995 = vsub.f32 %v4975, %v4987
        %v4996 = vsub.f32 %v4978, %v4990
        %v4997 = vsub.f32 %v4980, %v4993
        %v4998 = vmul.f32 %v4994, 1.442695
        %v4999 = vpow.pop %v4998
        %v5000 = vmul.f32 %v4995, 1.442695
        %v5001 = vpow.pop %v5000
        %v5002 = vmul.f32 %v4996, 1.442695
        %v5003 = vpow.pop %v5002
        %v5004 = vmul.f32 %v4997, 1.442695
        %v5005 = vpow.pop %v5004
        %v5006 = vsub.f32 0.0, %v4984
        %v5007 = vsub.f32 0.0, %v4987
        %v5008 = vsub.f32 0.0, %v4990
        %v5009 = vsub.f32 0.0, %v4993
        %v5010 = vmul.f32 %v5006, 1.442695
        %v5011 = vpow.pop %v5010
        %v5012 = vmul.f32 %v5007, 1.442695
        %v5013 = vpow.pop %v5012
        %v5014 = vmul.f32 %v5008, 1.442695
        %v5015 = vpow.pop %v5014
        %v5016 = vmul.f32 %v5009, 1.442695
        %v5017 = vpow.pop %v5016
        %v5018 = vmul.f32 %v5011, 1e-05
        %v5019 = vmul.f32 %v5013, 1e-05
        %v5020 = vmul.f32 %v5015, 1e-05
        %v5021 = vmul.f32 %v5017, 1e-05
        %v5022 = vmul.f32 %v5018, %v565
        %v5023 = vmul.f32 %v5019, %v566
        %v5024 = vmul.f32 %v5020, %v567
        %v5025 = vmul.f32 %v5021, %v568
        %v5026 = vadd.f32 %v4999, %v5022
        %v5027 = vadd.f32 %v5001, %v5023
        %v5028 = vadd.f32 %v5003, %v5024
        %v5029 = vadd.f32 %v5005, %v5025
        %v5030 = vmul.f32 %v5026, %v546
        %v5031 = vmul.f32 %v5027, %v547
        %v5032 = vmul.f32 %v5028, %v548
        %v5033 = vmul.f32 %v5029, %v549
        %v5034 = vsel %vm889, %v5030, 0.0
        %5035 = vadd.xlane.f32.xlu0 %v5034
        %v5036 = vpop.xlane.xlu0 %5035
        %v5037 = vsel %vm889, %v5031, 0.0
        %5038 = vadd.xlane.f32.xlu0 %v5037
        %v5039 = vpop.xlane.xlu0 %5038
        %v5040 = vsel %vm889, %v5032, 0.0
        %5041 = vadd.xlane.f32.xlu0 %v5040
        %v5042 = vpop.xlane.xlu0 %5041
        %v5043 = vsel %vm889, %v5033, 0.0
        %5044 = vadd.xlane.f32.xlu0 %v5043
        %v5045 = vpop.xlane.xlu0 %5044
        %v5046 = vrcp.pop %v5036
        %v5047 = vrcp.pop %v5039
        %v5048 = vrcp.pop %v5042
        %v5049 = vrcp.pop %v5045
        %v5050 = vmul.f32 %v5030, %v5046
        %v5051 = vmul.f32 %v5031, %v5047
        %v5052 = vmul.f32 %v5032, %v5048
        %v5053 = vmul.f32 %v5033, %v5049
        %v5054 = vpack.c.bf16 %v5051, %v5050
        %v5055 = vpack.c.bf16 %v5053, %v5052
        %v5057 = vsel %vm889, %v5054, 0
        %v5060 = vsel %vm889, %v5055, 0
        %5062 = vmatpush.bf16.msra.mxu0 0
        %5063 = vmatpush.bf16.msra.mxu0 0
        %5064 = vmatpush.bf16.msra.mxu0 0
        %5065 = vmatpush.bf16.msra.mxu0 0
        %5066 = vmatpush.bf16.msra.mxu0 0
        %5067 = vmatpush.bf16.msra.mxu0 0
        %5068 = vmatpush.bf16.msra.mxu0 %v4662
        %5069 = vmatpush.bf16.msra.mxu0 %v4660
        %5070 = vmatmul.bf16.gmra.mxu0 %v5057
        %v5071 = vpop.f32.mrf.mxu0
        %v5072 = vadd.f32 0.0, %v5071
        %v5073 = vpop.f32.mrf.mxu0
        %v5074 = vadd.f32 0.0, %v5073
        %5075 = vmatmul.bf16.gmra.mxu0 %v5060
        %v5076 = vpop.f32.mrf.mxu0
        %v5077 = vadd.f32 0.0, %v5076
        %v5078 = vpop.f32.mrf.mxu0
        %v5079 = vadd.f32 0.0, %v5078
        %5080 = vdwg.mxu0
        %5081 = vmatpush.bf16.msra.mxu0 0
        %5082 = vmatpush.bf16.msra.mxu0 0
        %5083 = vmatpush.bf16.msra.mxu0 0
        %5084 = vmatpush.bf16.msra.mxu0 0
        %5085 = vmatpush.bf16.msra.mxu0 0
        %5086 = vmatpush.bf16.msra.mxu0 0
        %5087 = vmatpush.bf16.msra.mxu0 %v4663
        %5088 = vmatpush.bf16.msra.mxu0 %v4661
        %5089 = vmatmul.bf16.gmra.mxu0 %v5057
        %v5090 = vpop.f32.mrf.mxu0
        %v5091 = vadd.f32 0.0, %v5090
        %v5092 = vpop.f32.mrf.mxu0
        %v5093 = vadd.f32 0.0, %v5092
        %5094 = vmatmul.bf16.gmra.mxu0 %v5060
        %v5095 = vpop.f32.mrf.mxu0
        %v5096 = vadd.f32 0.0, %v5095
        %v5097 = vpop.f32.mrf.mxu0
        %v5098 = vadd.f32 0.0, %v5097
        %5099 = vdwg.mxu0
        %v5100 = vpack.c.bf16 %v5074, %v5072
        %v5101 = vpack.c.bf16 %v5093, %v5091
        %v5102 = vpack.c.bf16 %v5079, %v5077
        %v5103 = vpack.c.bf16 %v5098, %v5096
        %s5104 = scalar_lea.vmem [#allocation10], 1024
        %v5105 = vld [vmem:[%s5104] sm:$0xff]
        %v5106 = vld [vmem:[%s5104 + $0x8] sm:$0xff]
        %v5107 = vld [vmem:[%s5104 + $0x10] sm:$0xff]
        %v5108 = vld [vmem:[%s5104 + $0x18] sm:$0xff]
        %v5109 = vld [vmem:[%s5104 + $0x20] sm:$0xff]
        %v5110 = vld [vmem:[%s5104 + $0x28] sm:$0xff]
        %v5111 = vld [vmem:[%s5104 + $0x30] sm:$0xff]
        %v5112 = vld [vmem:[%s5104 + $0x38] sm:$0xff]
        %v5113 = vld [vmem:[%s5104 + $0x40] sm:$0xff]
        %v5114 = vld [vmem:[%s5104 + $0x48] sm:$0xff]
        %v5115 = vld [vmem:[%s5104 + $0x50] sm:$0xff]
        %v5116 = vld [vmem:[%s5104 + $0x58] sm:$0xff]
        %v5117 = vld [vmem:[%s5104 + $0x60] sm:$0xff]
        %v5118 = vld [vmem:[%s5104 + $0x68] sm:$0xff]
        %v5119 = vld [vmem:[%s5104 + $0x70] sm:$0xff]
        %v5120 = vld [vmem:[%s5104 + $0x78] sm:$0xff]
        %v5121 = vld [vmem:[%s5104 + $0x80] sm:$0xff]
        %v5122 = vld [vmem:[%s5104 + $0x88] sm:$0xff]
        %v5123 = vld [vmem:[%s5104 + $0x90] sm:$0xff]
        %v5124 = vld [vmem:[%s5104 + $0x98] sm:$0xff]
        %v5125 = vld [vmem:[%s5104 + $0xa0] sm:$0xff]
        %v5126 = vld [vmem:[%s5104 + $0xa8] sm:$0xff]
        %v5127 = vld [vmem:[%s5104 + $0xb0] sm:$0xff]
        %v5128 = vld [vmem:[%s5104 + $0xb8] sm:$0xff]
        %v5129 = vld [vmem:[%s5104 + $0xc0] sm:$0xff]
        %v5130 = vld [vmem:[%s5104 + $0xc8] sm:$0xff]
        %v5131 = vld [vmem:[%s5104 + $0xd0] sm:$0xff]
        %v5132 = vld [vmem:[%s5104 + $0xd8] sm:$0xff]
        %v5133 = vld [vmem:[%s5104 + $0xe0] sm:$0xff]
        %v5134 = vld [vmem:[%s5104 + $0xe8] sm:$0xff]
        %v5135 = vld [vmem:[%s5104 + $0xf0] sm:$0xff]
        %v5136 = vld [vmem:[%s5104 + $0xf8] sm:$0xff]
        %s5137 = scalar_lea.vmem [#allocation11], 8
        %v5138 = vld [vmem:[%s5137] sm:$0x3]
        %v5140 = vperm.slane %v5138, 0
        %v5141 = vperm.slane %v5138, 1
        %v5176 = vunpack.c.l.b16 %v5105
        %v5177 = vunpack.c.h.b16 %v5105
        %v5178 = vunpack.c.l.b16 %v5106
        %v5179 = vunpack.c.h.b16 %v5106
        %v5180 = vunpack.c.l.b16 %v5107
        %v5181 = vunpack.c.h.b16 %v5107
        %v5182 = vunpack.c.l.b16 %v5108
        %v5183 = vunpack.c.h.b16 %v5108
        %v5184 = vunpack.c.l.b16 %v5109
        %v5185 = vunpack.c.h.b16 %v5109
        %v5186 = vunpack.c.l.b16 %v5110
        %v5187 = vunpack.c.h.b16 %v5110
        %v5188 = vunpack.c.l.b16 %v5111
        %v5189 = vunpack.c.h.b16 %v5111
        %v5190 = vunpack.c.l.b16 %v5112
        %v5191 = vunpack.c.h.b16 %v5112
        %v5192 = vunpack.c.l.b16 %v5113
        %v5193 = vunpack.c.h.b16 %v5113
        %v5194 = vunpack.c.l.b16 %v5114
        %v5195 = vunpack.c.h.b16 %v5114
        %v5196 = vunpack.c.l.b16 %v5115
        %v5197 = vunpack.c.h.b16 %v5115
        %v5198 = vunpack.c.l.b16 %v5116
        %v5199 = vunpack.c.h.b16 %v5116
        %v5200 = vunpack.c.l.b16 %v5117
        %v5201 = vunpack.c.h.b16 %v5117
        %v5202 = vunpack.c.l.b16 %v5118
        %v5203 = vunpack.c.h.b16 %v5118
        %v5204 = vunpack.c.l.b16 %v5119
        %v5205 = vunpack.c.h.b16 %v5119
        %v5206 = vunpack.c.l.b16 %v5120
        %v5207 = vunpack.c.h.b16 %v5120
        %v5208 = vunpack.c.l.b16 %v5121
        %v5209 = vunpack.c.h.b16 %v5121
        %v5210 = vunpack.c.l.b16 %v5122
        %v5211 = vunpack.c.h.b16 %v5122
        %v5212 = vunpack.c.l.b16 %v5123
        %v5213 = vunpack.c.h.b16 %v5123
        %v5214 = vunpack.c.l.b16 %v5124
        %v5215 = vunpack.c.h.b16 %v5124
        %v5216 = vunpack.c.l.b16 %v5125
        %v5217 = vunpack.c.h.b16 %v5125
        %v5218 = vunpack.c.l.b16 %v5126
        %v5219 = vunpack.c.h.b16 %v5126
        %v5220 = vunpack.c.l.b16 %v5127
        %v5221 = vunpack.c.h.b16 %v5127
        %v5222 = vunpack.c.l.b16 %v5128
        %v5223 = vunpack.c.h.b16 %v5128
        %v5224 = vunpack.c.l.b16 %v5129
        %v5225 = vunpack.c.h.b16 %v5129
        %v5226 = vunpack.c.l.b16 %v5130
        %v5227 = vunpack.c.h.b16 %v5130
        %v5228 = vunpack.c.l.b16 %v5131
        %v5229 = vunpack.c.h.b16 %v5131
        %v5230 = vunpack.c.l.b16 %v5132
        %v5231 = vunpack.c.h.b16 %v5132
        %v5232 = vunpack.c.l.b16 %v5133
        %v5233 = vunpack.c.h.b16 %v5133
        %v5234 = vunpack.c.l.b16 %v5134
        %v5235 = vunpack.c.h.b16 %v5134
        %v5236 = vunpack.c.l.b16 %v5135
        %v5237 = vunpack.c.h.b16 %v5135
        %v5238 = vunpack.c.l.b16 %v5136
        %v5239 = vunpack.c.h.b16 %v5136
        %v5240 = vpack.c.b16 %v5178, %v5176
        %v5241 = vpack.c.b16 %v5179, %v5177
        %v5242 = vpack.c.b16 %v5182, %v5180
        %v5243 = vpack.c.b16 %v5183, %v5181
        %v5244 = vpack.c.b16 %v5186, %v5184
        %v5245 = vpack.c.b16 %v5187, %v5185
        %v5246 = vpack.c.b16 %v5190, %v5188
        %v5247 = vpack.c.b16 %v5191, %v5189
        %v5248 = vpack.c.b16 %v5194, %v5192
        %v5249 = vpack.c.b16 %v5195, %v5193
        %v5250 = vpack.c.b16 %v5198, %v5196
        %v5251 = vpack.c.b16 %v5199, %v5197
        %v5252 = vpack.c.b16 %v5202, %v5200
        %v5253 = vpack.c.b16 %v5203, %v5201
        %v5254 = vpack.c.b16 %v5206, %v5204
        %v5255 = vpack.c.b16 %v5207, %v5205
        %v5256 = vpack.c.b16 %v5210, %v5208
        %v5257 = vpack.c.b16 %v5211, %v5209
        %v5258 = vpack.c.b16 %v5214, %v5212
        %v5259 = vpack.c.b16 %v5215, %v5213
        %v5260 = vpack.c.b16 %v5218, %v5216
        %v5261 = vpack.c.b16 %v5219, %v5217
        %v5262 = vpack.c.b16 %v5222, %v5220
        %v5263 = vpack.c.b16 %v5223, %v5221
        %v5264 = vpack.c.b16 %v5226, %v5224
        %v5265 = vpack.c.b16 %v5227, %v5225
        %v5266 = vpack.c.b16 %v5230, %v5228
        %v5267 = vpack.c.b16 %v5231, %v5229
        %v5268 = vpack.c.b16 %v5234, %v5232
        %v5269 = vpack.c.b16 %v5235, %v5233
        %v5270 = vpack.c.b16 %v5238, %v5236
        %v5271 = vpack.c.b16 %v5239, %v5237
        %5304 = vmatpush.bf16.msra.mxu0 %v5254
        %5305 = vmatpush.bf16.msra.mxu0 %v5252
        %5306 = vmatpush.bf16.msra.mxu0 %v5250
        %5307 = vmatpush.bf16.msra.mxu0 %v5248
        %5308 = vmatpush.bf16.msra.mxu0 %v5246
        %5309 = vmatpush.bf16.msra.mxu0 %v5244
        %5310 = vmatpush.bf16.msra.mxu0 %v5242
        %5311 = vmatpush.bf16.msra.mxu0 %v5240
        %5312 = vmatmul.bf16.gmra.mxu0 %v5100
        %v5313 = vpop.f32.mrf.mxu0
        %v5314 = vadd.f32 %v5140, %v5313
        %v5315 = vpop.f32.mrf.mxu0
        %v5316 = vadd.f32 %v5140, %v5315
        %5317 = vmatmul.bf16.gmra.mxu0 %v5102
        %v5318 = vpop.f32.mrf.mxu0
        %v5319 = vadd.f32 %v5140, %v5318
        %v5320 = vpop.f32.mrf.mxu0
        %v5321 = vadd.f32 %v5140, %v5320
        %5322 = vdwg.mxu0
        %5323 = vmatpush.bf16.msra.mxu0 %v5270
        %5324 = vmatpush.bf16.msra.mxu0 %v5268
        %5325 = vmatpush.bf16.msra.mxu0 %v5266
        %5326 = vmatpush.bf16.msra.mxu0 %v5264
        %5327 = vmatpush.bf16.msra.mxu0 %v5262
        %5328 = vmatpush.bf16.msra.mxu0 %v5260
        %5329 = vmatpush.bf16.msra.mxu0 %v5258
        %5330 = vmatpush.bf16.msra.mxu0 %v5256
        %5331 = vmatmul.bf16.gmra.mxu0 %v5101
        %v5332 = vpop.f32.mrf.mxu0
        %v5333 = vadd.f32 %v5314, %v5332
        %v5334 = vpop.f32.mrf.mxu0
        %v5335 = vadd.f32 %v5316, %v5334
        %5336 = vmatmul.bf16.gmra.mxu0 %v5103
        %v5337 = vpop.f32.mrf.mxu0
        %v5338 = vadd.f32 %v5319, %v5337
        %v5339 = vpop.f32.mrf.mxu0
        %v5340 = vadd.f32 %v5321, %v5339
        %5341 = vdwg.mxu0
        %5342 = vmatpush.bf16.msra.mxu0 %v5255
        %5343 = vmatpush.bf16.msra.mxu0 %v5253
        %5344 = vmatpush.bf16.msra.mxu0 %v5251
        %5345 = vmatpush.bf16.msra.mxu0 %v5249
        %5346 = vmatpush.bf16.msra.mxu0 %v5247
        %5347 = vmatpush.bf16.msra.mxu0 %v5245
        %5348 = vmatpush.bf16.msra.mxu0 %v5243
        %5349 = vmatpush.bf16.msra.mxu0 %v5241
        %5350 = vmatmul.bf16.gmra.mxu0 %v5100
        %v5351 = vpop.f32.mrf.mxu0
        %v5352 = vadd.f32 %v5141, %v5351
        %v5353 = vpop.f32.mrf.mxu0
        %v5354 = vadd.f32 %v5141, %v5353
        %5355 = vmatmul.bf16.gmra.mxu0 %v5102
        %v5356 = vpop.f32.mrf.mxu0
        %v5357 = vadd.f32 %v5141, %v5356
        %v5358 = vpop.f32.mrf.mxu0
        %v5359 = vadd.f32 %v5141, %v5358
        %5360 = vdwg.mxu0
        %5361 = vmatpush.bf16.msra.mxu0 %v5271
        %5362 = vmatpush.bf16.msra.mxu0 %v5269
        %5363 = vmatpush.bf16.msra.mxu0 %v5267
        %5364 = vmatpush.bf16.msra.mxu0 %v5265
        %5365 = vmatpush.bf16.msra.mxu0 %v5263
        %5366 = vmatpush.bf16.msra.mxu0 %v5261
        %5367 = vmatpush.bf16.msra.mxu0 %v5259
        %5368 = vmatpush.bf16.msra.mxu0 %v5257
        %5369 = vmatmul.bf16.gmra.mxu0 %v5101
        %v5370 = vpop.f32.mrf.mxu0
        %v5371 = vadd.f32 %v5352, %v5370
        %v5372 = vpop.f32.mrf.mxu0
        %v5373 = vadd.f32 %v5354, %v5372
        %5374 = vmatmul.bf16.gmra.mxu0 %v5103
        %v5375 = vpop.f32.mrf.mxu0
        %v5376 = vadd.f32 %v5357, %v5375
        %v5377 = vpop.f32.mrf.mxu0
        %v5378 = vadd.f32 %v5359, %v5377
        %5379 = vdwg.mxu0
        %v5380 = vmax.f32 %v5333, 0.0
        %v5381 = vmax.f32 %v5371, 0.0
        %v5382 = vmax.f32 %v5335, 0.0
        %v5383 = vmax.f32 %v5373, 0.0
        %v5384 = vmax.f32 %v5338, 0.0
        %v5385 = vmax.f32 %v5376, 0.0
        %v5386 = vmax.f32 %v5340, 0.0
        %v5387 = vmax.f32 %v5378, 0.0
        %v5388 = vpack.c.bf16 %v5382, %v5380
        %v5389 = vpack.c.bf16 %v5383, %v5381
        %v5390 = vpack.c.bf16 %v5386, %v5384
        %v5391 = vpack.c.bf16 %v5387, %v5385
        %s5392 = scalar_lea.vmem [#allocation13], 1024
        %v5393 = vld [vmem:[%s5392] sm:$0xff]
        %v5394 = vld [vmem:[%s5392 + $0x8] sm:$0xff]
        %v5395 = vld [vmem:[%s5392 + $0x10] sm:$0xff]
        %v5396 = vld [vmem:[%s5392 + $0x18] sm:$0xff]
        %v5397 = vld [vmem:[%s5392 + $0x20] sm:$0xff]
        %v5398 = vld [vmem:[%s5392 + $0x28] sm:$0xff]
        %v5399 = vld [vmem:[%s5392 + $0x30] sm:$0xff]
        %v5400 = vld [vmem:[%s5392 + $0x38] sm:$0xff]
        %v5401 = vld [vmem:[%s5392 + $0x40] sm:$0xff]
        %v5402 = vld [vmem:[%s5392 + $0x48] sm:$0xff]
        %v5403 = vld [vmem:[%s5392 + $0x50] sm:$0xff]
        %v5404 = vld [vmem:[%s5392 + $0x58] sm:$0xff]
        %v5405 = vld [vmem:[%s5392 + $0x60] sm:$0xff]
        %v5406 = vld [vmem:[%s5392 + $0x68] sm:$0xff]
        %v5407 = vld [vmem:[%s5392 + $0x70] sm:$0xff]
        %v5408 = vld [vmem:[%s5392 + $0x78] sm:$0xff]
        %v5409 = vld [vmem:[%s5392 + $0x80] sm:$0xff]
        %v5410 = vld [vmem:[%s5392 + $0x88] sm:$0xff]
        %v5411 = vld [vmem:[%s5392 + $0x90] sm:$0xff]
        %v5412 = vld [vmem:[%s5392 + $0x98] sm:$0xff]
        %v5413 = vld [vmem:[%s5392 + $0xa0] sm:$0xff]
        %v5414 = vld [vmem:[%s5392 + $0xa8] sm:$0xff]
        %v5415 = vld [vmem:[%s5392 + $0xb0] sm:$0xff]
        %v5416 = vld [vmem:[%s5392 + $0xb8] sm:$0xff]
        %v5417 = vld [vmem:[%s5392 + $0xc0] sm:$0xff]
        %v5418 = vld [vmem:[%s5392 + $0xc8] sm:$0xff]
        %v5419 = vld [vmem:[%s5392 + $0xd0] sm:$0xff]
        %v5420 = vld [vmem:[%s5392 + $0xd8] sm:$0xff]
        %v5421 = vld [vmem:[%s5392 + $0xe0] sm:$0xff]
        %v5422 = vld [vmem:[%s5392 + $0xe8] sm:$0xff]
        %v5423 = vld [vmem:[%s5392 + $0xf0] sm:$0xff]
        %v5424 = vld [vmem:[%s5392 + $0xf8] sm:$0xff]
        %s5425 = scalar_lea.vmem [#allocation14], 8
        %v5426 = vld [vmem:[%s5425] sm:$0x3]
        %v5428 = vperm.slane %v5426, 0
        %v5429 = vperm.slane %v5426, 1
        %v5464 = vunpack.c.l.b16 %v5393
        %v5465 = vunpack.c.h.b16 %v5393
        %v5466 = vunpack.c.l.b16 %v5394
        %v5467 = vunpack.c.h.b16 %v5394
        %v5468 = vunpack.c.l.b16 %v5395
        %v5469 = vunpack.c.h.b16 %v5395
        %v5470 = vunpack.c.l.b16 %v5396
        %v5471 = vunpack.c.h.b16 %v5396
        %v5472 = vunpack.c.l.b16 %v5397
        %v5473 = vunpack.c.h.b16 %v5397
        %v5474 = vunpack.c.l.b16 %v5398
        %v5475 = vunpack.c.h.b16 %v5398
        %v5476 = vunpack.c.l.b16 %v5399
        %v5477 = vunpack.c.h.b16 %v5399
        %v5478 = vunpack.c.l.b16 %v5400
        %v5479 = vunpack.c.h.b16 %v5400
        %v5480 = vunpack.c.l.b16 %v5401
        %v5481 = vunpack.c.h.b16 %v5401
        %v5482 = vunpack.c.l.b16 %v5402
        %v5483 = vunpack.c.h.b16 %v5402
        %v5484 = vunpack.c.l.b16 %v5403
        %v5485 = vunpack.c.h.b16 %v5403
        %v5486 = vunpack.c.l.b16 %v5404
        %v5487 = vunpack.c.h.b16 %v5404
        %v5488 = vunpack.c.l.b16 %v5405
        %v5489 = vunpack.c.h.b16 %v5405
        %v5490 = vunpack.c.l.b16 %v5406
        %v5491 = vunpack.c.h.b16 %v5406
        %v5492 = vunpack.c.l.b16 %v5407
        %v5493 = vunpack.c.h.b16 %v5407
        %v5494 = vunpack.c.l.b16 %v5408
        %v5495 = vunpack.c.h.b16 %v5408
        %v5496 = vunpack.c.l.b16 %v5409
        %v5497 = vunpack.c.h.b16 %v5409
        %v5498 = vunpack.c.l.b16 %v5410
        %v5499 = vunpack.c.h.b16 %v5410
        %v5500 = vunpack.c.l.b16 %v5411
        %v5501 = vunpack.c.h.b16 %v5411
        %v5502 = vunpack.c.l.b16 %v5412
        %v5503 = vunpack.c.h.b16 %v5412
        %v5504 = vunpack.c.l.b16 %v5413
        %v5505 = vunpack.c.h.b16 %v5413
        %v5506 = vunpack.c.l.b16 %v5414
        %v5507 = vunpack.c.h.b16 %v5414
        %v5508 = vunpack.c.l.b16 %v5415
        %v5509 = vunpack.c.h.b16 %v5415
        %v5510 = vunpack.c.l.b16 %v5416
        %v5511 = vunpack.c.h.b16 %v5416
        %v5512 = vunpack.c.l.b16 %v5417
        %v5513 = vunpack.c.h.b16 %v5417
        %v5514 = vunpack.c.l.b16 %v5418
        %v5515 = vunpack.c.h.b16 %v5418
        %v5516 = vunpack.c.l.b16 %v5419
        %v5517 = vunpack.c.h.b16 %v5419
        %v5518 = vunpack.c.l.b16 %v5420
        %v5519 = vunpack.c.h.b16 %v5420
        %v5520 = vunpack.c.l.b16 %v5421
        %v5521 = vunpack.c.h.b16 %v5421
        %v5522 = vunpack.c.l.b16 %v5422
        %v5523 = vunpack.c.h.b16 %v5422
        %v5524 = vunpack.c.l.b16 %v5423
        %v5525 = vunpack.c.h.b16 %v5423
        %v5526 = vunpack.c.l.b16 %v5424
        %v5527 = vunpack.c.h.b16 %v5424
        %v5528 = vpack.c.b16 %v5466, %v5464
        %v5529 = vpack.c.b16 %v5467, %v5465
        %v5530 = vpack.c.b16 %v5470, %v5468
        %v5531 = vpack.c.b16 %v5471, %v5469
        %v5532 = vpack.c.b16 %v5474, %v5472
        %v5533 = vpack.c.b16 %v5475, %v5473
        %v5534 = vpack.c.b16 %v5478, %v5476
        %v5535 = vpack.c.b16 %v5479, %v5477
        %v5536 = vpack.c.b16 %v5482, %v5480
        %v5537 = vpack.c.b16 %v5483, %v5481
        %v5538 = vpack.c.b16 %v5486, %v5484
        %v5539 = vpack.c.b16 %v5487, %v5485
        %v5540 = vpack.c.b16 %v5490, %v5488
        %v5541 = vpack.c.b16 %v5491, %v5489
        %v5542 = vpack.c.b16 %v5494, %v5492
        %v5543 = vpack.c.b16 %v5495, %v5493
        %v5544 = vpack.c.b16 %v5498, %v5496
        %v5545 = vpack.c.b16 %v5499, %v5497
        %v5546 = vpack.c.b16 %v5502, %v5500
        %v5547 = vpack.c.b16 %v5503, %v5501
        %v5548 = vpack.c.b16 %v5506, %v5504
        %v5549 = vpack.c.b16 %v5507, %v5505
        %v5550 = vpack.c.b16 %v5510, %v5508
        %v5551 = vpack.c.b16 %v5511, %v5509
        %v5552 = vpack.c.b16 %v5514, %v5512
        %v5553 = vpack.c.b16 %v5515, %v5513
        %v5554 = vpack.c.b16 %v5518, %v5516
        %v5555 = vpack.c.b16 %v5519, %v5517
        %v5556 = vpack.c.b16 %v5522, %v5520
        %v5557 = vpack.c.b16 %v5523, %v5521
        %v5558 = vpack.c.b16 %v5526, %v5524
        %v5559 = vpack.c.b16 %v5527, %v5525
        %5592 = vmatpush.bf16.msra.mxu0 %v5542
        %5593 = vmatpush.bf16.msra.mxu0 %v5540
        %5594 = vmatpush.bf16.msra.mxu0 %v5538
        %5595 = vmatpush.bf16.msra.mxu0 %v5536
        %5596 = vmatpush.bf16.msra.mxu0 %v5534
        %5597 = vmatpush.bf16.msra.mxu0 %v5532
        %5598 = vmatpush.bf16.msra.mxu0 %v5530
        %5599 = vmatpush.bf16.msra.mxu0 %v5528
        %5600 = vmatmul.bf16.gmra.mxu0 %v5388
        %v5601 = vpop.f32.mrf.mxu0
        %v5602 = vadd.f32 %v5428, %v5601
        %v5603 = vpop.f32.mrf.mxu0
        %v5604 = vadd.f32 %v5428, %v5603
        %5605 = vmatmul.bf16.gmra.mxu0 %v5390
        %v5606 = vpop.f32.mrf.mxu0
        %v5607 = vadd.f32 %v5428, %v5606
        %v5608 = vpop.f32.mrf.mxu0
        %v5609 = vadd.f32 %v5428, %v5608
        %5610 = vdwg.mxu0
        %5611 = vmatpush.bf16.msra.mxu0 %v5558
        %5612 = vmatpush.bf16.msra.mxu0 %v5556
        %5613 = vmatpush.bf16.msra.mxu0 %v5554
        %5614 = vmatpush.bf16.msra.mxu0 %v5552
        %5615 = vmatpush.bf16.msra.mxu0 %v5550
        %5616 = vmatpush.bf16.msra.mxu0 %v5548
        %5617 = vmatpush.bf16.msra.mxu0 %v5546
        %5618 = vmatpush.bf16.msra.mxu0 %v5544
        %5619 = vmatmul.bf16.gmra.mxu0 %v5389
        %v5620 = vpop.f32.mrf.mxu0
        %v5621 = vadd.f32 %v5602, %v5620
        %v5622 = vpop.f32.mrf.mxu0
        %v5623 = vadd.f32 %v5604, %v5622
        %5624 = vmatmul.bf16.gmra.mxu0 %v5391
        %v5625 = vpop.f32.mrf.mxu0
        %v5626 = vadd.f32 %v5607, %v5625
        %v5627 = vpop.f32.mrf.mxu0
        %v5628 = vadd.f32 %v5609, %v5627
        %5629 = vdwg.mxu0
        %5630 = vmatpush.bf16.msra.mxu0 %v5543
        %5631 = vmatpush.bf16.msra.mxu0 %v5541
        %5632 = vmatpush.bf16.msra.mxu0 %v5539
        %5633 = vmatpush.bf16.msra.mxu0 %v5537
        %5634 = vmatpush.bf16.msra.mxu0 %v5535
        %5635 = vmatpush.bf16.msra.mxu0 %v5533
        %5636 = vmatpush.bf16.msra.mxu0 %v5531
        %5637 = vmatpush.bf16.msra.mxu0 %v5529
        %5638 = vmatmul.bf16.gmra.mxu0 %v5388
        %v5639 = vpop.f32.mrf.mxu0
        %v5640 = vadd.f32 %v5429, %v5639
        %v5641 = vpop.f32.mrf.mxu0
        %v5642 = vadd.f32 %v5429, %v5641
        %5643 = vmatmul.bf16.gmra.mxu0 %v5390
        %v5644 = vpop.f32.mrf.mxu0
        %v5645 = vadd.f32 %v5429, %v5644
        %v5646 = vpop.f32.mrf.mxu0
        %v5647 = vadd.f32 %v5429, %v5646
        %5648 = vdwg.mxu0
        %5649 = vmatpush.bf16.msra.mxu0 %v5559
        %5650 = vmatpush.bf16.msra.mxu0 %v5557
        %5651 = vmatpush.bf16.msra.mxu0 %v5555
        %5652 = vmatpush.bf16.msra.mxu0 %v5553
        %5653 = vmatpush.bf16.msra.mxu0 %v5551
        %5654 = vmatpush.bf16.msra.mxu0 %v5549
        %5655 = vmatpush.bf16.msra.mxu0 %v5547
        %5656 = vmatpush.bf16.msra.mxu0 %v5545
        %5657 = vmatmul.bf16.gmra.mxu0 %v5389
        %v5658 = vpop.f32.mrf.mxu0
        %v5659 = vadd.f32 %v5640, %v5658
        %v5660 = vpop.f32.mrf.mxu0
        %v5661 = vadd.f32 %v5642, %v5660
        %5662 = vmatmul.bf16.gmra.mxu0 %v5391
        %v5663 = vpop.f32.mrf.mxu0
        %v5664 = vadd.f32 %v5645, %v5663
        %v5665 = vpop.f32.mrf.mxu0
        %v5666 = vadd.f32 %v5647, %v5665
        %5667 = vdwg.mxu0
        %v5668 = vmax.f32 %v5621, 0.0
        %v5669 = vmax.f32 %v5659, 0.0
        %v5670 = vmax.f32 %v5623, 0.0
        %v5671 = vmax.f32 %v5661, 0.0
        %v5672 = vmax.f32 %v5626, 0.0
        %v5673 = vmax.f32 %v5664, 0.0
        %v5674 = vmax.f32 %v5628, 0.0
        %v5675 = vmax.f32 %v5666, 0.0
        %v5676 = vadd.f32 %v5668, %v4652
        %v5677 = vadd.f32 %v5669, %v4653
        %v5678 = vadd.f32 %v5670, %v4654
        %v5679 = vadd.f32 %v5671, %v4655
        %v5680 = vadd.f32 %v5672, %v4656
        %v5681 = vadd.f32 %v5673, %v4657
        %v5682 = vadd.f32 %v5674, %v4658
        %v5683 = vadd.f32 %v5675, %v4659
        %v5684 = vpack.c.bf16 %v5678, %v5676
        %v5685 = vpack.c.bf16 %v5679, %v5677
        %v5686 = vpack.c.bf16 %v5682, %v5680
        %v5687 = vpack.c.bf16 %v5683, %v5681
        %s5688 = scalar_lea.vmem [#allocation7], 1280
        %v5689 = vld [vmem:[%s5688] sm:$0xff]
        %v5690 = vld [vmem:[%s5688 + $0x8] sm:$0xff]
        %v5691 = vld [vmem:[%s5688 + $0x10] sm:$0xff]
        %v5692 = vld [vmem:[%s5688 + $0x18] sm:$0xff]
        %v5693 = vld [vmem:[%s5688 + $0x20] sm:$0xff]
        %v5694 = vld [vmem:[%s5688 + $0x28] sm:$0xff]
        %v5695 = vld [vmem:[%s5688 + $0x30] sm:$0xff]
        %v5696 = vld [vmem:[%s5688 + $0x38] sm:$0xff]
        %v5697 = vld [vmem:[%s5688 + $0x40] sm:$0xff]
        %v5698 = vld [vmem:[%s5688 + $0x48] sm:$0xff]
        %v5699 = vld [vmem:[%s5688 + $0x50] sm:$0xff]
        %v5700 = vld [vmem:[%s5688 + $0x58] sm:$0xff]
        %v5701 = vld [vmem:[%s5688 + $0x60] sm:$0xff]
        %v5702 = vld [vmem:[%s5688 + $0x68] sm:$0xff]
        %v5703 = vld [vmem:[%s5688 + $0x70] sm:$0xff]
        %v5704 = vld [vmem:[%s5688 + $0x78] sm:$0xff]
        %v5705 = vld [vmem:[%s5688 + $0x80] sm:$0xff]
        %v5706 = vld [vmem:[%s5688 + $0x88] sm:$0xff]
        %v5707 = vld [vmem:[%s5688 + $0x90] sm:$0xff]
        %v5708 = vld [vmem:[%s5688 + $0x98] sm:$0xff]
        %v5709 = vld [vmem:[%s5688 + $0xa0] sm:$0xff]
        %v5710 = vld [vmem:[%s5688 + $0xa8] sm:$0xff]
        %v5711 = vld [vmem:[%s5688 + $0xb0] sm:$0xff]
        %v5712 = vld [vmem:[%s5688 + $0xb8] sm:$0xff]
        %v5713 = vld [vmem:[%s5688 + $0xc0] sm:$0xff]
        %v5714 = vld [vmem:[%s5688 + $0xc8] sm:$0xff]
        %v5715 = vld [vmem:[%s5688 + $0xd0] sm:$0xff]
        %v5716 = vld [vmem:[%s5688 + $0xd8] sm:$0xff]
        %v5717 = vld [vmem:[%s5688 + $0xe0] sm:$0xff]
        %v5718 = vld [vmem:[%s5688 + $0xe8] sm:$0xff]
        %v5719 = vld [vmem:[%s5688 + $0xf0] sm:$0xff]
        %v5720 = vld [vmem:[%s5688 + $0xf8] sm:$0xff]
        %s5721 = scalar_lea.vmem [#allocation8], 10
        %v5722 = vld [vmem:[%s5721] sm:$0x3]
        %v5724 = vperm.slane %v5722, 0
        %v5725 = vperm.slane %v5722, 1
        %v5760 = vunpack.c.l.b16 %v5689
        %v5761 = vunpack.c.h.b16 %v5689
        %v5762 = vunpack.c.l.b16 %v5690
        %v5763 = vunpack.c.h.b16 %v5690
        %v5764 = vunpack.c.l.b16 %v5691
        %v5765 = vunpack.c.h.b16 %v5691
        %v5766 = vunpack.c.l.b16 %v5692
        %v5767 = vunpack.c.h.b16 %v5692
        %v5768 = vunpack.c.l.b16 %v5693
        %v5769 = vunpack.c.h.b16 %v5693
        %v5770 = vunpack.c.l.b16 %v5694
        %v5771 = vunpack.c.h.b16 %v5694
        %v5772 = vunpack.c.l.b16 %v5695
        %v5773 = vunpack.c.h.b16 %v5695
        %v5774 = vunpack.c.l.b16 %v5696
        %v5775 = vunpack.c.h.b16 %v5696
        %v5776 = vunpack.c.l.b16 %v5697
        %v5777 = vunpack.c.h.b16 %v5697
        %v5778 = vunpack.c.l.b16 %v5698
        %v5779 = vunpack.c.h.b16 %v5698
        %v5780 = vunpack.c.l.b16 %v5699
        %v5781 = vunpack.c.h.b16 %v5699
        %v5782 = vunpack.c.l.b16 %v5700
        %v5783 = vunpack.c.h.b16 %v5700
        %v5784 = vunpack.c.l.b16 %v5701
        %v5785 = vunpack.c.h.b16 %v5701
        %v5786 = vunpack.c.l.b16 %v5702
        %v5787 = vunpack.c.h.b16 %v5702
        %v5788 = vunpack.c.l.b16 %v5703
        %v5789 = vunpack.c.h.b16 %v5703
        %v5790 = vunpack.c.l.b16 %v5704
        %v5791 = vunpack.c.h.b16 %v5704
        %v5792 = vunpack.c.l.b16 %v5705
        %v5793 = vunpack.c.h.b16 %v5705
        %v5794 = vunpack.c.l.b16 %v5706
        %v5795 = vunpack.c.h.b16 %v5706
        %v5796 = vunpack.c.l.b16 %v5707
        %v5797 = vunpack.c.h.b16 %v5707
        %v5798 = vunpack.c.l.b16 %v5708
        %v5799 = vunpack.c.h.b16 %v5708
        %v5800 = vunpack.c.l.b16 %v5709
        %v5801 = vunpack.c.h.b16 %v5709
        %v5802 = vunpack.c.l.b16 %v5710
        %v5803 = vunpack.c.h.b16 %v5710
        %v5804 = vunpack.c.l.b16 %v5711
        %v5805 = vunpack.c.h.b16 %v5711
        %v5806 = vunpack.c.l.b16 %v5712
        %v5807 = vunpack.c.h.b16 %v5712
        %v5808 = vunpack.c.l.b16 %v5713
        %v5809 = vunpack.c.h.b16 %v5713
        %v5810 = vunpack.c.l.b16 %v5714
        %v5811 = vunpack.c.h.b16 %v5714
        %v5812 = vunpack.c.l.b16 %v5715
        %v5813 = vunpack.c.h.b16 %v5715
        %v5814 = vunpack.c.l.b16 %v5716
        %v5815 = vunpack.c.h.b16 %v5716
        %v5816 = vunpack.c.l.b16 %v5717
        %v5817 = vunpack.c.h.b16 %v5717
        %v5818 = vunpack.c.l.b16 %v5718
        %v5819 = vunpack.c.h.b16 %v5718
        %v5820 = vunpack.c.l.b16 %v5719
        %v5821 = vunpack.c.h.b16 %v5719
        %v5822 = vunpack.c.l.b16 %v5720
        %v5823 = vunpack.c.h.b16 %v5720
        %v5824 = vpack.c.b16 %v5762, %v5760
        %v5825 = vpack.c.b16 %v5763, %v5761
        %v5826 = vpack.c.b16 %v5766, %v5764
        %v5827 = vpack.c.b16 %v5767, %v5765
        %v5828 = vpack.c.b16 %v5770, %v5768
        %v5829 = vpack.c.b16 %v5771, %v5769
        %v5830 = vpack.c.b16 %v5774, %v5772
        %v5831 = vpack.c.b16 %v5775, %v5773
        %v5832 = vpack.c.b16 %v5778, %v5776
        %v5833 = vpack.c.b16 %v5779, %v5777
        %v5834 = vpack.c.b16 %v5782, %v5780
        %v5835 = vpack.c.b16 %v5783, %v5781
        %v5836 = vpack.c.b16 %v5786, %v5784
        %v5837 = vpack.c.b16 %v5787, %v5785
        %v5838 = vpack.c.b16 %v5790, %v5788
        %v5839 = vpack.c.b16 %v5791, %v5789
        %v5840 = vpack.c.b16 %v5794, %v5792
        %v5841 = vpack.c.b16 %v5795, %v5793
        %v5842 = vpack.c.b16 %v5798, %v5796
        %v5843 = vpack.c.b16 %v5799, %v5797
        %v5844 = vpack.c.b16 %v5802, %v5800
        %v5845 = vpack.c.b16 %v5803, %v5801
        %v5846 = vpack.c.b16 %v5806, %v5804
        %v5847 = vpack.c.b16 %v5807, %v5805
        %v5848 = vpack.c.b16 %v5810, %v5808
        %v5849 = vpack.c.b16 %v5811, %v5809
        %v5850 = vpack.c.b16 %v5814, %v5812
        %v5851 = vpack.c.b16 %v5815, %v5813
        %v5852 = vpack.c.b16 %v5818, %v5816
        %v5853 = vpack.c.b16 %v5819, %v5817
        %v5854 = vpack.c.b16 %v5822, %v5820
        %v5855 = vpack.c.b16 %v5823, %v5821
        %5888 = vmatpush.bf16.msra.mxu0 %v5838
        %5889 = vmatpush.bf16.msra.mxu0 %v5836
        %5890 = vmatpush.bf16.msra.mxu0 %v5834
        %5891 = vmatpush.bf16.msra.mxu0 %v5832
        %5892 = vmatpush.bf16.msra.mxu0 %v5830
        %5893 = vmatpush.bf16.msra.mxu0 %v5828
        %5894 = vmatpush.bf16.msra.mxu0 %v5826
        %5895 = vmatpush.bf16.msra.mxu0 %v5824
        %5896 = vmatmul.bf16.gmra.mxu0 %v5684
        %v5897 = vpop.f32.mrf.mxu0
        %v5898 = vadd.f32 %v5724, %v5897
        %v5899 = vpop.f32.mrf.mxu0
        %v5900 = vadd.f32 %v5724, %v5899
        %5901 = vmatmul.bf16.gmra.mxu0 %v5686
        %v5902 = vpop.f32.mrf.mxu0
        %v5903 = vadd.f32 %v5724, %v5902
        %v5904 = vpop.f32.mrf.mxu0
        %v5905 = vadd.f32 %v5724, %v5904
        %5906 = vdwg.mxu0
        %5907 = vmatpush.bf16.msra.mxu0 %v5854
        %5908 = vmatpush.bf16.msra.mxu0 %v5852
        %5909 = vmatpush.bf16.msra.mxu0 %v5850
        %5910 = vmatpush.bf16.msra.mxu0 %v5848
        %5911 = vmatpush.bf16.msra.mxu0 %v5846
        %5912 = vmatpush.bf16.msra.mxu0 %v5844
        %5913 = vmatpush.bf16.msra.mxu0 %v5842
        %5914 = vmatpush.bf16.msra.mxu0 %v5840
        %5915 = vmatmul.bf16.gmra.mxu0 %v5685
        %v5916 = vpop.f32.mrf.mxu0
        %v5917 = vadd.f32 %v5898, %v5916
        %v5918 = vpop.f32.mrf.mxu0
        %v5919 = vadd.f32 %v5900, %v5918
        %5920 = vmatmul.bf16.gmra.mxu0 %v5687
        %v5921 = vpop.f32.mrf.mxu0
        %v5922 = vadd.f32 %v5903, %v5921
        %v5923 = vpop.f32.mrf.mxu0
        %v5924 = vadd.f32 %v5905, %v5923
        %5925 = vdwg.mxu0
        %5926 = vmatpush.bf16.msra.mxu0 %v5839
        %5927 = vmatpush.bf16.msra.mxu0 %v5837
        %5928 = vmatpush.bf16.msra.mxu0 %v5835
        %5929 = vmatpush.bf16.msra.mxu0 %v5833
        %5930 = vmatpush.bf16.msra.mxu0 %v5831
        %5931 = vmatpush.bf16.msra.mxu0 %v5829
        %5932 = vmatpush.bf16.msra.mxu0 %v5827
        %5933 = vmatpush.bf16.msra.mxu0 %v5825
        %5934 = vmatmul.bf16.gmra.mxu0 %v5684
        %v5935 = vpop.f32.mrf.mxu0
        %v5936 = vadd.f32 %v5725, %v5935
        %v5937 = vpop.f32.mrf.mxu0
        %v5938 = vadd.f32 %v5725, %v5937
        %5939 = vmatmul.bf16.gmra.mxu0 %v5686
        %v5940 = vpop.f32.mrf.mxu0
        %v5941 = vadd.f32 %v5725, %v5940
        %v5942 = vpop.f32.mrf.mxu0
        %v5943 = vadd.f32 %v5725, %v5942
        %5944 = vdwg.mxu0
        %5945 = vmatpush.bf16.msra.mxu0 %v5855
        %5946 = vmatpush.bf16.msra.mxu0 %v5853
        %5947 = vmatpush.bf16.msra.mxu0 %v5851
        %5948 = vmatpush.bf16.msra.mxu0 %v5849
        %5949 = vmatpush.bf16.msra.mxu0 %v5847
        %5950 = vmatpush.bf16.msra.mxu0 %v5845
        %5951 = vmatpush.bf16.msra.mxu0 %v5843
        %5952 = vmatpush.bf16.msra.mxu0 %v5841
        %5953 = vmatmul.bf16.gmra.mxu0 %v5685
        %v5954 = vpop.f32.mrf.mxu0
        %v5955 = vadd.f32 %v5936, %v5954
        %v5956 = vpop.f32.mrf.mxu0
        %v5957 = vadd.f32 %v5938, %v5956
        %5958 = vmatmul.bf16.gmra.mxu0 %v5687
        %v5959 = vpop.f32.mrf.mxu0
        %v5960 = vadd.f32 %v5941, %v5959
        %v5961 = vpop.f32.mrf.mxu0
        %v5962 = vadd.f32 %v5943, %v5961
        %5963 = vdwg.mxu0
        %v5964 = vpack.c.bf16 %v5919, %v5917
        %v5965 = vpack.c.bf16 %v5957, %v5955
        %v5966 = vpack.c.bf16 %v5924, %v5922
        %v5967 = vpack.c.bf16 %v5962, %v5960
        %5968 = vmatpush.bf16.xpose.msra.mxu0 0
        %5969 = vmatpush.bf16.xpose.msra.mxu0 0
        %5970 = vmatpush.bf16.xpose.msra.mxu0 0
        %5971 = vmatpush.bf16.xpose.msra.mxu0 0
        %5972 = vmatpush.bf16.xpose.msra.mxu0 0
        %5973 = vmatpush.bf16.xpose.msra.mxu0 0
        %5974 = vmatpush.bf16.xpose.msra.mxu0 %v5686
        %5975 = vmatpush.bf16.xpose.msra.mxu0 %v5684
        %5976 = vmatmul.bf16.gmra.mxu0 %v5964
        %v5977 = vpop.f32.mrf.mxu0
        %v5978 = vadd.f32 0.0, %v5977
        %v5979 = vpop.f32.mrf.mxu0
        %v5980 = vadd.f32 0.0, %v5979
        %5981 = vmatmul.bf16.gmra.mxu0 %v5966
        %v5982 = vpop.f32.mrf.mxu0
        %v5983 = vadd.f32 0.0, %v5982
        %v5984 = vpop.f32.mrf.mxu0
        %v5985 = vadd.f32 0.0, %v5984
        %5986 = vdwg.mxu0
        %5987 = vmatpush.bf16.xpose.msra.mxu0 0
        %5988 = vmatpush.bf16.xpose.msra.mxu0 0
        %5989 = vmatpush.bf16.xpose.msra.mxu0 0
        %5990 = vmatpush.bf16.xpose.msra.mxu0 0
        %5991 = vmatpush.bf16.xpose.msra.mxu0 0
        %5992 = vmatpush.bf16.xpose.msra.mxu0 0
        %5993 = vmatpush.bf16.xpose.msra.mxu0 %v5687
        %5994 = vmatpush.bf16.xpose.msra.mxu0 %v5685
        %5995 = vmatmul.bf16.gmra.mxu0 %v5965
        %v5996 = vpop.f32.mrf.mxu0
        %v5997 = vadd.f32 %v5978, %v5996
        %v5998 = vpop.f32.mrf.mxu0
        %v5999 = vadd.f32 %v5980, %v5998
        %6000 = vmatmul.bf16.gmra.mxu0 %v5967
        %v6001 = vpop.f32.mrf.mxu0
        %v6002 = vadd.f32 %v5983, %v6001
        %v6003 = vpop.f32.mrf.mxu0
        %v6004 = vadd.f32 %v5985, %v6003
        %6005 = vdwg.mxu0
        %v6006 = vsel %vm889, %v5997, -inf
        %6007 = vmax.xlane.f32.xlu0 %v6006
        %v6008 = vpop.xlane.xlu0 %6007
        %v6009 = vsel %vm889, %v5999, -inf
        %6010 = vmax.xlane.f32.xlu0 %v6009
        %v6011 = vpop.xlane.xlu0 %6010
        %v6012 = vsel %vm889, %v6002, -inf
        %6013 = vmax.xlane.f32.xlu0 %v6012
        %v6014 = vpop.xlane.xlu0 %6013
        %v6015 = vsel %vm889, %v6004, -inf
        %6016 = vmax.xlane.f32.xlu0 %v6015
        %v6017 = vpop.xlane.xlu0 %6016
        %v6018 = vsub.f32 %v5997, %v6008
        %v6019 = vsub.f32 %v5999, %v6011
        %v6020 = vsub.f32 %v6002, %v6014
        %v6021 = vsub.f32 %v6004, %v6017
        %v6022 = vmul.f32 %v6018, 1.442695
        %v6023 = vpow.pop %v6022
        %v6024 = vmul.f32 %v6019, 1.442695
        %v6025 = vpow.pop %v6024
        %v6026 = vmul.f32 %v6020, 1.442695
        %v6027 = vpow.pop %v6026
        %v6028 = vmul.f32 %v6021, 1.442695
        %v6029 = vpow.pop %v6028
        %v6030 = vsub.f32 0.0, %v6008
        %v6031 = vsub.f32 0.0, %v6011
        %v6032 = vsub.f32 0.0, %v6014
        %v6033 = vsub.f32 0.0, %v6017
        %v6034 = vmul.f32 %v6030, 1.442695
        %v6035 = vpow.pop %v6034
        %v6036 = vmul.f32 %v6031, 1.442695
        %v6037 = vpow.pop %v6036
        %v6038 = vmul.f32 %v6032, 1.442695
        %v6039 = vpow.pop %v6038
        %v6040 = vmul.f32 %v6033, 1.442695
        %v6041 = vpow.pop %v6040
        %v6042 = vmul.f32 %v6035, 1e-05
        %v6043 = vmul.f32 %v6037, 1e-05
        %v6044 = vmul.f32 %v6039, 1e-05
        %v6045 = vmul.f32 %v6041, 1e-05
        %v6046 = vmul.f32 %v6042, %v565
        %v6047 = vmul.f32 %v6043, %v566
        %v6048 = vmul.f32 %v6044, %v567
        %v6049 = vmul.f32 %v6045, %v568
        %v6050 = vadd.f32 %v6023, %v6046
        %v6051 = vadd.f32 %v6025, %v6047
        %v6052 = vadd.f32 %v6027, %v6048
        %v6053 = vadd.f32 %v6029, %v6049
        %v6054 = vmul.f32 %v6050, %v546
        %v6055 = vmul.f32 %v6051, %v547
        %v6056 = vmul.f32 %v6052, %v548
        %v6057 = vmul.f32 %v6053, %v549
        %v6058 = vsel %vm889, %v6054, 0.0
        %6059 = vadd.xlane.f32.xlu0 %v6058
        %v6060 = vpop.xlane.xlu0 %6059
        %v6061 = vsel %vm889, %v6055, 0.0
        %6062 = vadd.xlane.f32.xlu0 %v6061
        %v6063 = vpop.xlane.xlu0 %6062
        %v6064 = vsel %vm889, %v6056, 0.0
        %6065 = vadd.xlane.f32.xlu0 %v6064
        %v6066 = vpop.xlane.xlu0 %6065
        %v6067 = vsel %vm889, %v6057, 0.0
        %6068 = vadd.xlane.f32.xlu0 %v6067
        %v6069 = vpop.xlane.xlu0 %6068
        %v6070 = vrcp.pop %v6060
        %v6071 = vrcp.pop %v6063
        %v6072 = vrcp.pop %v6066
        %v6073 = vrcp.pop %v6069
        %v6074 = vmul.f32 %v6054, %v6070
        %v6075 = vmul.f32 %v6055, %v6071
        %v6076 = vmul.f32 %v6056, %v6072
        %v6077 = vmul.f32 %v6057, %v6073
        %v6078 = vpack.c.bf16 %v6075, %v6074
        %v6079 = vpack.c.bf16 %v6077, %v6076
        %v6081 = vsel %vm889, %v6078, 0
        %v6084 = vsel %vm889, %v6079, 0
        %6086 = vmatpush.bf16.msra.mxu0 0
        %6087 = vmatpush.bf16.msra.mxu0 0
        %6088 = vmatpush.bf16.msra.mxu0 0
        %6089 = vmatpush.bf16.msra.mxu0 0
        %6090 = vmatpush.bf16.msra.mxu0 0
        %6091 = vmatpush.bf16.msra.mxu0 0
        %6092 = vmatpush.bf16.msra.mxu0 %v5686
        %6093 = vmatpush.bf16.msra.mxu0 %v5684
        %6094 = vmatmul.bf16.gmra.mxu0 %v6081
        %v6095 = vpop.f32.mrf.mxu0
        %v6096 = vadd.f32 0.0, %v6095
        %v6097 = vpop.f32.mrf.mxu0
        %v6098 = vadd.f32 0.0, %v6097
        %6099 = vmatmul.bf16.gmra.mxu0 %v6084
        %v6100 = vpop.f32.mrf.mxu0
        %v6101 = vadd.f32 0.0, %v6100
        %v6102 = vpop.f32.mrf.mxu0
        %v6103 = vadd.f32 0.0, %v6102
        %6104 = vdwg.mxu0
        %6105 = vmatpush.bf16.msra.mxu0 0
        %6106 = vmatpush.bf16.msra.mxu0 0
        %6107 = vmatpush.bf16.msra.mxu0 0
        %6108 = vmatpush.bf16.msra.mxu0 0
        %6109 = vmatpush.bf16.msra.mxu0 0
        %6110 = vmatpush.bf16.msra.mxu0 0
        %6111 = vmatpush.bf16.msra.mxu0 %v5687
        %6112 = vmatpush.bf16.msra.mxu0 %v5685
        %6113 = vmatmul.bf16.gmra.mxu0 %v6081
        %v6114 = vpop.f32.mrf.mxu0
        %v6115 = vadd.f32 0.0, %v6114
        %v6116 = vpop.f32.mrf.mxu0
        %v6117 = vadd.f32 0.0, %v6116
        %6118 = vmatmul.bf16.gmra.mxu0 %v6084
        %v6119 = vpop.f32.mrf.mxu0
        %v6120 = vadd.f32 0.0, %v6119
        %v6121 = vpop.f32.mrf.mxu0
        %v6122 = vadd.f32 0.0, %v6121
        %6123 = vdwg.mxu0
        %v6124 = vpack.c.bf16 %v6098, %v6096
        %v6125 = vpack.c.bf16 %v6117, %v6115
        %v6126 = vpack.c.bf16 %v6103, %v6101
        %v6127 = vpack.c.bf16 %v6122, %v6120
        %s6128 = scalar_lea.vmem [#allocation10], 1280
        %v6129 = vld [vmem:[%s6128] sm:$0xff]
        %v6130 = vld [vmem:[%s6128 + $0x8] sm:$0xff]
        %v6131 = vld [vmem:[%s6128 + $0x10] sm:$0xff]
        %v6132 = vld [vmem:[%s6128 + $0x18] sm:$0xff]
        %v6133 = vld [vmem:[%s6128 + $0x20] sm:$0xff]
        %v6134 = vld [vmem:[%s6128 + $0x28] sm:$0xff]
        %v6135 = vld [vmem:[%s6128 + $0x30] sm:$0xff]
        %v6136 = vld [vmem:[%s6128 + $0x38] sm:$0xff]
        %v6137 = vld [vmem:[%s6128 + $0x40] sm:$0xff]
        %v6138 = vld [vmem:[%s6128 + $0x48] sm:$0xff]
        %v6139 = vld [vmem:[%s6128 + $0x50] sm:$0xff]
        %v6140 = vld [vmem:[%s6128 + $0x58] sm:$0xff]
        %v6141 = vld [vmem:[%s6128 + $0x60] sm:$0xff]
        %v6142 = vld [vmem:[%s6128 + $0x68] sm:$0xff]
        %v6143 = vld [vmem:[%s6128 + $0x70] sm:$0xff]
        %v6144 = vld [vmem:[%s6128 + $0x78] sm:$0xff]
        %v6145 = vld [vmem:[%s6128 + $0x80] sm:$0xff]
        %v6146 = vld [vmem:[%s6128 + $0x88] sm:$0xff]
        %v6147 = vld [vmem:[%s6128 + $0x90] sm:$0xff]
        %v6148 = vld [vmem:[%s6128 + $0x98] sm:$0xff]
        %v6149 = vld [vmem:[%s6128 + $0xa0] sm:$0xff]
        %v6150 = vld [vmem:[%s6128 + $0xa8] sm:$0xff]
        %v6151 = vld [vmem:[%s6128 + $0xb0] sm:$0xff]
        %v6152 = vld [vmem:[%s6128 + $0xb8] sm:$0xff]
        %v6153 = vld [vmem:[%s6128 + $0xc0] sm:$0xff]
        %v6154 = vld [vmem:[%s6128 + $0xc8] sm:$0xff]
        %v6155 = vld [vmem:[%s6128 + $0xd0] sm:$0xff]
        %v6156 = vld [vmem:[%s6128 + $0xd8] sm:$0xff]
        %v6157 = vld [vmem:[%s6128 + $0xe0] sm:$0xff]
        %v6158 = vld [vmem:[%s6128 + $0xe8] sm:$0xff]
        %v6159 = vld [vmem:[%s6128 + $0xf0] sm:$0xff]
        %v6160 = vld [vmem:[%s6128 + $0xf8] sm:$0xff]
        %s6161 = scalar_lea.vmem [#allocation11], 10
        %v6162 = vld [vmem:[%s6161] sm:$0x3]
        %v6164 = vperm.slane %v6162, 0
        %v6165 = vperm.slane %v6162, 1
        %v6200 = vunpack.c.l.b16 %v6129
        %v6201 = vunpack.c.h.b16 %v6129
        %v6202 = vunpack.c.l.b16 %v6130
        %v6203 = vunpack.c.h.b16 %v6130
        %v6204 = vunpack.c.l.b16 %v6131
        %v6205 = vunpack.c.h.b16 %v6131
        %v6206 = vunpack.c.l.b16 %v6132
        %v6207 = vunpack.c.h.b16 %v6132
        %v6208 = vunpack.c.l.b16 %v6133
        %v6209 = vunpack.c.h.b16 %v6133
        %v6210 = vunpack.c.l.b16 %v6134
        %v6211 = vunpack.c.h.b16 %v6134
        %v6212 = vunpack.c.l.b16 %v6135
        %v6213 = vunpack.c.h.b16 %v6135
        %v6214 = vunpack.c.l.b16 %v6136
        %v6215 = vunpack.c.h.b16 %v6136
        %v6216 = vunpack.c.l.b16 %v6137
        %v6217 = vunpack.c.h.b16 %v6137
        %v6218 = vunpack.c.l.b16 %v6138
        %v6219 = vunpack.c.h.b16 %v6138
        %v6220 = vunpack.c.l.b16 %v6139
        %v6221 = vunpack.c.h.b16 %v6139
        %v6222 = vunpack.c.l.b16 %v6140
        %v6223 = vunpack.c.h.b16 %v6140
        %v6224 = vunpack.c.l.b16 %v6141
        %v6225 = vunpack.c.h.b16 %v6141
        %v6226 = vunpack.c.l.b16 %v6142
        %v6227 = vunpack.c.h.b16 %v6142
        %v6228 = vunpack.c.l.b16 %v6143
        %v6229 = vunpack.c.h.b16 %v6143
        %v6230 = vunpack.c.l.b16 %v6144
        %v6231 = vunpack.c.h.b16 %v6144
        %v6232 = vunpack.c.l.b16 %v6145
        %v6233 = vunpack.c.h.b16 %v6145
        %v6234 = vunpack.c.l.b16 %v6146
        %v6235 = vunpack.c.h.b16 %v6146
        %v6236 = vunpack.c.l.b16 %v6147
        %v6237 = vunpack.c.h.b16 %v6147
        %v6238 = vunpack.c.l.b16 %v6148
        %v6239 = vunpack.c.h.b16 %v6148
        %v6240 = vunpack.c.l.b16 %v6149
        %v6241 = vunpack.c.h.b16 %v6149
        %v6242 = vunpack.c.l.b16 %v6150
        %v6243 = vunpack.c.h.b16 %v6150
        %v6244 = vunpack.c.l.b16 %v6151
        %v6245 = vunpack.c.h.b16 %v6151
        %v6246 = vunpack.c.l.b16 %v6152
        %v6247 = vunpack.c.h.b16 %v6152
        %v6248 = vunpack.c.l.b16 %v6153
        %v6249 = vunpack.c.h.b16 %v6153
        %v6250 = vunpack.c.l.b16 %v6154
        %v6251 = vunpack.c.h.b16 %v6154
        %v6252 = vunpack.c.l.b16 %v6155
        %v6253 = vunpack.c.h.b16 %v6155
        %v6254 = vunpack.c.l.b16 %v6156
        %v6255 = vunpack.c.h.b16 %v6156
        %v6256 = vunpack.c.l.b16 %v6157
        %v6257 = vunpack.c.h.b16 %v6157
        %v6258 = vunpack.c.l.b16 %v6158
        %v6259 = vunpack.c.h.b16 %v6158
        %v6260 = vunpack.c.l.b16 %v6159
        %v6261 = vunpack.c.h.b16 %v6159
        %v6262 = vunpack.c.l.b16 %v6160
        %v6263 = vunpack.c.h.b16 %v6160
        %v6264 = vpack.c.b16 %v6202, %v6200
        %v6265 = vpack.c.b16 %v6203, %v6201
        %v6266 = vpack.c.b16 %v6206, %v6204
        %v6267 = vpack.c.b16 %v6207, %v6205
        %v6268 = vpack.c.b16 %v6210, %v6208
        %v6269 = vpack.c.b16 %v6211, %v6209
        %v6270 = vpack.c.b16 %v6214, %v6212
        %v6271 = vpack.c.b16 %v6215, %v6213
        %v6272 = vpack.c.b16 %v6218, %v6216
        %v6273 = vpack.c.b16 %v6219, %v6217
        %v6274 = vpack.c.b16 %v6222, %v6220
        %v6275 = vpack.c.b16 %v6223, %v6221
        %v6276 = vpack.c.b16 %v6226, %v6224
        %v6277 = vpack.c.b16 %v6227, %v6225
        %v6278 = vpack.c.b16 %v6230, %v6228
        %v6279 = vpack.c.b16 %v6231, %v6229
        %v6280 = vpack.c.b16 %v6234, %v6232
        %v6281 = vpack.c.b16 %v6235, %v6233
        %v6282 = vpack.c.b16 %v6238, %v6236
        %v6283 = vpack.c.b16 %v6239, %v6237
        %v6284 = vpack.c.b16 %v6242, %v6240
        %v6285 = vpack.c.b16 %v6243, %v6241
        %v6286 = vpack.c.b16 %v6246, %v6244
        %v6287 = vpack.c.b16 %v6247, %v6245
        %v6288 = vpack.c.b16 %v6250, %v6248
        %v6289 = vpack.c.b16 %v6251, %v6249
        %v6290 = vpack.c.b16 %v6254, %v6252
        %v6291 = vpack.c.b16 %v6255, %v6253
        %v6292 = vpack.c.b16 %v6258, %v6256
        %v6293 = vpack.c.b16 %v6259, %v6257
        %v6294 = vpack.c.b16 %v6262, %v6260
        %v6295 = vpack.c.b16 %v6263, %v6261
        %6328 = vmatpush.bf16.msra.mxu0 %v6278
        %6329 = vmatpush.bf16.msra.mxu0 %v6276
        %6330 = vmatpush.bf16.msra.mxu0 %v6274
        %6331 = vmatpush.bf16.msra.mxu0 %v6272
        %6332 = vmatpush.bf16.msra.mxu0 %v6270
        %6333 = vmatpush.bf16.msra.mxu0 %v6268
        %6334 = vmatpush.bf16.msra.mxu0 %v6266
        %6335 = vmatpush.bf16.msra.mxu0 %v6264
        %6336 = vmatmul.bf16.gmra.mxu0 %v6124
        %v6337 = vpop.f32.mrf.mxu0
        %v6338 = vadd.f32 %v6164, %v6337
        %v6339 = vpop.f32.mrf.mxu0
        %v6340 = vadd.f32 %v6164, %v6339
        %6341 = vmatmul.bf16.gmra.mxu0 %v6126
        %v6342 = vpop.f32.mrf.mxu0
        %v6343 = vadd.f32 %v6164, %v6342
        %v6344 = vpop.f32.mrf.mxu0
        %v6345 = vadd.f32 %v6164, %v6344
        %6346 = vdwg.mxu0
        %6347 = vmatpush.bf16.msra.mxu0 %v6294
        %6348 = vmatpush.bf16.msra.mxu0 %v6292
        %6349 = vmatpush.bf16.msra.mxu0 %v6290
        %6350 = vmatpush.bf16.msra.mxu0 %v6288
        %6351 = vmatpush.bf16.msra.mxu0 %v6286
        %6352 = vmatpush.bf16.msra.mxu0 %v6284
        %6353 = vmatpush.bf16.msra.mxu0 %v6282
        %6354 = vmatpush.bf16.msra.mxu0 %v6280
        %6355 = vmatmul.bf16.gmra.mxu0 %v6125
        %v6356 = vpop.f32.mrf.mxu0
        %v6357 = vadd.f32 %v6338, %v6356
        %v6358 = vpop.f32.mrf.mxu0
        %v6359 = vadd.f32 %v6340, %v6358
        %6360 = vmatmul.bf16.gmra.mxu0 %v6127
        %v6361 = vpop.f32.mrf.mxu0
        %v6362 = vadd.f32 %v6343, %v6361
        %v6363 = vpop.f32.mrf.mxu0
        %v6364 = vadd.f32 %v6345, %v6363
        %6365 = vdwg.mxu0
        %6366 = vmatpush.bf16.msra.mxu0 %v6279
        %6367 = vmatpush.bf16.msra.mxu0 %v6277
        %6368 = vmatpush.bf16.msra.mxu0 %v6275
        %6369 = vmatpush.bf16.msra.mxu0 %v6273
        %6370 = vmatpush.bf16.msra.mxu0 %v6271
        %6371 = vmatpush.bf16.msra.mxu0 %v6269
        %6372 = vmatpush.bf16.msra.mxu0 %v6267
        %6373 = vmatpush.bf16.msra.mxu0 %v6265
        %6374 = vmatmul.bf16.gmra.mxu0 %v6124
        %v6375 = vpop.f32.mrf.mxu0
        %v6376 = vadd.f32 %v6165, %v6375
        %v6377 = vpop.f32.mrf.mxu0
        %v6378 = vadd.f32 %v6165, %v6377
        %6379 = vmatmul.bf16.gmra.mxu0 %v6126
        %v6380 = vpop.f32.mrf.mxu0
        %v6381 = vadd.f32 %v6165, %v6380
        %v6382 = vpop.f32.mrf.mxu0
        %v6383 = vadd.f32 %v6165, %v6382
        %6384 = vdwg.mxu0
        %6385 = vmatpush.bf16.msra.mxu0 %v6295
        %6386 = vmatpush.bf16.msra.mxu0 %v6293
        %6387 = vmatpush.bf16.msra.mxu0 %v6291
        %6388 = vmatpush.bf16.msra.mxu0 %v6289
        %6389 = vmatpush.bf16.msra.mxu0 %v6287
        %6390 = vmatpush.bf16.msra.mxu0 %v6285
        %6391 = vmatpush.bf16.msra.mxu0 %v6283
        %6392 = vmatpush.bf16.msra.mxu0 %v6281
        %6393 = vmatmul.bf16.gmra.mxu0 %v6125
        %v6394 = vpop.f32.mrf.mxu0
        %v6395 = vadd.f32 %v6376, %v6394
        %v6396 = vpop.f32.mrf.mxu0
        %v6397 = vadd.f32 %v6378, %v6396
        %6398 = vmatmul.bf16.gmra.mxu0 %v6127
        %v6399 = vpop.f32.mrf.mxu0
        %v6400 = vadd.f32 %v6381, %v6399
        %v6401 = vpop.f32.mrf.mxu0
        %v6402 = vadd.f32 %v6383, %v6401
        %6403 = vdwg.mxu0
        %v6404 = vmax.f32 %v6357, 0.0
        %v6405 = vmax.f32 %v6395, 0.0
        %v6406 = vmax.f32 %v6359, 0.0
        %v6407 = vmax.f32 %v6397, 0.0
        %v6408 = vmax.f32 %v6362, 0.0
        %v6409 = vmax.f32 %v6400, 0.0
        %v6410 = vmax.f32 %v6364, 0.0
        %v6411 = vmax.f32 %v6402, 0.0
        %v6412 = vpack.c.bf16 %v6406, %v6404
        %v6413 = vpack.c.bf16 %v6407, %v6405
        %v6414 = vpack.c.bf16 %v6410, %v6408
        %v6415 = vpack.c.bf16 %v6411, %v6409
        %s6416 = scalar_lea.vmem [#allocation13], 1280
        %v6417 = vld [vmem:[%s6416] sm:$0xff]
        %v6418 = vld [vmem:[%s6416 + $0x8] sm:$0xff]
        %v6419 = vld [vmem:[%s6416 + $0x10] sm:$0xff]
        %v6420 = vld [vmem:[%s6416 + $0x18] sm:$0xff]
        %v6421 = vld [vmem:[%s6416 + $0x20] sm:$0xff]
        %v6422 = vld [vmem:[%s6416 + $0x28] sm:$0xff]
        %v6423 = vld [vmem:[%s6416 + $0x30] sm:$0xff]
        %v6424 = vld [vmem:[%s6416 + $0x38] sm:$0xff]
        %v6425 = vld [vmem:[%s6416 + $0x40] sm:$0xff]
        %v6426 = vld [vmem:[%s6416 + $0x48] sm:$0xff]
        %v6427 = vld [vmem:[%s6416 + $0x50] sm:$0xff]
        %v6428 = vld [vmem:[%s6416 + $0x58] sm:$0xff]
        %v6429 = vld [vmem:[%s6416 + $0x60] sm:$0xff]
        %v6430 = vld [vmem:[%s6416 + $0x68] sm:$0xff]
        %v6431 = vld [vmem:[%s6416 + $0x70] sm:$0xff]
        %v6432 = vld [vmem:[%s6416 + $0x78] sm:$0xff]
        %v6433 = vld [vmem:[%s6416 + $0x80] sm:$0xff]
        %v6434 = vld [vmem:[%s6416 + $0x88] sm:$0xff]
        %v6435 = vld [vmem:[%s6416 + $0x90] sm:$0xff]
        %v6436 = vld [vmem:[%s6416 + $0x98] sm:$0xff]
        %v6437 = vld [vmem:[%s6416 + $0xa0] sm:$0xff]
        %v6438 = vld [vmem:[%s6416 + $0xa8] sm:$0xff]
        %v6439 = vld [vmem:[%s6416 + $0xb0] sm:$0xff]
        %v6440 = vld [vmem:[%s6416 + $0xb8] sm:$0xff]
        %v6441 = vld [vmem:[%s6416 + $0xc0] sm:$0xff]
        %v6442 = vld [vmem:[%s6416 + $0xc8] sm:$0xff]
        %v6443 = vld [vmem:[%s6416 + $0xd0] sm:$0xff]
        %v6444 = vld [vmem:[%s6416 + $0xd8] sm:$0xff]
        %v6445 = vld [vmem:[%s6416 + $0xe0] sm:$0xff]
        %v6446 = vld [vmem:[%s6416 + $0xe8] sm:$0xff]
        %v6447 = vld [vmem:[%s6416 + $0xf0] sm:$0xff]
        %v6448 = vld [vmem:[%s6416 + $0xf8] sm:$0xff]
        %s6449 = scalar_lea.vmem [#allocation14], 10
        %v6450 = vld [vmem:[%s6449] sm:$0x3]
        %v6452 = vperm.slane %v6450, 0
        %v6453 = vperm.slane %v6450, 1
        %v6488 = vunpack.c.l.b16 %v6417
        %v6489 = vunpack.c.h.b16 %v6417
        %v6490 = vunpack.c.l.b16 %v6418
        %v6491 = vunpack.c.h.b16 %v6418
        %v6492 = vunpack.c.l.b16 %v6419
        %v6493 = vunpack.c.h.b16 %v6419
        %v6494 = vunpack.c.l.b16 %v6420
        %v6495 = vunpack.c.h.b16 %v6420
        %v6496 = vunpack.c.l.b16 %v6421
        %v6497 = vunpack.c.h.b16 %v6421
        %v6498 = vunpack.c.l.b16 %v6422
        %v6499 = vunpack.c.h.b16 %v6422
        %v6500 = vunpack.c.l.b16 %v6423
        %v6501 = vunpack.c.h.b16 %v6423
        %v6502 = vunpack.c.l.b16 %v6424
        %v6503 = vunpack.c.h.b16 %v6424
        %v6504 = vunpack.c.l.b16 %v6425
        %v6505 = vunpack.c.h.b16 %v6425
        %v6506 = vunpack.c.l.b16 %v6426
        %v6507 = vunpack.c.h.b16 %v6426
        %v6508 = vunpack.c.l.b16 %v6427
        %v6509 = vunpack.c.h.b16 %v6427
        %v6510 = vunpack.c.l.b16 %v6428
        %v6511 = vunpack.c.h.b16 %v6428
        %v6512 = vunpack.c.l.b16 %v6429
        %v6513 = vunpack.c.h.b16 %v6429
        %v6514 = vunpack.c.l.b16 %v6430
        %v6515 = vunpack.c.h.b16 %v6430
        %v6516 = vunpack.c.l.b16 %v6431
        %v6517 = vunpack.c.h.b16 %v6431
        %v6518 = vunpack.c.l.b16 %v6432
        %v6519 = vunpack.c.h.b16 %v6432
        %v6520 = vunpack.c.l.b16 %v6433
        %v6521 = vunpack.c.h.b16 %v6433
        %v6522 = vunpack.c.l.b16 %v6434
        %v6523 = vunpack.c.h.b16 %v6434
        %v6524 = vunpack.c.l.b16 %v6435
        %v6525 = vunpack.c.h.b16 %v6435
        %v6526 = vunpack.c.l.b16 %v6436
        %v6527 = vunpack.c.h.b16 %v6436
        %v6528 = vunpack.c.l.b16 %v6437
        %v6529 = vunpack.c.h.b16 %v6437
        %v6530 = vunpack.c.l.b16 %v6438
        %v6531 = vunpack.c.h.b16 %v6438
        %v6532 = vunpack.c.l.b16 %v6439
        %v6533 = vunpack.c.h.b16 %v6439
        %v6534 = vunpack.c.l.b16 %v6440
        %v6535 = vunpack.c.h.b16 %v6440
        %v6536 = vunpack.c.l.b16 %v6441
        %v6537 = vunpack.c.h.b16 %v6441
        %v6538 = vunpack.c.l.b16 %v6442
        %v6539 = vunpack.c.h.b16 %v6442
        %v6540 = vunpack.c.l.b16 %v6443
        %v6541 = vunpack.c.h.b16 %v6443
        %v6542 = vunpack.c.l.b16 %v6444
        %v6543 = vunpack.c.h.b16 %v6444
        %v6544 = vunpack.c.l.b16 %v6445
        %v6545 = vunpack.c.h.b16 %v6445
        %v6546 = vunpack.c.l.b16 %v6446
        %v6547 = vunpack.c.h.b16 %v6446
        %v6548 = vunpack.c.l.b16 %v6447
        %v6549 = vunpack.c.h.b16 %v6447
        %v6550 = vunpack.c.l.b16 %v6448
        %v6551 = vunpack.c.h.b16 %v6448
        %v6552 = vpack.c.b16 %v6490, %v6488
        %v6553 = vpack.c.b16 %v6491, %v6489
        %v6554 = vpack.c.b16 %v6494, %v6492
        %v6555 = vpack.c.b16 %v6495, %v6493
        %v6556 = vpack.c.b16 %v6498, %v6496
        %v6557 = vpack.c.b16 %v6499, %v6497
        %v6558 = vpack.c.b16 %v6502, %v6500
        %v6559 = vpack.c.b16 %v6503, %v6501
        %v6560 = vpack.c.b16 %v6506, %v6504
        %v6561 = vpack.c.b16 %v6507, %v6505
        %v6562 = vpack.c.b16 %v6510, %v6508
        %v6563 = vpack.c.b16 %v6511, %v6509
        %v6564 = vpack.c.b16 %v6514, %v6512
        %v6565 = vpack.c.b16 %v6515, %v6513
        %v6566 = vpack.c.b16 %v6518, %v6516
        %v6567 = vpack.c.b16 %v6519, %v6517
        %v6568 = vpack.c.b16 %v6522, %v6520
        %v6569 = vpack.c.b16 %v6523, %v6521
        %v6570 = vpack.c.b16 %v6526, %v6524
        %v6571 = vpack.c.b16 %v6527, %v6525
        %v6572 = vpack.c.b16 %v6530, %v6528
        %v6573 = vpack.c.b16 %v6531, %v6529
        %v6574 = vpack.c.b16 %v6534, %v6532
        %v6575 = vpack.c.b16 %v6535, %v6533
        %v6576 = vpack.c.b16 %v6538, %v6536
        %v6577 = vpack.c.b16 %v6539, %v6537
        %v6578 = vpack.c.b16 %v6542, %v6540
        %v6579 = vpack.c.b16 %v6543, %v6541
        %v6580 = vpack.c.b16 %v6546, %v6544
        %v6581 = vpack.c.b16 %v6547, %v6545
        %v6582 = vpack.c.b16 %v6550, %v6548
        %v6583 = vpack.c.b16 %v6551, %v6549
        %6616 = vmatpush.bf16.msra.mxu0 %v6566
        %6617 = vmatpush.bf16.msra.mxu0 %v6564
        %6618 = vmatpush.bf16.msra.mxu0 %v6562
        %6619 = vmatpush.bf16.msra.mxu0 %v6560
        %6620 = vmatpush.bf16.msra.mxu0 %v6558
        %6621 = vmatpush.bf16.msra.mxu0 %v6556
        %6622 = vmatpush.bf16.msra.mxu0 %v6554
        %6623 = vmatpush.bf16.msra.mxu0 %v6552
        %6624 = vmatmul.bf16.gmra.mxu0 %v6412
        %v6625 = vpop.f32.mrf.mxu0
        %v6626 = vadd.f32 %v6452, %v6625
        %v6627 = vpop.f32.mrf.mxu0
        %v6628 = vadd.f32 %v6452, %v6627
        %6629 = vmatmul.bf16.gmra.mxu0 %v6414
        %v6630 = vpop.f32.mrf.mxu0
        %v6631 = vadd.f32 %v6452, %v6630
        %v6632 = vpop.f32.mrf.mxu0
        %v6633 = vadd.f32 %v6452, %v6632
        %6634 = vdwg.mxu0
        %6635 = vmatpush.bf16.msra.mxu0 %v6582
        %6636 = vmatpush.bf16.msra.mxu0 %v6580
        %6637 = vmatpush.bf16.msra.mxu0 %v6578
        %6638 = vmatpush.bf16.msra.mxu0 %v6576
        %6639 = vmatpush.bf16.msra.mxu0 %v6574
        %6640 = vmatpush.bf16.msra.mxu0 %v6572
        %6641 = vmatpush.bf16.msra.mxu0 %v6570
        %6642 = vmatpush.bf16.msra.mxu0 %v6568
        %6643 = vmatmul.bf16.gmra.mxu0 %v6413
        %v6644 = vpop.f32.mrf.mxu0
        %v6645 = vadd.f32 %v6626, %v6644
        %v6646 = vpop.f32.mrf.mxu0
        %v6647 = vadd.f32 %v6628, %v6646
        %6648 = vmatmul.bf16.gmra.mxu0 %v6415
        %v6649 = vpop.f32.mrf.mxu0
        %v6650 = vadd.f32 %v6631, %v6649
        %v6651 = vpop.f32.mrf.mxu0
        %v6652 = vadd.f32 %v6633, %v6651
        %6653 = vdwg.mxu0
        %6654 = vmatpush.bf16.msra.mxu0 %v6567
        %6655 = vmatpush.bf16.msra.mxu0 %v6565
        %6656 = vmatpush.bf16.msra.mxu0 %v6563
        %6657 = vmatpush.bf16.msra.mxu0 %v6561
        %6658 = vmatpush.bf16.msra.mxu0 %v6559
        %6659 = vmatpush.bf16.msra.mxu0 %v6557
        %6660 = vmatpush.bf16.msra.mxu0 %v6555
        %6661 = vmatpush.bf16.msra.mxu0 %v6553
        %6662 = vmatmul.bf16.gmra.mxu0 %v6412
        %v6663 = vpop.f32.mrf.mxu0
        %v6664 = vadd.f32 %v6453, %v6663
        %v6665 = vpop.f32.mrf.mxu0
        %v6666 = vadd.f32 %v6453, %v6665
        %6667 = vmatmul.bf16.gmra.mxu0 %v6414
        %v6668 = vpop.f32.mrf.mxu0
        %v6669 = vadd.f32 %v6453, %v6668
        %v6670 = vpop.f32.mrf.mxu0
        %v6671 = vadd.f32 %v6453, %v6670
        %6672 = vdwg.mxu0
        %6673 = vmatpush.bf16.msra.mxu0 %v6583
        %6674 = vmatpush.bf16.msra.mxu0 %v6581
        %6675 = vmatpush.bf16.msra.mxu0 %v6579
        %6676 = vmatpush.bf16.msra.mxu0 %v6577
        %6677 = vmatpush.bf16.msra.mxu0 %v6575
        %6678 = vmatpush.bf16.msra.mxu0 %v6573
        %6679 = vmatpush.bf16.msra.mxu0 %v6571
        %6680 = vmatpush.bf16.msra.mxu0 %v6569
        %6681 = vmatmul.bf16.gmra.mxu0 %v6413
        %v6682 = vpop.f32.mrf.mxu0
        %v6683 = vadd.f32 %v6664, %v6682
        %v6684 = vpop.f32.mrf.mxu0
        %v6685 = vadd.f32 %v6666, %v6684
        %6686 = vmatmul.bf16.gmra.mxu0 %v6415
        %v6687 = vpop.f32.mrf.mxu0
        %v6688 = vadd.f32 %v6669, %v6687
        %v6689 = vpop.f32.mrf.mxu0
        %v6690 = vadd.f32 %v6671, %v6689
        %6691 = vdwg.mxu0
        %v6692 = vmax.f32 %v6645, 0.0
        %v6693 = vmax.f32 %v6683, 0.0
        %v6694 = vmax.f32 %v6647, 0.0
        %v6695 = vmax.f32 %v6685, 0.0
        %v6696 = vmax.f32 %v6650, 0.0
        %v6697 = vmax.f32 %v6688, 0.0
        %v6698 = vmax.f32 %v6652, 0.0
        %v6699 = vmax.f32 %v6690, 0.0
        %v6700 = vadd.f32 %v6692, %v5676
        %v6701 = vadd.f32 %v6693, %v5677
        %v6702 = vadd.f32 %v6694, %v5678
        %v6703 = vadd.f32 %v6695, %v5679
        %v6704 = vadd.f32 %v6696, %v5680
        %v6705 = vadd.f32 %v6697, %v5681
        %v6706 = vadd.f32 %v6698, %v5682
        %v6707 = vadd.f32 %v6699, %v5683
        %v6708 = vpack.c.bf16 %v6702, %v6700
        %v6709 = vpack.c.bf16 %v6703, %v6701
        %v6710 = vpack.c.bf16 %v6706, %v6704
        %v6711 = vpack.c.bf16 %v6707, %v6705
        %s6712 = scalar_lea.vmem [#allocation7], 1536
        %v6713 = vld [vmem:[%s6712] sm:$0xff]
        %v6714 = vld [vmem:[%s6712 + $0x8] sm:$0xff]
        %v6715 = vld [vmem:[%s6712 + $0x10] sm:$0xff]
        %v6716 = vld [vmem:[%s6712 + $0x18] sm:$0xff]
        %v6717 = vld [vmem:[%s6712 + $0x20] sm:$0xff]
        %v6718 = vld [vmem:[%s6712 + $0x28] sm:$0xff]
        %v6719 = vld [vmem:[%s6712 + $0x30] sm:$0xff]
        %v6720 = vld [vmem:[%s6712 + $0x38] sm:$0xff]
        %v6721 = vld [vmem:[%s6712 + $0x40] sm:$0xff]
        %v6722 = vld [vmem:[%s6712 + $0x48] sm:$0xff]
        %v6723 = vld [vmem:[%s6712 + $0x50] sm:$0xff]
        %v6724 = vld [vmem:[%s6712 + $0x58] sm:$0xff]
        %v6725 = vld [vmem:[%s6712 + $0x60] sm:$0xff]
        %v6726 = vld [vmem:[%s6712 + $0x68] sm:$0xff]
        %v6727 = vld [vmem:[%s6712 + $0x70] sm:$0xff]
        %v6728 = vld [vmem:[%s6712 + $0x78] sm:$0xff]
        %v6729 = vld [vmem:[%s6712 + $0x80] sm:$0xff]
        %v6730 = vld [vmem:[%s6712 + $0x88] sm:$0xff]
        %v6731 = vld [vmem:[%s6712 + $0x90] sm:$0xff]
        %v6732 = vld [vmem:[%s6712 + $0x98] sm:$0xff]
        %v6733 = vld [vmem:[%s6712 + $0xa0] sm:$0xff]
        %v6734 = vld [vmem:[%s6712 + $0xa8] sm:$0xff]
        %v6735 = vld [vmem:[%s6712 + $0xb0] sm:$0xff]
        %v6736 = vld [vmem:[%s6712 + $0xb8] sm:$0xff]
        %v6737 = vld [vmem:[%s6712 + $0xc0] sm:$0xff]
        %v6738 = vld [vmem:[%s6712 + $0xc8] sm:$0xff]
        %v6739 = vld [vmem:[%s6712 + $0xd0] sm:$0xff]
        %v6740 = vld [vmem:[%s6712 + $0xd8] sm:$0xff]
        %v6741 = vld [vmem:[%s6712 + $0xe0] sm:$0xff]
        %v6742 = vld [vmem:[%s6712 + $0xe8] sm:$0xff]
        %v6743 = vld [vmem:[%s6712 + $0xf0] sm:$0xff]
        %v6744 = vld [vmem:[%s6712 + $0xf8] sm:$0xff]
        %s6745 = scalar_lea.vmem [#allocation8], 12
        %v6746 = vld [vmem:[%s6745] sm:$0x3]
        %v6748 = vperm.slane %v6746, 0
        %v6749 = vperm.slane %v6746, 1
        %v6784 = vunpack.c.l.b16 %v6713
        %v6785 = vunpack.c.h.b16 %v6713
        %v6786 = vunpack.c.l.b16 %v6714
        %v6787 = vunpack.c.h.b16 %v6714
        %v6788 = vunpack.c.l.b16 %v6715
        %v6789 = vunpack.c.h.b16 %v6715
        %v6790 = vunpack.c.l.b16 %v6716
        %v6791 = vunpack.c.h.b16 %v6716
        %v6792 = vunpack.c.l.b16 %v6717
        %v6793 = vunpack.c.h.b16 %v6717
        %v6794 = vunpack.c.l.b16 %v6718
        %v6795 = vunpack.c.h.b16 %v6718
        %v6796 = vunpack.c.l.b16 %v6719
        %v6797 = vunpack.c.h.b16 %v6719
        %v6798 = vunpack.c.l.b16 %v6720
        %v6799 = vunpack.c.h.b16 %v6720
        %v6800 = vunpack.c.l.b16 %v6721
        %v6801 = vunpack.c.h.b16 %v6721
        %v6802 = vunpack.c.l.b16 %v6722
        %v6803 = vunpack.c.h.b16 %v6722
        %v6804 = vunpack.c.l.b16 %v6723
        %v6805 = vunpack.c.h.b16 %v6723
        %v6806 = vunpack.c.l.b16 %v6724
        %v6807 = vunpack.c.h.b16 %v6724
        %v6808 = vunpack.c.l.b16 %v6725
        %v6809 = vunpack.c.h.b16 %v6725
        %v6810 = vunpack.c.l.b16 %v6726
        %v6811 = vunpack.c.h.b16 %v6726
        %v6812 = vunpack.c.l.b16 %v6727
        %v6813 = vunpack.c.h.b16 %v6727
        %v6814 = vunpack.c.l.b16 %v6728
        %v6815 = vunpack.c.h.b16 %v6728
        %v6816 = vunpack.c.l.b16 %v6729
        %v6817 = vunpack.c.h.b16 %v6729
        %v6818 = vunpack.c.l.b16 %v6730
        %v6819 = vunpack.c.h.b16 %v6730
        %v6820 = vunpack.c.l.b16 %v6731
        %v6821 = vunpack.c.h.b16 %v6731
        %v6822 = vunpack.c.l.b16 %v6732
        %v6823 = vunpack.c.h.b16 %v6732
        %v6824 = vunpack.c.l.b16 %v6733
        %v6825 = vunpack.c.h.b16 %v6733
        %v6826 = vunpack.c.l.b16 %v6734
        %v6827 = vunpack.c.h.b16 %v6734
        %v6828 = vunpack.c.l.b16 %v6735
        %v6829 = vunpack.c.h.b16 %v6735
        %v6830 = vunpack.c.l.b16 %v6736
        %v6831 = vunpack.c.h.b16 %v6736
        %v6832 = vunpack.c.l.b16 %v6737
        %v6833 = vunpack.c.h.b16 %v6737
        %v6834 = vunpack.c.l.b16 %v6738
        %v6835 = vunpack.c.h.b16 %v6738
        %v6836 = vunpack.c.l.b16 %v6739
        %v6837 = vunpack.c.h.b16 %v6739
        %v6838 = vunpack.c.l.b16 %v6740
        %v6839 = vunpack.c.h.b16 %v6740
        %v6840 = vunpack.c.l.b16 %v6741
        %v6841 = vunpack.c.h.b16 %v6741
        %v6842 = vunpack.c.l.b16 %v6742
        %v6843 = vunpack.c.h.b16 %v6742
        %v6844 = vunpack.c.l.b16 %v6743
        %v6845 = vunpack.c.h.b16 %v6743
        %v6846 = vunpack.c.l.b16 %v6744
        %v6847 = vunpack.c.h.b16 %v6744
        %v6848 = vpack.c.b16 %v6786, %v6784
        %v6849 = vpack.c.b16 %v6787, %v6785
        %v6850 = vpack.c.b16 %v6790, %v6788
        %v6851 = vpack.c.b16 %v6791, %v6789
        %v6852 = vpack.c.b16 %v6794, %v6792
        %v6853 = vpack.c.b16 %v6795, %v6793
        %v6854 = vpack.c.b16 %v6798, %v6796
        %v6855 = vpack.c.b16 %v6799, %v6797
        %v6856 = vpack.c.b16 %v6802, %v6800
        %v6857 = vpack.c.b16 %v6803, %v6801
        %v6858 = vpack.c.b16 %v6806, %v6804
        %v6859 = vpack.c.b16 %v6807, %v6805
        %v6860 = vpack.c.b16 %v6810, %v6808
        %v6861 = vpack.c.b16 %v6811, %v6809
        %v6862 = vpack.c.b16 %v6814, %v6812
        %v6863 = vpack.c.b16 %v6815, %v6813
        %v6864 = vpack.c.b16 %v6818, %v6816
        %v6865 = vpack.c.b16 %v6819, %v6817
        %v6866 = vpack.c.b16 %v6822, %v6820
        %v6867 = vpack.c.b16 %v6823, %v6821
        %v6868 = vpack.c.b16 %v6826, %v6824
        %v6869 = vpack.c.b16 %v6827, %v6825
        %v6870 = vpack.c.b16 %v6830, %v6828
        %v6871 = vpack.c.b16 %v6831, %v6829
        %v6872 = vpack.c.b16 %v6834, %v6832
        %v6873 = vpack.c.b16 %v6835, %v6833
        %v6874 = vpack.c.b16 %v6838, %v6836
        %v6875 = vpack.c.b16 %v6839, %v6837
        %v6876 = vpack.c.b16 %v6842, %v6840
        %v6877 = vpack.c.b16 %v6843, %v6841
        %v6878 = vpack.c.b16 %v6846, %v6844
        %v6879 = vpack.c.b16 %v6847, %v6845
        %6912 = vmatpush.bf16.msra.mxu0 %v6862
        %6913 = vmatpush.bf16.msra.mxu0 %v6860
        %6914 = vmatpush.bf16.msra.mxu0 %v6858
        %6915 = vmatpush.bf16.msra.mxu0 %v6856
        %6916 = vmatpush.bf16.msra.mxu0 %v6854
        %6917 = vmatpush.bf16.msra.mxu0 %v6852
        %6918 = vmatpush.bf16.msra.mxu0 %v6850
        %6919 = vmatpush.bf16.msra.mxu0 %v6848
        %6920 = vmatmul.bf16.gmra.mxu0 %v6708
        %v6921 = vpop.f32.mrf.mxu0
        %v6922 = vadd.f32 %v6748, %v6921
        %v6923 = vpop.f32.mrf.mxu0
        %v6924 = vadd.f32 %v6748, %v6923
        %6925 = vmatmul.bf16.gmra.mxu0 %v6710
        %v6926 = vpop.f32.mrf.mxu0
        %v6927 = vadd.f32 %v6748, %v6926
        %v6928 = vpop.f32.mrf.mxu0
        %v6929 = vadd.f32 %v6748, %v6928
        %6930 = vdwg.mxu0
        %6931 = vmatpush.bf16.msra.mxu0 %v6878
        %6932 = vmatpush.bf16.msra.mxu0 %v6876
        %6933 = vmatpush.bf16.msra.mxu0 %v6874
        %6934 = vmatpush.bf16.msra.mxu0 %v6872
        %6935 = vmatpush.bf16.msra.mxu0 %v6870
        %6936 = vmatpush.bf16.msra.mxu0 %v6868
        %6937 = vmatpush.bf16.msra.mxu0 %v6866
        %6938 = vmatpush.bf16.msra.mxu0 %v6864
        %6939 = vmatmul.bf16.gmra.mxu0 %v6709
        %v6940 = vpop.f32.mrf.mxu0
        %v6941 = vadd.f32 %v6922, %v6940
        %v6942 = vpop.f32.mrf.mxu0
        %v6943 = vadd.f32 %v6924, %v6942
        %6944 = vmatmul.bf16.gmra.mxu0 %v6711
        %v6945 = vpop.f32.mrf.mxu0
        %v6946 = vadd.f32 %v6927, %v6945
        %v6947 = vpop.f32.mrf.mxu0
        %v6948 = vadd.f32 %v6929, %v6947
        %6949 = vdwg.mxu0
        %6950 = vmatpush.bf16.msra.mxu0 %v6863
        %6951 = vmatpush.bf16.msra.mxu0 %v6861
        %6952 = vmatpush.bf16.msra.mxu0 %v6859
        %6953 = vmatpush.bf16.msra.mxu0 %v6857
        %6954 = vmatpush.bf16.msra.mxu0 %v6855
        %6955 = vmatpush.bf16.msra.mxu0 %v6853
        %6956 = vmatpush.bf16.msra.mxu0 %v6851
        %6957 = vmatpush.bf16.msra.mxu0 %v6849
        %6958 = vmatmul.bf16.gmra.mxu0 %v6708
        %v6959 = vpop.f32.mrf.mxu0
        %v6960 = vadd.f32 %v6749, %v6959
        %v6961 = vpop.f32.mrf.mxu0
        %v6962 = vadd.f32 %v6749, %v6961
        %6963 = vmatmul.bf16.gmra.mxu0 %v6710
        %v6964 = vpop.f32.mrf.mxu0
        %v6965 = vadd.f32 %v6749, %v6964
        %v6966 = vpop.f32.mrf.mxu0
        %v6967 = vadd.f32 %v6749, %v6966
        %6968 = vdwg.mxu0
        %6969 = vmatpush.bf16.msra.mxu0 %v6879
        %6970 = vmatpush.bf16.msra.mxu0 %v6877
        %6971 = vmatpush.bf16.msra.mxu0 %v6875
        %6972 = vmatpush.bf16.msra.mxu0 %v6873
        %6973 = vmatpush.bf16.msra.mxu0 %v6871
        %6974 = vmatpush.bf16.msra.mxu0 %v6869
        %6975 = vmatpush.bf16.msra.mxu0 %v6867
        %6976 = vmatpush.bf16.msra.mxu0 %v6865
        %6977 = vmatmul.bf16.gmra.mxu0 %v6709
        %v6978 = vpop.f32.mrf.mxu0
        %v6979 = vadd.f32 %v6960, %v6978
        %v6980 = vpop.f32.mrf.mxu0
        %v6981 = vadd.f32 %v6962, %v6980
        %6982 = vmatmul.bf16.gmra.mxu0 %v6711
        %v6983 = vpop.f32.mrf.mxu0
        %v6984 = vadd.f32 %v6965, %v6983
        %v6985 = vpop.f32.mrf.mxu0
        %v6986 = vadd.f32 %v6967, %v6985
        %6987 = vdwg.mxu0
        %v6988 = vpack.c.bf16 %v6943, %v6941
        %v6989 = vpack.c.bf16 %v6981, %v6979
        %v6990 = vpack.c.bf16 %v6948, %v6946
        %v6991 = vpack.c.bf16 %v6986, %v6984
        %6992 = vmatpush.bf16.xpose.msra.mxu0 0
        %6993 = vmatpush.bf16.xpose.msra.mxu0 0
        %6994 = vmatpush.bf16.xpose.msra.mxu0 0
        %6995 = vmatpush.bf16.xpose.msra.mxu0 0
        %6996 = vmatpush.bf16.xpose.msra.mxu0 0
        %6997 = vmatpush.bf16.xpose.msra.mxu0 0
        %6998 = vmatpush.bf16.xpose.msra.mxu0 %v6710
        %6999 = vmatpush.bf16.xpose.msra.mxu0 %v6708
        %7000 = vmatmul.bf16.gmra.mxu0 %v6988
        %v7001 = vpop.f32.mrf.mxu0
        %v7002 = vadd.f32 0.0, %v7001
        %v7003 = vpop.f32.mrf.mxu0
        %v7004 = vadd.f32 0.0, %v7003
        %7005 = vmatmul.bf16.gmra.mxu0 %v6990
        %v7006 = vpop.f32.mrf.mxu0
        %v7007 = vadd.f32 0.0, %v7006
        %v7008 = vpop.f32.mrf.mxu0
        %v7009 = vadd.f32 0.0, %v7008
        %7010 = vdwg.mxu0
        %7011 = vmatpush.bf16.xpose.msra.mxu0 0
        %7012 = vmatpush.bf16.xpose.msra.mxu0 0
        %7013 = vmatpush.bf16.xpose.msra.mxu0 0
        %7014 = vmatpush.bf16.xpose.msra.mxu0 0
        %7015 = vmatpush.bf16.xpose.msra.mxu0 0
        %7016 = vmatpush.bf16.xpose.msra.mxu0 0
        %7017 = vmatpush.bf16.xpose.msra.mxu0 %v6711
        %7018 = vmatpush.bf16.xpose.msra.mxu0 %v6709
        %7019 = vmatmul.bf16.gmra.mxu0 %v6989
        %v7020 = vpop.f32.mrf.mxu0
        %v7021 = vadd.f32 %v7002, %v7020
        %v7022 = vpop.f32.mrf.mxu0
        %v7023 = vadd.f32 %v7004, %v7022
        %7024 = vmatmul.bf16.gmra.mxu0 %v6991
        %v7025 = vpop.f32.mrf.mxu0
        %v7026 = vadd.f32 %v7007, %v7025
        %v7027 = vpop.f32.mrf.mxu0
        %v7028 = vadd.f32 %v7009, %v7027
        %7029 = vdwg.mxu0
        %v7030 = vsel %vm889, %v7021, -inf
        %7031 = vmax.xlane.f32.xlu0 %v7030
        %v7032 = vpop.xlane.xlu0 %7031
        %v7033 = vsel %vm889, %v7023, -inf
        %7034 = vmax.xlane.f32.xlu0 %v7033
        %v7035 = vpop.xlane.xlu0 %7034
        %v7036 = vsel %vm889, %v7026, -inf
        %7037 = vmax.xlane.f32.xlu0 %v7036
        %v7038 = vpop.xlane.xlu0 %7037
        %v7039 = vsel %vm889, %v7028, -inf
        %7040 = vmax.xlane.f32.xlu0 %v7039
        %v7041 = vpop.xlane.xlu0 %7040
        %v7042 = vsub.f32 %v7021, %v7032
        %v7043 = vsub.f32 %v7023, %v7035
        %v7044 = vsub.f32 %v7026, %v7038
        %v7045 = vsub.f32 %v7028, %v7041
        %v7046 = vmul.f32 %v7042, 1.442695
        %v7047 = vpow.pop %v7046
        %v7048 = vmul.f32 %v7043, 1.442695
        %v7049 = vpow.pop %v7048
        %v7050 = vmul.f32 %v7044, 1.442695
        %v7051 = vpow.pop %v7050
        %v7052 = vmul.f32 %v7045, 1.442695
        %v7053 = vpow.pop %v7052
        %v7054 = vsub.f32 0.0, %v7032
        %v7055 = vsub.f32 0.0, %v7035
        %v7056 = vsub.f32 0.0, %v7038
        %v7057 = vsub.f32 0.0, %v7041
        %v7058 = vmul.f32 %v7054, 1.442695
        %v7059 = vpow.pop %v7058
        %v7060 = vmul.f32 %v7055, 1.442695
        %v7061 = vpow.pop %v7060
        %v7062 = vmul.f32 %v7056, 1.442695
        %v7063 = vpow.pop %v7062
        %v7064 = vmul.f32 %v7057, 1.442695
        %v7065 = vpow.pop %v7064
        %v7066 = vmul.f32 %v7059, 1e-05
        %v7067 = vmul.f32 %v7061, 1e-05
        %v7068 = vmul.f32 %v7063, 1e-05
        %v7069 = vmul.f32 %v7065, 1e-05
        %v7070 = vmul.f32 %v7066, %v565
        %v7071 = vmul.f32 %v7067, %v566
        %v7072 = vmul.f32 %v7068, %v567
        %v7073 = vmul.f32 %v7069, %v568
        %v7074 = vadd.f32 %v7047, %v7070
        %v7075 = vadd.f32 %v7049, %v7071
        %v7076 = vadd.f32 %v7051, %v7072
        %v7077 = vadd.f32 %v7053, %v7073
        %v7078 = vmul.f32 %v7074, %v546
        %v7079 = vmul.f32 %v7075, %v547
        %v7080 = vmul.f32 %v7076, %v548
        %v7081 = vmul.f32 %v7077, %v549
        %v7082 = vsel %vm889, %v7078, 0.0
        %7083 = vadd.xlane.f32.xlu0 %v7082
        %v7084 = vpop.xlane.xlu0 %7083
        %v7085 = vsel %vm889, %v7079, 0.0
        %7086 = vadd.xlane.f32.xlu0 %v7085
        %v7087 = vpop.xlane.xlu0 %7086
        %v7088 = vsel %vm889, %v7080, 0.0
        %7089 = vadd.xlane.f32.xlu0 %v7088
        %v7090 = vpop.xlane.xlu0 %7089
        %v7091 = vsel %vm889, %v7081, 0.0
        %7092 = vadd.xlane.f32.xlu0 %v7091
        %v7093 = vpop.xlane.xlu0 %7092
        %v7094 = vrcp.pop %v7084
        %v7095 = vrcp.pop %v7087
        %v7096 = vrcp.pop %v7090
        %v7097 = vrcp.pop %v7093
        %v7098 = vmul.f32 %v7078, %v7094
        %v7099 = vmul.f32 %v7079, %v7095
        %v7100 = vmul.f32 %v7080, %v7096
        %v7101 = vmul.f32 %v7081, %v7097
        %v7102 = vpack.c.bf16 %v7099, %v7098
        %v7103 = vpack.c.bf16 %v7101, %v7100
        %v7105 = vsel %vm889, %v7102, 0
        %v7108 = vsel %vm889, %v7103, 0
        %7110 = vmatpush.bf16.msra.mxu0 0
        %7111 = vmatpush.bf16.msra.mxu0 0
        %7112 = vmatpush.bf16.msra.mxu0 0
        %7113 = vmatpush.bf16.msra.mxu0 0
        %7114 = vmatpush.bf16.msra.mxu0 0
        %7115 = vmatpush.bf16.msra.mxu0 0
        %7116 = vmatpush.bf16.msra.mxu0 %v6710
        %7117 = vmatpush.bf16.msra.mxu0 %v6708
        %7118 = vmatmul.bf16.gmra.mxu0 %v7105
        %v7119 = vpop.f32.mrf.mxu0
        %v7120 = vadd.f32 0.0, %v7119
        %v7121 = vpop.f32.mrf.mxu0
        %v7122 = vadd.f32 0.0, %v7121
        %7123 = vmatmul.bf16.gmra.mxu0 %v7108
        %v7124 = vpop.f32.mrf.mxu0
        %v7125 = vadd.f32 0.0, %v7124
        %v7126 = vpop.f32.mrf.mxu0
        %v7127 = vadd.f32 0.0, %v7126
        %7128 = vdwg.mxu0
        %7129 = vmatpush.bf16.msra.mxu0 0
        %7130 = vmatpush.bf16.msra.mxu0 0
        %7131 = vmatpush.bf16.msra.mxu0 0
        %7132 = vmatpush.bf16.msra.mxu0 0
        %7133 = vmatpush.bf16.msra.mxu0 0
        %7134 = vmatpush.bf16.msra.mxu0 0
        %7135 = vmatpush.bf16.msra.mxu0 %v6711
        %7136 = vmatpush.bf16.msra.mxu0 %v6709
        %7137 = vmatmul.bf16.gmra.mxu0 %v7105
        %v7138 = vpop.f32.mrf.mxu0
        %v7139 = vadd.f32 0.0, %v7138
        %v7140 = vpop.f32.mrf.mxu0
        %v7141 = vadd.f32 0.0, %v7140
        %7142 = vmatmul.bf16.gmra.mxu0 %v7108
        %v7143 = vpop.f32.mrf.mxu0
        %v7144 = vadd.f32 0.0, %v7143
        %v7145 = vpop.f32.mrf.mxu0
        %v7146 = vadd.f32 0.0, %v7145
        %7147 = vdwg.mxu0
        %v7148 = vpack.c.bf16 %v7122, %v7120
        %v7149 = vpack.c.bf16 %v7141, %v7139
        %v7150 = vpack.c.bf16 %v7127, %v7125
        %v7151 = vpack.c.bf16 %v7146, %v7144
        %s7152 = scalar_lea.vmem [#allocation10], 1536
        %v7153 = vld [vmem:[%s7152] sm:$0xff]
        %v7154 = vld [vmem:[%s7152 + $0x8] sm:$0xff]
        %v7155 = vld [vmem:[%s7152 + $0x10] sm:$0xff]
        %v7156 = vld [vmem:[%s7152 + $0x18] sm:$0xff]
        %v7157 = vld [vmem:[%s7152 + $0x20] sm:$0xff]
        %v7158 = vld [vmem:[%s7152 + $0x28] sm:$0xff]
        %v7159 = vld [vmem:[%s7152 + $0x30] sm:$0xff]
        %v7160 = vld [vmem:[%s7152 + $0x38] sm:$0xff]
        %v7161 = vld [vmem:[%s7152 + $0x40] sm:$0xff]
        %v7162 = vld [vmem:[%s7152 + $0x48] sm:$0xff]
        %v7163 = vld [vmem:[%s7152 + $0x50] sm:$0xff]
        %v7164 = vld [vmem:[%s7152 + $0x58] sm:$0xff]
        %v7165 = vld [vmem:[%s7152 + $0x60] sm:$0xff]
        %v7166 = vld [vmem:[%s7152 + $0x68] sm:$0xff]
        %v7167 = vld [vmem:[%s7152 + $0x70] sm:$0xff]
        %v7168 = vld [vmem:[%s7152 + $0x78] sm:$0xff]
        %v7169 = vld [vmem:[%s7152 + $0x80] sm:$0xff]
        %v7170 = vld [vmem:[%s7152 + $0x88] sm:$0xff]
        %v7171 = vld [vmem:[%s7152 + $0x90] sm:$0xff]
        %v7172 = vld [vmem:[%s7152 + $0x98] sm:$0xff]
        %v7173 = vld [vmem:[%s7152 + $0xa0] sm:$0xff]
        %v7174 = vld [vmem:[%s7152 + $0xa8] sm:$0xff]
        %v7175 = vld [vmem:[%s7152 + $0xb0] sm:$0xff]
        %v7176 = vld [vmem:[%s7152 + $0xb8] sm:$0xff]
        %v7177 = vld [vmem:[%s7152 + $0xc0] sm:$0xff]
        %v7178 = vld [vmem:[%s7152 + $0xc8] sm:$0xff]
        %v7179 = vld [vmem:[%s7152 + $0xd0] sm:$0xff]
        %v7180 = vld [vmem:[%s7152 + $0xd8] sm:$0xff]
        %v7181 = vld [vmem:[%s7152 + $0xe0] sm:$0xff]
        %v7182 = vld [vmem:[%s7152 + $0xe8] sm:$0xff]
        %v7183 = vld [vmem:[%s7152 + $0xf0] sm:$0xff]
        %v7184 = vld [vmem:[%s7152 + $0xf8] sm:$0xff]
        %s7185 = scalar_lea.vmem [#allocation11], 12
        %v7186 = vld [vmem:[%s7185] sm:$0x3]
        %v7188 = vperm.slane %v7186, 0
        %v7189 = vperm.slane %v7186, 1
        %v7224 = vunpack.c.l.b16 %v7153
        %v7225 = vunpack.c.h.b16 %v7153
        %v7226 = vunpack.c.l.b16 %v7154
        %v7227 = vunpack.c.h.b16 %v7154
        %v7228 = vunpack.c.l.b16 %v7155
        %v7229 = vunpack.c.h.b16 %v7155
        %v7230 = vunpack.c.l.b16 %v7156
        %v7231 = vunpack.c.h.b16 %v7156
        %v7232 = vunpack.c.l.b16 %v7157
        %v7233 = vunpack.c.h.b16 %v7157
        %v7234 = vunpack.c.l.b16 %v7158
        %v7235 = vunpack.c.h.b16 %v7158
        %v7236 = vunpack.c.l.b16 %v7159
        %v7237 = vunpack.c.h.b16 %v7159
        %v7238 = vunpack.c.l.b16 %v7160
        %v7239 = vunpack.c.h.b16 %v7160
        %v7240 = vunpack.c.l.b16 %v7161
        %v7241 = vunpack.c.h.b16 %v7161
        %v7242 = vunpack.c.l.b16 %v7162
        %v7243 = vunpack.c.h.b16 %v7162
        %v7244 = vunpack.c.l.b16 %v7163
        %v7245 = vunpack.c.h.b16 %v7163
        %v7246 = vunpack.c.l.b16 %v7164
        %v7247 = vunpack.c.h.b16 %v7164
        %v7248 = vunpack.c.l.b16 %v7165
        %v7249 = vunpack.c.h.b16 %v7165
        %v7250 = vunpack.c.l.b16 %v7166
        %v7251 = vunpack.c.h.b16 %v7166
        %v7252 = vunpack.c.l.b16 %v7167
        %v7253 = vunpack.c.h.b16 %v7167
        %v7254 = vunpack.c.l.b16 %v7168
        %v7255 = vunpack.c.h.b16 %v7168
        %v7256 = vunpack.c.l.b16 %v7169
        %v7257 = vunpack.c.h.b16 %v7169
        %v7258 = vunpack.c.l.b16 %v7170
        %v7259 = vunpack.c.h.b16 %v7170
        %v7260 = vunpack.c.l.b16 %v7171
        %v7261 = vunpack.c.h.b16 %v7171
        %v7262 = vunpack.c.l.b16 %v7172
        %v7263 = vunpack.c.h.b16 %v7172
        %v7264 = vunpack.c.l.b16 %v7173
        %v7265 = vunpack.c.h.b16 %v7173
        %v7266 = vunpack.c.l.b16 %v7174
        %v7267 = vunpack.c.h.b16 %v7174
        %v7268 = vunpack.c.l.b16 %v7175
        %v7269 = vunpack.c.h.b16 %v7175
        %v7270 = vunpack.c.l.b16 %v7176
        %v7271 = vunpack.c.h.b16 %v7176
        %v7272 = vunpack.c.l.b16 %v7177
        %v7273 = vunpack.c.h.b16 %v7177
        %v7274 = vunpack.c.l.b16 %v7178
        %v7275 = vunpack.c.h.b16 %v7178
        %v7276 = vunpack.c.l.b16 %v7179
        %v7277 = vunpack.c.h.b16 %v7179
        %v7278 = vunpack.c.l.b16 %v7180
        %v7279 = vunpack.c.h.b16 %v7180
        %v7280 = vunpack.c.l.b16 %v7181
        %v7281 = vunpack.c.h.b16 %v7181
        %v7282 = vunpack.c.l.b16 %v7182
        %v7283 = vunpack.c.h.b16 %v7182
        %v7284 = vunpack.c.l.b16 %v7183
        %v7285 = vunpack.c.h.b16 %v7183
        %v7286 = vunpack.c.l.b16 %v7184
        %v7287 = vunpack.c.h.b16 %v7184
        %v7288 = vpack.c.b16 %v7226, %v7224
        %v7289 = vpack.c.b16 %v7227, %v7225
        %v7290 = vpack.c.b16 %v7230, %v7228
        %v7291 = vpack.c.b16 %v7231, %v7229
        %v7292 = vpack.c.b16 %v7234, %v7232
        %v7293 = vpack.c.b16 %v7235, %v7233
        %v7294 = vpack.c.b16 %v7238, %v7236
        %v7295 = vpack.c.b16 %v7239, %v7237
        %v7296 = vpack.c.b16 %v7242, %v7240
        %v7297 = vpack.c.b16 %v7243, %v7241
        %v7298 = vpack.c.b16 %v7246, %v7244
        %v7299 = vpack.c.b16 %v7247, %v7245
        %v7300 = vpack.c.b16 %v7250, %v7248
        %v7301 = vpack.c.b16 %v7251, %v7249
        %v7302 = vpack.c.b16 %v7254, %v7252
        %v7303 = vpack.c.b16 %v7255, %v7253
        %v7304 = vpack.c.b16 %v7258, %v7256
        %v7305 = vpack.c.b16 %v7259, %v7257
        %v7306 = vpack.c.b16 %v7262, %v7260
        %v7307 = vpack.c.b16 %v7263, %v7261
        %v7308 = vpack.c.b16 %v7266, %v7264
        %v7309 = vpack.c.b16 %v7267, %v7265
        %v7310 = vpack.c.b16 %v7270, %v7268
        %v7311 = vpack.c.b16 %v7271, %v7269
        %v7312 = vpack.c.b16 %v7274, %v7272
        %v7313 = vpack.c.b16 %v7275, %v7273
        %v7314 = vpack.c.b16 %v7278, %v7276
        %v7315 = vpack.c.b16 %v7279, %v7277
        %v7316 = vpack.c.b16 %v7282, %v7280
        %v7317 = vpack.c.b16 %v7283, %v7281
        %v7318 = vpack.c.b16 %v7286, %v7284
        %v7319 = vpack.c.b16 %v7287, %v7285
        %7352 = vmatpush.bf16.msra.mxu0 %v7302
        %7353 = vmatpush.bf16.msra.mxu0 %v7300
        %7354 = vmatpush.bf16.msra.mxu0 %v7298
        %7355 = vmatpush.bf16.msra.mxu0 %v7296
        %7356 = vmatpush.bf16.msra.mxu0 %v7294
        %7357 = vmatpush.bf16.msra.mxu0 %v7292
        %7358 = vmatpush.bf16.msra.mxu0 %v7290
        %7359 = vmatpush.bf16.msra.mxu0 %v7288
        %7360 = vmatmul.bf16.gmra.mxu0 %v7148
        %v7361 = vpop.f32.mrf.mxu0
        %v7362 = vadd.f32 %v7188, %v7361
        %v7363 = vpop.f32.mrf.mxu0
        %v7364 = vadd.f32 %v7188, %v7363
        %7365 = vmatmul.bf16.gmra.mxu0 %v7150
        %v7366 = vpop.f32.mrf.mxu0
        %v7367 = vadd.f32 %v7188, %v7366
        %v7368 = vpop.f32.mrf.mxu0
        %v7369 = vadd.f32 %v7188, %v7368
        %7370 = vdwg.mxu0
        %7371 = vmatpush.bf16.msra.mxu0 %v7318
        %7372 = vmatpush.bf16.msra.mxu0 %v7316
        %7373 = vmatpush.bf16.msra.mxu0 %v7314
        %7374 = vmatpush.bf16.msra.mxu0 %v7312
        %7375 = vmatpush.bf16.msra.mxu0 %v7310
        %7376 = vmatpush.bf16.msra.mxu0 %v7308
        %7377 = vmatpush.bf16.msra.mxu0 %v7306
        %7378 = vmatpush.bf16.msra.mxu0 %v7304
        %7379 = vmatmul.bf16.gmra.mxu0 %v7149
        %v7380 = vpop.f32.mrf.mxu0
        %v7381 = vadd.f32 %v7362, %v7380
        %v7382 = vpop.f32.mrf.mxu0
        %v7383 = vadd.f32 %v7364, %v7382
        %7384 = vmatmul.bf16.gmra.mxu0 %v7151
        %v7385 = vpop.f32.mrf.mxu0
        %v7386 = vadd.f32 %v7367, %v7385
        %v7387 = vpop.f32.mrf.mxu0
        %v7388 = vadd.f32 %v7369, %v7387
        %7389 = vdwg.mxu0
        %7390 = vmatpush.bf16.msra.mxu0 %v7303
        %7391 = vmatpush.bf16.msra.mxu0 %v7301
        %7392 = vmatpush.bf16.msra.mxu0 %v7299
        %7393 = vmatpush.bf16.msra.mxu0 %v7297
        %7394 = vmatpush.bf16.msra.mxu0 %v7295
        %7395 = vmatpush.bf16.msra.mxu0 %v7293
        %7396 = vmatpush.bf16.msra.mxu0 %v7291
        %7397 = vmatpush.bf16.msra.mxu0 %v7289
        %7398 = vmatmul.bf16.gmra.mxu0 %v7148
        %v7399 = vpop.f32.mrf.mxu0
        %v7400 = vadd.f32 %v7189, %v7399
        %v7401 = vpop.f32.mrf.mxu0
        %v7402 = vadd.f32 %v7189, %v7401
        %7403 = vmatmul.bf16.gmra.mxu0 %v7150
        %v7404 = vpop.f32.mrf.mxu0
        %v7405 = vadd.f32 %v7189, %v7404
        %v7406 = vpop.f32.mrf.mxu0
        %v7407 = vadd.f32 %v7189, %v7406
        %7408 = vdwg.mxu0
        %7409 = vmatpush.bf16.msra.mxu0 %v7319
        %7410 = vmatpush.bf16.msra.mxu0 %v7317
        %7411 = vmatpush.bf16.msra.mxu0 %v7315
        %7412 = vmatpush.bf16.msra.mxu0 %v7313
        %7413 = vmatpush.bf16.msra.mxu0 %v7311
        %7414 = vmatpush.bf16.msra.mxu0 %v7309
        %7415 = vmatpush.bf16.msra.mxu0 %v7307
        %7416 = vmatpush.bf16.msra.mxu0 %v7305
        %7417 = vmatmul.bf16.gmra.mxu0 %v7149
        %v7418 = vpop.f32.mrf.mxu0
        %v7419 = vadd.f32 %v7400, %v7418
        %v7420 = vpop.f32.mrf.mxu0
        %v7421 = vadd.f32 %v7402, %v7420
        %7422 = vmatmul.bf16.gmra.mxu0 %v7151
        %v7423 = vpop.f32.mrf.mxu0
        %v7424 = vadd.f32 %v7405, %v7423
        %v7425 = vpop.f32.mrf.mxu0
        %v7426 = vadd.f32 %v7407, %v7425
        %7427 = vdwg.mxu0
        %v7428 = vmax.f32 %v7381, 0.0
        %v7429 = vmax.f32 %v7419, 0.0
        %v7430 = vmax.f32 %v7383, 0.0
        %v7431 = vmax.f32 %v7421, 0.0
        %v7432 = vmax.f32 %v7386, 0.0
        %v7433 = vmax.f32 %v7424, 0.0
        %v7434 = vmax.f32 %v7388, 0.0
        %v7435 = vmax.f32 %v7426, 0.0
        %v7436 = vpack.c.bf16 %v7430, %v7428
        %v7437 = vpack.c.bf16 %v7431, %v7429
        %v7438 = vpack.c.bf16 %v7434, %v7432
        %v7439 = vpack.c.bf16 %v7435, %v7433
        %s7440 = scalar_lea.vmem [#allocation13], 1536
        %v7441 = vld [vmem:[%s7440] sm:$0xff]
        %v7442 = vld [vmem:[%s7440 + $0x8] sm:$0xff]
        %v7443 = vld [vmem:[%s7440 + $0x10] sm:$0xff]
        %v7444 = vld [vmem:[%s7440 + $0x18] sm:$0xff]
        %v7445 = vld [vmem:[%s7440 + $0x20] sm:$0xff]
        %v7446 = vld [vmem:[%s7440 + $0x28] sm:$0xff]
        %v7447 = vld [vmem:[%s7440 + $0x30] sm:$0xff]
        %v7448 = vld [vmem:[%s7440 + $0x38] sm:$0xff]
        %v7449 = vld [vmem:[%s7440 + $0x40] sm:$0xff]
        %v7450 = vld [vmem:[%s7440 + $0x48] sm:$0xff]
        %v7451 = vld [vmem:[%s7440 + $0x50] sm:$0xff]
        %v7452 = vld [vmem:[%s7440 + $0x58] sm:$0xff]
        %v7453 = vld [vmem:[%s7440 + $0x60] sm:$0xff]
        %v7454 = vld [vmem:[%s7440 + $0x68] sm:$0xff]
        %v7455 = vld [vmem:[%s7440 + $0x70] sm:$0xff]
        %v7456 = vld [vmem:[%s7440 + $0x78] sm:$0xff]
        %v7457 = vld [vmem:[%s7440 + $0x80] sm:$0xff]
        %v7458 = vld [vmem:[%s7440 + $0x88] sm:$0xff]
        %v7459 = vld [vmem:[%s7440 + $0x90] sm:$0xff]
        %v7460 = vld [vmem:[%s7440 + $0x98] sm:$0xff]
        %v7461 = vld [vmem:[%s7440 + $0xa0] sm:$0xff]
        %v7462 = vld [vmem:[%s7440 + $0xa8] sm:$0xff]
        %v7463 = vld [vmem:[%s7440 + $0xb0] sm:$0xff]
        %v7464 = vld [vmem:[%s7440 + $0xb8] sm:$0xff]
        %v7465 = vld [vmem:[%s7440 + $0xc0] sm:$0xff]
        %v7466 = vld [vmem:[%s7440 + $0xc8] sm:$0xff]
        %v7467 = vld [vmem:[%s7440 + $0xd0] sm:$0xff]
        %v7468 = vld [vmem:[%s7440 + $0xd8] sm:$0xff]
        %v7469 = vld [vmem:[%s7440 + $0xe0] sm:$0xff]
        %v7470 = vld [vmem:[%s7440 + $0xe8] sm:$0xff]
        %v7471 = vld [vmem:[%s7440 + $0xf0] sm:$0xff]
        %v7472 = vld [vmem:[%s7440 + $0xf8] sm:$0xff]
        %s7473 = scalar_lea.vmem [#allocation14], 12
        %v7474 = vld [vmem:[%s7473] sm:$0x3]
        %v7476 = vperm.slane %v7474, 0
        %v7477 = vperm.slane %v7474, 1
        %v7512 = vunpack.c.l.b16 %v7441
        %v7513 = vunpack.c.h.b16 %v7441
        %v7514 = vunpack.c.l.b16 %v7442
        %v7515 = vunpack.c.h.b16 %v7442
        %v7516 = vunpack.c.l.b16 %v7443
        %v7517 = vunpack.c.h.b16 %v7443
        %v7518 = vunpack.c.l.b16 %v7444
        %v7519 = vunpack.c.h.b16 %v7444
        %v7520 = vunpack.c.l.b16 %v7445
        %v7521 = vunpack.c.h.b16 %v7445
        %v7522 = vunpack.c.l.b16 %v7446
        %v7523 = vunpack.c.h.b16 %v7446
        %v7524 = vunpack.c.l.b16 %v7447
        %v7525 = vunpack.c.h.b16 %v7447
        %v7526 = vunpack.c.l.b16 %v7448
        %v7527 = vunpack.c.h.b16 %v7448
        %v7528 = vunpack.c.l.b16 %v7449
        %v7529 = vunpack.c.h.b16 %v7449
        %v7530 = vunpack.c.l.b16 %v7450
        %v7531 = vunpack.c.h.b16 %v7450
        %v7532 = vunpack.c.l.b16 %v7451
        %v7533 = vunpack.c.h.b16 %v7451
        %v7534 = vunpack.c.l.b16 %v7452
        %v7535 = vunpack.c.h.b16 %v7452
        %v7536 = vunpack.c.l.b16 %v7453
        %v7537 = vunpack.c.h.b16 %v7453
        %v7538 = vunpack.c.l.b16 %v7454
        %v7539 = vunpack.c.h.b16 %v7454
        %v7540 = vunpack.c.l.b16 %v7455
        %v7541 = vunpack.c.h.b16 %v7455
        %v7542 = vunpack.c.l.b16 %v7456
        %v7543 = vunpack.c.h.b16 %v7456
        %v7544 = vunpack.c.l.b16 %v7457
        %v7545 = vunpack.c.h.b16 %v7457
        %v7546 = vunpack.c.l.b16 %v7458
        %v7547 = vunpack.c.h.b16 %v7458
        %v7548 = vunpack.c.l.b16 %v7459
        %v7549 = vunpack.c.h.b16 %v7459
        %v7550 = vunpack.c.l.b16 %v7460
        %v7551 = vunpack.c.h.b16 %v7460
        %v7552 = vunpack.c.l.b16 %v7461
        %v7553 = vunpack.c.h.b16 %v7461
        %v7554 = vunpack.c.l.b16 %v7462
        %v7555 = vunpack.c.h.b16 %v7462
        %v7556 = vunpack.c.l.b16 %v7463
        %v7557 = vunpack.c.h.b16 %v7463
        %v7558 = vunpack.c.l.b16 %v7464
        %v7559 = vunpack.c.h.b16 %v7464
        %v7560 = vunpack.c.l.b16 %v7465
        %v7561 = vunpack.c.h.b16 %v7465
        %v7562 = vunpack.c.l.b16 %v7466
        %v7563 = vunpack.c.h.b16 %v7466
        %v7564 = vunpack.c.l.b16 %v7467
        %v7565 = vunpack.c.h.b16 %v7467
        %v7566 = vunpack.c.l.b16 %v7468
        %v7567 = vunpack.c.h.b16 %v7468
        %v7568 = vunpack.c.l.b16 %v7469
        %v7569 = vunpack.c.h.b16 %v7469
        %v7570 = vunpack.c.l.b16 %v7470
        %v7571 = vunpack.c.h.b16 %v7470
        %v7572 = vunpack.c.l.b16 %v7471
        %v7573 = vunpack.c.h.b16 %v7471
        %v7574 = vunpack.c.l.b16 %v7472
        %v7575 = vunpack.c.h.b16 %v7472
        %v7576 = vpack.c.b16 %v7514, %v7512
        %v7577 = vpack.c.b16 %v7515, %v7513
        %v7578 = vpack.c.b16 %v7518, %v7516
        %v7579 = vpack.c.b16 %v7519, %v7517
        %v7580 = vpack.c.b16 %v7522, %v7520
        %v7581 = vpack.c.b16 %v7523, %v7521
        %v7582 = vpack.c.b16 %v7526, %v7524
        %v7583 = vpack.c.b16 %v7527, %v7525
        %v7584 = vpack.c.b16 %v7530, %v7528
        %v7585 = vpack.c.b16 %v7531, %v7529
        %v7586 = vpack.c.b16 %v7534, %v7532
        %v7587 = vpack.c.b16 %v7535, %v7533
        %v7588 = vpack.c.b16 %v7538, %v7536
        %v7589 = vpack.c.b16 %v7539, %v7537
        %v7590 = vpack.c.b16 %v7542, %v7540
        %v7591 = vpack.c.b16 %v7543, %v7541
        %v7592 = vpack.c.b16 %v7546, %v7544
        %v7593 = vpack.c.b16 %v7547, %v7545
        %v7594 = vpack.c.b16 %v7550, %v7548
        %v7595 = vpack.c.b16 %v7551, %v7549
        %v7596 = vpack.c.b16 %v7554, %v7552
        %v7597 = vpack.c.b16 %v7555, %v7553
        %v7598 = vpack.c.b16 %v7558, %v7556
        %v7599 = vpack.c.b16 %v7559, %v7557
        %v7600 = vpack.c.b16 %v7562, %v7560
        %v7601 = vpack.c.b16 %v7563, %v7561
        %v7602 = vpack.c.b16 %v7566, %v7564
        %v7603 = vpack.c.b16 %v7567, %v7565
        %v7604 = vpack.c.b16 %v7570, %v7568
        %v7605 = vpack.c.b16 %v7571, %v7569
        %v7606 = vpack.c.b16 %v7574, %v7572
        %v7607 = vpack.c.b16 %v7575, %v7573
        %7640 = vmatpush.bf16.msra.mxu0 %v7590
        %7641 = vmatpush.bf16.msra.mxu0 %v7588
        %7642 = vmatpush.bf16.msra.mxu0 %v7586
        %7643 = vmatpush.bf16.msra.mxu0 %v7584
        %7644 = vmatpush.bf16.msra.mxu0 %v7582
        %7645 = vmatpush.bf16.msra.mxu0 %v7580
        %7646 = vmatpush.bf16.msra.mxu0 %v7578
        %7647 = vmatpush.bf16.msra.mxu0 %v7576
        %7648 = vmatmul.bf16.gmra.mxu0 %v7436
        %v7649 = vpop.f32.mrf.mxu0
        %v7650 = vadd.f32 %v7476, %v7649
        %v7651 = vpop.f32.mrf.mxu0
        %v7652 = vadd.f32 %v7476, %v7651
        %7653 = vmatmul.bf16.gmra.mxu0 %v7438
        %v7654 = vpop.f32.mrf.mxu0
        %v7655 = vadd.f32 %v7476, %v7654
        %v7656 = vpop.f32.mrf.mxu0
        %v7657 = vadd.f32 %v7476, %v7656
        %7658 = vdwg.mxu0
        %7659 = vmatpush.bf16.msra.mxu0 %v7606
        %7660 = vmatpush.bf16.msra.mxu0 %v7604
        %7661 = vmatpush.bf16.msra.mxu0 %v7602
        %7662 = vmatpush.bf16.msra.mxu0 %v7600
        %7663 = vmatpush.bf16.msra.mxu0 %v7598
        %7664 = vmatpush.bf16.msra.mxu0 %v7596
        %7665 = vmatpush.bf16.msra.mxu0 %v7594
        %7666 = vmatpush.bf16.msra.mxu0 %v7592
        %7667 = vmatmul.bf16.gmra.mxu0 %v7437
        %v7668 = vpop.f32.mrf.mxu0
        %v7669 = vadd.f32 %v7650, %v7668
        %v7670 = vpop.f32.mrf.mxu0
        %v7671 = vadd.f32 %v7652, %v7670
        %7672 = vmatmul.bf16.gmra.mxu0 %v7439
        %v7673 = vpop.f32.mrf.mxu0
        %v7674 = vadd.f32 %v7655, %v7673
        %v7675 = vpop.f32.mrf.mxu0
        %v7676 = vadd.f32 %v7657, %v7675
        %7677 = vdwg.mxu0
        %7678 = vmatpush.bf16.msra.mxu0 %v7591
        %7679 = vmatpush.bf16.msra.mxu0 %v7589
        %7680 = vmatpush.bf16.msra.mxu0 %v7587
        %7681 = vmatpush.bf16.msra.mxu0 %v7585
        %7682 = vmatpush.bf16.msra.mxu0 %v7583
        %7683 = vmatpush.bf16.msra.mxu0 %v7581
        %7684 = vmatpush.bf16.msra.mxu0 %v7579
        %7685 = vmatpush.bf16.msra.mxu0 %v7577
        %7686 = vmatmul.bf16.gmra.mxu0 %v7436
        %v7687 = vpop.f32.mrf.mxu0
        %v7688 = vadd.f32 %v7477, %v7687
        %v7689 = vpop.f32.mrf.mxu0
        %v7690 = vadd.f32 %v7477, %v7689
        %7691 = vmatmul.bf16.gmra.mxu0 %v7438
        %v7692 = vpop.f32.mrf.mxu0
        %v7693 = vadd.f32 %v7477, %v7692
        %v7694 = vpop.f32.mrf.mxu0
        %v7695 = vadd.f32 %v7477, %v7694
        %7696 = vdwg.mxu0
        %7697 = vmatpush.bf16.msra.mxu0 %v7607
        %7698 = vmatpush.bf16.msra.mxu0 %v7605
        %7699 = vmatpush.bf16.msra.mxu0 %v7603
        %7700 = vmatpush.bf16.msra.mxu0 %v7601
        %7701 = vmatpush.bf16.msra.mxu0 %v7599
        %7702 = vmatpush.bf16.msra.mxu0 %v7597
        %7703 = vmatpush.bf16.msra.mxu0 %v7595
        %7704 = vmatpush.bf16.msra.mxu0 %v7593
        %7705 = vmatmul.bf16.gmra.mxu0 %v7437
        %v7706 = vpop.f32.mrf.mxu0
        %v7707 = vadd.f32 %v7688, %v7706
        %v7708 = vpop.f32.mrf.mxu0
        %v7709 = vadd.f32 %v7690, %v7708
        %7710 = vmatmul.bf16.gmra.mxu0 %v7439
        %v7711 = vpop.f32.mrf.mxu0
        %v7712 = vadd.f32 %v7693, %v7711
        %v7713 = vpop.f32.mrf.mxu0
        %v7714 = vadd.f32 %v7695, %v7713
        %7715 = vdwg.mxu0
        %v7716 = vmax.f32 %v7669, 0.0
        %v7717 = vmax.f32 %v7707, 0.0
        %v7718 = vmax.f32 %v7671, 0.0
        %v7719 = vmax.f32 %v7709, 0.0
        %v7720 = vmax.f32 %v7674, 0.0
        %v7721 = vmax.f32 %v7712, 0.0
        %v7722 = vmax.f32 %v7676, 0.0
        %v7723 = vmax.f32 %v7714, 0.0
        %v7724 = vadd.f32 %v7716, %v6700
        %v7725 = vadd.f32 %v7717, %v6701
        %v7726 = vadd.f32 %v7718, %v6702
        %v7727 = vadd.f32 %v7719, %v6703
        %v7728 = vadd.f32 %v7720, %v6704
        %v7729 = vadd.f32 %v7721, %v6705
        %v7730 = vadd.f32 %v7722, %v6706
        %v7731 = vadd.f32 %v7723, %v6707
        %v7732 = vpack.c.bf16 %v7726, %v7724
        %v7733 = vpack.c.bf16 %v7727, %v7725
        %v7734 = vpack.c.bf16 %v7730, %v7728
        %v7735 = vpack.c.bf16 %v7731, %v7729
        %v7736 = vld [vmem:[#allocation16] sm:$0xff]
        %v7737 = vld [vmem:[#allocation16 + $0x8] sm:$0xff]
        %v7738 = vld [vmem:[#allocation16 + $0x10] sm:$0xff]
        %v7739 = vld [vmem:[#allocation16 + $0x18] sm:$0xff]
        %v7740 = vld [vmem:[#allocation16 + $0x20] sm:$0xff]
        %v7741 = vld [vmem:[#allocation16 + $0x28] sm:$0xff]
        %v7742 = vld [vmem:[#allocation16 + $0x30] sm:$0xff]
        %v7743 = vld [vmem:[#allocation16 + $0x38] sm:$0xff]
        %v7744 = vld [vmem:[#allocation16 + $0x40] sm:$0xff]
        %v7745 = vld [vmem:[#allocation16 + $0x48] sm:$0xff]
        %v7746 = vld [vmem:[#allocation16 + $0x50] sm:$0xff]
        %v7747 = vld [vmem:[#allocation16 + $0x58] sm:$0xff]
        %v7748 = vld [vmem:[#allocation16 + $0x60] sm:$0xff]
        %v7749 = vld [vmem:[#allocation16 + $0x68] sm:$0xff]
        %v7750 = vld [vmem:[#allocation16 + $0x70] sm:$0xff]
        %v7751 = vld [vmem:[#allocation16 + $0x78] sm:$0xff]
        %v7752 = vld [vmem:[#allocation16 + $0x80] sm:$0xff]
        %v7753 = vld [vmem:[#allocation16 + $0x88] sm:$0xff]
        %v7754 = vld [vmem:[#allocation16 + $0x90] sm:$0xff]
        %v7755 = vld [vmem:[#allocation16 + $0x98] sm:$0xff]
        %v7756 = vld [vmem:[#allocation16 + $0xa0] sm:$0xff]
        %v7757 = vld [vmem:[#allocation16 + $0xa8] sm:$0xff]
        %v7758 = vld [vmem:[#allocation16 + $0xb0] sm:$0xff]
        %v7759 = vld [vmem:[#allocation16 + $0xb8] sm:$0xff]
        %v7760 = vld [vmem:[#allocation16 + $0xc0] sm:$0xff]
        %v7761 = vld [vmem:[#allocation16 + $0xc8] sm:$0xff]
        %v7762 = vld [vmem:[#allocation16 + $0xd0] sm:$0xff]
        %v7763 = vld [vmem:[#allocation16 + $0xd8] sm:$0xff]
        %v7764 = vld [vmem:[#allocation16 + $0xe0] sm:$0xff]
        %v7765 = vld [vmem:[#allocation16 + $0xe8] sm:$0xff]
        %v7766 = vld [vmem:[#allocation16 + $0xf0] sm:$0xff]
        %v7767 = vld [vmem:[#allocation16 + $0xf8] sm:$0xff]
        %v7768 = vld [vmem:[%s9] sm:$0x3]
        %v7770 = vperm.slane %v7768, 0
        %v7771 = vperm.slane %v7768, 1
        %v7806 = vunpack.c.l.b16 %v7736
        %v7807 = vunpack.c.h.b16 %v7736
        %v7808 = vunpack.c.l.b16 %v7737
        %v7809 = vunpack.c.h.b16 %v7737
        %v7810 = vunpack.c.l.b16 %v7738
        %v7811 = vunpack.c.h.b16 %v7738
        %v7812 = vunpack.c.l.b16 %v7739
        %v7813 = vunpack.c.h.b16 %v7739
        %v7814 = vunpack.c.l.b16 %v7740
        %v7815 = vunpack.c.h.b16 %v7740
        %v7816 = vunpack.c.l.b16 %v7741
        %v7817 = vunpack.c.h.b16 %v7741
        %v7818 = vunpack.c.l.b16 %v7742
        %v7819 = vunpack.c.h.b16 %v7742
        %v7820 = vunpack.c.l.b16 %v7743
        %v7821 = vunpack.c.h.b16 %v7743
        %v7822 = vunpack.c.l.b16 %v7744
        %v7823 = vunpack.c.h.b16 %v7744
        %v7824 = vunpack.c.l.b16 %v7745
        %v7825 = vunpack.c.h.b16 %v7745
        %v7826 = vunpack.c.l.b16 %v7746
        %v7827 = vunpack.c.h.b16 %v7746
        %v7828 = vunpack.c.l.b16 %v7747
        %v7829 = vunpack.c.h.b16 %v7747
        %v7830 = vunpack.c.l.b16 %v7748
        %v7831 = vunpack.c.h.b16 %v7748
        %v7832 = vunpack.c.l.b16 %v7749
        %v7833 = vunpack.c.h.b16 %v7749
        %v7834 = vunpack.c.l.b16 %v7750
        %v7835 = vunpack.c.h.b16 %v7750
        %v7836 = vunpack.c.l.b16 %v7751
        %v7837 = vunpack.c.h.b16 %v7751
        %v7838 = vunpack.c.l.b16 %v7752
        %v7839 = vunpack.c.h.b16 %v7752
        %v7840 = vunpack.c.l.b16 %v7753
        %v7841 = vunpack.c.h.b16 %v7753
        %v7842 = vunpack.c.l.b16 %v7754
        %v7843 = vunpack.c.h.b16 %v7754
        %v7844 = vunpack.c.l.b16 %v7755
        %v7845 = vunpack.c.h.b16 %v7755
        %v7846 = vunpack.c.l.b16 %v7756
        %v7847 = vunpack.c.h.b16 %v7756
        %v7848 = vunpack.c.l.b16 %v7757
        %v7849 = vunpack.c.h.b16 %v7757
        %v7850 = vunpack.c.l.b16 %v7758
        %v7851 = vunpack.c.h.b16 %v7758
        %v7852 = vunpack.c.l.b16 %v7759
        %v7853 = vunpack.c.h.b16 %v7759
        %v7854 = vunpack.c.l.b16 %v7760
        %v7855 = vunpack.c.h.b16 %v7760
        %v7856 = vunpack.c.l.b16 %v7761
        %v7857 = vunpack.c.h.b16 %v7761
        %v7858 = vunpack.c.l.b16 %v7762
        %v7859 = vunpack.c.h.b16 %v7762
        %v7860 = vunpack.c.l.b16 %v7763
        %v7861 = vunpack.c.h.b16 %v7763
        %v7862 = vunpack.c.l.b16 %v7764
        %v7863 = vunpack.c.h.b16 %v7764
        %v7864 = vunpack.c.l.b16 %v7765
        %v7865 = vunpack.c.h.b16 %v7765
        %v7866 = vunpack.c.l.b16 %v7766
        %v7867 = vunpack.c.h.b16 %v7766
        %v7868 = vunpack.c.l.b16 %v7767
        %v7869 = vunpack.c.h.b16 %v7767
        %v7870 = vpack.c.b16 %v7808, %v7806
        %v7871 = vpack.c.b16 %v7809, %v7807
        %v7872 = vpack.c.b16 %v7812, %v7810
        %v7873 = vpack.c.b16 %v7813, %v7811
        %v7874 = vpack.c.b16 %v7816, %v7814
        %v7875 = vpack.c.b16 %v7817, %v7815
        %v7876 = vpack.c.b16 %v7820, %v7818
        %v7877 = vpack.c.b16 %v7821, %v7819
        %v7878 = vpack.c.b16 %v7824, %v7822
        %v7879 = vpack.c.b16 %v7825, %v7823
        %v7880 = vpack.c.b16 %v7828, %v7826
        %v7881 = vpack.c.b16 %v7829, %v7827
        %v7882 = vpack.c.b16 %v7832, %v7830
        %v7883 = vpack.c.b16 %v7833, %v7831
        %v7884 = vpack.c.b16 %v7836, %v7834
        %v7885 = vpack.c.b16 %v7837, %v7835
        %v7886 = vpack.c.b16 %v7840, %v7838
        %v7887 = vpack.c.b16 %v7841, %v7839
        %v7888 = vpack.c.b16 %v7844, %v7842
        %v7889 = vpack.c.b16 %v7845, %v7843
        %v7890 = vpack.c.b16 %v7848, %v7846
        %v7891 = vpack.c.b16 %v7849, %v7847
        %v7892 = vpack.c.b16 %v7852, %v7850
        %v7893 = vpack.c.b16 %v7853, %v7851
        %v7894 = vpack.c.b16 %v7856, %v7854
        %v7895 = vpack.c.b16 %v7857, %v7855
        %v7896 = vpack.c.b16 %v7860, %v7858
        %v7897 = vpack.c.b16 %v7861, %v7859
        %v7898 = vpack.c.b16 %v7864, %v7862
        %v7899 = vpack.c.b16 %v7865, %v7863
        %v7900 = vpack.c.b16 %v7868, %v7866
        %v7901 = vpack.c.b16 %v7869, %v7867
        %7934 = vmatpush.bf16.msra.mxu0 %v7884
        %7935 = vmatpush.bf16.msra.mxu0 %v7882
        %7936 = vmatpush.bf16.msra.mxu0 %v7880
        %7937 = vmatpush.bf16.msra.mxu0 %v7878
        %7938 = vmatpush.bf16.msra.mxu0 %v7876
        %7939 = vmatpush.bf16.msra.mxu0 %v7874
        %7940 = vmatpush.bf16.msra.mxu0 %v7872
        %7941 = vmatpush.bf16.msra.mxu0 %v7870
        %7942 = vmatmul.bf16.gmra.mxu0 %v7732
        %v7943 = vpop.f32.mrf.mxu0
        %v7944 = vadd.f32 %v7770, %v7943
        %v7945 = vpop.f32.mrf.mxu0
        %v7946 = vadd.f32 %v7770, %v7945
        %7947 = vmatmul.bf16.gmra.mxu0 %v7734
        %v7948 = vpop.f32.mrf.mxu0
        %v7949 = vadd.f32 %v7770, %v7948
        %v7950 = vpop.f32.mrf.mxu0
        %v7951 = vadd.f32 %v7770, %v7950
        %7952 = vdwg.mxu0
        %7953 = vmatpush.bf16.msra.mxu0 %v7900
        %7954 = vmatpush.bf16.msra.mxu0 %v7898
        %7955 = vmatpush.bf16.msra.mxu0 %v7896
        %7956 = vmatpush.bf16.msra.mxu0 %v7894
        %7957 = vmatpush.bf16.msra.mxu0 %v7892
        %7958 = vmatpush.bf16.msra.mxu0 %v7890
        %7959 = vmatpush.bf16.msra.mxu0 %v7888
        %7960 = vmatpush.bf16.msra.mxu0 %v7886
        %7961 = vmatmul.bf16.gmra.mxu0 %v7733
        %v7962 = vpop.f32.mrf.mxu0
        %v7963 = vadd.f32 %v7944, %v7962
        %v7964 = vpop.f32.mrf.mxu0
        %v7965 = vadd.f32 %v7946, %v7964
        %7966 = vmatmul.bf16.gmra.mxu0 %v7735
        %v7967 = vpop.f32.mrf.mxu0
        %v7968 = vadd.f32 %v7949, %v7967
        %v7969 = vpop.f32.mrf.mxu0
        %v7970 = vadd.f32 %v7951, %v7969
        %7971 = vdwg.mxu0
        %7972 = vmatpush.bf16.msra.mxu0 %v7885
        %7973 = vmatpush.bf16.msra.mxu0 %v7883
        %7974 = vmatpush.bf16.msra.mxu0 %v7881
        %7975 = vmatpush.bf16.msra.mxu0 %v7879
        %7976 = vmatpush.bf16.msra.mxu0 %v7877
        %7977 = vmatpush.bf16.msra.mxu0 %v7875
        %7978 = vmatpush.bf16.msra.mxu0 %v7873
        %7979 = vmatpush.bf16.msra.mxu0 %v7871
        %7980 = vmatmul.bf16.gmra.mxu0 %v7732
        %v7981 = vpop.f32.mrf.mxu0
        %v7982 = vadd.f32 %v7771, %v7981
        %v7983 = vpop.f32.mrf.mxu0
        %v7984 = vadd.f32 %v7771, %v7983
        %7985 = vmatmul.bf16.gmra.mxu0 %v7734
        %v7986 = vpop.f32.mrf.mxu0
        %v7987 = vadd.f32 %v7771, %v7986
        %v7988 = vpop.f32.mrf.mxu0
        %v7989 = vadd.f32 %v7771, %v7988
        %7990 = vdwg.mxu0
        %7991 = vmatpush.bf16.msra.mxu0 %v7901
        %7992 = vmatpush.bf16.msra.mxu0 %v7899
        %7993 = vmatpush.bf16.msra.mxu0 %v7897
        %7994 = vmatpush.bf16.msra.mxu0 %v7895
        %7995 = vmatpush.bf16.msra.mxu0 %v7893
        %7996 = vmatpush.bf16.msra.mxu0 %v7891
        %7997 = vmatpush.bf16.msra.mxu0 %v7889
        %7998 = vmatpush.bf16.msra.mxu0 %v7887
        %7999 = vmatmul.bf16.gmra.mxu0 %v7733
        %v8000 = vpop.f32.mrf.mxu0
        %v8001 = vadd.f32 %v7982, %v8000
        %v8002 = vpop.f32.mrf.mxu0
        %v8003 = vadd.f32 %v7984, %v8002
        %8004 = vmatmul.bf16.gmra.mxu0 %v7735
        %v8005 = vpop.f32.mrf.mxu0
        %v8006 = vadd.f32 %v7987, %v8005
        %v8007 = vpop.f32.mrf.mxu0
        %v8008 = vadd.f32 %v7989, %v8007
        %8009 = vdwg.mxu0
        %8010 = vst [vmem:[%s536] sm:$0xff] %v7963
        %8011 = vst [vmem:[%s536 + $0x8] sm:$0xff] %v8001
        %8012 = vst [vmem:[%s536 + $0x10] sm:$0xff] %v7965
        %8013 = vst [vmem:[%s536 + $0x18] sm:$0xff] %v8003
        %8014 = vst [vmem:[%s536 + $0x20] sm:$0xff] %v7968
        %8015 = vst [vmem:[%s536 + $0x28] sm:$0xff] %v8006
        %8016 = vst [vmem:[%s536 + $0x30] sm:$0xff] %v7970
        %8017 = vst [vmem:[%s536 + $0x38] sm:$0xff] %v8008
        %s8018 = sand.u32 %s261, 1
        %s8019 = scalar_lea.sflag [#allocation4], %s8018
        %s8020 = sand.u32 %s261, 1
        %s8021 = smul.addr %s8020, 64
        %s8022 = scalar_lea.vmem [#allocation17], %s8021
        // Predicated region
        $region97: #{tpu_custom_call.1} parent=59 // pred_check
          %p8023 = pneg %p271
        $region98: #{tpu_custom_call.1} parent=59 // pred_check_branch
          %8025 = sbr.rel (%p8023) target = $region100
        $region99: #{tpu_custom_call.1} parent=59 // pred_region
          %8027 = vsyncadd %s8019, 0
          %s8028 = smul.addr %s33, 8
          %s8029 = smul.addr %s8028, 8
          %s8030 = scalar_lea.hbm %s10, %s8029
          %s8031 = sshll.u32 %s8022, 4
          %s8032 = int_to_ptr.vmem [resolvable:$true] %s8031
          %s8033 = sshll.u32 %s8030, 4
          %s8034 = int_to_ptr.hbm [resolvable:$true] %s8033
          %8039 = dma.vmem_to_hbm [thread:$0]  %s8032, 1024, %s8034, %s8019, 256, 256, 16
        $region100: #{tpu_custom_call.1} parent=59 // pred_fallthru
          _
      $region60: #{tpu_custom_call.1} parent=5 // pred_fallthru
        _
      %p8040 = scmp.le.s32.totalorder 2, %s28
      // Predicated region
      $region101: #{tpu_custom_call.1} parent=5 // pred_check
        %p8041 = pneg %p8040
      $region102: #{tpu_custom_call.1} parent=5 // pred_check_branch
        %8043 = sbr.rel (%p8041) target = $region104
      $region103: #{tpu_custom_call.1} parent=5 // pred_region
        %s8044 = ssub.s32 %s28, 2
        // Predicated region
        $region105: #{tpu_custom_call.1} parent=103 // pred_check
          %p8045 = pneg %p277
        $region106: #{tpu_custom_call.1} parent=103 // pred_check_branch
          %8047 = sbr.rel (%p8045) target = $region108
        $region107: #{tpu_custom_call.1} parent=103 // pred_region
          %s8048 = sand.u32 %s262, 1
          %s8049 = scalar_lea.sflag [#allocation4], %s8048
          %s8050 = sand.u32 %s262, 1
          %s8051 = smul.addr %s8050, 64
          %s8052 = scalar_lea.vmem [#allocation17], %s8051
          %8054 = dma.done %s8049, 1024
        $region108: #{tpu_custom_call.1} parent=103 // pred_fallthru
          _
      $region104: #{tpu_custom_call.1} parent=5 // pred_fallthru
        _
    $region6: #{tpu_custom_call.1} parent=1 // loop_footer
      %s32 = sadd.s32 1, %s28
    $region7: #{tpu_custom_call.1} parent=1 // loop_footer_branch
      %27 = sbr.rel target = $region3
    $region8: #{tpu_custom_call.1} parent=1 // loop_exit
      _
    %8055 = vsyncpa [#allocation3], 1
    %s8056 = scalar_lea.sflag [#allocation3], 1
    %8057 = vsyncpa %s8056, 1
    %8058 = vsyncpa [#allocation6], 1
    %s8059 = scalar_lea.sflag [#allocation6], 1
    %8060 = vsyncpa %s8059, 1
    %8061 = vsyncpa [#allocation9], 1
    %8062 = vsyncpa [#allocation12], 1
    %8063 = vsyncpa [#allocation15], 1
    %8064 = vsyncpa [#allocation4], 1
    %s8065 = scalar_lea.sflag [#allocation4], 1
    %8066 = vsyncpa %s8065, 1

</llo_original>
